<compile_context>
chip_gen: v7x
topology: tpu7x:2x2x1
jax: 0.10.0
libtpu: 0.0.40
codegen_flags: <defaults>
</compile_context>

<pallas_src>
import jax
import jax.numpy as jnp
from jax.experimental import pallas as pl
from jax.experimental.pallas import tpu as pltpu

EPS = 1e-5  # nn.InstanceNorm2d default eps (affine=False -> no scale/shift)


# ---------------------------------------------------------------------------
# Fused kernel factory (static C, H, W baked in)
# ---------------------------------------------------------------------------
def _make_kernel(C, H, W, compute_dtype):
    Wp, Hp = W + 2, H + 2
    J = H * Wp                        # flat conv-output domain (stride Wp/row)
    P2 = Hp * Wp + 2                  # flat padded-image length (+2 tap slack)
    OFF = ((3 * Wp + 7) // 8) * 8     # scratch offset, >= 3*Wp, sublane aligned
    BUF = OFF + Wp + P2 + 8           # scratch rows covering all shift windows
    inv_hw = 1.0 / float(H * W)

    def conv3x3(read_tap, w_ref):
        # y[j, co] = sum_{kh,kw,ci} src[j + kh*Wp + kw, ci] * w[kh*3+kw, ci, co]
        acc = None
        for kh in range(3):
            for kw in range(3):
                tap = read_tap(kh * Wp + kw).astype(compute_dtype)
                wt = w_ref[kh * 3 + kw].astype(compute_dtype)
                part = jnp.dot(tap, wt, preferred_element_type=jnp.float32)
                acc = part if acc is None else acc + part
        return acc

    def kernel(xp_ref, col_ref, q_ref, w1_ref, b1_ref, w2_ref, b2_ref,
               o_ref, pad_ref, hp_ref):
        colid = col_ref[...]                       # (J, 1) f32: w-index mod Wp
        valid = (colid < W).astype(jnp.float32)    # 1.0 on real pixels

        def instance_norm(y):                      # y: (J, C) f32
            ym = y * valid
            s1 = jnp.sum(ym, axis=0, keepdims=True)        # (1, C)
            s2 = jnp.sum(ym * y, axis=0, keepdims=True)    # single-pass stats
            mean = s1 * inv_hw
            var = s2 * inv_hw - mean * mean                # biased (PyTorch IN)
            return (y - mean) * jax.lax.rsqrt(var + EPS)

        # ---- conv1 -> InstanceNorm -> ReLU (h stays in VMEM) ----
        y1 = conv3x3(lambda d: xp_ref[0, d:d + J, :], w1_ref) + b1_ref[...]
        h = jnp.maximum(instance_norm(y1), 0.0)             # (J, C)

        # ---- in-kernel ReflectionPad2d(1) of h (flattened layout) ----
        pad_ref[...] = jnp.zeros_like(pad_ref)
        # column (W-axis) reflection:
        #   g[q] = h[row(q), reflect(col(q) - 1)]  for col(q) in [0, Wp)
        pad_ref[OFF:OFF + J, :] = h
        h_m1 = pad_ref[OFF + 1:OFF + 1 + J, :]     # h[q + 1]
        h_p1 = pad_ref[OFF - 1:OFF - 1 + J, :]     # h[q - 1]
        h_p3 = pad_ref[OFF - 3:OFF - 3 + J, :]     # h[q - 3]
        g = jnp.where(colid == 0.0, h_m1,
                      jnp.where(colid == float(Wp - 1), h_p3, h_p1))
        # row (H-axis) reflection: hp[q] = g[q + Wp] / g[q - Wp] / g[q - 3*Wp]
        pad_ref[OFF:OFF + J, :] = g
        g_top = pad_ref[OFF + Wp:OFF + Wp + P2, :]
        g_mid = pad_ref[OFF - Wp:OFF - Wp + P2, :]
        g_bot = pad_ref[OFF - 3 * Wp:OFF - 3 * Wp + P2, :]
        qidx = q_ref[...]                          # (P2, 1) f32 flat index
        hp_ref[...] = jnp.where(qidx < Wp, g_top,
                                jnp.where(qidx < (H + 1) * Wp, g_mid, g_bot))

        # ---- conv2 -> InstanceNorm -> residual add ----
        y2 = conv3x3(lambda d: hp_ref[d:d + J, :], w2_ref) + b2_ref[...]
        y2n = instance_norm(y2)
        res = xp_ref[0, Wp + 1:Wp + 1 + J, :]      # original x in same layout
        o_ref[0] = (res + y2n).astype(o_ref.dtype)

    return kernel, J, P2, BUF


# ---------------------------------------------------------------------------
# Wrapper: XLA-side layout glue + pallas_call
# ---------------------------------------------------------------------------
def resnet_block(x, w1, b1, w2, b2, *, compute_dtype=jnp.float32):
    """x: (N, C, H, W); w*: (C, C, 3, 3); b*: (C,).  Returns (N, C, H, W)."""
    N, C, H, W = x.shape
    if H < 2 or W < 2:
        raise ValueError("ReflectionPad2d(1) requires H, W >= 2")
    Hp, Wp = H + 2, W + 2
    kernel, J, P2, BUF = _make_kernel(C, H, W, compute_dtype)

    # Reflection pad of x + NCHW -> (N, Hp*Wp, C) spatial-major flatten, plus 2
    # zero rows of slack so every in-kernel tap window is in bounds.  This is
    # ~1.3x the activation size (vs. the 9x im2col previously written to HBM).
    xp = jnp.pad(x, ((0, 0), (0, 0), (1, 1), (1, 1)), mode="reflect")
    xp = jnp.transpose(xp, (0, 2, 3, 1)).reshape(N, Hp * Wp, C)
    xp = jnp.pad(xp, ((0, 0), (0, 2), (0, 0))).astype(jnp.float32)

    # Per-tap weight matrices: w_taps[kh*3+kw, ci, co] = w[co, ci, kh, kw]
    w1t = jnp.transpose(w1, (2, 3, 1, 0)).reshape(9, C, C).astype(jnp.float32)
    w2t = jnp.transpose(w2, (2, 3, 1, 0)).reshape(9, C, C).astype(jnp.float32)
    b1r = b1.reshape(1, C).astype(jnp.float32)
    b2r = b2.reshape(1, C).astype(jnp.float32)

    # Static index helpers (avoid in-kernel integer div/mod).
    colid = (jnp.arange(J, dtype=jnp.int32) % Wp).astype(jnp.float32)
    colid = colid.reshape(J, 1)
    qidx = jnp.arange(P2, dtype=jnp.float32).reshape(P2, 1)

    flops = int(2 * (2 * 9 * C * C * H * W) * N)
    bytes_accessed = int(4 * (xp.size + w1t.size + w2t.size + 2 * C
                              + N * J * C + J + P2))
    cost = pl.CostEstimate(flops=flops, transcendentals=2 * N * C,
                           bytes_accessed=bytes_accessed)

    # Estimated per-step VMEM (double-buffered I/O blocks + scratch); raise the
    # scoped limit only if a large configuration needs it (never at test size).
    vmem_need = 4 * (2 * P2 * C + 2 * J * C + 2 * 9 * C * C
                     + BUF * C + P2 * C + J + P2 + 2 * C)
    ckw = dict(dimension_semantics=("parallel",))
    if vmem_need > 32 * 1024 * 1024:
        # TODO(synk): beyond ~96 MiB (v7x has 64 MiB physical VMEM) switch to an
        # HW-tiled grid with accumulate-then-finalize InstanceNorm.
        ckw["vmem_limit_bytes"] = min(int(1.5 * vmem_need), 96 * 1024 * 1024)

    out = pl.pallas_call(
        kernel,
        out_shape=jax.ShapeDtypeStruct((N, J, C), x.dtype),
        grid=(N,),
        in_specs=[
            pl.BlockSpec((1, P2, C), lambda n: (n, 0, 0)),   # padded activation
            pl.BlockSpec((J, 1), lambda n: (0, 0)),          # column index
            pl.BlockSpec((P2, 1), lambda n: (0, 0)),         # flat index
            pl.BlockSpec((9, C, C), lambda n: (0, 0, 0)),    # conv1 taps
            pl.BlockSpec((1, C), lambda n: (0, 0)),          # bias1
            pl.BlockSpec((9, C, C), lambda n: (0, 0, 0)),    # conv2 taps
            pl.BlockSpec((1, C), lambda n: (0, 0)),          # bias2
        ],
        out_specs=pl.BlockSpec((1, J, C), lambda n: (n, 0, 0)),
        scratch_shapes=[pltpu.VMEM((BUF, C), jnp.float32),   # shift buffer
                        pltpu.VMEM((P2, C), jnp.float32)],   # padded h
        compiler_params=pltpu.CompilerParams(**ckw),
        cost_estimate=cost,
    )(xp, colid, qidx, w1t, b1r, w2t, b2r)

    # (N, H*Wp, C) -> (N, H, Wp, C) -> drop the 2 pad columns -> NCHW
    out = out.reshape(N, H, Wp, C)[:, :, :W, :]
    return jnp.transpose(out, (0, 3, 1, 2))


# ---------------------------------------------------------------------------
# Pure-JAX reference (correctness check)
# ---------------------------------------------------------------------------
def _reference(x, w1, b1, w2, b2):
    def conv(x, w, b):
        xp = jnp.pad(x, ((0, 0), (0, 0), (1, 1), (1, 1)), mode="reflect")
        y = jax.lax.conv_general_dilated(
            xp, w, window_strides=(1, 1), padding="VALID",
            dimension_numbers=("NCHW", "OIHW", "NCHW"))
        return y + b.reshape(1, -1, 1, 1)

    def inorm(y):
        m = jnp.mean(y, axis=(2, 3), keepdims=True)
        v = jnp.mean((y - m) ** 2, axis=(2, 3), keepdims=True)
        return (y - m) / jnp.sqrt(v + EPS)

    h = jnp.maximum(inorm(conv(x, w1, b1)), 0.0)
    return x + inorm(conv(h, w2, b2))


if __name__ == "__main__":
    N, C, H, W = 2, 4, 16, 16  # dimension = 4

    key = jax.random.PRNGKey(0)
    kx, k1, k2, k3, k4 = jax.random.split(key, 5)
    x  = jax.random.normal(kx, (N, C, H, W), dtype=jnp.float32)
    w1 = 0.1 * jax.random.normal(k1, (C, C, 3, 3), dtype=jnp.float32)
    b1 = 0.1 * jax.random.normal(k2, (C,), dtype=jnp.float32)
    w2 = 0.1 * jax.random.normal(k3, (C, C, 3, 3), dtype=jnp.float32)
    b2 = 0.1 * jax.random.normal(k4, (C,), dtype=jnp.float32)

    out = jax.jit(resnet_block)(x, w1, b1, w2, b2)
    out = jax.block_until_ready(out)

    ref = _reference(x, w1, b1, w2, b2)
    max_err = float(jnp.max(jnp.abs(out - ref)))
    assert out.shape == (N, C, H, W)
    assert max_err < 1e-4, f"mismatch vs reference: {max_err}"
    print("KERNEL_OK")
</pallas_src>

<mosaic_0001>
module attributes {stable_mosaic.version = 11 : i64} {
  func.func @kernel(%arg0: i32, %arg1: memref<1x326x4xf32, #tpu.memory_space<vmem>>, %arg2: memref<288x1xf32, #tpu.memory_space<vmem>>, %arg3: memref<326x1xf32, #tpu.memory_space<vmem>>, %arg4: memref<9x4x4xf32, #tpu.memory_space<vmem>>, %arg5: memref<1x4xf32, #tpu.memory_space<vmem>>, %arg6: memref<9x4x4xf32, #tpu.memory_space<vmem>>, %arg7: memref<1x4xf32, #tpu.memory_space<vmem>>, %arg8: memref<1x288x4xf32, #tpu.memory_space<vmem>>, %arg9: memref<408x4xf32, #tpu.memory_space<vmem>>, %arg10: memref<326x4xf32, #tpu.memory_space<vmem>>) attributes {dimension_semantics = [#tpu.dimension_semantics<parallel>], iteration_bounds = array<i64: 2>, scalar_prefetch = 0 : i64, scratch_operands = 2 : i64, tpu.core_type = #tpu.core_type<tc>, window_params = [{transform_indices = @transform_0, window_bounds = array<i64: 1, 326, 4>}, {pipeline_mode = #tpu.pipeline_mode<synchronous>, transform_indices = @transform_1, window_bounds = array<i64: 288, 1>}, {pipeline_mode = #tpu.pipeline_mode<synchronous>, transform_indices = @transform_2, window_bounds = array<i64: 326, 1>}, {pipeline_mode = #tpu.pipeline_mode<synchronous>, transform_indices = @transform_3, window_bounds = array<i64: 9, 4, 4>}, {pipeline_mode = #tpu.pipeline_mode<synchronous>, transform_indices = @transform_4, window_bounds = array<i64: 1, 4>}, {pipeline_mode = #tpu.pipeline_mode<synchronous>, transform_indices = @transform_5, window_bounds = array<i64: 9, 4, 4>}, {pipeline_mode = #tpu.pipeline_mode<synchronous>, transform_indices = @transform_6, window_bounds = array<i64: 1, 4>}, {transform_indices = @transform_7, window_bounds = array<i64: 1, 288, 4>}]} {
    %c0 = arith.constant 0 : index
    %c0_0 = arith.constant 0 : index
    %0 = vector.load %arg2[%c0, %c0_0] : memref<288x1xf32, #tpu.memory_space<vmem>>, vector<288x1xf32>
    %cst = arith.constant 1.600000e+01 : f32
    %1 = vector.broadcast %cst : f32 to vector<288x1xf32>
    %2 = arith.cmpf olt, %0, %1 : vector<288x1xf32>
    %3 = arith.extui %2 : vector<288x1xi1> to vector<288x1xi32>
    %4 = arith.sitofp %3 : vector<288x1xi32> to vector<288x1xf32>
    %c0_1 = arith.constant 0 : index
    %c0_2 = arith.constant 0 : index
    %c0_3 = arith.constant 0 : index
    %5 = vector.load %arg1[%c0_1, %c0_2, %c0_3] : memref<1x326x4xf32, #tpu.memory_space<vmem>>, vector<1x288x4xf32>
    %6 = vector.shape_cast %5 : vector<1x288x4xf32> to vector<288x4xf32>
    %c0_4 = arith.constant 0 : index
    %c0_5 = arith.constant 0 : index
    %c0_6 = arith.constant 0 : index
    %7 = vector.load %arg4[%c0_4, %c0_5, %c0_6] : memref<9x4x4xf32, #tpu.memory_space<vmem>>, vector<1x4x4xf32>
    %8 = vector.shape_cast %7 : vector<1x4x4xf32> to vector<4x4xf32>
    %cst_7 = arith.constant dense<0.000000e+00> : vector<288x4xf32>
    %9 = tpu.matmul %6, %8, %cst_7 {dimension_numbers = #tpu.dot_dimension_numbers<[1], [0], [0], [1], [0, 0, 1, 1], [], []>} : vector<288x4xf32>, vector<4x4xf32>, vector<288x4xf32> -> vector<288x4xf32>
    %c0_8 = arith.constant 0 : index
    %c1 = arith.constant 1 : index
    %c0_9 = arith.constant 0 : index
    %10 = vector.load %arg1[%c0_8, %c1, %c0_9] : memref<1x326x4xf32, #tpu.memory_space<vmem>>, vector<1x288x4xf32>
    %11 = vector.shape_cast %10 : vector<1x288x4xf32> to vector<288x4xf32>
    %c1_10 = arith.constant 1 : index
    %c0_11 = arith.constant 0 : index
    %c0_12 = arith.constant 0 : index
    %12 = vector.load %arg4[%c1_10, %c0_11, %c0_12] : memref<9x4x4xf32, #tpu.memory_space<vmem>>, vector<1x4x4xf32>
    %13 = vector.shape_cast %12 : vector<1x4x4xf32> to vector<4x4xf32>
    %cst_13 = arith.constant dense<0.000000e+00> : vector<288x4xf32>
    %14 = tpu.matmul %11, %13, %cst_13 {dimension_numbers = #tpu.dot_dimension_numbers<[1], [0], [0], [1], [0, 0, 1, 1], [], []>} : vector<288x4xf32>, vector<4x4xf32>, vector<288x4xf32> -> vector<288x4xf32>
    %15 = arith.addf %9, %14 : vector<288x4xf32>
    %c0_14 = arith.constant 0 : index
    %c2 = arith.constant 2 : index
    %c0_15 = arith.constant 0 : index
    %16 = vector.load %arg1[%c0_14, %c2, %c0_15] : memref<1x326x4xf32, #tpu.memory_space<vmem>>, vector<1x288x4xf32>
    %17 = vector.shape_cast %16 : vector<1x288x4xf32> to vector<288x4xf32>
    %c2_16 = arith.constant 2 : index
    %c0_17 = arith.constant 0 : index
    %c0_18 = arith.constant 0 : index
    %18 = vector.load %arg4[%c2_16, %c0_17, %c0_18] : memref<9x4x4xf32, #tpu.memory_space<vmem>>, vector<1x4x4xf32>
    %19 = vector.shape_cast %18 : vector<1x4x4xf32> to vector<4x4xf32>
    %cst_19 = arith.constant dense<0.000000e+00> : vector<288x4xf32>
    %20 = tpu.matmul %17, %19, %cst_19 {dimension_numbers = #tpu.dot_dimension_numbers<[1], [0], [0], [1], [0, 0, 1, 1], [], []>} : vector<288x4xf32>, vector<4x4xf32>, vector<288x4xf32> -> vector<288x4xf32>
    %21 = arith.addf %15, %20 : vector<288x4xf32>
    %c0_20 = arith.constant 0 : index
    %c18 = arith.constant 18 : index
    %c0_21 = arith.constant 0 : index
    %22 = vector.load %arg1[%c0_20, %c18, %c0_21] : memref<1x326x4xf32, #tpu.memory_space<vmem>>, vector<1x288x4xf32>
    %23 = vector.shape_cast %22 : vector<1x288x4xf32> to vector<288x4xf32>
    %c3 = arith.constant 3 : index
    %c0_22 = arith.constant 0 : index
    %c0_23 = arith.constant 0 : index
    %24 = vector.load %arg4[%c3, %c0_22, %c0_23] : memref<9x4x4xf32, #tpu.memory_space<vmem>>, vector<1x4x4xf32>
    %25 = vector.shape_cast %24 : vector<1x4x4xf32> to vector<4x4xf32>
    %cst_24 = arith.constant dense<0.000000e+00> : vector<288x4xf32>
    %26 = tpu.matmul %23, %25, %cst_24 {dimension_numbers = #tpu.dot_dimension_numbers<[1], [0], [0], [1], [0, 0, 1, 1], [], []>} : vector<288x4xf32>, vector<4x4xf32>, vector<288x4xf32> -> vector<288x4xf32>
    %27 = arith.addf %21, %26 : vector<288x4xf32>
    %c0_25 = arith.constant 0 : index
    %c19 = arith.constant 19 : index
    %c0_26 = arith.constant 0 : index
    %28 = vector.load %arg1[%c0_25, %c19, %c0_26] : memref<1x326x4xf32, #tpu.memory_space<vmem>>, vector<1x288x4xf32>
    %29 = vector.shape_cast %28 : vector<1x288x4xf32> to vector<288x4xf32>
    %c4 = arith.constant 4 : index
    %c0_27 = arith.constant 0 : index
    %c0_28 = arith.constant 0 : index
    %30 = vector.load %arg4[%c4, %c0_27, %c0_28] : memref<9x4x4xf32, #tpu.memory_space<vmem>>, vector<1x4x4xf32>
    %31 = vector.shape_cast %30 : vector<1x4x4xf32> to vector<4x4xf32>
    %cst_29 = arith.constant dense<0.000000e+00> : vector<288x4xf32>
    %32 = tpu.matmul %29, %31, %cst_29 {dimension_numbers = #tpu.dot_dimension_numbers<[1], [0], [0], [1], [0, 0, 1, 1], [], []>} : vector<288x4xf32>, vector<4x4xf32>, vector<288x4xf32> -> vector<288x4xf32>
    %33 = arith.addf %27, %32 : vector<288x4xf32>
    %c0_30 = arith.constant 0 : index
    %c20 = arith.constant 20 : index
    %c0_31 = arith.constant 0 : index
    %34 = vector.load %arg1[%c0_30, %c20, %c0_31] : memref<1x326x4xf32, #tpu.memory_space<vmem>>, vector<1x288x4xf32>
    %35 = vector.shape_cast %34 : vector<1x288x4xf32> to vector<288x4xf32>
    %c5 = arith.constant 5 : index
    %c0_32 = arith.constant 0 : index
    %c0_33 = arith.constant 0 : index
    %36 = vector.load %arg4[%c5, %c0_32, %c0_33] : memref<9x4x4xf32, #tpu.memory_space<vmem>>, vector<1x4x4xf32>
    %37 = vector.shape_cast %36 : vector<1x4x4xf32> to vector<4x4xf32>
    %cst_34 = arith.constant dense<0.000000e+00> : vector<288x4xf32>
    %38 = tpu.matmul %35, %37, %cst_34 {dimension_numbers = #tpu.dot_dimension_numbers<[1], [0], [0], [1], [0, 0, 1, 1], [], []>} : vector<288x4xf32>, vector<4x4xf32>, vector<288x4xf32> -> vector<288x4xf32>
    %39 = arith.addf %33, %38 : vector<288x4xf32>
    %c0_35 = arith.constant 0 : index
    %c36 = arith.constant 36 : index
    %c0_36 = arith.constant 0 : index
    %40 = vector.load %arg1[%c0_35, %c36, %c0_36] : memref<1x326x4xf32, #tpu.memory_space<vmem>>, vector<1x288x4xf32>
    %41 = vector.shape_cast %40 : vector<1x288x4xf32> to vector<288x4xf32>
    %c6 = arith.constant 6 : index
    %c0_37 = arith.constant 0 : index
    %c0_38 = arith.constant 0 : index
    %42 = vector.load %arg4[%c6, %c0_37, %c0_38] : memref<9x4x4xf32, #tpu.memory_space<vmem>>, vector<1x4x4xf32>
    %43 = vector.shape_cast %42 : vector<1x4x4xf32> to vector<4x4xf32>
    %cst_39 = arith.constant dense<0.000000e+00> : vector<288x4xf32>
    %44 = tpu.matmul %41, %43, %cst_39 {dimension_numbers = #tpu.dot_dimension_numbers<[1], [0], [0], [1], [0, 0, 1, 1], [], []>} : vector<288x4xf32>, vector<4x4xf32>, vector<288x4xf32> -> vector<288x4xf32>
    %45 = arith.addf %39, %44 : vector<288x4xf32>
    %c0_40 = arith.constant 0 : index
    %c37 = arith.constant 37 : index
    %c0_41 = arith.constant 0 : index
    %46 = vector.load %arg1[%c0_40, %c37, %c0_41] : memref<1x326x4xf32, #tpu.memory_space<vmem>>, vector<1x288x4xf32>
    %47 = vector.shape_cast %46 : vector<1x288x4xf32> to vector<288x4xf32>
    %c7 = arith.constant 7 : index
    %c0_42 = arith.constant 0 : index
    %c0_43 = arith.constant 0 : index
    %48 = vector.load %arg4[%c7, %c0_42, %c0_43] : memref<9x4x4xf32, #tpu.memory_space<vmem>>, vector<1x4x4xf32>
    %49 = vector.shape_cast %48 : vector<1x4x4xf32> to vector<4x4xf32>
    %cst_44 = arith.constant dense<0.000000e+00> : vector<288x4xf32>
    %50 = tpu.matmul %47, %49, %cst_44 {dimension_numbers = #tpu.dot_dimension_numbers<[1], [0], [0], [1], [0, 0, 1, 1], [], []>} : vector<288x4xf32>, vector<4x4xf32>, vector<288x4xf32> -> vector<288x4xf32>
    %51 = arith.addf %45, %50 : vector<288x4xf32>
    %c0_45 = arith.constant 0 : index
    %c38 = arith.constant 38 : index
    %c0_46 = arith.constant 0 : index
    %52 = vector.load %arg1[%c0_45, %c38, %c0_46] : memref<1x326x4xf32, #tpu.memory_space<vmem>>, vector<1x288x4xf32>
    %53 = vector.shape_cast %52 : vector<1x288x4xf32> to vector<288x4xf32>
    %c8 = arith.constant 8 : index
    %c0_47 = arith.constant 0 : index
    %c0_48 = arith.constant 0 : index
    %54 = vector.load %arg4[%c8, %c0_47, %c0_48] : memref<9x4x4xf32, #tpu.memory_space<vmem>>, vector<1x4x4xf32>
    %55 = vector.shape_cast %54 : vector<1x4x4xf32> to vector<4x4xf32>
    %cst_49 = arith.constant dense<0.000000e+00> : vector<288x4xf32>
    %56 = tpu.matmul %53, %55, %cst_49 {dimension_numbers = #tpu.dot_dimension_numbers<[1], [0], [0], [1], [0, 0, 1, 1], [], []>} : vector<288x4xf32>, vector<4x4xf32>, vector<288x4xf32> -> vector<288x4xf32>
    %57 = arith.addf %51, %56 : vector<288x4xf32>
    %c0_50 = arith.constant 0 : index
    %c0_51 = arith.constant 0 : index
    %58 = vector.load %arg5[%c0_50, %c0_51] : memref<1x4xf32, #tpu.memory_space<vmem>>, vector<1x4xf32>
    %59 = vector.broadcast %58 : vector<1x4xf32> to vector<288x4xf32>
    %60 = arith.addf %57, %59 : vector<288x4xf32>
    %61 = vector.broadcast %4 : vector<288x1xf32> to vector<288x4xf32>
    %62 = arith.mulf %60, %61 : vector<288x4xf32>
    %cst_52 = arith.constant dense<0.000000e+00> : vector<4xf32>
    %63 = vector.multi_reduction <add>, %62, %cst_52 [0] : vector<288x4xf32> to vector<4xf32>
    %64 = vector.shape_cast %63 : vector<4xf32> to vector<1x4xf32>
    %65 = arith.mulf %62, %60 : vector<288x4xf32>
    %cst_53 = arith.constant dense<0.000000e+00> : vector<4xf32>
    %66 = vector.multi_reduction <add>, %65, %cst_53 [0] : vector<288x4xf32> to vector<4xf32>
    %67 = vector.shape_cast %66 : vector<4xf32> to vector<1x4xf32>
    %cst_54 = arith.constant 3.906250e-03 : f32
    %68 = vector.broadcast %cst_54 : f32 to vector<1x4xf32>
    %69 = arith.mulf %64, %68 : vector<1x4xf32>
    %cst_55 = arith.constant 3.906250e-03 : f32
    %70 = vector.broadcast %cst_55 : f32 to vector<1x4xf32>
    %71 = arith.mulf %67, %70 : vector<1x4xf32>
    %72 = arith.mulf %69, %69 : vector<1x4xf32>
    %73 = arith.subf %71, %72 : vector<1x4xf32>
    %74 = vector.broadcast %69 : vector<1x4xf32> to vector<288x4xf32>
    %75 = arith.subf %60, %74 : vector<288x4xf32>
    %cst_56 = arith.constant 9.99999974E-6 : f32
    %76 = vector.broadcast %cst_56 : f32 to vector<1x4xf32>
    %77 = arith.addf %73, %76 : vector<1x4xf32>
    %78 = math.rsqrt %77 : vector<1x4xf32>
    %79 = vector.broadcast %78 : vector<1x4xf32> to vector<288x4xf32>
    %80 = arith.mulf %75, %79 : vector<288x4xf32>
    %cst_57 = arith.constant 0.000000e+00 : f32
    %81 = vector.broadcast %cst_57 : f32 to vector<288x4xf32>
    %82 = arith.maximumf %80, %81 : vector<288x4xf32>
    %cst_58 = arith.constant 0.000000e+00 : f32
    %83 = vector.broadcast %cst_58 : f32 to vector<408x4xf32>
    %c0_59 = arith.constant 0 : index
    %c0_60 = arith.constant 0 : index
    %84 = vector.load %arg9[%c0_59, %c0_60] : memref<408x4xf32, #tpu.memory_space<vmem>>, vector<408x4xf32>
    tpu.vector_store %arg9[%c0_59, %c0_60], %83 {strides = array<i32>} : memref<408x4xf32, #tpu.memory_space<vmem>>, vector<408x4xf32>,
    %c56 = arith.constant 56 : index
    %c0_61 = arith.constant 0 : index
    %85 = vector.load %arg9[%c56, %c0_61] : memref<408x4xf32, #tpu.memory_space<vmem>>, vector<288x4xf32>
    tpu.vector_store %arg9[%c56, %c0_61], %82 {strides = array<i32>} : memref<408x4xf32, #tpu.memory_space<vmem>>, vector<288x4xf32>,
    %c57 = arith.constant 57 : index
    %c0_62 = arith.constant 0 : index
    %86 = vector.load %arg9[%c57, %c0_62] : memref<408x4xf32, #tpu.memory_space<vmem>>, vector<288x4xf32>
    %c55 = arith.constant 55 : index
    %c0_63 = arith.constant 0 : index
    %87 = vector.load %arg9[%c55, %c0_63] : memref<408x4xf32, #tpu.memory_space<vmem>>, vector<288x4xf32>
    %c53 = arith.constant 53 : index
    %c0_64 = arith.constant 0 : index
    %88 = vector.load %arg9[%c53, %c0_64] : memref<408x4xf32, #tpu.memory_space<vmem>>, vector<288x4xf32>
    %cst_65 = arith.constant 0.000000e+00 : f32
    %89 = vector.broadcast %cst_65 : f32 to vector<288x1xf32>
    %90 = arith.cmpf oeq, %0, %89 : vector<288x1xf32>
    %cst_66 = arith.constant 1.700000e+01 : f32
    %91 = vector.broadcast %cst_66 : f32 to vector<288x1xf32>
    %92 = arith.cmpf oeq, %0, %91 : vector<288x1xf32>
    %93 = vector.shape_cast %92 : vector<288x1xi1> to vector<288x1xi1>
    %94 = vector.broadcast %93 : vector<288x1xi1> to vector<288x4xi1>
    %95 = arith.select %94, %88, %87 : vector<288x4xi1>, vector<288x4xf32>
    %96 = vector.shape_cast %90 : vector<288x1xi1> to vector<288x1xi1>
    %97 = vector.broadcast %96 : vector<288x1xi1> to vector<288x4xi1>
    %98 = arith.select %97, %86, %95 : vector<288x4xi1>, vector<288x4xf32>
    %c56_67 = arith.constant 56 : index
    %c0_68 = arith.constant 0 : index
    %99 = vector.load %arg9[%c56_67, %c0_68] : memref<408x4xf32, #tpu.memory_space<vmem>>, vector<288x4xf32>
    tpu.vector_store %arg9[%c56_67, %c0_68], %98 {strides = array<i32>} : memref<408x4xf32, #tpu.memory_space<vmem>>, vector<288x4xf32>,
    %c74 = arith.constant 74 : index
    %c0_69 = arith.constant 0 : index
    %100 = vector.load %arg9[%c74, %c0_69] : memref<408x4xf32, #tpu.memory_space<vmem>>, vector<326x4xf32>
    %c38_70 = arith.constant 38 : index
    %c0_71 = arith.constant 0 : index
    %101 = vector.load %arg9[%c38_70, %c0_71] : memref<408x4xf32, #tpu.memory_space<vmem>>, vector<326x4xf32>
    %c2_72 = arith.constant 2 : index
    %c0_73 = arith.constant 0 : index
    %102 = vector.load %arg9[%c2_72, %c0_73] : memref<408x4xf32, #tpu.memory_space<vmem>>, vector<326x4xf32>
    %c0_74 = arith.constant 0 : index
    %c0_75 = arith.constant 0 : index
    %103 = vector.load %arg3[%c0_74, %c0_75] : memref<326x1xf32, #tpu.memory_space<vmem>>, vector<326x1xf32>
    %cst_76 = arith.constant 1.800000e+01 : f32
    %104 = vector.broadcast %cst_76 : f32 to vector<326x1xf32>
    %105 = arith.cmpf olt, %103, %104 : vector<326x1xf32>
    %cst_77 = arith.constant 3.060000e+02 : f32
    %106 = vector.broadcast %cst_77 : f32 to vector<326x1xf32>
    %107 = arith.cmpf olt, %103, %106 : vector<326x1xf32>
    %108 = vector.shape_cast %107 : vector<326x1xi1> to vector<326x1xi1>
    %109 = vector.broadcast %108 : vector<326x1xi1> to vector<326x4xi1>
    %110 = arith.select %109, %101, %102 : vector<326x4xi1>, vector<326x4xf32>
    %111 = vector.shape_cast %105 : vector<326x1xi1> to vector<326x1xi1>
    %112 = vector.broadcast %111 : vector<326x1xi1> to vector<326x4xi1>
    %113 = arith.select %112, %100, %110 : vector<326x4xi1>, vector<326x4xf32>
    %c0_78 = arith.constant 0 : index
    %c0_79 = arith.constant 0 : index
    %114 = vector.load %arg10[%c0_78, %c0_79] : memref<326x4xf32, #tpu.memory_space<vmem>>, vector<326x4xf32>
    tpu.vector_store %arg10[%c0_78, %c0_79], %113 {strides = array<i32>} : memref<326x4xf32, #tpu.memory_space<vmem>>, vector<326x4xf32>,
    %c0_80 = arith.constant 0 : index
    %c0_81 = arith.constant 0 : index
    %115 = vector.load %arg10[%c0_80, %c0_81] : memref<326x4xf32, #tpu.memory_space<vmem>>, vector<288x4xf32>
    %c0_82 = arith.constant 0 : index
    %c0_83 = arith.constant 0 : index
    %c0_84 = arith.constant 0 : index
    %116 = vector.load %arg6[%c0_82, %c0_83, %c0_84] : memref<9x4x4xf32, #tpu.memory_space<vmem>>, vector<1x4x4xf32>
    %117 = vector.shape_cast %116 : vector<1x4x4xf32> to vector<4x4xf32>
    %cst_85 = arith.constant dense<0.000000e+00> : vector<288x4xf32>
    %118 = tpu.matmul %115, %117, %cst_85 {dimension_numbers = #tpu.dot_dimension_numbers<[1], [0], [0], [1], [0, 0, 1, 1], [], []>} : vector<288x4xf32>, vector<4x4xf32>, vector<288x4xf32> -> vector<288x4xf32>
    %c1_86 = arith.constant 1 : index
    %c0_87 = arith.constant 0 : index
    %119 = vector.load %arg10[%c1_86, %c0_87] : memref<326x4xf32, #tpu.memory_space<vmem>>, vector<288x4xf32>
    %c1_88 = arith.constant 1 : index
    %c0_89 = arith.constant 0 : index
    %c0_90 = arith.constant 0 : index
    %120 = vector.load %arg6[%c1_88, %c0_89, %c0_90] : memref<9x4x4xf32, #tpu.memory_space<vmem>>, vector<1x4x4xf32>
    %121 = vector.shape_cast %120 : vector<1x4x4xf32> to vector<4x4xf32>
    %cst_91 = arith.constant dense<0.000000e+00> : vector<288x4xf32>
    %122 = tpu.matmul %119, %121, %cst_91 {dimension_numbers = #tpu.dot_dimension_numbers<[1], [0], [0], [1], [0, 0, 1, 1], [], []>} : vector<288x4xf32>, vector<4x4xf32>, vector<288x4xf32> -> vector<288x4xf32>
    %123 = arith.addf %118, %122 : vector<288x4xf32>
    %c2_92 = arith.constant 2 : index
    %c0_93 = arith.constant 0 : index
    %124 = vector.load %arg10[%c2_92, %c0_93] : memref<326x4xf32, #tpu.memory_space<vmem>>, vector<288x4xf32>
    %c2_94 = arith.constant 2 : index
    %c0_95 = arith.constant 0 : index
    %c0_96 = arith.constant 0 : index
    %125 = vector.load %arg6[%c2_94, %c0_95, %c0_96] : memref<9x4x4xf32, #tpu.memory_space<vmem>>, vector<1x4x4xf32>
    %126 = vector.shape_cast %125 : vector<1x4x4xf32> to vector<4x4xf32>
    %cst_97 = arith.constant dense<0.000000e+00> : vector<288x4xf32>
    %127 = tpu.matmul %124, %126, %cst_97 {dimension_numbers = #tpu.dot_dimension_numbers<[1], [0], [0], [1], [0, 0, 1, 1], [], []>} : vector<288x4xf32>, vector<4x4xf32>, vector<288x4xf32> -> vector<288x4xf32>
    %128 = arith.addf %123, %127 : vector<288x4xf32>
    %c18_98 = arith.constant 18 : index
    %c0_99 = arith.constant 0 : index
    %129 = vector.load %arg10[%c18_98, %c0_99] : memref<326x4xf32, #tpu.memory_space<vmem>>, vector<288x4xf32>
    %c3_100 = arith.constant 3 : index
    %c0_101 = arith.constant 0 : index
    %c0_102 = arith.constant 0 : index
    %130 = vector.load %arg6[%c3_100, %c0_101, %c0_102] : memref<9x4x4xf32, #tpu.memory_space<vmem>>, vector<1x4x4xf32>
    %131 = vector.shape_cast %130 : vector<1x4x4xf32> to vector<4x4xf32>
    %cst_103 = arith.constant dense<0.000000e+00> : vector<288x4xf32>
    %132 = tpu.matmul %129, %131, %cst_103 {dimension_numbers = #tpu.dot_dimension_numbers<[1], [0], [0], [1], [0, 0, 1, 1], [], []>} : vector<288x4xf32>, vector<4x4xf32>, vector<288x4xf32> -> vector<288x4xf32>
    %133 = arith.addf %128, %132 : vector<288x4xf32>
    %c19_104 = arith.constant 19 : index
    %c0_105 = arith.constant 0 : index
    %134 = vector.load %arg10[%c19_104, %c0_105] : memref<326x4xf32, #tpu.memory_space<vmem>>, vector<288x4xf32>
    %c4_106 = arith.constant 4 : index
    %c0_107 = arith.constant 0 : index
    %c0_108 = arith.constant 0 : index
    %135 = vector.load %arg6[%c4_106, %c0_107, %c0_108] : memref<9x4x4xf32, #tpu.memory_space<vmem>>, vector<1x4x4xf32>
    %136 = vector.shape_cast %135 : vector<1x4x4xf32> to vector<4x4xf32>
    %cst_109 = arith.constant dense<0.000000e+00> : vector<288x4xf32>
    %137 = tpu.matmul %134, %136, %cst_109 {dimension_numbers = #tpu.dot_dimension_numbers<[1], [0], [0], [1], [0, 0, 1, 1], [], []>} : vector<288x4xf32>, vector<4x4xf32>, vector<288x4xf32> -> vector<288x4xf32>
    %138 = arith.addf %133, %137 : vector<288x4xf32>
    %c20_110 = arith.constant 20 : index
    %c0_111 = arith.constant 0 : index
    %139 = vector.load %arg10[%c20_110, %c0_111] : memref<326x4xf32, #tpu.memory_space<vmem>>, vector<288x4xf32>
    %c5_112 = arith.constant 5 : index
    %c0_113 = arith.constant 0 : index
    %c0_114 = arith.constant 0 : index
    %140 = vector.load %arg6[%c5_112, %c0_113, %c0_114] : memref<9x4x4xf32, #tpu.memory_space<vmem>>, vector<1x4x4xf32>
    %141 = vector.shape_cast %140 : vector<1x4x4xf32> to vector<4x4xf32>
    %cst_115 = arith.constant dense<0.000000e+00> : vector<288x4xf32>
    %142 = tpu.matmul %139, %141, %cst_115 {dimension_numbers = #tpu.dot_dimension_numbers<[1], [0], [0], [1], [0, 0, 1, 1], [], []>} : vector<288x4xf32>, vector<4x4xf32>, vector<288x4xf32> -> vector<288x4xf32>
    %143 = arith.addf %138, %142 : vector<288x4xf32>
    %c36_116 = arith.constant 36 : index
    %c0_117 = arith.constant 0 : index
    %144 = vector.load %arg10[%c36_116, %c0_117] : memref<326x4xf32, #tpu.memory_space<vmem>>, vector<288x4xf32>
    %c6_118 = arith.constant 6 : index
    %c0_119 = arith.constant 0 : index
    %c0_120 = arith.constant 0 : index
    %145 = vector.load %arg6[%c6_118, %c0_119, %c0_120] : memref<9x4x4xf32, #tpu.memory_space<vmem>>, vector<1x4x4xf32>
    %146 = vector.shape_cast %145 : vector<1x4x4xf32> to vector<4x4xf32>
    %cst_121 = arith.constant dense<0.000000e+00> : vector<288x4xf32>
    %147 = tpu.matmul %144, %146, %cst_121 {dimension_numbers = #tpu.dot_dimension_numbers<[1], [0], [0], [1], [0, 0, 1, 1], [], []>} : vector<288x4xf32>, vector<4x4xf32>, vector<288x4xf32> -> vector<288x4xf32>
    %148 = arith.addf %143, %147 : vector<288x4xf32>
    %c37_122 = arith.constant 37 : index
    %c0_123 = arith.constant 0 : index
    %149 = vector.load %arg10[%c37_122, %c0_123] : memref<326x4xf32, #tpu.memory_space<vmem>>, vector<288x4xf32>
    %c7_124 = arith.constant 7 : index
    %c0_125 = arith.constant 0 : index
    %c0_126 = arith.constant 0 : index
    %150 = vector.load %arg6[%c7_124, %c0_125, %c0_126] : memref<9x4x4xf32, #tpu.memory_space<vmem>>, vector<1x4x4xf32>
    %151 = vector.shape_cast %150 : vector<1x4x4xf32> to vector<4x4xf32>
    %cst_127 = arith.constant dense<0.000000e+00> : vector<288x4xf32>
    %152 = tpu.matmul %149, %151, %cst_127 {dimension_numbers = #tpu.dot_dimension_numbers<[1], [0], [0], [1], [0, 0, 1, 1], [], []>} : vector<288x4xf32>, vector<4x4xf32>, vector<288x4xf32> -> vector<288x4xf32>
    %153 = arith.addf %148, %152 : vector<288x4xf32>
    %c38_128 = arith.constant 38 : index
    %c0_129 = arith.constant 0 : index
    %154 = vector.load %arg10[%c38_128, %c0_129] : memref<326x4xf32, #tpu.memory_space<vmem>>, vector<288x4xf32>
    %c8_130 = arith.constant 8 : index
    %c0_131 = arith.constant 0 : index
    %c0_132 = arith.constant 0 : index
    %155 = vector.load %arg6[%c8_130, %c0_131, %c0_132] : memref<9x4x4xf32, #tpu.memory_space<vmem>>, vector<1x4x4xf32>
    %156 = vector.shape_cast %155 : vector<1x4x4xf32> to vector<4x4xf32>
    %cst_133 = arith.constant dense<0.000000e+00> : vector<288x4xf32>
    %157 = tpu.matmul %154, %156, %cst_133 {dimension_numbers = #tpu.dot_dimension_numbers<[1], [0], [0], [1], [0, 0, 1, 1], [], []>} : vector<288x4xf32>, vector<4x4xf32>, vector<288x4xf32> -> vector<288x4xf32>
    %158 = arith.addf %153, %157 : vector<288x4xf32>
    %c0_134 = arith.constant 0 : index
    %c0_135 = arith.constant 0 : index
    %159 = vector.load %arg7[%c0_134, %c0_135] : memref<1x4xf32, #tpu.memory_space<vmem>>, vector<1x4xf32>
    %160 = vector.broadcast %159 : vector<1x4xf32> to vector<288x4xf32>
    %161 = arith.addf %158, %160 : vector<288x4xf32>
    %162 = vector.broadcast %4 : vector<288x1xf32> to vector<288x4xf32>
    %163 = arith.mulf %161, %162 : vector<288x4xf32>
    %cst_136 = arith.constant dense<0.000000e+00> : vector<4xf32>
    %164 = vector.multi_reduction <add>, %163, %cst_136 [0] : vector<288x4xf32> to vector<4xf32>
    %165 = vector.shape_cast %164 : vector<4xf32> to vector<1x4xf32>
    %166 = arith.mulf %163, %161 : vector<288x4xf32>
    %cst_137 = arith.constant dense<0.000000e+00> : vector<4xf32>
    %167 = vector.multi_reduction <add>, %166, %cst_137 [0] : vector<288x4xf32> to vector<4xf32>
    %168 = vector.shape_cast %167 : vector<4xf32> to vector<1x4xf32>
    %cst_138 = arith.constant 3.906250e-03 : f32
    %169 = vector.broadcast %cst_138 : f32 to vector<1x4xf32>
    %170 = arith.mulf %165, %169 : vector<1x4xf32>
    %cst_139 = arith.constant 3.906250e-03 : f32
    %171 = vector.broadcast %cst_139 : f32 to vector<1x4xf32>
    %172 = arith.mulf %168, %171 : vector<1x4xf32>
    %173 = arith.mulf %170, %170 : vector<1x4xf32>
    %174 = arith.subf %172, %173 : vector<1x4xf32>
    %175 = vector.broadcast %170 : vector<1x4xf32> to vector<288x4xf32>
    %176 = arith.subf %161, %175 : vector<288x4xf32>
    %cst_140 = arith.constant 9.99999974E-6 : f32
    %177 = vector.broadcast %cst_140 : f32 to vector<1x4xf32>
    %178 = arith.addf %174, %177 : vector<1x4xf32>
    %179 = math.rsqrt %178 : vector<1x4xf32>
    %180 = vector.broadcast %179 : vector<1x4xf32> to vector<288x4xf32>
    %181 = arith.mulf %176, %180 : vector<288x4xf32>
    %c0_141 = arith.constant 0 : index
    %c19_142 = arith.constant 19 : index
    %c0_143 = arith.constant 0 : index
    %182 = vector.load %arg1[%c0_141, %c19_142, %c0_143] : memref<1x326x4xf32, #tpu.memory_space<vmem>>, vector<1x288x4xf32>
    %183 = vector.shape_cast %182 : vector<1x288x4xf32> to vector<288x4xf32>
    %184 = arith.addf %183, %181 : vector<288x4xf32>
    %c0_144 = arith.constant 0 : index
    %c0_145 = arith.constant 0 : index
    %c0_146 = arith.constant 0 : index
    %185 = vector.load %arg8[%c0_144, %c0_145, %c0_146] : memref<1x288x4xf32, #tpu.memory_space<vmem>>, vector<1x288x4xf32>
    %186 = vector.shape_cast %185 : vector<1x288x4xf32> to vector<288x4xf32>
    %187 = vector.shape_cast %184 : vector<288x4xf32> to vector<1x288x4xf32>
    tpu.vector_store %arg8[%c0_144, %c0_145, %c0_146], %187 {strides = array<i32>} : memref<1x288x4xf32, #tpu.memory_space<vmem>>, vector<1x288x4xf32>,
    return
  }
  func.func @transform_0(%arg0: i32) -> (i32, i32, i32) {
    %c0_i32 = arith.constant 0 : i32
    %c0_i32_0 = arith.constant 0 : i32
    %c0_i32_1 = arith.constant 0 : i32
    return %arg0, %c0_i32, %c0_i32_0 : i32, i32, i32
  }
  func.func @transform_1(%arg0: i32) -> (i32, i32) {
    %c0_i32 = arith.constant 0 : i32
    %c0_i32_0 = arith.constant 0 : i32
    %c0_i32_1 = arith.constant 0 : i32
    return %c0_i32, %c0_i32_0 : i32, i32
  }
  func.func @transform_2(%arg0: i32) -> (i32, i32) {
    %c0_i32 = arith.constant 0 : i32
    %c0_i32_0 = arith.constant 0 : i32
    %c0_i32_1 = arith.constant 0 : i32
    return %c0_i32, %c0_i32_0 : i32, i32
  }
  func.func @transform_3(%arg0: i32) -> (i32, i32, i32) {
    %c0_i32 = arith.constant 0 : i32
    %c0_i32_0 = arith.constant 0 : i32
    %c0_i32_1 = arith.constant 0 : i32
    %c0_i32_2 = arith.constant 0 : i32
    return %c0_i32, %c0_i32_0, %c0_i32_1 : i32, i32, i32
  }
  func.func @transform_4(%arg0: i32) -> (i32, i32) {
    %c0_i32 = arith.constant 0 : i32
    %c0_i32_0 = arith.constant 0 : i32
    %c0_i32_1 = arith.constant 0 : i32
    return %c0_i32, %c0_i32_0 : i32, i32
  }
  func.func @transform_5(%arg0: i32) -> (i32, i32, i32) {
    %c0_i32 = arith.constant 0 : i32
    %c0_i32_0 = arith.constant 0 : i32
    %c0_i32_1 = arith.constant 0 : i32
    %c0_i32_2 = arith.constant 0 : i32
    return %c0_i32, %c0_i32_0, %c0_i32_1 : i32, i32, i32
  }
  func.func @transform_6(%arg0: i32) -> (i32, i32) {
    %c0_i32 = arith.constant 0 : i32
    %c0_i32_0 = arith.constant 0 : i32
    %c0_i32_1 = arith.constant 0 : i32
    return %c0_i32, %c0_i32_0 : i32, i32
  }
  func.func @transform_7(%arg0: i32) -> (i32, i32, i32) {
    %c0_i32 = arith.constant 0 : i32
    %c0_i32_0 = arith.constant 0 : i32
    %c0_i32_1 = arith.constant 0 : i32
    return %arg0, %c0_i32, %c0_i32_0 : i32, i32, i32
  }
}

</mosaic_0001>

<llo_original>
// kernel: resnet_block.1
$region0: #{resnet_block.1}
  #allocation0 [shape = 'u32[]', space=smem, size = 0x4, offset = 0x4, fixed_abs, tag = 'smem constant byte address 0x4 - core index']
  #allocation1 [shape = 'u32[144,128]{1,0:T(1,128)}', space=vmem, size = 0x12000, scoped, tag = 'internal scratch']
  #allocation2 [shape = 'f32[408,4]{1,0:T(8,128)}', space=vmem, size = 0x33000, scoped, tag = 'scratch operand']
  #allocation3 [shape = 'f32[326,4]{1,0:T(8,128)}', space=vmem, size = 0x29000, scoped, tag = 'scratch operand']
  %s0 = inlined_call_operand.vmem [shape: f32[2,326,4], index: 0, kind: input, shape index: {}]
  %s1 = inlined_call_operand.vmem [shape: f32[288,1], index: 1, kind: input, shape index: {}]
  %s2 = inlined_call_operand.vmem [shape: f32[326,1], index: 2, kind: input, shape index: {}]
  %s3 = inlined_call_operand.vmem [shape: f32[9,4,4], index: 3, kind: input, shape index: {}]
  %s4 = inlined_call_operand.vmem [shape: f32[1,4], index: 4, kind: input, shape index: {}]
  %s5 = inlined_call_operand.vmem [shape: f32[9,4,4], index: 5, kind: input, shape index: {}]
  %s6 = inlined_call_operand.vmem [shape: f32[1,4], index: 6, kind: input, shape index: {}]
  %s7 = inlined_call_operand.vmem [shape: f32[2,288,4], index: 7, kind: output, shape index: {}]
  %s8 = sld [smem:[#allocation0]]
  $region61: #{resnet_block.1} parent=0
    _
  %s10 = ssub.s32 1, %s8
  %s11 = scalar_select 0, %s10, %s8
  loop: start=0, step=1, limit=4
  $region2: #{resnet_block.1} parent=0 // loop_pre_header
    _
  $region3: #{resnet_block.1} parent=0 // loop_header
    %s13 = sphi 0, %s17
    %p14 = scmp.ge.s32.totalorder %s13, 4
    %s23 = sphi 0, %s25
    %s26 = sphi 0, %s23
    %s27 = sphi 0, %s26
    %s43 = sphi 0, %s27
    %s47 = sphi 0, %s47
    %s49 = sphi 0, %s47
    %s50 = sphi 0, %s49
    %s64 = sphi 0, %s50
    %s68 = sphi 0, %s68
    %s70 = sphi 0, %s68
    %s71 = sphi 0, %s70
    %s85 = sphi 0, %s71
    %s89 = sphi 0, %s89
    %s91 = sphi 0, %s89
    %s92 = sphi 0, %s91
    %s106 = sphi 0, %s92
    %s110 = sphi 0, %s110
    %s112 = sphi 0, %s110
    %s113 = sphi 0, %s112
    %s127 = sphi 0, %s113
    %s131 = sphi 0, %s131
    %s133 = sphi 0, %s131
    %s134 = sphi 0, %s133
    %s148 = sphi 0, %s134
    %s152 = sphi 0, %s152
    %s154 = sphi 0, %s152
    %s155 = sphi 0, %s154
    %s169 = sphi 0, %s155
    %s175 = sphi 0, %s177
    %s178 = sphi 0, %s175
    %s179 = sphi 0, %s178
    %s195 = sphi 0, %s179
  $region4: #{resnet_block.1} parent=0 // loop_header_branch
    %16 = sbr.rel (%p14) target = $region8
  $region5: #{resnet_block.1} parent=0 // loop_body
    %s18 = ssub.s32 %s13, 1
    %s19 = ssub.s32 %s13, 2
    %s20 = sadd.s32 %s13, 1
    %s21 = ssub.s32 %s13, %s20
    %p22 = scmp.eq.s32.totalorder %s21, 0
    %s24 = sadd.s32 %s23, 1
    %s25 = scalar_select %p22, %s23, %s24
    %p28 = pneg %p22
    %p29 = scmp.eq.s32.totalorder %s13, 1
    %p30 = por %p28, %p29
    %p31 = scmp.ne.s32.totalorder %s23, %s26
    %p32 = scmp.eq.s32.totalorder %s13, 0
    %p33 = por %p31, %p32
    %p34 = scmp.ne.s32.totalorder %s23, %s26
    %p35 = scmp.eq.s32.totalorder %s18, 1
    %p36 = por %p34, %p35
    %p37 = scmp.ne.s32.totalorder %s26, %s27
    %p38 = scmp.eq.s32.totalorder %s18, 0
    %p39 = por %p37, %p38
    %p40 = scmp.ne.s32.totalorder %s26, %s27
    %p41 = scmp.eq.s32.totalorder %s19, 1
    %p42 = por %p40, %p41
    %p44 = scmp.ne.s32.totalorder %s27, %s43
    %p45 = scmp.eq.s32.totalorder %s19, 0
    %p46 = por %p44, %p45
    %s48 = sadd.s32 %s47, 1
    %p51 = scmp.eq.s32.totalorder %s13, 1
    %p52 = scmp.ne.s32.totalorder %s47, %s49
    %p53 = scmp.eq.s32.totalorder %s13, 0
    %p54 = por %p52, %p53
    %p55 = scmp.ne.s32.totalorder %s47, %s49
    %p56 = scmp.eq.s32.totalorder %s18, 1
    %p57 = por %p55, %p56
    %p58 = scmp.ne.s32.totalorder %s49, %s50
    %p59 = scmp.eq.s32.totalorder %s18, 0
    %p60 = por %p58, %p59
    %p61 = scmp.ne.s32.totalorder %s49, %s50
    %p62 = scmp.eq.s32.totalorder %s19, 1
    %p63 = por %p61, %p62
    %p65 = scmp.ne.s32.totalorder %s50, %s64
    %p66 = scmp.eq.s32.totalorder %s19, 0
    %p67 = por %p65, %p66
    %s69 = sadd.s32 %s68, 1
    %p72 = scmp.eq.s32.totalorder %s13, 1
    %p73 = scmp.ne.s32.totalorder %s68, %s70
    %p74 = scmp.eq.s32.totalorder %s13, 0
    %p75 = por %p73, %p74
    %p76 = scmp.ne.s32.totalorder %s68, %s70
    %p77 = scmp.eq.s32.totalorder %s18, 1
    %p78 = por %p76, %p77
    %p79 = scmp.ne.s32.totalorder %s70, %s71
    %p80 = scmp.eq.s32.totalorder %s18, 0
    %p81 = por %p79, %p80
    %p82 = scmp.ne.s32.totalorder %s70, %s71
    %p83 = scmp.eq.s32.totalorder %s19, 1
    %p84 = por %p82, %p83
    %p86 = scmp.ne.s32.totalorder %s71, %s85
    %p87 = scmp.eq.s32.totalorder %s19, 0
    %p88 = por %p86, %p87
    %s90 = sadd.s32 %s89, 1
    %p93 = scmp.eq.s32.totalorder %s13, 1
    %p94 = scmp.ne.s32.totalorder %s89, %s91
    %p95 = scmp.eq.s32.totalorder %s13, 0
    %p96 = por %p94, %p95
    %p97 = scmp.ne.s32.totalorder %s89, %s91
    %p98 = scmp.eq.s32.totalorder %s18, 1
    %p99 = por %p97, %p98
    %p100 = scmp.ne.s32.totalorder %s91, %s92
    %p101 = scmp.eq.s32.totalorder %s18, 0
    %p102 = por %p100, %p101
    %p103 = scmp.ne.s32.totalorder %s91, %s92
    %p104 = scmp.eq.s32.totalorder %s19, 1
    %p105 = por %p103, %p104
    %p107 = scmp.ne.s32.totalorder %s92, %s106
    %p108 = scmp.eq.s32.totalorder %s19, 0
    %p109 = por %p107, %p108
    %s111 = sadd.s32 %s110, 1
    %p114 = scmp.eq.s32.totalorder %s13, 1
    %p115 = scmp.ne.s32.totalorder %s110, %s112
    %p116 = scmp.eq.s32.totalorder %s13, 0
    %p117 = por %p115, %p116
    %p118 = scmp.ne.s32.totalorder %s110, %s112
    %p119 = scmp.eq.s32.totalorder %s18, 1
    %p120 = por %p118, %p119
    %p121 = scmp.ne.s32.totalorder %s112, %s113
    %p122 = scmp.eq.s32.totalorder %s18, 0
    %p123 = por %p121, %p122
    %p124 = scmp.ne.s32.totalorder %s112, %s113
    %p125 = scmp.eq.s32.totalorder %s19, 1
    %p126 = por %p124, %p125
    %p128 = scmp.ne.s32.totalorder %s113, %s127
    %p129 = scmp.eq.s32.totalorder %s19, 0
    %p130 = por %p128, %p129
    %s132 = sadd.s32 %s131, 1
    %p135 = scmp.eq.s32.totalorder %s13, 1
    %p136 = scmp.ne.s32.totalorder %s131, %s133
    %p137 = scmp.eq.s32.totalorder %s13, 0
    %p138 = por %p136, %p137
    %p139 = scmp.ne.s32.totalorder %s131, %s133
    %p140 = scmp.eq.s32.totalorder %s18, 1
    %p141 = por %p139, %p140
    %p142 = scmp.ne.s32.totalorder %s133, %s134
    %p143 = scmp.eq.s32.totalorder %s18, 0
    %p144 = por %p142, %p143
    %p145 = scmp.ne.s32.totalorder %s133, %s134
    %p146 = scmp.eq.s32.totalorder %s19, 1
    %p147 = por %p145, %p146
    %p149 = scmp.ne.s32.totalorder %s134, %s148
    %p150 = scmp.eq.s32.totalorder %s19, 0
    %p151 = por %p149, %p150
    %s153 = sadd.s32 %s152, 1
    %p156 = scmp.eq.s32.totalorder %s13, 1
    %p157 = scmp.ne.s32.totalorder %s152, %s154
    %p158 = scmp.eq.s32.totalorder %s13, 0
    %p159 = por %p157, %p158
    %p160 = scmp.ne.s32.totalorder %s152, %s154
    %p161 = scmp.eq.s32.totalorder %s18, 1
    %p162 = por %p160, %p161
    %p163 = scmp.ne.s32.totalorder %s154, %s155
    %p164 = scmp.eq.s32.totalorder %s18, 0
    %p165 = por %p163, %p164
    %p166 = scmp.ne.s32.totalorder %s154, %s155
    %p167 = scmp.eq.s32.totalorder %s19, 1
    %p168 = por %p166, %p167
    %p170 = scmp.ne.s32.totalorder %s155, %s169
    %p171 = scmp.eq.s32.totalorder %s19, 0
    %p172 = por %p170, %p171
    %s173 = ssub.s32 %s13, %s20
    %p174 = scmp.eq.s32.totalorder %s173, 0
    %s176 = sadd.s32 %s175, 1
    %s177 = scalar_select %p174, %s175, %s176
    %p180 = pneg %p174
    %p181 = scmp.eq.s32.totalorder %s13, 1
    %p182 = por %p180, %p181
    %p183 = scmp.ne.s32.totalorder %s175, %s178
    %p184 = scmp.eq.s32.totalorder %s13, 0
    %p185 = por %p183, %p184
    %p186 = scmp.ne.s32.totalorder %s175, %s178
    %p187 = scmp.eq.s32.totalorder %s18, 1
    %p188 = por %p186, %p187
    %p189 = scmp.ne.s32.totalorder %s178, %s179
    %p190 = scmp.eq.s32.totalorder %s18, 0
    %p191 = por %p189, %p190
    %p192 = scmp.ne.s32.totalorder %s178, %s179
    %p193 = scmp.eq.s32.totalorder %s19, 1
    %p194 = por %p192, %p193
    %p196 = scmp.ne.s32.totalorder %s179, %s195
    %p197 = scmp.eq.s32.totalorder %s19, 0
    %p198 = por %p196, %p197
    %p199 = scmp.le.s32.totalorder 1, %s13
    %p200 = scmp.lt.s32.totalorder %s13, 3
    %p201 = pnand %p199, %p200
    %p202 = pneg %p201
    // Predicated region
    $region9: #{resnet_block.1} parent=5 // pred_check
      _
    $region10: #{resnet_block.1} parent=5 // pred_check_branch
      %204 = sbr.rel (%p201) target = $region12
    $region11: #{resnet_block.1} parent=5 // pred_region
      %s205 = ssub.s32 %s13, 1
      // Predicated region
      $region13: #{resnet_block.1} parent=11 // pred_check
        %p206 = pneg %p60
      $region14: #{resnet_block.1} parent=11 // pred_check_branch
        %208 = sbr.rel (%p206) target = $region16
      $region15: #{resnet_block.1} parent=11 // pred_region
        _
      $region16: #{resnet_block.1} parent=11 // pred_fallthru
        _
      // Predicated region
      $region17: #{resnet_block.1} parent=11 // pred_check
        %p209 = pneg %p81
      $region18: #{resnet_block.1} parent=11 // pred_check_branch
        %211 = sbr.rel (%p209) target = $region20
      $region19: #{resnet_block.1} parent=11 // pred_region
        _
      $region20: #{resnet_block.1} parent=11 // pred_fallthru
        _
      // Predicated region
      $region21: #{resnet_block.1} parent=11 // pred_check
        %p212 = pneg %p102
      $region22: #{resnet_block.1} parent=11 // pred_check_branch
        %214 = sbr.rel (%p212) target = $region24
      $region23: #{resnet_block.1} parent=11 // pred_region
        _
      $region24: #{resnet_block.1} parent=11 // pred_fallthru
        _
      // Predicated region
      $region25: #{resnet_block.1} parent=11 // pred_check
        %p215 = pneg %p123
      $region26: #{resnet_block.1} parent=11 // pred_check_branch
        %217 = sbr.rel (%p215) target = $region28
      $region27: #{resnet_block.1} parent=11 // pred_region
        _
      $region28: #{resnet_block.1} parent=11 // pred_fallthru
        _
      // Predicated region
      $region29: #{resnet_block.1} parent=11 // pred_check
        %p218 = pneg %p144
      $region30: #{resnet_block.1} parent=11 // pred_check_branch
        %220 = sbr.rel (%p218) target = $region32
      $region31: #{resnet_block.1} parent=11 // pred_region
        _
      $region32: #{resnet_block.1} parent=11 // pred_fallthru
        _
      // Predicated region
      $region33: #{resnet_block.1} parent=11 // pred_check
        %p221 = pneg %p165
      $region34: #{resnet_block.1} parent=11 // pred_check_branch
        %223 = sbr.rel (%p221) target = $region36
      $region35: #{resnet_block.1} parent=11 // pred_region
        _
      $region36: #{resnet_block.1} parent=11 // pred_fallthru
        _
    $region12: #{resnet_block.1} parent=5 // pred_fallthru
      _
    %p224 = scmp.lt.s32.totalorder %s13, 2
    // Predicated region
    $region37: #{resnet_block.1} parent=5 // pred_check
      %p225 = pneg %p224
    $region38: #{resnet_block.1} parent=5 // pred_check_branch
      %227 = sbr.rel (%p225) target = $region40
    $region39: #{resnet_block.1} parent=5 // pred_region
      // Predicated region
      $region41: #{resnet_block.1} parent=39 // pred_check
        %p228 = pneg %p33
      $region42: #{resnet_block.1} parent=39 // pred_check_branch
        %230 = sbr.rel (%p228) target = $region44
      $region43: #{resnet_block.1} parent=39 // pred_region
        %p231 = scmp.lt.s32.totalorder %s13, 1
        %s232 = scalar_select %p231, %s13, 1
        %s233 = smul.addr %s232, 41
        %s234 = smul.addr %s233, 8
        %s235 = scalar_lea.vmem %s0, %s234
      $region44: #{resnet_block.1} parent=39 // pred_fallthru
        _
    $region40: #{resnet_block.1} parent=5 // pred_fallthru
      _
    %p236 = scmp.le.s32.totalorder 1, %s13
    %p237 = scmp.lt.s32.totalorder %s13, 3
    %p238 = pnand %p236, %p237
    %p239 = pneg %p238
    // Predicated region
    $region45: #{resnet_block.1} parent=5 // pred_check
      _
    $region46: #{resnet_block.1} parent=5 // pred_check_branch
      %241 = sbr.rel (%p238) target = $region48
    $region47: #{resnet_block.1} parent=5 // pred_region
      %s242 = ssub.s32 %s13, 1
      %p243 = scmp.lt.s32.totalorder %s18, 1
      %s244 = scalar_select %p243, %s18, 1
      %s245 = smul.addr %s244, 41
      %s246 = smul.addr %s245, 8
      %s247 = scalar_lea.vmem %s0, %s246
      %p248 = pneg %p39
      %p249 = pneg %p36
      %p250 = pneg %p60
      %p251 = pneg %p57
      %p252 = pneg %p81
      %p253 = pneg %p78
      %p254 = pneg %p102
      %p255 = pneg %p99
      %p256 = pneg %p123
      %p257 = pneg %p120
      %p258 = pneg %p144
      %p259 = pneg %p141
      %p260 = pneg %p165
      %p261 = pneg %p162
      %p262 = pneg %p191
      %p263 = pneg %p188
      %p264 = scmp.lt.s32.totalorder %s18, 1
      %s265 = scalar_select %p264, %s18, 1
      %s266 = smul.addr %s265, 36
      %s267 = smul.addr %s266, 8
      %s268 = scalar_lea.vmem %s7, %s267
      %p269 = scmp.lt.s32.totalorder %s18, 1
      %s270 = scalar_select %p269, %s18, 1
      %s271 = smul.addr %s270, 41
      %s272 = smul.addr %s271, 8
      %s273 = scalar_lea.vmem %s0, %s272
      %p274 = scmp.lt.s32.totalorder %s18, 1
      %s275 = scalar_select %p274, %s18, 1
      %s276 = smul.addr %s275, 36
      %s277 = smul.addr %s276, 8
      %s278 = scalar_lea.vmem %s7, %s277
      %v279 = vld [vmem:[%s1] sm:$0xff]
      %v280 = vld [vmem:[%s1 + $0x8] sm:$0xff]
      %v281 = vld [vmem:[%s1 + $0x10] sm:$0xff]
      %v282 = vld [vmem:[%s1 + $0x18] sm:$0xff]
      %v283 = vld [vmem:[%s1 + $0x20] sm:$0xff]
      %v284 = vld [vmem:[%s1 + $0x28] sm:$0xff]
      %v285 = vld [vmem:[%s1 + $0x30] sm:$0xff]
      %v286 = vld [vmem:[%s1 + $0x38] sm:$0xff]
      %v287 = vld [vmem:[%s1 + $0x40] sm:$0xff]
      %v288 = vld [vmem:[%s1 + $0x48] sm:$0xff]
      %v289 = vld [vmem:[%s1 + $0x50] sm:$0xff]
      %v290 = vld [vmem:[%s1 + $0x58] sm:$0xff]
      %v291 = vld [vmem:[%s1 + $0x60] sm:$0xff]
      %v292 = vld [vmem:[%s1 + $0x68] sm:$0xff]
      %v293 = vld [vmem:[%s1 + $0x70] sm:$0xff]
      %v294 = vld [vmem:[%s1 + $0x78] sm:$0xff]
      %v295 = vld [vmem:[%s1 + $0x80] sm:$0xff]
      %v296 = vld [vmem:[%s1 + $0x88] sm:$0xff]
      %v297 = vld [vmem:[%s1 + $0x90] sm:$0xff]
      %v298 = vld [vmem:[%s1 + $0x98] sm:$0xff]
      %v299 = vld [vmem:[%s1 + $0xa0] sm:$0xff]
      %v300 = vld [vmem:[%s1 + $0xa8] sm:$0xff]
      %v301 = vld [vmem:[%s1 + $0xb0] sm:$0xff]
      %v302 = vld [vmem:[%s1 + $0xb8] sm:$0xff]
      %v303 = vld [vmem:[%s1 + $0xc0] sm:$0xff]
      %v304 = vld [vmem:[%s1 + $0xc8] sm:$0xff]
      %v305 = vld [vmem:[%s1 + $0xd0] sm:$0xff]
      %v306 = vld [vmem:[%s1 + $0xd8] sm:$0xff]
      %v307 = vld [vmem:[%s1 + $0xe0] sm:$0xff]
      %v308 = vld [vmem:[%s1 + $0xe8] sm:$0xff]
      %v309 = vld [vmem:[%s1 + $0xf0] sm:$0xff]
      %v310 = vld [vmem:[%s1 + $0xf8] sm:$0xff]
      %v311 = vld [vmem:[%s1 + $0x100] sm:$0xff]
      %v312 = vld [vmem:[%s1 + $0x108] sm:$0xff]
      %v313 = vld [vmem:[%s1 + $0x110] sm:$0xff]
      %v314 = vld [vmem:[%s1 + $0x118] sm:$0xff]
      %vm315 = vcmp.lt.f32.partialorder %v279, 16.0
      %vm316 = vcmp.lt.f32.partialorder %v280, 16.0
      %vm317 = vcmp.lt.f32.partialorder %v281, 16.0
      %vm318 = vcmp.lt.f32.partialorder %v282, 16.0
      %vm319 = vcmp.lt.f32.partialorder %v283, 16.0
      %vm320 = vcmp.lt.f32.partialorder %v284, 16.0
      %vm321 = vcmp.lt.f32.partialorder %v285, 16.0
      %vm322 = vcmp.lt.f32.partialorder %v286, 16.0
      %vm323 = vcmp.lt.f32.partialorder %v287, 16.0
      %vm324 = vcmp.lt.f32.partialorder %v288, 16.0
      %vm325 = vcmp.lt.f32.partialorder %v289, 16.0
      %vm326 = vcmp.lt.f32.partialorder %v290, 16.0
      %vm327 = vcmp.lt.f32.partialorder %v291, 16.0
      %vm328 = vcmp.lt.f32.partialorder %v292, 16.0
      %vm329 = vcmp.lt.f32.partialorder %v293, 16.0
      %vm330 = vcmp.lt.f32.partialorder %v294, 16.0
      %vm331 = vcmp.lt.f32.partialorder %v295, 16.0
      %vm332 = vcmp.lt.f32.partialorder %v296, 16.0
      %vm333 = vcmp.lt.f32.partialorder %v297, 16.0
      %vm334 = vcmp.lt.f32.partialorder %v298, 16.0
      %vm335 = vcmp.lt.f32.partialorder %v299, 16.0
      %vm336 = vcmp.lt.f32.partialorder %v300, 16.0
      %vm337 = vcmp.lt.f32.partialorder %v301, 16.0
      %vm338 = vcmp.lt.f32.partialorder %v302, 16.0
      %vm339 = vcmp.lt.f32.partialorder %v303, 16.0
      %vm340 = vcmp.lt.f32.partialorder %v304, 16.0
      %vm341 = vcmp.lt.f32.partialorder %v305, 16.0
      %vm342 = vcmp.lt.f32.partialorder %v306, 16.0
      %vm343 = vcmp.lt.f32.partialorder %v307, 16.0
      %vm344 = vcmp.lt.f32.partialorder %v308, 16.0
      %vm345 = vcmp.lt.f32.partialorder %v309, 16.0
      %vm346 = vcmp.lt.f32.partialorder %v310, 16.0
      %vm347 = vcmp.lt.f32.partialorder %v311, 16.0
      %vm348 = vcmp.lt.f32.partialorder %v312, 16.0
      %vm349 = vcmp.lt.f32.partialorder %v313, 16.0
      %vm350 = vcmp.lt.f32.partialorder %v314, 16.0
      %v351 = vsel %vm315, 1, 0
      %v352 = vsel %vm316, 1, 0
      %v353 = vsel %vm317, 1, 0
      %v354 = vsel %vm318, 1, 0
      %v355 = vsel %vm319, 1, 0
      %v356 = vsel %vm320, 1, 0
      %v357 = vsel %vm321, 1, 0
      %v358 = vsel %vm322, 1, 0
      %v359 = vsel %vm323, 1, 0
      %v360 = vsel %vm324, 1, 0
      %v361 = vsel %vm325, 1, 0
      %v362 = vsel %vm326, 1, 0
      %v363 = vsel %vm327, 1, 0
      %v364 = vsel %vm328, 1, 0
      %v365 = vsel %vm329, 1, 0
      %v366 = vsel %vm330, 1, 0
      %v367 = vsel %vm331, 1, 0
      %v368 = vsel %vm332, 1, 0
      %v369 = vsel %vm333, 1, 0
      %v370 = vsel %vm334, 1, 0
      %v371 = vsel %vm335, 1, 0
      %v372 = vsel %vm336, 1, 0
      %v373 = vsel %vm337, 1, 0
      %v374 = vsel %vm338, 1, 0
      %v375 = vsel %vm339, 1, 0
      %v376 = vsel %vm340, 1, 0
      %v377 = vsel %vm341, 1, 0
      %v378 = vsel %vm342, 1, 0
      %v379 = vsel %vm343, 1, 0
      %v380 = vsel %vm344, 1, 0
      %v381 = vsel %vm345, 1, 0
      %v382 = vsel %vm346, 1, 0
      %v383 = vsel %vm347, 1, 0
      %v384 = vsel %vm348, 1, 0
      %v385 = vsel %vm349, 1, 0
      %v386 = vsel %vm350, 1, 0
      %v387 = vcvt.s32.f32 %v351
      %v388 = vcvt.s32.f32 %v352
      %v389 = vcvt.s32.f32 %v353
      %v390 = vcvt.s32.f32 %v354
      %v391 = vcvt.s32.f32 %v355
      %v392 = vcvt.s32.f32 %v356
      %v393 = vcvt.s32.f32 %v357
      %v394 = vcvt.s32.f32 %v358
      %v395 = vcvt.s32.f32 %v359
      %v396 = vcvt.s32.f32 %v360
      %v397 = vcvt.s32.f32 %v361
      %v398 = vcvt.s32.f32 %v362
      %v399 = vcvt.s32.f32 %v363
      %v400 = vcvt.s32.f32 %v364
      %v401 = vcvt.s32.f32 %v365
      %v402 = vcvt.s32.f32 %v366
      %v403 = vcvt.s32.f32 %v367
      %v404 = vcvt.s32.f32 %v368
      %v405 = vcvt.s32.f32 %v369
      %v406 = vcvt.s32.f32 %v370
      %v407 = vcvt.s32.f32 %v371
      %v408 = vcvt.s32.f32 %v372
      %v409 = vcvt.s32.f32 %v373
      %v410 = vcvt.s32.f32 %v374
      %v411 = vcvt.s32.f32 %v375
      %v412 = vcvt.s32.f32 %v376
      %v413 = vcvt.s32.f32 %v377
      %v414 = vcvt.s32.f32 %v378
      %v415 = vcvt.s32.f32 %v379
      %v416 = vcvt.s32.f32 %v380
      %v417 = vcvt.s32.f32 %v381
      %v418 = vcvt.s32.f32 %v382
      %v419 = vcvt.s32.f32 %v383
      %v420 = vcvt.s32.f32 %v384
      %v421 = vcvt.s32.f32 %v385
      %v422 = vcvt.s32.f32 %v386
      %v423 = vld [vmem:[%s273] sm:$0xff]
      %v424 = vld [vmem:[%s273 + $0x8] sm:$0xff]
      %v425 = vld [vmem:[%s273 + $0x10] sm:$0xff]
      %v426 = vld [vmem:[%s273 + $0x18] sm:$0xff]
      %v427 = vld [vmem:[%s273 + $0x20] sm:$0xff]
      %v428 = vld [vmem:[%s273 + $0x28] sm:$0xff]
      %v429 = vld [vmem:[%s273 + $0x30] sm:$0xff]
      %v430 = vld [vmem:[%s273 + $0x38] sm:$0xff]
      %v431 = vld [vmem:[%s273 + $0x40] sm:$0xff]
      %v432 = vld [vmem:[%s273 + $0x48] sm:$0xff]
      %v433 = vld [vmem:[%s273 + $0x50] sm:$0xff]
      %v434 = vld [vmem:[%s273 + $0x58] sm:$0xff]
      %v435 = vld [vmem:[%s273 + $0x60] sm:$0xff]
      %v436 = vld [vmem:[%s273 + $0x68] sm:$0xff]
      %v437 = vld [vmem:[%s273 + $0x70] sm:$0xff]
      %v438 = vld [vmem:[%s273 + $0x78] sm:$0xff]
      %v439 = vld [vmem:[%s273 + $0x80] sm:$0xff]
      %v440 = vld [vmem:[%s273 + $0x88] sm:$0xff]
      %v441 = vld [vmem:[%s273 + $0x90] sm:$0xff]
      %v442 = vld [vmem:[%s273 + $0x98] sm:$0xff]
      %v443 = vld [vmem:[%s273 + $0xa0] sm:$0xff]
      %v444 = vld [vmem:[%s273 + $0xa8] sm:$0xff]
      %v445 = vld [vmem:[%s273 + $0xb0] sm:$0xff]
      %v446 = vld [vmem:[%s273 + $0xb8] sm:$0xff]
      %v447 = vld [vmem:[%s273 + $0xc0] sm:$0xff]
      %v448 = vld [vmem:[%s273 + $0xc8] sm:$0xff]
      %v449 = vld [vmem:[%s273 + $0xd0] sm:$0xff]
      %v450 = vld [vmem:[%s273 + $0xd8] sm:$0xff]
      %v451 = vld [vmem:[%s273 + $0xe0] sm:$0xff]
      %v452 = vld [vmem:[%s273 + $0xe8] sm:$0xff]
      %v453 = vld [vmem:[%s273 + $0xf0] sm:$0xff]
      %v454 = vld [vmem:[%s273 + $0xf8] sm:$0xff]
      %v455 = vld [vmem:[%s273 + $0x100] sm:$0xff]
      %v456 = vld [vmem:[%s273 + $0x108] sm:$0xff]
      %v457 = vld [vmem:[%s273 + $0x110] sm:$0xff]
      %v458 = vld [vmem:[%s273 + $0x118] sm:$0xff]
      %v459 = vld [vmem:[%s3] sm:$0xf]
      %v460 = vld [vmem:[%s273 + $0x1] sm:$0xff]
      %v461 = vld [vmem:[%s273 + $0x9] sm:$0xff]
      %v462 = vld [vmem:[%s273 + $0x11] sm:$0xff]
      %v463 = vld [vmem:[%s273 + $0x19] sm:$0xff]
      %v464 = vld [vmem:[%s273 + $0x21] sm:$0xff]
      %v465 = vld [vmem:[%s273 + $0x29] sm:$0xff]
      %v466 = vld [vmem:[%s273 + $0x31] sm:$0xff]
      %v467 = vld [vmem:[%s273 + $0x39] sm:$0xff]
      %v468 = vld [vmem:[%s273 + $0x41] sm:$0xff]
      %v469 = vld [vmem:[%s273 + $0x49] sm:$0xff]
      %v470 = vld [vmem:[%s273 + $0x51] sm:$0xff]
      %v471 = vld [vmem:[%s273 + $0x59] sm:$0xff]
      %v472 = vld [vmem:[%s273 + $0x61] sm:$0xff]
      %v473 = vld [vmem:[%s273 + $0x69] sm:$0xff]
      %v474 = vld [vmem:[%s273 + $0x71] sm:$0xff]
      %v475 = vld [vmem:[%s273 + $0x79] sm:$0xff]
      %v476 = vld [vmem:[%s273 + $0x81] sm:$0xff]
      %v477 = vld [vmem:[%s273 + $0x89] sm:$0xff]
      %v478 = vld [vmem:[%s273 + $0x91] sm:$0xff]
      %v479 = vld [vmem:[%s273 + $0x99] sm:$0xff]
      %v480 = vld [vmem:[%s273 + $0xa1] sm:$0xff]
      %v481 = vld [vmem:[%s273 + $0xa9] sm:$0xff]
      %v482 = vld [vmem:[%s273 + $0xb1] sm:$0xff]
      %v483 = vld [vmem:[%s273 + $0xb9] sm:$0xff]
      %v484 = vld [vmem:[%s273 + $0xc1] sm:$0xff]
      %v485 = vld [vmem:[%s273 + $0xc9] sm:$0xff]
      %v486 = vld [vmem:[%s273 + $0xd1] sm:$0xff]
      %v487 = vld [vmem:[%s273 + $0xd9] sm:$0xff]
      %v488 = vld [vmem:[%s273 + $0xe1] sm:$0xff]
      %v489 = vld [vmem:[%s273 + $0xe9] sm:$0xff]
      %v490 = vld [vmem:[%s273 + $0xf1] sm:$0xff]
      %v491 = vld [vmem:[%s273 + $0xf9] sm:$0xff]
      %v492 = vld [vmem:[%s273 + $0x101] sm:$0xff]
      %v493 = vld [vmem:[%s273 + $0x109] sm:$0xff]
      %v494 = vld [vmem:[%s273 + $0x111] sm:$0xff]
      %v495 = vld [vmem:[%s273 + $0x119] sm:$0xff]
      %s496 = scalar_lea.vmem %s3, 4
      %v497 = vld [vmem:[%s496] sm:$0xf]
      %vm498 = vcmask 31744
      %v500 = vsel %vm498, %v460, 0
      %v503 = vsel %vm498, %v461, 0
      %v506 = vsel %vm498, %v462, 0
      %v509 = vsel %vm498, %v463, 0
      %v512 = vsel %vm498, %v464, 0
      %v515 = vsel %vm498, %v465, 0
      %v518 = vsel %vm498, %v466, 0
      %v521 = vsel %vm498, %v467, 0
      %v524 = vsel %vm498, %v468, 0
      %v527 = vsel %vm498, %v469, 0
      %v530 = vsel %vm498, %v470, 0
      %v533 = vsel %vm498, %v471, 0
      %v536 = vsel %vm498, %v472, 0
      %v539 = vsel %vm498, %v473, 0
      %v542 = vsel %vm498, %v474, 0
      %v545 = vsel %vm498, %v475, 0
      %v548 = vsel %vm498, %v476, 0
      %v551 = vsel %vm498, %v477, 0
      %v554 = vsel %vm498, %v478, 0
      %v557 = vsel %vm498, %v479, 0
      %v560 = vsel %vm498, %v480, 0
      %v563 = vsel %vm498, %v481, 0
      %v566 = vsel %vm498, %v482, 0
      %v569 = vsel %vm498, %v483, 0
      %v572 = vsel %vm498, %v484, 0
      %v575 = vsel %vm498, %v485, 0
      %v578 = vsel %vm498, %v486, 0
      %v581 = vsel %vm498, %v487, 0
      %v584 = vsel %vm498, %v488, 0
      %v587 = vsel %vm498, %v489, 0
      %v590 = vsel %vm498, %v490, 0
      %v593 = vsel %vm498, %v491, 0
      %v596 = vsel %vm498, %v492, 0
      %v599 = vsel %vm498, %v493, 0
      %v602 = vsel %vm498, %v494, 0
      %v605 = vsel %vm498, %v495, 0
      %vm607 = vcmask 1043456
      %v609 = vsel %vm607, %v497, 0
      %611 = vmatprep.subr.mxu0 0.0
      %612 = vmatpush1.msra.mxu0 %v609
      %613 = vmatprep.subr.mxu0 0.0
      %614 = vmatpush1.msra.mxu0 0.0
      %615 = vmatprep.subr.mxu0 0.0
      %616 = vmatpush1.msra.mxu0 0.0
      %617 = vmatprep.subr.mxu0 0.0
      %618 = vmatpush1.msra.mxu0 0.0
      %619 = vmatprep.subr.mxu0 0.0
      %620 = vmatpush1.msra.mxu0 0.0
      %621 = vmatprep.subr.mxu0 0.0
      %622 = vmatpush1.msra.mxu0 0.0
      %623 = vmatprep.subr.mxu0 0.0
      %624 = vmatpush1.msra.mxu0 0.0
      %625 = vmatprep.subr.mxu0 0.0
      %626 = vmatpush1.msra.mxu0 0.0
      %627 = vmatprep.subr.mxu0 0.0
      %628 = vmatpush1.msra.mxu0 0.0
      %629 = vmatprep.subr.mxu0 0.0
      %630 = vmatpush1.msra.mxu0 0.0
      %631 = vmatprep.subr.mxu0 0.0
      %632 = vmatpush1.msra.mxu0 0.0
      %633 = vmatprep.subr.mxu0 0.0
      %634 = vmatpush1.msra.mxu0 0.0
      %635 = vmatprep.subr.mxu0 0.0
      %636 = vmatpush1.msra.mxu0 0.0
      %637 = vmatprep.subr.mxu0 0.0
      %638 = vmatpush1.msra.mxu0 0.0
      %639 = vmatprep.subr.mxu0 0.0
      %640 = vmatpush1.msra.mxu0 0.0
      %641 = vmatprep.subr.mxu0 0.0
      %642 = vmatpush1.msra.mxu0 0.0
      %643 = vmatprep.subr.mxu0 0.0
      %644 = vmatpush1.msra.mxu0 0.0
      %645 = vmatprep.subr.mxu0 0.0
      %646 = vmatpush1.msra.mxu0 0.0
      %647 = vmatprep.subr.mxu0 0.0
      %648 = vmatpush1.msra.mxu0 0.0
      %649 = vmatprep.subr.mxu0 0.0
      %650 = vmatpush1.msra.mxu0 0.0
      %651 = vmatprep.subr.mxu0 0.0
      %652 = vmatpush1.msra.mxu0 0.0
      %653 = vmatprep.subr.mxu0 0.0
      %654 = vmatpush1.msra.mxu0 0.0
      %655 = vmatprep.subr.mxu0 0.0
      %656 = vmatpush1.msra.mxu0 0.0
      %657 = vmatprep.subr.mxu0 0.0
      %658 = vmatpush1.msra.mxu0 0.0
      %659 = vmatprep.subr.mxu0 0.0
      %660 = vmatpush1.msra.mxu0 0.0
      %661 = vmatprep.subr.mxu0 0.0
      %662 = vmatpush1.msra.mxu0 0.0
      %663 = vmatprep.subr.mxu0 0.0
      %664 = vmatpush1.msra.mxu0 0.0
      %665 = vmatprep.subr.mxu0 0.0
      %666 = vmatpush1.msra.mxu0 0.0
      %667 = vmatprep.subr.mxu0 0.0
      %668 = vmatpush1.msra.mxu0 0.0
      %669 = vmatprep.subr.mxu0 0.0
      %670 = vmatpush1.msra.mxu0 0.0
      %671 = vmatprep.subr.mxu0 0.0
      %672 = vmatpush1.msra.mxu0 0.0
      %673 = vmatprep.subr.mxu0 0.0
      %674 = vmatpush1.msra.mxu0 0.0
      %675 = vmatprep.mubr.f32.mxu0 0.0
      %676 = vmatmul.mubr.f32.gmra.mrb[0].mxu0 %v500
      %v677 = vpop.f32.mrb[0].mxu0
      %v678 = vadd.f32 0.0, %v677
      %v679 = vpop.f32.mrb[0].mxu0
      %680 = vmatprep.mubr.f32.mxu0 0.0
      %681 = vmatmul.mubr.f32.gmra.mrb[0].mxu0 %v503
      %v682 = vpop.f32.mrb[0].mxu0
      %v683 = vadd.f32 0.0, %v682
      %v684 = vpop.f32.mrb[0].mxu0
      %685 = vmatprep.mubr.f32.mxu0 0.0
      %686 = vmatmul.mubr.f32.gmra.mrb[0].mxu0 %v506
      %v687 = vpop.f32.mrb[0].mxu0
      %v688 = vadd.f32 0.0, %v687
      %v689 = vpop.f32.mrb[0].mxu0
      %690 = vmatprep.mubr.f32.mxu0 0.0
      %691 = vmatmul.mubr.f32.gmra.mrb[0].mxu0 %v509
      %v692 = vpop.f32.mrb[0].mxu0
      %v693 = vadd.f32 0.0, %v692
      %v694 = vpop.f32.mrb[0].mxu0
      %695 = vmatprep.mubr.f32.mxu0 0.0
      %696 = vmatmul.mubr.f32.gmra.mrb[0].mxu0 %v512
      %v697 = vpop.f32.mrb[0].mxu0
      %v698 = vadd.f32 0.0, %v697
      %v699 = vpop.f32.mrb[0].mxu0
      %700 = vmatprep.mubr.f32.mxu0 0.0
      %701 = vmatmul.mubr.f32.gmra.mrb[0].mxu0 %v515
      %v702 = vpop.f32.mrb[0].mxu0
      %v703 = vadd.f32 0.0, %v702
      %v704 = vpop.f32.mrb[0].mxu0
      %705 = vmatprep.mubr.f32.mxu0 0.0
      %706 = vmatmul.mubr.f32.gmra.mrb[0].mxu0 %v518
      %v707 = vpop.f32.mrb[0].mxu0
      %v708 = vadd.f32 0.0, %v707
      %v709 = vpop.f32.mrb[0].mxu0
      %710 = vmatprep.mubr.f32.mxu0 0.0
      %711 = vmatmul.mubr.f32.gmra.mrb[0].mxu0 %v521
      %v712 = vpop.f32.mrb[0].mxu0
      %v713 = vadd.f32 0.0, %v712
      %v714 = vpop.f32.mrb[0].mxu0
      %715 = vmatprep.mubr.f32.mxu0 0.0
      %716 = vmatmul.mubr.f32.gmra.mrb[0].mxu0 %v524
      %v717 = vpop.f32.mrb[0].mxu0
      %v718 = vadd.f32 0.0, %v717
      %v719 = vpop.f32.mrb[0].mxu0
      %720 = vmatprep.mubr.f32.mxu0 0.0
      %721 = vmatmul.mubr.f32.gmra.mrb[0].mxu0 %v527
      %v722 = vpop.f32.mrb[0].mxu0
      %v723 = vadd.f32 0.0, %v722
      %v724 = vpop.f32.mrb[0].mxu0
      %725 = vmatprep.mubr.f32.mxu0 0.0
      %726 = vmatmul.mubr.f32.gmra.mrb[0].mxu0 %v530
      %v727 = vpop.f32.mrb[0].mxu0
      %v728 = vadd.f32 0.0, %v727
      %v729 = vpop.f32.mrb[0].mxu0
      %730 = vmatprep.mubr.f32.mxu0 0.0
      %731 = vmatmul.mubr.f32.gmra.mrb[0].mxu0 %v533
      %v732 = vpop.f32.mrb[0].mxu0
      %v733 = vadd.f32 0.0, %v732
      %v734 = vpop.f32.mrb[0].mxu0
      %735 = vmatprep.mubr.f32.mxu0 0.0
      %736 = vmatmul.mubr.f32.gmra.mrb[0].mxu0 %v536
      %v737 = vpop.f32.mrb[0].mxu0
      %v738 = vadd.f32 0.0, %v737
      %v739 = vpop.f32.mrb[0].mxu0
      %740 = vmatprep.mubr.f32.mxu0 0.0
      %741 = vmatmul.mubr.f32.gmra.mrb[0].mxu0 %v539
      %v742 = vpop.f32.mrb[0].mxu0
      %v743 = vadd.f32 0.0, %v742
      %v744 = vpop.f32.mrb[0].mxu0
      %745 = vmatprep.mubr.f32.mxu0 0.0
      %746 = vmatmul.mubr.f32.gmra.mrb[0].mxu0 %v542
      %v747 = vpop.f32.mrb[0].mxu0
      %v748 = vadd.f32 0.0, %v747
      %v749 = vpop.f32.mrb[0].mxu0
      %750 = vmatprep.mubr.f32.mxu0 0.0
      %751 = vmatmul.mubr.f32.gmra.mrb[0].mxu0 %v545
      %v752 = vpop.f32.mrb[0].mxu0
      %v753 = vadd.f32 0.0, %v752
      %v754 = vpop.f32.mrb[0].mxu0
      %755 = vmatprep.mubr.f32.mxu0 0.0
      %756 = vmatmul.mubr.f32.gmra.mrb[0].mxu0 %v548
      %v757 = vpop.f32.mrb[0].mxu0
      %v758 = vadd.f32 0.0, %v757
      %v759 = vpop.f32.mrb[0].mxu0
      %760 = vmatprep.mubr.f32.mxu0 0.0
      %761 = vmatmul.mubr.f32.gmra.mrb[0].mxu0 %v551
      %v762 = vpop.f32.mrb[0].mxu0
      %v763 = vadd.f32 0.0, %v762
      %v764 = vpop.f32.mrb[0].mxu0
      %765 = vmatprep.mubr.f32.mxu0 0.0
      %766 = vmatmul.mubr.f32.gmra.mrb[0].mxu0 %v554
      %v767 = vpop.f32.mrb[0].mxu0
      %v768 = vadd.f32 0.0, %v767
      %v769 = vpop.f32.mrb[0].mxu0
      %770 = vmatprep.mubr.f32.mxu0 0.0
      %771 = vmatmul.mubr.f32.gmra.mrb[0].mxu0 %v557
      %v772 = vpop.f32.mrb[0].mxu0
      %v773 = vadd.f32 0.0, %v772
      %v774 = vpop.f32.mrb[0].mxu0
      %775 = vmatprep.mubr.f32.mxu0 0.0
      %776 = vmatmul.mubr.f32.gmra.mrb[0].mxu0 %v560
      %v777 = vpop.f32.mrb[0].mxu0
      %v778 = vadd.f32 0.0, %v777
      %v779 = vpop.f32.mrb[0].mxu0
      %780 = vmatprep.mubr.f32.mxu0 0.0
      %781 = vmatmul.mubr.f32.gmra.mrb[0].mxu0 %v563
      %v782 = vpop.f32.mrb[0].mxu0
      %v783 = vadd.f32 0.0, %v782
      %v784 = vpop.f32.mrb[0].mxu0
      %785 = vmatprep.mubr.f32.mxu0 0.0
      %786 = vmatmul.mubr.f32.gmra.mrb[0].mxu0 %v566
      %v787 = vpop.f32.mrb[0].mxu0
      %v788 = vadd.f32 0.0, %v787
      %v789 = vpop.f32.mrb[0].mxu0
      %790 = vmatprep.mubr.f32.mxu0 0.0
      %791 = vmatmul.mubr.f32.gmra.mrb[0].mxu0 %v569
      %v792 = vpop.f32.mrb[0].mxu0
      %v793 = vadd.f32 0.0, %v792
      %v794 = vpop.f32.mrb[0].mxu0
      %795 = vmatprep.mubr.f32.mxu0 0.0
      %796 = vmatmul.mubr.f32.gmra.mrb[0].mxu0 %v572
      %v797 = vpop.f32.mrb[0].mxu0
      %v798 = vadd.f32 0.0, %v797
      %v799 = vpop.f32.mrb[0].mxu0
      %800 = vmatprep.mubr.f32.mxu0 0.0
      %801 = vmatmul.mubr.f32.gmra.mrb[0].mxu0 %v575
      %v802 = vpop.f32.mrb[0].mxu0
      %v803 = vadd.f32 0.0, %v802
      %v804 = vpop.f32.mrb[0].mxu0
      %805 = vmatprep.mubr.f32.mxu0 0.0
      %806 = vmatmul.mubr.f32.gmra.mrb[0].mxu0 %v578
      %v807 = vpop.f32.mrb[0].mxu0
      %v808 = vadd.f32 0.0, %v807
      %v809 = vpop.f32.mrb[0].mxu0
      %810 = vmatprep.mubr.f32.mxu0 0.0
      %811 = vmatmul.mubr.f32.gmra.mrb[0].mxu0 %v581
      %v812 = vpop.f32.mrb[0].mxu0
      %v813 = vadd.f32 0.0, %v812
      %v814 = vpop.f32.mrb[0].mxu0
      %815 = vmatprep.mubr.f32.mxu0 0.0
      %816 = vmatmul.mubr.f32.gmra.mrb[0].mxu0 %v584
      %v817 = vpop.f32.mrb[0].mxu0
      %v818 = vadd.f32 0.0, %v817
      %v819 = vpop.f32.mrb[0].mxu0
      %820 = vmatprep.mubr.f32.mxu0 0.0
      %821 = vmatmul.mubr.f32.gmra.mrb[0].mxu0 %v587
      %v822 = vpop.f32.mrb[0].mxu0
      %v823 = vadd.f32 0.0, %v822
      %v824 = vpop.f32.mrb[0].mxu0
      %825 = vmatprep.mubr.f32.mxu0 0.0
      %826 = vmatmul.mubr.f32.gmra.mrb[0].mxu0 %v590
      %v827 = vpop.f32.mrb[0].mxu0
      %v828 = vadd.f32 0.0, %v827
      %v829 = vpop.f32.mrb[0].mxu0
      %830 = vmatprep.mubr.f32.mxu0 0.0
      %831 = vmatmul.mubr.f32.gmra.mrb[0].mxu0 %v593
      %v832 = vpop.f32.mrb[0].mxu0
      %v833 = vadd.f32 0.0, %v832
      %v834 = vpop.f32.mrb[0].mxu0
      %835 = vmatprep.mubr.f32.mxu0 0.0
      %836 = vmatmul.mubr.f32.gmra.mrb[0].mxu0 %v596
      %v837 = vpop.f32.mrb[0].mxu0
      %v838 = vadd.f32 0.0, %v837
      %v839 = vpop.f32.mrb[0].mxu0
      %840 = vmatprep.mubr.f32.mxu0 0.0
      %841 = vmatmul.mubr.f32.gmra.mrb[0].mxu0 %v599
      %v842 = vpop.f32.mrb[0].mxu0
      %v843 = vadd.f32 0.0, %v842
      %v844 = vpop.f32.mrb[0].mxu0
      %845 = vmatprep.mubr.f32.mxu0 0.0
      %846 = vmatmul.mubr.f32.gmra.mrb[0].mxu0 %v602
      %v847 = vpop.f32.mrb[0].mxu0
      %v848 = vadd.f32 0.0, %v847
      %v849 = vpop.f32.mrb[0].mxu0
      %850 = vmatprep.mubr.f32.mxu0 0.0
      %851 = vmatmul.mubr.f32.gmra.mrb[0].mxu0 %v605
      %v852 = vpop.f32.mrb[0].mxu0
      %v853 = vadd.f32 0.0, %v852
      %v854 = vpop.f32.mrb[0].mxu0
      %855 = vdwg.mxu0
      %v857 = vsel %vm498, %v423, 0
      %v860 = vsel %vm498, %v424, 0
      %v863 = vsel %vm498, %v425, 0
      %v866 = vsel %vm498, %v426, 0
      %v869 = vsel %vm498, %v427, 0
      %v872 = vsel %vm498, %v428, 0
      %v875 = vsel %vm498, %v429, 0
      %v878 = vsel %vm498, %v430, 0
      %v881 = vsel %vm498, %v431, 0
      %v884 = vsel %vm498, %v432, 0
      %v887 = vsel %vm498, %v433, 0
      %v890 = vsel %vm498, %v434, 0
      %v893 = vsel %vm498, %v435, 0
      %v896 = vsel %vm498, %v436, 0
      %v899 = vsel %vm498, %v437, 0
      %v902 = vsel %vm498, %v438, 0
      %v905 = vsel %vm498, %v439, 0
      %v908 = vsel %vm498, %v440, 0
      %v911 = vsel %vm498, %v441, 0
      %v914 = vsel %vm498, %v442, 0
      %v917 = vsel %vm498, %v443, 0
      %v920 = vsel %vm498, %v444, 0
      %v923 = vsel %vm498, %v445, 0
      %v926 = vsel %vm498, %v446, 0
      %v929 = vsel %vm498, %v447, 0
      %v932 = vsel %vm498, %v448, 0
      %v935 = vsel %vm498, %v449, 0
      %v938 = vsel %vm498, %v450, 0
      %v941 = vsel %vm498, %v451, 0
      %v944 = vsel %vm498, %v452, 0
      %v947 = vsel %vm498, %v453, 0
      %v950 = vsel %vm498, %v454, 0
      %v953 = vsel %vm498, %v455, 0
      %v956 = vsel %vm498, %v456, 0
      %v959 = vsel %vm498, %v457, 0
      %v962 = vsel %vm498, %v458, 0
      %v965 = vsel %vm607, %v459, 0
      %967 = vmatprep.subr.mxu0 0.0
      %968 = vmatpush1.msra.mxu0 %v965
      %969 = vmatprep.subr.mxu0 0.0
      %970 = vmatpush1.msra.mxu0 0.0
      %971 = vmatprep.subr.mxu0 0.0
      %972 = vmatpush1.msra.mxu0 0.0
      %973 = vmatprep.subr.mxu0 0.0
      %974 = vmatpush1.msra.mxu0 0.0
      %975 = vmatprep.subr.mxu0 0.0
      %976 = vmatpush1.msra.mxu0 0.0
      %977 = vmatprep.subr.mxu0 0.0
      %978 = vmatpush1.msra.mxu0 0.0
      %979 = vmatprep.subr.mxu0 0.0
      %980 = vmatpush1.msra.mxu0 0.0
      %981 = vmatprep.subr.mxu0 0.0
      %982 = vmatpush1.msra.mxu0 0.0
      %983 = vmatprep.subr.mxu0 0.0
      %984 = vmatpush1.msra.mxu0 0.0
      %985 = vmatprep.subr.mxu0 0.0
      %986 = vmatpush1.msra.mxu0 0.0
      %987 = vmatprep.subr.mxu0 0.0
      %988 = vmatpush1.msra.mxu0 0.0
      %989 = vmatprep.subr.mxu0 0.0
      %990 = vmatpush1.msra.mxu0 0.0
      %991 = vmatprep.subr.mxu0 0.0
      %992 = vmatpush1.msra.mxu0 0.0
      %993 = vmatprep.subr.mxu0 0.0
      %994 = vmatpush1.msra.mxu0 0.0
      %995 = vmatprep.subr.mxu0 0.0
      %996 = vmatpush1.msra.mxu0 0.0
      %997 = vmatprep.subr.mxu0 0.0
      %998 = vmatpush1.msra.mxu0 0.0
      %999 = vmatprep.subr.mxu0 0.0
      %1000 = vmatpush1.msra.mxu0 0.0
      %1001 = vmatprep.subr.mxu0 0.0
      %1002 = vmatpush1.msra.mxu0 0.0
      %1003 = vmatprep.subr.mxu0 0.0
      %1004 = vmatpush1.msra.mxu0 0.0
      %1005 = vmatprep.subr.mxu0 0.0
      %1006 = vmatpush1.msra.mxu0 0.0
      %1007 = vmatprep.subr.mxu0 0.0
      %1008 = vmatpush1.msra.mxu0 0.0
      %1009 = vmatprep.subr.mxu0 0.0
      %1010 = vmatpush1.msra.mxu0 0.0
      %1011 = vmatprep.subr.mxu0 0.0
      %1012 = vmatpush1.msra.mxu0 0.0
      %1013 = vmatprep.subr.mxu0 0.0
      %1014 = vmatpush1.msra.mxu0 0.0
      %1015 = vmatprep.subr.mxu0 0.0
      %1016 = vmatpush1.msra.mxu0 0.0
      %1017 = vmatprep.subr.mxu0 0.0
      %1018 = vmatpush1.msra.mxu0 0.0
      %1019 = vmatprep.subr.mxu0 0.0
      %1020 = vmatpush1.msra.mxu0 0.0
      %1021 = vmatprep.subr.mxu0 0.0
      %1022 = vmatpush1.msra.mxu0 0.0
      %1023 = vmatprep.subr.mxu0 0.0
      %1024 = vmatpush1.msra.mxu0 0.0
      %1025 = vmatprep.subr.mxu0 0.0
      %1026 = vmatpush1.msra.mxu0 0.0
      %1027 = vmatprep.subr.mxu0 0.0
      %1028 = vmatpush1.msra.mxu0 0.0
      %1029 = vmatprep.subr.mxu0 0.0
      %1030 = vmatpush1.msra.mxu0 0.0
      %1031 = vmatprep.mubr.f32.mxu0 0.0
      %1032 = vmatmul.mubr.f32.gmra.mrb[0].mxu0 %v857
      %v1033 = vpop.f32.mrb[0].mxu0
      %v1034 = vadd.f32 %v678, %v1033
      %v1035 = vpop.f32.mrb[0].mxu0
      %1036 = vmatprep.mubr.f32.mxu0 0.0
      %1037 = vmatmul.mubr.f32.gmra.mrb[0].mxu0 %v860
      %v1038 = vpop.f32.mrb[0].mxu0
      %v1039 = vadd.f32 %v683, %v1038
      %v1040 = vpop.f32.mrb[0].mxu0
      %1041 = vmatprep.mubr.f32.mxu0 0.0
      %1042 = vmatmul.mubr.f32.gmra.mrb[0].mxu0 %v863
      %v1043 = vpop.f32.mrb[0].mxu0
      %v1044 = vadd.f32 %v688, %v1043
      %v1045 = vpop.f32.mrb[0].mxu0
      %1046 = vmatprep.mubr.f32.mxu0 0.0
      %1047 = vmatmul.mubr.f32.gmra.mrb[0].mxu0 %v866
      %v1048 = vpop.f32.mrb[0].mxu0
      %v1049 = vadd.f32 %v693, %v1048
      %v1050 = vpop.f32.mrb[0].mxu0
      %1051 = vmatprep.mubr.f32.mxu0 0.0
      %1052 = vmatmul.mubr.f32.gmra.mrb[0].mxu0 %v869
      %v1053 = vpop.f32.mrb[0].mxu0
      %v1054 = vadd.f32 %v698, %v1053
      %v1055 = vpop.f32.mrb[0].mxu0
      %1056 = vmatprep.mubr.f32.mxu0 0.0
      %1057 = vmatmul.mubr.f32.gmra.mrb[0].mxu0 %v872
      %v1058 = vpop.f32.mrb[0].mxu0
      %v1059 = vadd.f32 %v703, %v1058
      %v1060 = vpop.f32.mrb[0].mxu0
      %1061 = vmatprep.mubr.f32.mxu0 0.0
      %1062 = vmatmul.mubr.f32.gmra.mrb[0].mxu0 %v875
      %v1063 = vpop.f32.mrb[0].mxu0
      %v1064 = vadd.f32 %v708, %v1063
      %v1065 = vpop.f32.mrb[0].mxu0
      %1066 = vmatprep.mubr.f32.mxu0 0.0
      %1067 = vmatmul.mubr.f32.gmra.mrb[0].mxu0 %v878
      %v1068 = vpop.f32.mrb[0].mxu0
      %v1069 = vadd.f32 %v713, %v1068
      %v1070 = vpop.f32.mrb[0].mxu0
      %1071 = vmatprep.mubr.f32.mxu0 0.0
      %1072 = vmatmul.mubr.f32.gmra.mrb[0].mxu0 %v881
      %v1073 = vpop.f32.mrb[0].mxu0
      %v1074 = vadd.f32 %v718, %v1073
      %v1075 = vpop.f32.mrb[0].mxu0
      %1076 = vmatprep.mubr.f32.mxu0 0.0
      %1077 = vmatmul.mubr.f32.gmra.mrb[0].mxu0 %v884
      %v1078 = vpop.f32.mrb[0].mxu0
      %v1079 = vadd.f32 %v723, %v1078
      %v1080 = vpop.f32.mrb[0].mxu0
      %1081 = vmatprep.mubr.f32.mxu0 0.0
      %1082 = vmatmul.mubr.f32.gmra.mrb[0].mxu0 %v887
      %v1083 = vpop.f32.mrb[0].mxu0
      %v1084 = vadd.f32 %v728, %v1083
      %v1085 = vpop.f32.mrb[0].mxu0
      %1086 = vmatprep.mubr.f32.mxu0 0.0
      %1087 = vmatmul.mubr.f32.gmra.mrb[0].mxu0 %v890
      %v1088 = vpop.f32.mrb[0].mxu0
      %v1089 = vadd.f32 %v733, %v1088
      %v1090 = vpop.f32.mrb[0].mxu0
      %1091 = vmatprep.mubr.f32.mxu0 0.0
      %1092 = vmatmul.mubr.f32.gmra.mrb[0].mxu0 %v893
      %v1093 = vpop.f32.mrb[0].mxu0
      %v1094 = vadd.f32 %v738, %v1093
      %v1095 = vpop.f32.mrb[0].mxu0
      %1096 = vmatprep.mubr.f32.mxu0 0.0
      %1097 = vmatmul.mubr.f32.gmra.mrb[0].mxu0 %v896
      %v1098 = vpop.f32.mrb[0].mxu0
      %v1099 = vadd.f32 %v743, %v1098
      %v1100 = vpop.f32.mrb[0].mxu0
      %1101 = vmatprep.mubr.f32.mxu0 0.0
      %1102 = vmatmul.mubr.f32.gmra.mrb[0].mxu0 %v899
      %v1103 = vpop.f32.mrb[0].mxu0
      %v1104 = vadd.f32 %v748, %v1103
      %v1105 = vpop.f32.mrb[0].mxu0
      %1106 = vmatprep.mubr.f32.mxu0 0.0
      %1107 = vmatmul.mubr.f32.gmra.mrb[0].mxu0 %v902
      %v1108 = vpop.f32.mrb[0].mxu0
      %v1109 = vadd.f32 %v753, %v1108
      %v1110 = vpop.f32.mrb[0].mxu0
      %1111 = vmatprep.mubr.f32.mxu0 0.0
      %1112 = vmatmul.mubr.f32.gmra.mrb[0].mxu0 %v905
      %v1113 = vpop.f32.mrb[0].mxu0
      %v1114 = vadd.f32 %v758, %v1113
      %v1115 = vpop.f32.mrb[0].mxu0
      %1116 = vmatprep.mubr.f32.mxu0 0.0
      %1117 = vmatmul.mubr.f32.gmra.mrb[0].mxu0 %v908
      %v1118 = vpop.f32.mrb[0].mxu0
      %v1119 = vadd.f32 %v763, %v1118
      %v1120 = vpop.f32.mrb[0].mxu0
      %1121 = vmatprep.mubr.f32.mxu0 0.0
      %1122 = vmatmul.mubr.f32.gmra.mrb[0].mxu0 %v911
      %v1123 = vpop.f32.mrb[0].mxu0
      %v1124 = vadd.f32 %v768, %v1123
      %v1125 = vpop.f32.mrb[0].mxu0
      %1126 = vmatprep.mubr.f32.mxu0 0.0
      %1127 = vmatmul.mubr.f32.gmra.mrb[0].mxu0 %v914
      %v1128 = vpop.f32.mrb[0].mxu0
      %v1129 = vadd.f32 %v773, %v1128
      %v1130 = vpop.f32.mrb[0].mxu0
      %1131 = vmatprep.mubr.f32.mxu0 0.0
      %1132 = vmatmul.mubr.f32.gmra.mrb[0].mxu0 %v917
      %v1133 = vpop.f32.mrb[0].mxu0
      %v1134 = vadd.f32 %v778, %v1133
      %v1135 = vpop.f32.mrb[0].mxu0
      %1136 = vmatprep.mubr.f32.mxu0 0.0
      %1137 = vmatmul.mubr.f32.gmra.mrb[0].mxu0 %v920
      %v1138 = vpop.f32.mrb[0].mxu0
      %v1139 = vadd.f32 %v783, %v1138
      %v1140 = vpop.f32.mrb[0].mxu0
      %1141 = vmatprep.mubr.f32.mxu0 0.0
      %1142 = vmatmul.mubr.f32.gmra.mrb[0].mxu0 %v923
      %v1143 = vpop.f32.mrb[0].mxu0
      %v1144 = vadd.f32 %v788, %v1143
      %v1145 = vpop.f32.mrb[0].mxu0
      %1146 = vmatprep.mubr.f32.mxu0 0.0
      %1147 = vmatmul.mubr.f32.gmra.mrb[0].mxu0 %v926
      %v1148 = vpop.f32.mrb[0].mxu0
      %v1149 = vadd.f32 %v793, %v1148
      %v1150 = vpop.f32.mrb[0].mxu0
      %1151 = vmatprep.mubr.f32.mxu0 0.0
      %1152 = vmatmul.mubr.f32.gmra.mrb[0].mxu0 %v929
      %v1153 = vpop.f32.mrb[0].mxu0
      %v1154 = vadd.f32 %v798, %v1153
      %v1155 = vpop.f32.mrb[0].mxu0
      %1156 = vmatprep.mubr.f32.mxu0 0.0
      %1157 = vmatmul.mubr.f32.gmra.mrb[0].mxu0 %v932
      %v1158 = vpop.f32.mrb[0].mxu0
      %v1159 = vadd.f32 %v803, %v1158
      %v1160 = vpop.f32.mrb[0].mxu0
      %1161 = vmatprep.mubr.f32.mxu0 0.0
      %1162 = vmatmul.mubr.f32.gmra.mrb[0].mxu0 %v935
      %v1163 = vpop.f32.mrb[0].mxu0
      %v1164 = vadd.f32 %v808, %v1163
      %v1165 = vpop.f32.mrb[0].mxu0
      %1166 = vmatprep.mubr.f32.mxu0 0.0
      %1167 = vmatmul.mubr.f32.gmra.mrb[0].mxu0 %v938
      %v1168 = vpop.f32.mrb[0].mxu0
      %v1169 = vadd.f32 %v813, %v1168
      %v1170 = vpop.f32.mrb[0].mxu0
      %1171 = vmatprep.mubr.f32.mxu0 0.0
      %1172 = vmatmul.mubr.f32.gmra.mrb[0].mxu0 %v941
      %v1173 = vpop.f32.mrb[0].mxu0
      %v1174 = vadd.f32 %v818, %v1173
      %v1175 = vpop.f32.mrb[0].mxu0
      %1176 = vmatprep.mubr.f32.mxu0 0.0
      %1177 = vmatmul.mubr.f32.gmra.mrb[0].mxu0 %v944
      %v1178 = vpop.f32.mrb[0].mxu0
      %v1179 = vadd.f32 %v823, %v1178
      %v1180 = vpop.f32.mrb[0].mxu0
      %1181 = vmatprep.mubr.f32.mxu0 0.0
      %1182 = vmatmul.mubr.f32.gmra.mrb[0].mxu0 %v947
      %v1183 = vpop.f32.mrb[0].mxu0
      %v1184 = vadd.f32 %v828, %v1183
      %v1185 = vpop.f32.mrb[0].mxu0
      %1186 = vmatprep.mubr.f32.mxu0 0.0
      %1187 = vmatmul.mubr.f32.gmra.mrb[0].mxu0 %v950
      %v1188 = vpop.f32.mrb[0].mxu0
      %v1189 = vadd.f32 %v833, %v1188
      %v1190 = vpop.f32.mrb[0].mxu0
      %1191 = vmatprep.mubr.f32.mxu0 0.0
      %1192 = vmatmul.mubr.f32.gmra.mrb[0].mxu0 %v953
      %v1193 = vpop.f32.mrb[0].mxu0
      %v1194 = vadd.f32 %v838, %v1193
      %v1195 = vpop.f32.mrb[0].mxu0
      %1196 = vmatprep.mubr.f32.mxu0 0.0
      %1197 = vmatmul.mubr.f32.gmra.mrb[0].mxu0 %v956
      %v1198 = vpop.f32.mrb[0].mxu0
      %v1199 = vadd.f32 %v843, %v1198
      %v1200 = vpop.f32.mrb[0].mxu0
      %1201 = vmatprep.mubr.f32.mxu0 0.0
      %1202 = vmatmul.mubr.f32.gmra.mrb[0].mxu0 %v959
      %v1203 = vpop.f32.mrb[0].mxu0
      %v1204 = vadd.f32 %v848, %v1203
      %v1205 = vpop.f32.mrb[0].mxu0
      %1206 = vmatprep.mubr.f32.mxu0 0.0
      %1207 = vmatmul.mubr.f32.gmra.mrb[0].mxu0 %v962
      %v1208 = vpop.f32.mrb[0].mxu0
      %v1209 = vadd.f32 %v853, %v1208
      %v1210 = vpop.f32.mrb[0].mxu0
      %1211 = vdwg.mxu0
      %v1212 = vld [vmem:[%s273 + $0x2] sm:$0xff]
      %v1213 = vld [vmem:[%s273 + $0xa] sm:$0xff]
      %v1214 = vld [vmem:[%s273 + $0x12] sm:$0xff]
      %v1215 = vld [vmem:[%s273 + $0x1a] sm:$0xff]
      %v1216 = vld [vmem:[%s273 + $0x22] sm:$0xff]
      %v1217 = vld [vmem:[%s273 + $0x2a] sm:$0xff]
      %v1218 = vld [vmem:[%s273 + $0x32] sm:$0xff]
      %v1219 = vld [vmem:[%s273 + $0x3a] sm:$0xff]
      %v1220 = vld [vmem:[%s273 + $0x42] sm:$0xff]
      %v1221 = vld [vmem:[%s273 + $0x4a] sm:$0xff]
      %v1222 = vld [vmem:[%s273 + $0x52] sm:$0xff]
      %v1223 = vld [vmem:[%s273 + $0x5a] sm:$0xff]
      %v1224 = vld [vmem:[%s273 + $0x62] sm:$0xff]
      %v1225 = vld [vmem:[%s273 + $0x6a] sm:$0xff]
      %v1226 = vld [vmem:[%s273 + $0x72] sm:$0xff]
      %v1227 = vld [vmem:[%s273 + $0x7a] sm:$0xff]
      %v1228 = vld [vmem:[%s273 + $0x82] sm:$0xff]
      %v1229 = vld [vmem:[%s273 + $0x8a] sm:$0xff]
      %v1230 = vld [vmem:[%s273 + $0x92] sm:$0xff]
      %v1231 = vld [vmem:[%s273 + $0x9a] sm:$0xff]
      %v1232 = vld [vmem:[%s273 + $0xa2] sm:$0xff]
      %v1233 = vld [vmem:[%s273 + $0xaa] sm:$0xff]
      %v1234 = vld [vmem:[%s273 + $0xb2] sm:$0xff]
      %v1235 = vld [vmem:[%s273 + $0xba] sm:$0xff]
      %v1236 = vld [vmem:[%s273 + $0xc2] sm:$0xff]
      %v1237 = vld [vmem:[%s273 + $0xca] sm:$0xff]
      %v1238 = vld [vmem:[%s273 + $0xd2] sm:$0xff]
      %v1239 = vld [vmem:[%s273 + $0xda] sm:$0xff]
      %v1240 = vld [vmem:[%s273 + $0xe2] sm:$0xff]
      %v1241 = vld [vmem:[%s273 + $0xea] sm:$0xff]
      %v1242 = vld [vmem:[%s273 + $0xf2] sm:$0xff]
      %v1243 = vld [vmem:[%s273 + $0xfa] sm:$0xff]
      %v1244 = vld [vmem:[%s273 + $0x102] sm:$0xff]
      %v1245 = vld [vmem:[%s273 + $0x10a] sm:$0xff]
      %v1246 = vld [vmem:[%s273 + $0x112] sm:$0xff]
      %v1247 = vld [vmem:[%s273 + $0x11a] sm:$0xff]
      %s1248 = scalar_lea.vmem %s3, 8
      %v1249 = vld [vmem:[%s1248] sm:$0xf]
      %v1251 = vsel %vm498, %v1212, 0
      %v1254 = vsel %vm498, %v1213, 0
      %v1257 = vsel %vm498, %v1214, 0
      %v1260 = vsel %vm498, %v1215, 0
      %v1263 = vsel %vm498, %v1216, 0
      %v1266 = vsel %vm498, %v1217, 0
      %v1269 = vsel %vm498, %v1218, 0
      %v1272 = vsel %vm498, %v1219, 0
      %v1275 = vsel %vm498, %v1220, 0
      %v1278 = vsel %vm498, %v1221, 0
      %v1281 = vsel %vm498, %v1222, 0
      %v1284 = vsel %vm498, %v1223, 0
      %v1287 = vsel %vm498, %v1224, 0
      %v1290 = vsel %vm498, %v1225, 0
      %v1293 = vsel %vm498, %v1226, 0
      %v1296 = vsel %vm498, %v1227, 0
      %v1299 = vsel %vm498, %v1228, 0
      %v1302 = vsel %vm498, %v1229, 0
      %v1305 = vsel %vm498, %v1230, 0
      %v1308 = vsel %vm498, %v1231, 0
      %v1311 = vsel %vm498, %v1232, 0
      %v1314 = vsel %vm498, %v1233, 0
      %v1317 = vsel %vm498, %v1234, 0
      %v1320 = vsel %vm498, %v1235, 0
      %v1323 = vsel %vm498, %v1236, 0
      %v1326 = vsel %vm498, %v1237, 0
      %v1329 = vsel %vm498, %v1238, 0
      %v1332 = vsel %vm498, %v1239, 0
      %v1335 = vsel %vm498, %v1240, 0
      %v1338 = vsel %vm498, %v1241, 0
      %v1341 = vsel %vm498, %v1242, 0
      %v1344 = vsel %vm498, %v1243, 0
      %v1347 = vsel %vm498, %v1244, 0
      %v1350 = vsel %vm498, %v1245, 0
      %v1353 = vsel %vm498, %v1246, 0
      %v1356 = vsel %vm498, %v1247, 0
      %v1359 = vsel %vm607, %v1249, 0
      %1361 = vmatprep.subr.mxu0 0.0
      %1362 = vmatpush1.msra.mxu0 %v1359
      %1363 = vmatprep.subr.mxu0 0.0
      %1364 = vmatpush1.msra.mxu0 0.0
      %1365 = vmatprep.subr.mxu0 0.0
      %1366 = vmatpush1.msra.mxu0 0.0
      %1367 = vmatprep.subr.mxu0 0.0
      %1368 = vmatpush1.msra.mxu0 0.0
      %1369 = vmatprep.subr.mxu0 0.0
      %1370 = vmatpush1.msra.mxu0 0.0
      %1371 = vmatprep.subr.mxu0 0.0
      %1372 = vmatpush1.msra.mxu0 0.0
      %1373 = vmatprep.subr.mxu0 0.0
      %1374 = vmatpush1.msra.mxu0 0.0
      %1375 = vmatprep.subr.mxu0 0.0
      %1376 = vmatpush1.msra.mxu0 0.0
      %1377 = vmatprep.subr.mxu0 0.0
      %1378 = vmatpush1.msra.mxu0 0.0
      %1379 = vmatprep.subr.mxu0 0.0
      %1380 = vmatpush1.msra.mxu0 0.0
      %1381 = vmatprep.subr.mxu0 0.0
      %1382 = vmatpush1.msra.mxu0 0.0
      %1383 = vmatprep.subr.mxu0 0.0
      %1384 = vmatpush1.msra.mxu0 0.0
      %1385 = vmatprep.subr.mxu0 0.0
      %1386 = vmatpush1.msra.mxu0 0.0
      %1387 = vmatprep.subr.mxu0 0.0
      %1388 = vmatpush1.msra.mxu0 0.0
      %1389 = vmatprep.subr.mxu0 0.0
      %1390 = vmatpush1.msra.mxu0 0.0
      %1391 = vmatprep.subr.mxu0 0.0
      %1392 = vmatpush1.msra.mxu0 0.0
      %1393 = vmatprep.subr.mxu0 0.0
      %1394 = vmatpush1.msra.mxu0 0.0
      %1395 = vmatprep.subr.mxu0 0.0
      %1396 = vmatpush1.msra.mxu0 0.0
      %1397 = vmatprep.subr.mxu0 0.0
      %1398 = vmatpush1.msra.mxu0 0.0
      %1399 = vmatprep.subr.mxu0 0.0
      %1400 = vmatpush1.msra.mxu0 0.0
      %1401 = vmatprep.subr.mxu0 0.0
      %1402 = vmatpush1.msra.mxu0 0.0
      %1403 = vmatprep.subr.mxu0 0.0
      %1404 = vmatpush1.msra.mxu0 0.0
      %1405 = vmatprep.subr.mxu0 0.0
      %1406 = vmatpush1.msra.mxu0 0.0
      %1407 = vmatprep.subr.mxu0 0.0
      %1408 = vmatpush1.msra.mxu0 0.0
      %1409 = vmatprep.subr.mxu0 0.0
      %1410 = vmatpush1.msra.mxu0 0.0
      %1411 = vmatprep.subr.mxu0 0.0
      %1412 = vmatpush1.msra.mxu0 0.0
      %1413 = vmatprep.subr.mxu0 0.0
      %1414 = vmatpush1.msra.mxu0 0.0
      %1415 = vmatprep.subr.mxu0 0.0
      %1416 = vmatpush1.msra.mxu0 0.0
      %1417 = vmatprep.subr.mxu0 0.0
      %1418 = vmatpush1.msra.mxu0 0.0
      %1419 = vmatprep.subr.mxu0 0.0
      %1420 = vmatpush1.msra.mxu0 0.0
      %1421 = vmatprep.subr.mxu0 0.0
      %1422 = vmatpush1.msra.mxu0 0.0
      %1423 = vmatprep.subr.mxu0 0.0
      %1424 = vmatpush1.msra.mxu0 0.0
      %1425 = vmatprep.mubr.f32.mxu0 0.0
      %1426 = vmatmul.mubr.f32.gmra.mrb[0].mxu0 %v1251
      %v1427 = vpop.f32.mrb[0].mxu0
      %v1428 = vadd.f32 0.0, %v1427
      %v1429 = vpop.f32.mrb[0].mxu0
      %1430 = vmatprep.mubr.f32.mxu0 0.0
      %1431 = vmatmul.mubr.f32.gmra.mrb[0].mxu0 %v1254
      %v1432 = vpop.f32.mrb[0].mxu0
      %v1433 = vadd.f32 0.0, %v1432
      %v1434 = vpop.f32.mrb[0].mxu0
      %1435 = vmatprep.mubr.f32.mxu0 0.0
      %1436 = vmatmul.mubr.f32.gmra.mrb[0].mxu0 %v1257
      %v1437 = vpop.f32.mrb[0].mxu0
      %v1438 = vadd.f32 0.0, %v1437
      %v1439 = vpop.f32.mrb[0].mxu0
      %1440 = vmatprep.mubr.f32.mxu0 0.0
      %1441 = vmatmul.mubr.f32.gmra.mrb[0].mxu0 %v1260
      %v1442 = vpop.f32.mrb[0].mxu0
      %v1443 = vadd.f32 0.0, %v1442
      %v1444 = vpop.f32.mrb[0].mxu0
      %1445 = vmatprep.mubr.f32.mxu0 0.0
      %1446 = vmatmul.mubr.f32.gmra.mrb[0].mxu0 %v1263
      %v1447 = vpop.f32.mrb[0].mxu0
      %v1448 = vadd.f32 0.0, %v1447
      %v1449 = vpop.f32.mrb[0].mxu0
      %1450 = vmatprep.mubr.f32.mxu0 0.0
      %1451 = vmatmul.mubr.f32.gmra.mrb[0].mxu0 %v1266
      %v1452 = vpop.f32.mrb[0].mxu0
      %v1453 = vadd.f32 0.0, %v1452
      %v1454 = vpop.f32.mrb[0].mxu0
      %1455 = vmatprep.mubr.f32.mxu0 0.0
      %1456 = vmatmul.mubr.f32.gmra.mrb[0].mxu0 %v1269
      %v1457 = vpop.f32.mrb[0].mxu0
      %v1458 = vadd.f32 0.0, %v1457
      %v1459 = vpop.f32.mrb[0].mxu0
      %1460 = vmatprep.mubr.f32.mxu0 0.0
      %1461 = vmatmul.mubr.f32.gmra.mrb[0].mxu0 %v1272
      %v1462 = vpop.f32.mrb[0].mxu0
      %v1463 = vadd.f32 0.0, %v1462
      %v1464 = vpop.f32.mrb[0].mxu0
      %1465 = vmatprep.mubr.f32.mxu0 0.0
      %1466 = vmatmul.mubr.f32.gmra.mrb[0].mxu0 %v1275
      %v1467 = vpop.f32.mrb[0].mxu0
      %v1468 = vadd.f32 0.0, %v1467
      %v1469 = vpop.f32.mrb[0].mxu0
      %1470 = vmatprep.mubr.f32.mxu0 0.0
      %1471 = vmatmul.mubr.f32.gmra.mrb[0].mxu0 %v1278
      %v1472 = vpop.f32.mrb[0].mxu0
      %v1473 = vadd.f32 0.0, %v1472
      %v1474 = vpop.f32.mrb[0].mxu0
      %1475 = vmatprep.mubr.f32.mxu0 0.0
      %1476 = vmatmul.mubr.f32.gmra.mrb[0].mxu0 %v1281
      %v1477 = vpop.f32.mrb[0].mxu0
      %v1478 = vadd.f32 0.0, %v1477
      %v1479 = vpop.f32.mrb[0].mxu0
      %1480 = vmatprep.mubr.f32.mxu0 0.0
      %1481 = vmatmul.mubr.f32.gmra.mrb[0].mxu0 %v1284
      %v1482 = vpop.f32.mrb[0].mxu0
      %v1483 = vadd.f32 0.0, %v1482
      %v1484 = vpop.f32.mrb[0].mxu0
      %1485 = vmatprep.mubr.f32.mxu0 0.0
      %1486 = vmatmul.mubr.f32.gmra.mrb[0].mxu0 %v1287
      %v1487 = vpop.f32.mrb[0].mxu0
      %v1488 = vadd.f32 0.0, %v1487
      %v1489 = vpop.f32.mrb[0].mxu0
      %1490 = vmatprep.mubr.f32.mxu0 0.0
      %1491 = vmatmul.mubr.f32.gmra.mrb[0].mxu0 %v1290
      %v1492 = vpop.f32.mrb[0].mxu0
      %v1493 = vadd.f32 0.0, %v1492
      %v1494 = vpop.f32.mrb[0].mxu0
      %1495 = vmatprep.mubr.f32.mxu0 0.0
      %1496 = vmatmul.mubr.f32.gmra.mrb[0].mxu0 %v1293
      %v1497 = vpop.f32.mrb[0].mxu0
      %v1498 = vadd.f32 0.0, %v1497
      %v1499 = vpop.f32.mrb[0].mxu0
      %1500 = vmatprep.mubr.f32.mxu0 0.0
      %1501 = vmatmul.mubr.f32.gmra.mrb[0].mxu0 %v1296
      %v1502 = vpop.f32.mrb[0].mxu0
      %v1503 = vadd.f32 0.0, %v1502
      %v1504 = vpop.f32.mrb[0].mxu0
      %1505 = vmatprep.mubr.f32.mxu0 0.0
      %1506 = vmatmul.mubr.f32.gmra.mrb[0].mxu0 %v1299
      %v1507 = vpop.f32.mrb[0].mxu0
      %v1508 = vadd.f32 0.0, %v1507
      %v1509 = vpop.f32.mrb[0].mxu0
      %1510 = vmatprep.mubr.f32.mxu0 0.0
      %1511 = vmatmul.mubr.f32.gmra.mrb[0].mxu0 %v1302
      %v1512 = vpop.f32.mrb[0].mxu0
      %v1513 = vadd.f32 0.0, %v1512
      %v1514 = vpop.f32.mrb[0].mxu0
      %1515 = vmatprep.mubr.f32.mxu0 0.0
      %1516 = vmatmul.mubr.f32.gmra.mrb[0].mxu0 %v1305
      %v1517 = vpop.f32.mrb[0].mxu0
      %v1518 = vadd.f32 0.0, %v1517
      %v1519 = vpop.f32.mrb[0].mxu0
      %1520 = vmatprep.mubr.f32.mxu0 0.0
      %1521 = vmatmul.mubr.f32.gmra.mrb[0].mxu0 %v1308
      %v1522 = vpop.f32.mrb[0].mxu0
      %v1523 = vadd.f32 0.0, %v1522
      %v1524 = vpop.f32.mrb[0].mxu0
      %1525 = vmatprep.mubr.f32.mxu0 0.0
      %1526 = vmatmul.mubr.f32.gmra.mrb[0].mxu0 %v1311
      %v1527 = vpop.f32.mrb[0].mxu0
      %v1528 = vadd.f32 0.0, %v1527
      %v1529 = vpop.f32.mrb[0].mxu0
      %1530 = vmatprep.mubr.f32.mxu0 0.0
      %1531 = vmatmul.mubr.f32.gmra.mrb[0].mxu0 %v1314
      %v1532 = vpop.f32.mrb[0].mxu0
      %v1533 = vadd.f32 0.0, %v1532
      %v1534 = vpop.f32.mrb[0].mxu0
      %1535 = vmatprep.mubr.f32.mxu0 0.0
      %1536 = vmatmul.mubr.f32.gmra.mrb[0].mxu0 %v1317
      %v1537 = vpop.f32.mrb[0].mxu0
      %v1538 = vadd.f32 0.0, %v1537
      %v1539 = vpop.f32.mrb[0].mxu0
      %1540 = vmatprep.mubr.f32.mxu0 0.0
      %1541 = vmatmul.mubr.f32.gmra.mrb[0].mxu0 %v1320
      %v1542 = vpop.f32.mrb[0].mxu0
      %v1543 = vadd.f32 0.0, %v1542
      %v1544 = vpop.f32.mrb[0].mxu0
      %1545 = vmatprep.mubr.f32.mxu0 0.0
      %1546 = vmatmul.mubr.f32.gmra.mrb[0].mxu0 %v1323
      %v1547 = vpop.f32.mrb[0].mxu0
      %v1548 = vadd.f32 0.0, %v1547
      %v1549 = vpop.f32.mrb[0].mxu0
      %1550 = vmatprep.mubr.f32.mxu0 0.0
      %1551 = vmatmul.mubr.f32.gmra.mrb[0].mxu0 %v1326
      %v1552 = vpop.f32.mrb[0].mxu0
      %v1553 = vadd.f32 0.0, %v1552
      %v1554 = vpop.f32.mrb[0].mxu0
      %1555 = vmatprep.mubr.f32.mxu0 0.0
      %1556 = vmatmul.mubr.f32.gmra.mrb[0].mxu0 %v1329
      %v1557 = vpop.f32.mrb[0].mxu0
      %v1558 = vadd.f32 0.0, %v1557
      %v1559 = vpop.f32.mrb[0].mxu0
      %1560 = vmatprep.mubr.f32.mxu0 0.0
      %1561 = vmatmul.mubr.f32.gmra.mrb[0].mxu0 %v1332
      %v1562 = vpop.f32.mrb[0].mxu0
      %v1563 = vadd.f32 0.0, %v1562
      %v1564 = vpop.f32.mrb[0].mxu0
      %1565 = vmatprep.mubr.f32.mxu0 0.0
      %1566 = vmatmul.mubr.f32.gmra.mrb[0].mxu0 %v1335
      %v1567 = vpop.f32.mrb[0].mxu0
      %v1568 = vadd.f32 0.0, %v1567
      %v1569 = vpop.f32.mrb[0].mxu0
      %1570 = vmatprep.mubr.f32.mxu0 0.0
      %1571 = vmatmul.mubr.f32.gmra.mrb[0].mxu0 %v1338
      %v1572 = vpop.f32.mrb[0].mxu0
      %v1573 = vadd.f32 0.0, %v1572
      %v1574 = vpop.f32.mrb[0].mxu0
      %1575 = vmatprep.mubr.f32.mxu0 0.0
      %1576 = vmatmul.mubr.f32.gmra.mrb[0].mxu0 %v1341
      %v1577 = vpop.f32.mrb[0].mxu0
      %v1578 = vadd.f32 0.0, %v1577
      %v1579 = vpop.f32.mrb[0].mxu0
      %1580 = vmatprep.mubr.f32.mxu0 0.0
      %1581 = vmatmul.mubr.f32.gmra.mrb[0].mxu0 %v1344
      %v1582 = vpop.f32.mrb[0].mxu0
      %v1583 = vadd.f32 0.0, %v1582
      %v1584 = vpop.f32.mrb[0].mxu0
      %1585 = vmatprep.mubr.f32.mxu0 0.0
      %1586 = vmatmul.mubr.f32.gmra.mrb[0].mxu0 %v1347
      %v1587 = vpop.f32.mrb[0].mxu0
      %v1588 = vadd.f32 0.0, %v1587
      %v1589 = vpop.f32.mrb[0].mxu0
      %1590 = vmatprep.mubr.f32.mxu0 0.0
      %1591 = vmatmul.mubr.f32.gmra.mrb[0].mxu0 %v1350
      %v1592 = vpop.f32.mrb[0].mxu0
      %v1593 = vadd.f32 0.0, %v1592
      %v1594 = vpop.f32.mrb[0].mxu0
      %1595 = vmatprep.mubr.f32.mxu0 0.0
      %1596 = vmatmul.mubr.f32.gmra.mrb[0].mxu0 %v1353
      %v1597 = vpop.f32.mrb[0].mxu0
      %v1598 = vadd.f32 0.0, %v1597
      %v1599 = vpop.f32.mrb[0].mxu0
      %1600 = vmatprep.mubr.f32.mxu0 0.0
      %1601 = vmatmul.mubr.f32.gmra.mrb[0].mxu0 %v1356
      %v1602 = vpop.f32.mrb[0].mxu0
      %v1603 = vadd.f32 0.0, %v1602
      %v1604 = vpop.f32.mrb[0].mxu0
      %1605 = vdwg.mxu0
      %v1606 = vadd.f32 %v1034, %v1428
      %v1607 = vadd.f32 %v1039, %v1433
      %v1608 = vadd.f32 %v1044, %v1438
      %v1609 = vadd.f32 %v1049, %v1443
      %v1610 = vadd.f32 %v1054, %v1448
      %v1611 = vadd.f32 %v1059, %v1453
      %v1612 = vadd.f32 %v1064, %v1458
      %v1613 = vadd.f32 %v1069, %v1463
      %v1614 = vadd.f32 %v1074, %v1468
      %v1615 = vadd.f32 %v1079, %v1473
      %v1616 = vadd.f32 %v1084, %v1478
      %v1617 = vadd.f32 %v1089, %v1483
      %v1618 = vadd.f32 %v1094, %v1488
      %v1619 = vadd.f32 %v1099, %v1493
      %v1620 = vadd.f32 %v1104, %v1498
      %v1621 = vadd.f32 %v1109, %v1503
      %v1622 = vadd.f32 %v1114, %v1508
      %v1623 = vadd.f32 %v1119, %v1513
      %v1624 = vadd.f32 %v1124, %v1518
      %v1625 = vadd.f32 %v1129, %v1523
      %v1626 = vadd.f32 %v1134, %v1528
      %v1627 = vadd.f32 %v1139, %v1533
      %v1628 = vadd.f32 %v1144, %v1538
      %v1629 = vadd.f32 %v1149, %v1543
      %v1630 = vadd.f32 %v1154, %v1548
      %v1631 = vadd.f32 %v1159, %v1553
      %v1632 = vadd.f32 %v1164, %v1558
      %v1633 = vadd.f32 %v1169, %v1563
      %v1634 = vadd.f32 %v1174, %v1568
      %v1635 = vadd.f32 %v1179, %v1573
      %v1636 = vadd.f32 %v1184, %v1578
      %v1637 = vadd.f32 %v1189, %v1583
      %v1638 = vadd.f32 %v1194, %v1588
      %v1639 = vadd.f32 %v1199, %v1593
      %v1640 = vadd.f32 %v1204, %v1598
      %v1641 = vadd.f32 %v1209, %v1603
      %v1642 = vld [vmem:[%s273 + $0x12] sm:$0xff]
      %v1643 = vld [vmem:[%s273 + $0x1a] sm:$0xff]
      %v1644 = vld [vmem:[%s273 + $0x22] sm:$0xff]
      %v1645 = vld [vmem:[%s273 + $0x2a] sm:$0xff]
      %v1646 = vld [vmem:[%s273 + $0x32] sm:$0xff]
      %v1647 = vld [vmem:[%s273 + $0x3a] sm:$0xff]
      %v1648 = vld [vmem:[%s273 + $0x42] sm:$0xff]
      %v1649 = vld [vmem:[%s273 + $0x4a] sm:$0xff]
      %v1650 = vld [vmem:[%s273 + $0x52] sm:$0xff]
      %v1651 = vld [vmem:[%s273 + $0x5a] sm:$0xff]
      %v1652 = vld [vmem:[%s273 + $0x62] sm:$0xff]
      %v1653 = vld [vmem:[%s273 + $0x6a] sm:$0xff]
      %v1654 = vld [vmem:[%s273 + $0x72] sm:$0xff]
      %v1655 = vld [vmem:[%s273 + $0x7a] sm:$0xff]
      %v1656 = vld [vmem:[%s273 + $0x82] sm:$0xff]
      %v1657 = vld [vmem:[%s273 + $0x8a] sm:$0xff]
      %v1658 = vld [vmem:[%s273 + $0x92] sm:$0xff]
      %v1659 = vld [vmem:[%s273 + $0x9a] sm:$0xff]
      %v1660 = vld [vmem:[%s273 + $0xa2] sm:$0xff]
      %v1661 = vld [vmem:[%s273 + $0xaa] sm:$0xff]
      %v1662 = vld [vmem:[%s273 + $0xb2] sm:$0xff]
      %v1663 = vld [vmem:[%s273 + $0xba] sm:$0xff]
      %v1664 = vld [vmem:[%s273 + $0xc2] sm:$0xff]
      %v1665 = vld [vmem:[%s273 + $0xca] sm:$0xff]
      %v1666 = vld [vmem:[%s273 + $0xd2] sm:$0xff]
      %v1667 = vld [vmem:[%s273 + $0xda] sm:$0xff]
      %v1668 = vld [vmem:[%s273 + $0xe2] sm:$0xff]
      %v1669 = vld [vmem:[%s273 + $0xea] sm:$0xff]
      %v1670 = vld [vmem:[%s273 + $0xf2] sm:$0xff]
      %v1671 = vld [vmem:[%s273 + $0xfa] sm:$0xff]
      %v1672 = vld [vmem:[%s273 + $0x102] sm:$0xff]
      %v1673 = vld [vmem:[%s273 + $0x10a] sm:$0xff]
      %v1674 = vld [vmem:[%s273 + $0x112] sm:$0xff]
      %v1675 = vld [vmem:[%s273 + $0x11a] sm:$0xff]
      %v1676 = vld [vmem:[%s273 + $0x122] sm:$0xff]
      %v1677 = vld [vmem:[%s273 + $0x12a] sm:$0xff]
      %s1678 = scalar_lea.vmem %s3, 12
      %v1679 = vld [vmem:[%s1678] sm:$0xf]
      %v1681 = vsel %vm498, %v1642, 0
      %v1684 = vsel %vm498, %v1643, 0
      %v1687 = vsel %vm498, %v1644, 0
      %v1690 = vsel %vm498, %v1645, 0
      %v1693 = vsel %vm498, %v1646, 0
      %v1696 = vsel %vm498, %v1647, 0
      %v1699 = vsel %vm498, %v1648, 0
      %v1702 = vsel %vm498, %v1649, 0
      %v1705 = vsel %vm498, %v1650, 0
      %v1708 = vsel %vm498, %v1651, 0
      %v1711 = vsel %vm498, %v1652, 0
      %v1714 = vsel %vm498, %v1653, 0
      %v1717 = vsel %vm498, %v1654, 0
      %v1720 = vsel %vm498, %v1655, 0
      %v1723 = vsel %vm498, %v1656, 0
      %v1726 = vsel %vm498, %v1657, 0
      %v1729 = vsel %vm498, %v1658, 0
      %v1732 = vsel %vm498, %v1659, 0
      %v1735 = vsel %vm498, %v1660, 0
      %v1738 = vsel %vm498, %v1661, 0
      %v1741 = vsel %vm498, %v1662, 0
      %v1744 = vsel %vm498, %v1663, 0
      %v1747 = vsel %vm498, %v1664, 0
      %v1750 = vsel %vm498, %v1665, 0
      %v1753 = vsel %vm498, %v1666, 0
      %v1756 = vsel %vm498, %v1667, 0
      %v1759 = vsel %vm498, %v1668, 0
      %v1762 = vsel %vm498, %v1669, 0
      %v1765 = vsel %vm498, %v1670, 0
      %v1768 = vsel %vm498, %v1671, 0
      %v1771 = vsel %vm498, %v1672, 0
      %v1774 = vsel %vm498, %v1673, 0
      %v1777 = vsel %vm498, %v1674, 0
      %v1780 = vsel %vm498, %v1675, 0
      %v1783 = vsel %vm498, %v1676, 0
      %v1786 = vsel %vm498, %v1677, 0
      %v1789 = vsel %vm607, %v1679, 0
      %1791 = vmatprep.subr.mxu0 0.0
      %1792 = vmatpush1.msra.mxu0 %v1789
      %1793 = vmatprep.subr.mxu0 0.0
      %1794 = vmatpush1.msra.mxu0 0.0
      %1795 = vmatprep.subr.mxu0 0.0
      %1796 = vmatpush1.msra.mxu0 0.0
      %1797 = vmatprep.subr.mxu0 0.0
      %1798 = vmatpush1.msra.mxu0 0.0
      %1799 = vmatprep.subr.mxu0 0.0
      %1800 = vmatpush1.msra.mxu0 0.0
      %1801 = vmatprep.subr.mxu0 0.0
      %1802 = vmatpush1.msra.mxu0 0.0
      %1803 = vmatprep.subr.mxu0 0.0
      %1804 = vmatpush1.msra.mxu0 0.0
      %1805 = vmatprep.subr.mxu0 0.0
      %1806 = vmatpush1.msra.mxu0 0.0
      %1807 = vmatprep.subr.mxu0 0.0
      %1808 = vmatpush1.msra.mxu0 0.0
      %1809 = vmatprep.subr.mxu0 0.0
      %1810 = vmatpush1.msra.mxu0 0.0
      %1811 = vmatprep.subr.mxu0 0.0
      %1812 = vmatpush1.msra.mxu0 0.0
      %1813 = vmatprep.subr.mxu0 0.0
      %1814 = vmatpush1.msra.mxu0 0.0
      %1815 = vmatprep.subr.mxu0 0.0
      %1816 = vmatpush1.msra.mxu0 0.0
      %1817 = vmatprep.subr.mxu0 0.0
      %1818 = vmatpush1.msra.mxu0 0.0
      %1819 = vmatprep.subr.mxu0 0.0
      %1820 = vmatpush1.msra.mxu0 0.0
      %1821 = vmatprep.subr.mxu0 0.0
      %1822 = vmatpush1.msra.mxu0 0.0
      %1823 = vmatprep.subr.mxu0 0.0
      %1824 = vmatpush1.msra.mxu0 0.0
      %1825 = vmatprep.subr.mxu0 0.0
      %1826 = vmatpush1.msra.mxu0 0.0
      %1827 = vmatprep.subr.mxu0 0.0
      %1828 = vmatpush1.msra.mxu0 0.0
      %1829 = vmatprep.subr.mxu0 0.0
      %1830 = vmatpush1.msra.mxu0 0.0
      %1831 = vmatprep.subr.mxu0 0.0
      %1832 = vmatpush1.msra.mxu0 0.0
      %1833 = vmatprep.subr.mxu0 0.0
      %1834 = vmatpush1.msra.mxu0 0.0
      %1835 = vmatprep.subr.mxu0 0.0
      %1836 = vmatpush1.msra.mxu0 0.0
      %1837 = vmatprep.subr.mxu0 0.0
      %1838 = vmatpush1.msra.mxu0 0.0
      %1839 = vmatprep.subr.mxu0 0.0
      %1840 = vmatpush1.msra.mxu0 0.0
      %1841 = vmatprep.subr.mxu0 0.0
      %1842 = vmatpush1.msra.mxu0 0.0
      %1843 = vmatprep.subr.mxu0 0.0
      %1844 = vmatpush1.msra.mxu0 0.0
      %1845 = vmatprep.subr.mxu0 0.0
      %1846 = vmatpush1.msra.mxu0 0.0
      %1847 = vmatprep.subr.mxu0 0.0
      %1848 = vmatpush1.msra.mxu0 0.0
      %1849 = vmatprep.subr.mxu0 0.0
      %1850 = vmatpush1.msra.mxu0 0.0
      %1851 = vmatprep.subr.mxu0 0.0
      %1852 = vmatpush1.msra.mxu0 0.0
      %1853 = vmatprep.subr.mxu0 0.0
      %1854 = vmatpush1.msra.mxu0 0.0
      %1855 = vmatprep.mubr.f32.mxu0 0.0
      %1856 = vmatmul.mubr.f32.gmra.mrb[0].mxu0 %v1681
      %v1857 = vpop.f32.mrb[0].mxu0
      %v1858 = vadd.f32 0.0, %v1857
      %v1859 = vpop.f32.mrb[0].mxu0
      %1860 = vmatprep.mubr.f32.mxu0 0.0
      %1861 = vmatmul.mubr.f32.gmra.mrb[0].mxu0 %v1684
      %v1862 = vpop.f32.mrb[0].mxu0
      %v1863 = vadd.f32 0.0, %v1862
      %v1864 = vpop.f32.mrb[0].mxu0
      %1865 = vmatprep.mubr.f32.mxu0 0.0
      %1866 = vmatmul.mubr.f32.gmra.mrb[0].mxu0 %v1687
      %v1867 = vpop.f32.mrb[0].mxu0
      %v1868 = vadd.f32 0.0, %v1867
      %v1869 = vpop.f32.mrb[0].mxu0
      %1870 = vmatprep.mubr.f32.mxu0 0.0
      %1871 = vmatmul.mubr.f32.gmra.mrb[0].mxu0 %v1690
      %v1872 = vpop.f32.mrb[0].mxu0
      %v1873 = vadd.f32 0.0, %v1872
      %v1874 = vpop.f32.mrb[0].mxu0
      %1875 = vmatprep.mubr.f32.mxu0 0.0
      %1876 = vmatmul.mubr.f32.gmra.mrb[0].mxu0 %v1693
      %v1877 = vpop.f32.mrb[0].mxu0
      %v1878 = vadd.f32 0.0, %v1877
      %v1879 = vpop.f32.mrb[0].mxu0
      %1880 = vmatprep.mubr.f32.mxu0 0.0
      %1881 = vmatmul.mubr.f32.gmra.mrb[0].mxu0 %v1696
      %v1882 = vpop.f32.mrb[0].mxu0
      %v1883 = vadd.f32 0.0, %v1882
      %v1884 = vpop.f32.mrb[0].mxu0
      %1885 = vmatprep.mubr.f32.mxu0 0.0
      %1886 = vmatmul.mubr.f32.gmra.mrb[0].mxu0 %v1699
      %v1887 = vpop.f32.mrb[0].mxu0
      %v1888 = vadd.f32 0.0, %v1887
      %v1889 = vpop.f32.mrb[0].mxu0
      %1890 = vmatprep.mubr.f32.mxu0 0.0
      %1891 = vmatmul.mubr.f32.gmra.mrb[0].mxu0 %v1702
      %v1892 = vpop.f32.mrb[0].mxu0
      %v1893 = vadd.f32 0.0, %v1892
      %v1894 = vpop.f32.mrb[0].mxu0
      %1895 = vmatprep.mubr.f32.mxu0 0.0
      %1896 = vmatmul.mubr.f32.gmra.mrb[0].mxu0 %v1705
      %v1897 = vpop.f32.mrb[0].mxu0
      %v1898 = vadd.f32 0.0, %v1897
      %v1899 = vpop.f32.mrb[0].mxu0
      %1900 = vmatprep.mubr.f32.mxu0 0.0
      %1901 = vmatmul.mubr.f32.gmra.mrb[0].mxu0 %v1708
      %v1902 = vpop.f32.mrb[0].mxu0
      %v1903 = vadd.f32 0.0, %v1902
      %v1904 = vpop.f32.mrb[0].mxu0
      %1905 = vmatprep.mubr.f32.mxu0 0.0
      %1906 = vmatmul.mubr.f32.gmra.mrb[0].mxu0 %v1711
      %v1907 = vpop.f32.mrb[0].mxu0
      %v1908 = vadd.f32 0.0, %v1907
      %v1909 = vpop.f32.mrb[0].mxu0
      %1910 = vmatprep.mubr.f32.mxu0 0.0
      %1911 = vmatmul.mubr.f32.gmra.mrb[0].mxu0 %v1714
      %v1912 = vpop.f32.mrb[0].mxu0
      %v1913 = vadd.f32 0.0, %v1912
      %v1914 = vpop.f32.mrb[0].mxu0
      %1915 = vmatprep.mubr.f32.mxu0 0.0
      %1916 = vmatmul.mubr.f32.gmra.mrb[0].mxu0 %v1717
      %v1917 = vpop.f32.mrb[0].mxu0
      %v1918 = vadd.f32 0.0, %v1917
      %v1919 = vpop.f32.mrb[0].mxu0
      %1920 = vmatprep.mubr.f32.mxu0 0.0
      %1921 = vmatmul.mubr.f32.gmra.mrb[0].mxu0 %v1720
      %v1922 = vpop.f32.mrb[0].mxu0
      %v1923 = vadd.f32 0.0, %v1922
      %v1924 = vpop.f32.mrb[0].mxu0
      %1925 = vmatprep.mubr.f32.mxu0 0.0
      %1926 = vmatmul.mubr.f32.gmra.mrb[0].mxu0 %v1723
      %v1927 = vpop.f32.mrb[0].mxu0
      %v1928 = vadd.f32 0.0, %v1927
      %v1929 = vpop.f32.mrb[0].mxu0
      %1930 = vmatprep.mubr.f32.mxu0 0.0
      %1931 = vmatmul.mubr.f32.gmra.mrb[0].mxu0 %v1726
      %v1932 = vpop.f32.mrb[0].mxu0
      %v1933 = vadd.f32 0.0, %v1932
      %v1934 = vpop.f32.mrb[0].mxu0
      %1935 = vmatprep.mubr.f32.mxu0 0.0
      %1936 = vmatmul.mubr.f32.gmra.mrb[0].mxu0 %v1729
      %v1937 = vpop.f32.mrb[0].mxu0
      %v1938 = vadd.f32 0.0, %v1937
      %v1939 = vpop.f32.mrb[0].mxu0
      %1940 = vmatprep.mubr.f32.mxu0 0.0
      %1941 = vmatmul.mubr.f32.gmra.mrb[0].mxu0 %v1732
      %v1942 = vpop.f32.mrb[0].mxu0
      %v1943 = vadd.f32 0.0, %v1942
      %v1944 = vpop.f32.mrb[0].mxu0
      %1945 = vmatprep.mubr.f32.mxu0 0.0
      %1946 = vmatmul.mubr.f32.gmra.mrb[0].mxu0 %v1735
      %v1947 = vpop.f32.mrb[0].mxu0
      %v1948 = vadd.f32 0.0, %v1947
      %v1949 = vpop.f32.mrb[0].mxu0
      %1950 = vmatprep.mubr.f32.mxu0 0.0
      %1951 = vmatmul.mubr.f32.gmra.mrb[0].mxu0 %v1738
      %v1952 = vpop.f32.mrb[0].mxu0
      %v1953 = vadd.f32 0.0, %v1952
      %v1954 = vpop.f32.mrb[0].mxu0
      %1955 = vmatprep.mubr.f32.mxu0 0.0
      %1956 = vmatmul.mubr.f32.gmra.mrb[0].mxu0 %v1741
      %v1957 = vpop.f32.mrb[0].mxu0
      %v1958 = vadd.f32 0.0, %v1957
      %v1959 = vpop.f32.mrb[0].mxu0
      %1960 = vmatprep.mubr.f32.mxu0 0.0
      %1961 = vmatmul.mubr.f32.gmra.mrb[0].mxu0 %v1744
      %v1962 = vpop.f32.mrb[0].mxu0
      %v1963 = vadd.f32 0.0, %v1962
      %v1964 = vpop.f32.mrb[0].mxu0
      %1965 = vmatprep.mubr.f32.mxu0 0.0
      %1966 = vmatmul.mubr.f32.gmra.mrb[0].mxu0 %v1747
      %v1967 = vpop.f32.mrb[0].mxu0
      %v1968 = vadd.f32 0.0, %v1967
      %v1969 = vpop.f32.mrb[0].mxu0
      %1970 = vmatprep.mubr.f32.mxu0 0.0
      %1971 = vmatmul.mubr.f32.gmra.mrb[0].mxu0 %v1750
      %v1972 = vpop.f32.mrb[0].mxu0
      %v1973 = vadd.f32 0.0, %v1972
      %v1974 = vpop.f32.mrb[0].mxu0
      %1975 = vmatprep.mubr.f32.mxu0 0.0
      %1976 = vmatmul.mubr.f32.gmra.mrb[0].mxu0 %v1753
      %v1977 = vpop.f32.mrb[0].mxu0
      %v1978 = vadd.f32 0.0, %v1977
      %v1979 = vpop.f32.mrb[0].mxu0
      %1980 = vmatprep.mubr.f32.mxu0 0.0
      %1981 = vmatmul.mubr.f32.gmra.mrb[0].mxu0 %v1756
      %v1982 = vpop.f32.mrb[0].mxu0
      %v1983 = vadd.f32 0.0, %v1982
      %v1984 = vpop.f32.mrb[0].mxu0
      %1985 = vmatprep.mubr.f32.mxu0 0.0
      %1986 = vmatmul.mubr.f32.gmra.mrb[0].mxu0 %v1759
      %v1987 = vpop.f32.mrb[0].mxu0
      %v1988 = vadd.f32 0.0, %v1987
      %v1989 = vpop.f32.mrb[0].mxu0
      %1990 = vmatprep.mubr.f32.mxu0 0.0
      %1991 = vmatmul.mubr.f32.gmra.mrb[0].mxu0 %v1762
      %v1992 = vpop.f32.mrb[0].mxu0
      %v1993 = vadd.f32 0.0, %v1992
      %v1994 = vpop.f32.mrb[0].mxu0
      %1995 = vmatprep.mubr.f32.mxu0 0.0
      %1996 = vmatmul.mubr.f32.gmra.mrb[0].mxu0 %v1765
      %v1997 = vpop.f32.mrb[0].mxu0
      %v1998 = vadd.f32 0.0, %v1997
      %v1999 = vpop.f32.mrb[0].mxu0
      %2000 = vmatprep.mubr.f32.mxu0 0.0
      %2001 = vmatmul.mubr.f32.gmra.mrb[0].mxu0 %v1768
      %v2002 = vpop.f32.mrb[0].mxu0
      %v2003 = vadd.f32 0.0, %v2002
      %v2004 = vpop.f32.mrb[0].mxu0
      %2005 = vmatprep.mubr.f32.mxu0 0.0
      %2006 = vmatmul.mubr.f32.gmra.mrb[0].mxu0 %v1771
      %v2007 = vpop.f32.mrb[0].mxu0
      %v2008 = vadd.f32 0.0, %v2007
      %v2009 = vpop.f32.mrb[0].mxu0
      %2010 = vmatprep.mubr.f32.mxu0 0.0
      %2011 = vmatmul.mubr.f32.gmra.mrb[0].mxu0 %v1774
      %v2012 = vpop.f32.mrb[0].mxu0
      %v2013 = vadd.f32 0.0, %v2012
      %v2014 = vpop.f32.mrb[0].mxu0
      %2015 = vmatprep.mubr.f32.mxu0 0.0
      %2016 = vmatmul.mubr.f32.gmra.mrb[0].mxu0 %v1777
      %v2017 = vpop.f32.mrb[0].mxu0
      %v2018 = vadd.f32 0.0, %v2017
      %v2019 = vpop.f32.mrb[0].mxu0
      %2020 = vmatprep.mubr.f32.mxu0 0.0
      %2021 = vmatmul.mubr.f32.gmra.mrb[0].mxu0 %v1780
      %v2022 = vpop.f32.mrb[0].mxu0
      %v2023 = vadd.f32 0.0, %v2022
      %v2024 = vpop.f32.mrb[0].mxu0
      %2025 = vmatprep.mubr.f32.mxu0 0.0
      %2026 = vmatmul.mubr.f32.gmra.mrb[0].mxu0 %v1783
      %v2027 = vpop.f32.mrb[0].mxu0
      %v2028 = vadd.f32 0.0, %v2027
      %v2029 = vpop.f32.mrb[0].mxu0
      %2030 = vmatprep.mubr.f32.mxu0 0.0
      %2031 = vmatmul.mubr.f32.gmra.mrb[0].mxu0 %v1786
      %v2032 = vpop.f32.mrb[0].mxu0
      %v2033 = vadd.f32 0.0, %v2032
      %v2034 = vpop.f32.mrb[0].mxu0
      %2035 = vdwg.mxu0
      %v2036 = vadd.f32 %v1606, %v1858
      %v2037 = vadd.f32 %v1607, %v1863
      %v2038 = vadd.f32 %v1608, %v1868
      %v2039 = vadd.f32 %v1609, %v1873
      %v2040 = vadd.f32 %v1610, %v1878
      %v2041 = vadd.f32 %v1611, %v1883
      %v2042 = vadd.f32 %v1612, %v1888
      %v2043 = vadd.f32 %v1613, %v1893
      %v2044 = vadd.f32 %v1614, %v1898
      %v2045 = vadd.f32 %v1615, %v1903
      %v2046 = vadd.f32 %v1616, %v1908
      %v2047 = vadd.f32 %v1617, %v1913
      %v2048 = vadd.f32 %v1618, %v1918
      %v2049 = vadd.f32 %v1619, %v1923
      %v2050 = vadd.f32 %v1620, %v1928
      %v2051 = vadd.f32 %v1621, %v1933
      %v2052 = vadd.f32 %v1622, %v1938
      %v2053 = vadd.f32 %v1623, %v1943
      %v2054 = vadd.f32 %v1624, %v1948
      %v2055 = vadd.f32 %v1625, %v1953
      %v2056 = vadd.f32 %v1626, %v1958
      %v2057 = vadd.f32 %v1627, %v1963
      %v2058 = vadd.f32 %v1628, %v1968
      %v2059 = vadd.f32 %v1629, %v1973
      %v2060 = vadd.f32 %v1630, %v1978
      %v2061 = vadd.f32 %v1631, %v1983
      %v2062 = vadd.f32 %v1632, %v1988
      %v2063 = vadd.f32 %v1633, %v1993
      %v2064 = vadd.f32 %v1634, %v1998
      %v2065 = vadd.f32 %v1635, %v2003
      %v2066 = vadd.f32 %v1636, %v2008
      %v2067 = vadd.f32 %v1637, %v2013
      %v2068 = vadd.f32 %v1638, %v2018
      %v2069 = vadd.f32 %v1639, %v2023
      %v2070 = vadd.f32 %v1640, %v2028
      %v2071 = vadd.f32 %v1641, %v2033
      %v2072 = vld [vmem:[%s273 + $0x13] sm:$0xff]
      %v2073 = vld [vmem:[%s273 + $0x1b] sm:$0xff]
      %v2074 = vld [vmem:[%s273 + $0x23] sm:$0xff]
      %v2075 = vld [vmem:[%s273 + $0x2b] sm:$0xff]
      %v2076 = vld [vmem:[%s273 + $0x33] sm:$0xff]
      %v2077 = vld [vmem:[%s273 + $0x3b] sm:$0xff]
      %v2078 = vld [vmem:[%s273 + $0x43] sm:$0xff]
      %v2079 = vld [vmem:[%s273 + $0x4b] sm:$0xff]
      %v2080 = vld [vmem:[%s273 + $0x53] sm:$0xff]
      %v2081 = vld [vmem:[%s273 + $0x5b] sm:$0xff]
      %v2082 = vld [vmem:[%s273 + $0x63] sm:$0xff]
      %v2083 = vld [vmem:[%s273 + $0x6b] sm:$0xff]
      %v2084 = vld [vmem:[%s273 + $0x73] sm:$0xff]
      %v2085 = vld [vmem:[%s273 + $0x7b] sm:$0xff]
      %v2086 = vld [vmem:[%s273 + $0x83] sm:$0xff]
      %v2087 = vld [vmem:[%s273 + $0x8b] sm:$0xff]
      %v2088 = vld [vmem:[%s273 + $0x93] sm:$0xff]
      %v2089 = vld [vmem:[%s273 + $0x9b] sm:$0xff]
      %v2090 = vld [vmem:[%s273 + $0xa3] sm:$0xff]
      %v2091 = vld [vmem:[%s273 + $0xab] sm:$0xff]
      %v2092 = vld [vmem:[%s273 + $0xb3] sm:$0xff]
      %v2093 = vld [vmem:[%s273 + $0xbb] sm:$0xff]
      %v2094 = vld [vmem:[%s273 + $0xc3] sm:$0xff]
      %v2095 = vld [vmem:[%s273 + $0xcb] sm:$0xff]
      %v2096 = vld [vmem:[%s273 + $0xd3] sm:$0xff]
      %v2097 = vld [vmem:[%s273 + $0xdb] sm:$0xff]
      %v2098 = vld [vmem:[%s273 + $0xe3] sm:$0xff]
      %v2099 = vld [vmem:[%s273 + $0xeb] sm:$0xff]
      %v2100 = vld [vmem:[%s273 + $0xf3] sm:$0xff]
      %v2101 = vld [vmem:[%s273 + $0xfb] sm:$0xff]
      %v2102 = vld [vmem:[%s273 + $0x103] sm:$0xff]
      %v2103 = vld [vmem:[%s273 + $0x10b] sm:$0xff]
      %v2104 = vld [vmem:[%s273 + $0x113] sm:$0xff]
      %v2105 = vld [vmem:[%s273 + $0x11b] sm:$0xff]
      %v2106 = vld [vmem:[%s273 + $0x123] sm:$0xff]
      %v2107 = vld [vmem:[%s273 + $0x12b] sm:$0xff]
      %s2108 = scalar_lea.vmem %s3, 16
      %v2109 = vld [vmem:[%s2108] sm:$0xf]
      %v2111 = vsel %vm498, %v2072, 0
      %v2114 = vsel %vm498, %v2073, 0
      %v2117 = vsel %vm498, %v2074, 0
      %v2120 = vsel %vm498, %v2075, 0
      %v2123 = vsel %vm498, %v2076, 0
      %v2126 = vsel %vm498, %v2077, 0
      %v2129 = vsel %vm498, %v2078, 0
      %v2132 = vsel %vm498, %v2079, 0
      %v2135 = vsel %vm498, %v2080, 0
      %v2138 = vsel %vm498, %v2081, 0
      %v2141 = vsel %vm498, %v2082, 0
      %v2144 = vsel %vm498, %v2083, 0
      %v2147 = vsel %vm498, %v2084, 0
      %v2150 = vsel %vm498, %v2085, 0
      %v2153 = vsel %vm498, %v2086, 0
      %v2156 = vsel %vm498, %v2087, 0
      %v2159 = vsel %vm498, %v2088, 0
      %v2162 = vsel %vm498, %v2089, 0
      %v2165 = vsel %vm498, %v2090, 0
      %v2168 = vsel %vm498, %v2091, 0
      %v2171 = vsel %vm498, %v2092, 0
      %v2174 = vsel %vm498, %v2093, 0
      %v2177 = vsel %vm498, %v2094, 0
      %v2180 = vsel %vm498, %v2095, 0
      %v2183 = vsel %vm498, %v2096, 0
      %v2186 = vsel %vm498, %v2097, 0
      %v2189 = vsel %vm498, %v2098, 0
      %v2192 = vsel %vm498, %v2099, 0
      %v2195 = vsel %vm498, %v2100, 0
      %v2198 = vsel %vm498, %v2101, 0
      %v2201 = vsel %vm498, %v2102, 0
      %v2204 = vsel %vm498, %v2103, 0
      %v2207 = vsel %vm498, %v2104, 0
      %v2210 = vsel %vm498, %v2105, 0
      %v2213 = vsel %vm498, %v2106, 0
      %v2216 = vsel %vm498, %v2107, 0
      %v2219 = vsel %vm607, %v2109, 0
      %2221 = vmatprep.subr.mxu0 0.0
      %2222 = vmatpush1.msra.mxu0 %v2219
      %2223 = vmatprep.subr.mxu0 0.0
      %2224 = vmatpush1.msra.mxu0 0.0
      %2225 = vmatprep.subr.mxu0 0.0
      %2226 = vmatpush1.msra.mxu0 0.0
      %2227 = vmatprep.subr.mxu0 0.0
      %2228 = vmatpush1.msra.mxu0 0.0
      %2229 = vmatprep.subr.mxu0 0.0
      %2230 = vmatpush1.msra.mxu0 0.0
      %2231 = vmatprep.subr.mxu0 0.0
      %2232 = vmatpush1.msra.mxu0 0.0
      %2233 = vmatprep.subr.mxu0 0.0
      %2234 = vmatpush1.msra.mxu0 0.0
      %2235 = vmatprep.subr.mxu0 0.0
      %2236 = vmatpush1.msra.mxu0 0.0
      %2237 = vmatprep.subr.mxu0 0.0
      %2238 = vmatpush1.msra.mxu0 0.0
      %2239 = vmatprep.subr.mxu0 0.0
      %2240 = vmatpush1.msra.mxu0 0.0
      %2241 = vmatprep.subr.mxu0 0.0
      %2242 = vmatpush1.msra.mxu0 0.0
      %2243 = vmatprep.subr.mxu0 0.0
      %2244 = vmatpush1.msra.mxu0 0.0
      %2245 = vmatprep.subr.mxu0 0.0
      %2246 = vmatpush1.msra.mxu0 0.0
      %2247 = vmatprep.subr.mxu0 0.0
      %2248 = vmatpush1.msra.mxu0 0.0
      %2249 = vmatprep.subr.mxu0 0.0
      %2250 = vmatpush1.msra.mxu0 0.0
      %2251 = vmatprep.subr.mxu0 0.0
      %2252 = vmatpush1.msra.mxu0 0.0
      %2253 = vmatprep.subr.mxu0 0.0
      %2254 = vmatpush1.msra.mxu0 0.0
      %2255 = vmatprep.subr.mxu0 0.0
      %2256 = vmatpush1.msra.mxu0 0.0
      %2257 = vmatprep.subr.mxu0 0.0
      %2258 = vmatpush1.msra.mxu0 0.0
      %2259 = vmatprep.subr.mxu0 0.0
      %2260 = vmatpush1.msra.mxu0 0.0
      %2261 = vmatprep.subr.mxu0 0.0
      %2262 = vmatpush1.msra.mxu0 0.0
      %2263 = vmatprep.subr.mxu0 0.0
      %2264 = vmatpush1.msra.mxu0 0.0
      %2265 = vmatprep.subr.mxu0 0.0
      %2266 = vmatpush1.msra.mxu0 0.0
      %2267 = vmatprep.subr.mxu0 0.0
      %2268 = vmatpush1.msra.mxu0 0.0
      %2269 = vmatprep.subr.mxu0 0.0
      %2270 = vmatpush1.msra.mxu0 0.0
      %2271 = vmatprep.subr.mxu0 0.0
      %2272 = vmatpush1.msra.mxu0 0.0
      %2273 = vmatprep.subr.mxu0 0.0
      %2274 = vmatpush1.msra.mxu0 0.0
      %2275 = vmatprep.subr.mxu0 0.0
      %2276 = vmatpush1.msra.mxu0 0.0
      %2277 = vmatprep.subr.mxu0 0.0
      %2278 = vmatpush1.msra.mxu0 0.0
      %2279 = vmatprep.subr.mxu0 0.0
      %2280 = vmatpush1.msra.mxu0 0.0
      %2281 = vmatprep.subr.mxu0 0.0
      %2282 = vmatpush1.msra.mxu0 0.0
      %2283 = vmatprep.subr.mxu0 0.0
      %2284 = vmatpush1.msra.mxu0 0.0
      %2285 = vmatprep.mubr.f32.mxu0 0.0
      %2286 = vmatmul.mubr.f32.gmra.mrb[0].mxu0 %v2111
      %v2287 = vpop.f32.mrb[0].mxu0
      %v2288 = vadd.f32 0.0, %v2287
      %v2289 = vpop.f32.mrb[0].mxu0
      %2290 = vmatprep.mubr.f32.mxu0 0.0
      %2291 = vmatmul.mubr.f32.gmra.mrb[0].mxu0 %v2114
      %v2292 = vpop.f32.mrb[0].mxu0
      %v2293 = vadd.f32 0.0, %v2292
      %v2294 = vpop.f32.mrb[0].mxu0
      %2295 = vmatprep.mubr.f32.mxu0 0.0
      %2296 = vmatmul.mubr.f32.gmra.mrb[0].mxu0 %v2117
      %v2297 = vpop.f32.mrb[0].mxu0
      %v2298 = vadd.f32 0.0, %v2297
      %v2299 = vpop.f32.mrb[0].mxu0
      %2300 = vmatprep.mubr.f32.mxu0 0.0
      %2301 = vmatmul.mubr.f32.gmra.mrb[0].mxu0 %v2120
      %v2302 = vpop.f32.mrb[0].mxu0
      %v2303 = vadd.f32 0.0, %v2302
      %v2304 = vpop.f32.mrb[0].mxu0
      %2305 = vmatprep.mubr.f32.mxu0 0.0
      %2306 = vmatmul.mubr.f32.gmra.mrb[0].mxu0 %v2123
      %v2307 = vpop.f32.mrb[0].mxu0
      %v2308 = vadd.f32 0.0, %v2307
      %v2309 = vpop.f32.mrb[0].mxu0
      %2310 = vmatprep.mubr.f32.mxu0 0.0
      %2311 = vmatmul.mubr.f32.gmra.mrb[0].mxu0 %v2126
      %v2312 = vpop.f32.mrb[0].mxu0
      %v2313 = vadd.f32 0.0, %v2312
      %v2314 = vpop.f32.mrb[0].mxu0
      %2315 = vmatprep.mubr.f32.mxu0 0.0
      %2316 = vmatmul.mubr.f32.gmra.mrb[0].mxu0 %v2129
      %v2317 = vpop.f32.mrb[0].mxu0
      %v2318 = vadd.f32 0.0, %v2317
      %v2319 = vpop.f32.mrb[0].mxu0
      %2320 = vmatprep.mubr.f32.mxu0 0.0
      %2321 = vmatmul.mubr.f32.gmra.mrb[0].mxu0 %v2132
      %v2322 = vpop.f32.mrb[0].mxu0
      %v2323 = vadd.f32 0.0, %v2322
      %v2324 = vpop.f32.mrb[0].mxu0
      %2325 = vmatprep.mubr.f32.mxu0 0.0
      %2326 = vmatmul.mubr.f32.gmra.mrb[0].mxu0 %v2135
      %v2327 = vpop.f32.mrb[0].mxu0
      %v2328 = vadd.f32 0.0, %v2327
      %v2329 = vpop.f32.mrb[0].mxu0
      %2330 = vmatprep.mubr.f32.mxu0 0.0
      %2331 = vmatmul.mubr.f32.gmra.mrb[0].mxu0 %v2138
      %v2332 = vpop.f32.mrb[0].mxu0
      %v2333 = vadd.f32 0.0, %v2332
      %v2334 = vpop.f32.mrb[0].mxu0
      %2335 = vmatprep.mubr.f32.mxu0 0.0
      %2336 = vmatmul.mubr.f32.gmra.mrb[0].mxu0 %v2141
      %v2337 = vpop.f32.mrb[0].mxu0
      %v2338 = vadd.f32 0.0, %v2337
      %v2339 = vpop.f32.mrb[0].mxu0
      %2340 = vmatprep.mubr.f32.mxu0 0.0
      %2341 = vmatmul.mubr.f32.gmra.mrb[0].mxu0 %v2144
      %v2342 = vpop.f32.mrb[0].mxu0
      %v2343 = vadd.f32 0.0, %v2342
      %v2344 = vpop.f32.mrb[0].mxu0
      %2345 = vmatprep.mubr.f32.mxu0 0.0
      %2346 = vmatmul.mubr.f32.gmra.mrb[0].mxu0 %v2147
      %v2347 = vpop.f32.mrb[0].mxu0
      %v2348 = vadd.f32 0.0, %v2347
      %v2349 = vpop.f32.mrb[0].mxu0
      %2350 = vmatprep.mubr.f32.mxu0 0.0
      %2351 = vmatmul.mubr.f32.gmra.mrb[0].mxu0 %v2150
      %v2352 = vpop.f32.mrb[0].mxu0
      %v2353 = vadd.f32 0.0, %v2352
      %v2354 = vpop.f32.mrb[0].mxu0
      %2355 = vmatprep.mubr.f32.mxu0 0.0
      %2356 = vmatmul.mubr.f32.gmra.mrb[0].mxu0 %v2153
      %v2357 = vpop.f32.mrb[0].mxu0
      %v2358 = vadd.f32 0.0, %v2357
      %v2359 = vpop.f32.mrb[0].mxu0
      %2360 = vmatprep.mubr.f32.mxu0 0.0
      %2361 = vmatmul.mubr.f32.gmra.mrb[0].mxu0 %v2156
      %v2362 = vpop.f32.mrb[0].mxu0
      %v2363 = vadd.f32 0.0, %v2362
      %v2364 = vpop.f32.mrb[0].mxu0
      %2365 = vmatprep.mubr.f32.mxu0 0.0
      %2366 = vmatmul.mubr.f32.gmra.mrb[0].mxu0 %v2159
      %v2367 = vpop.f32.mrb[0].mxu0
      %v2368 = vadd.f32 0.0, %v2367
      %v2369 = vpop.f32.mrb[0].mxu0
      %2370 = vmatprep.mubr.f32.mxu0 0.0
      %2371 = vmatmul.mubr.f32.gmra.mrb[0].mxu0 %v2162
      %v2372 = vpop.f32.mrb[0].mxu0
      %v2373 = vadd.f32 0.0, %v2372
      %v2374 = vpop.f32.mrb[0].mxu0
      %2375 = vmatprep.mubr.f32.mxu0 0.0
      %2376 = vmatmul.mubr.f32.gmra.mrb[0].mxu0 %v2165
      %v2377 = vpop.f32.mrb[0].mxu0
      %v2378 = vadd.f32 0.0, %v2377
      %v2379 = vpop.f32.mrb[0].mxu0
      %2380 = vmatprep.mubr.f32.mxu0 0.0
      %2381 = vmatmul.mubr.f32.gmra.mrb[0].mxu0 %v2168
      %v2382 = vpop.f32.mrb[0].mxu0
      %v2383 = vadd.f32 0.0, %v2382
      %v2384 = vpop.f32.mrb[0].mxu0
      %2385 = vmatprep.mubr.f32.mxu0 0.0
      %2386 = vmatmul.mubr.f32.gmra.mrb[0].mxu0 %v2171
      %v2387 = vpop.f32.mrb[0].mxu0
      %v2388 = vadd.f32 0.0, %v2387
      %v2389 = vpop.f32.mrb[0].mxu0
      %2390 = vmatprep.mubr.f32.mxu0 0.0
      %2391 = vmatmul.mubr.f32.gmra.mrb[0].mxu0 %v2174
      %v2392 = vpop.f32.mrb[0].mxu0
      %v2393 = vadd.f32 0.0, %v2392
      %v2394 = vpop.f32.mrb[0].mxu0
      %2395 = vmatprep.mubr.f32.mxu0 0.0
      %2396 = vmatmul.mubr.f32.gmra.mrb[0].mxu0 %v2177
      %v2397 = vpop.f32.mrb[0].mxu0
      %v2398 = vadd.f32 0.0, %v2397
      %v2399 = vpop.f32.mrb[0].mxu0
      %2400 = vmatprep.mubr.f32.mxu0 0.0
      %2401 = vmatmul.mubr.f32.gmra.mrb[0].mxu0 %v2180
      %v2402 = vpop.f32.mrb[0].mxu0
      %v2403 = vadd.f32 0.0, %v2402
      %v2404 = vpop.f32.mrb[0].mxu0
      %2405 = vmatprep.mubr.f32.mxu0 0.0
      %2406 = vmatmul.mubr.f32.gmra.mrb[0].mxu0 %v2183
      %v2407 = vpop.f32.mrb[0].mxu0
      %v2408 = vadd.f32 0.0, %v2407
      %v2409 = vpop.f32.mrb[0].mxu0
      %2410 = vmatprep.mubr.f32.mxu0 0.0
      %2411 = vmatmul.mubr.f32.gmra.mrb[0].mxu0 %v2186
      %v2412 = vpop.f32.mrb[0].mxu0
      %v2413 = vadd.f32 0.0, %v2412
      %v2414 = vpop.f32.mrb[0].mxu0
      %2415 = vmatprep.mubr.f32.mxu0 0.0
      %2416 = vmatmul.mubr.f32.gmra.mrb[0].mxu0 %v2189
      %v2417 = vpop.f32.mrb[0].mxu0
      %v2418 = vadd.f32 0.0, %v2417
      %v2419 = vpop.f32.mrb[0].mxu0
      %2420 = vmatprep.mubr.f32.mxu0 0.0
      %2421 = vmatmul.mubr.f32.gmra.mrb[0].mxu0 %v2192
      %v2422 = vpop.f32.mrb[0].mxu0
      %v2423 = vadd.f32 0.0, %v2422
      %v2424 = vpop.f32.mrb[0].mxu0
      %2425 = vmatprep.mubr.f32.mxu0 0.0
      %2426 = vmatmul.mubr.f32.gmra.mrb[0].mxu0 %v2195
      %v2427 = vpop.f32.mrb[0].mxu0
      %v2428 = vadd.f32 0.0, %v2427
      %v2429 = vpop.f32.mrb[0].mxu0
      %2430 = vmatprep.mubr.f32.mxu0 0.0
      %2431 = vmatmul.mubr.f32.gmra.mrb[0].mxu0 %v2198
      %v2432 = vpop.f32.mrb[0].mxu0
      %v2433 = vadd.f32 0.0, %v2432
      %v2434 = vpop.f32.mrb[0].mxu0
      %2435 = vmatprep.mubr.f32.mxu0 0.0
      %2436 = vmatmul.mubr.f32.gmra.mrb[0].mxu0 %v2201
      %v2437 = vpop.f32.mrb[0].mxu0
      %v2438 = vadd.f32 0.0, %v2437
      %v2439 = vpop.f32.mrb[0].mxu0
      %2440 = vmatprep.mubr.f32.mxu0 0.0
      %2441 = vmatmul.mubr.f32.gmra.mrb[0].mxu0 %v2204
      %v2442 = vpop.f32.mrb[0].mxu0
      %v2443 = vadd.f32 0.0, %v2442
      %v2444 = vpop.f32.mrb[0].mxu0
      %2445 = vmatprep.mubr.f32.mxu0 0.0
      %2446 = vmatmul.mubr.f32.gmra.mrb[0].mxu0 %v2207
      %v2447 = vpop.f32.mrb[0].mxu0
      %v2448 = vadd.f32 0.0, %v2447
      %v2449 = vpop.f32.mrb[0].mxu0
      %2450 = vmatprep.mubr.f32.mxu0 0.0
      %2451 = vmatmul.mubr.f32.gmra.mrb[0].mxu0 %v2210
      %v2452 = vpop.f32.mrb[0].mxu0
      %v2453 = vadd.f32 0.0, %v2452
      %v2454 = vpop.f32.mrb[0].mxu0
      %2455 = vmatprep.mubr.f32.mxu0 0.0
      %2456 = vmatmul.mubr.f32.gmra.mrb[0].mxu0 %v2213
      %v2457 = vpop.f32.mrb[0].mxu0
      %v2458 = vadd.f32 0.0, %v2457
      %v2459 = vpop.f32.mrb[0].mxu0
      %2460 = vmatprep.mubr.f32.mxu0 0.0
      %2461 = vmatmul.mubr.f32.gmra.mrb[0].mxu0 %v2216
      %v2462 = vpop.f32.mrb[0].mxu0
      %v2463 = vadd.f32 0.0, %v2462
      %v2464 = vpop.f32.mrb[0].mxu0
      %2465 = vdwg.mxu0
      %v2466 = vadd.f32 %v2036, %v2288
      %v2467 = vadd.f32 %v2037, %v2293
      %v2468 = vadd.f32 %v2038, %v2298
      %v2469 = vadd.f32 %v2039, %v2303
      %v2470 = vadd.f32 %v2040, %v2308
      %v2471 = vadd.f32 %v2041, %v2313
      %v2472 = vadd.f32 %v2042, %v2318
      %v2473 = vadd.f32 %v2043, %v2323
      %v2474 = vadd.f32 %v2044, %v2328
      %v2475 = vadd.f32 %v2045, %v2333
      %v2476 = vadd.f32 %v2046, %v2338
      %v2477 = vadd.f32 %v2047, %v2343
      %v2478 = vadd.f32 %v2048, %v2348
      %v2479 = vadd.f32 %v2049, %v2353
      %v2480 = vadd.f32 %v2050, %v2358
      %v2481 = vadd.f32 %v2051, %v2363
      %v2482 = vadd.f32 %v2052, %v2368
      %v2483 = vadd.f32 %v2053, %v2373
      %v2484 = vadd.f32 %v2054, %v2378
      %v2485 = vadd.f32 %v2055, %v2383
      %v2486 = vadd.f32 %v2056, %v2388
      %v2487 = vadd.f32 %v2057, %v2393
      %v2488 = vadd.f32 %v2058, %v2398
      %v2489 = vadd.f32 %v2059, %v2403
      %v2490 = vadd.f32 %v2060, %v2408
      %v2491 = vadd.f32 %v2061, %v2413
      %v2492 = vadd.f32 %v2062, %v2418
      %v2493 = vadd.f32 %v2063, %v2423
      %v2494 = vadd.f32 %v2064, %v2428
      %v2495 = vadd.f32 %v2065, %v2433
      %v2496 = vadd.f32 %v2066, %v2438
      %v2497 = vadd.f32 %v2067, %v2443
      %v2498 = vadd.f32 %v2068, %v2448
      %v2499 = vadd.f32 %v2069, %v2453
      %v2500 = vadd.f32 %v2070, %v2458
      %v2501 = vadd.f32 %v2071, %v2463
      %v2502 = vld [vmem:[%s273 + $0x14] sm:$0xff]
      %v2503 = vld [vmem:[%s273 + $0x1c] sm:$0xff]
      %v2504 = vld [vmem:[%s273 + $0x24] sm:$0xff]
      %v2505 = vld [vmem:[%s273 + $0x2c] sm:$0xff]
      %v2506 = vld [vmem:[%s273 + $0x34] sm:$0xff]
      %v2507 = vld [vmem:[%s273 + $0x3c] sm:$0xff]
      %v2508 = vld [vmem:[%s273 + $0x44] sm:$0xff]
      %v2509 = vld [vmem:[%s273 + $0x4c] sm:$0xff]
      %v2510 = vld [vmem:[%s273 + $0x54] sm:$0xff]
      %v2511 = vld [vmem:[%s273 + $0x5c] sm:$0xff]
      %v2512 = vld [vmem:[%s273 + $0x64] sm:$0xff]
      %v2513 = vld [vmem:[%s273 + $0x6c] sm:$0xff]
      %v2514 = vld [vmem:[%s273 + $0x74] sm:$0xff]
      %v2515 = vld [vmem:[%s273 + $0x7c] sm:$0xff]
      %v2516 = vld [vmem:[%s273 + $0x84] sm:$0xff]
      %v2517 = vld [vmem:[%s273 + $0x8c] sm:$0xff]
      %v2518 = vld [vmem:[%s273 + $0x94] sm:$0xff]
      %v2519 = vld [vmem:[%s273 + $0x9c] sm:$0xff]
      %v2520 = vld [vmem:[%s273 + $0xa4] sm:$0xff]
      %v2521 = vld [vmem:[%s273 + $0xac] sm:$0xff]
      %v2522 = vld [vmem:[%s273 + $0xb4] sm:$0xff]
      %v2523 = vld [vmem:[%s273 + $0xbc] sm:$0xff]
      %v2524 = vld [vmem:[%s273 + $0xc4] sm:$0xff]
      %v2525 = vld [vmem:[%s273 + $0xcc] sm:$0xff]
      %v2526 = vld [vmem:[%s273 + $0xd4] sm:$0xff]
      %v2527 = vld [vmem:[%s273 + $0xdc] sm:$0xff]
      %v2528 = vld [vmem:[%s273 + $0xe4] sm:$0xff]
      %v2529 = vld [vmem:[%s273 + $0xec] sm:$0xff]
      %v2530 = vld [vmem:[%s273 + $0xf4] sm:$0xff]
      %v2531 = vld [vmem:[%s273 + $0xfc] sm:$0xff]
      %v2532 = vld [vmem:[%s273 + $0x104] sm:$0xff]
      %v2533 = vld [vmem:[%s273 + $0x10c] sm:$0xff]
      %v2534 = vld [vmem:[%s273 + $0x114] sm:$0xff]
      %v2535 = vld [vmem:[%s273 + $0x11c] sm:$0xff]
      %v2536 = vld [vmem:[%s273 + $0x124] sm:$0xff]
      %v2537 = vld [vmem:[%s273 + $0x12c] sm:$0xff]
      %s2538 = scalar_lea.vmem %s3, 20
      %v2539 = vld [vmem:[%s2538] sm:$0xf]
      %v2541 = vsel %vm498, %v2502, 0
      %v2544 = vsel %vm498, %v2503, 0
      %v2547 = vsel %vm498, %v2504, 0
      %v2550 = vsel %vm498, %v2505, 0
      %v2553 = vsel %vm498, %v2506, 0
      %v2556 = vsel %vm498, %v2507, 0
      %v2559 = vsel %vm498, %v2508, 0
      %v2562 = vsel %vm498, %v2509, 0
      %v2565 = vsel %vm498, %v2510, 0
      %v2568 = vsel %vm498, %v2511, 0
      %v2571 = vsel %vm498, %v2512, 0
      %v2574 = vsel %vm498, %v2513, 0
      %v2577 = vsel %vm498, %v2514, 0
      %v2580 = vsel %vm498, %v2515, 0
      %v2583 = vsel %vm498, %v2516, 0
      %v2586 = vsel %vm498, %v2517, 0
      %v2589 = vsel %vm498, %v2518, 0
      %v2592 = vsel %vm498, %v2519, 0
      %v2595 = vsel %vm498, %v2520, 0
      %v2598 = vsel %vm498, %v2521, 0
      %v2601 = vsel %vm498, %v2522, 0
      %v2604 = vsel %vm498, %v2523, 0
      %v2607 = vsel %vm498, %v2524, 0
      %v2610 = vsel %vm498, %v2525, 0
      %v2613 = vsel %vm498, %v2526, 0
      %v2616 = vsel %vm498, %v2527, 0
      %v2619 = vsel %vm498, %v2528, 0
      %v2622 = vsel %vm498, %v2529, 0
      %v2625 = vsel %vm498, %v2530, 0
      %v2628 = vsel %vm498, %v2531, 0
      %v2631 = vsel %vm498, %v2532, 0
      %v2634 = vsel %vm498, %v2533, 0
      %v2637 = vsel %vm498, %v2534, 0
      %v2640 = vsel %vm498, %v2535, 0
      %v2643 = vsel %vm498, %v2536, 0
      %v2646 = vsel %vm498, %v2537, 0
      %v2649 = vsel %vm607, %v2539, 0
      %2651 = vmatprep.subr.mxu0 0.0
      %2652 = vmatpush1.msra.mxu0 %v2649
      %2653 = vmatprep.subr.mxu0 0.0
      %2654 = vmatpush1.msra.mxu0 0.0
      %2655 = vmatprep.subr.mxu0 0.0
      %2656 = vmatpush1.msra.mxu0 0.0
      %2657 = vmatprep.subr.mxu0 0.0
      %2658 = vmatpush1.msra.mxu0 0.0
      %2659 = vmatprep.subr.mxu0 0.0
      %2660 = vmatpush1.msra.mxu0 0.0
      %2661 = vmatprep.subr.mxu0 0.0
      %2662 = vmatpush1.msra.mxu0 0.0
      %2663 = vmatprep.subr.mxu0 0.0
      %2664 = vmatpush1.msra.mxu0 0.0
      %2665 = vmatprep.subr.mxu0 0.0
      %2666 = vmatpush1.msra.mxu0 0.0
      %2667 = vmatprep.subr.mxu0 0.0
      %2668 = vmatpush1.msra.mxu0 0.0
      %2669 = vmatprep.subr.mxu0 0.0
      %2670 = vmatpush1.msra.mxu0 0.0
      %2671 = vmatprep.subr.mxu0 0.0
      %2672 = vmatpush1.msra.mxu0 0.0
      %2673 = vmatprep.subr.mxu0 0.0
      %2674 = vmatpush1.msra.mxu0 0.0
      %2675 = vmatprep.subr.mxu0 0.0
      %2676 = vmatpush1.msra.mxu0 0.0
      %2677 = vmatprep.subr.mxu0 0.0
      %2678 = vmatpush1.msra.mxu0 0.0
      %2679 = vmatprep.subr.mxu0 0.0
      %2680 = vmatpush1.msra.mxu0 0.0
      %2681 = vmatprep.subr.mxu0 0.0
      %2682 = vmatpush1.msra.mxu0 0.0
      %2683 = vmatprep.subr.mxu0 0.0
      %2684 = vmatpush1.msra.mxu0 0.0
      %2685 = vmatprep.subr.mxu0 0.0
      %2686 = vmatpush1.msra.mxu0 0.0
      %2687 = vmatprep.subr.mxu0 0.0
      %2688 = vmatpush1.msra.mxu0 0.0
      %2689 = vmatprep.subr.mxu0 0.0
      %2690 = vmatpush1.msra.mxu0 0.0
      %2691 = vmatprep.subr.mxu0 0.0
      %2692 = vmatpush1.msra.mxu0 0.0
      %2693 = vmatprep.subr.mxu0 0.0
      %2694 = vmatpush1.msra.mxu0 0.0
      %2695 = vmatprep.subr.mxu0 0.0
      %2696 = vmatpush1.msra.mxu0 0.0
      %2697 = vmatprep.subr.mxu0 0.0
      %2698 = vmatpush1.msra.mxu0 0.0
      %2699 = vmatprep.subr.mxu0 0.0
      %2700 = vmatpush1.msra.mxu0 0.0
      %2701 = vmatprep.subr.mxu0 0.0
      %2702 = vmatpush1.msra.mxu0 0.0
      %2703 = vmatprep.subr.mxu0 0.0
      %2704 = vmatpush1.msra.mxu0 0.0
      %2705 = vmatprep.subr.mxu0 0.0
      %2706 = vmatpush1.msra.mxu0 0.0
      %2707 = vmatprep.subr.mxu0 0.0
      %2708 = vmatpush1.msra.mxu0 0.0
      %2709 = vmatprep.subr.mxu0 0.0
      %2710 = vmatpush1.msra.mxu0 0.0
      %2711 = vmatprep.subr.mxu0 0.0
      %2712 = vmatpush1.msra.mxu0 0.0
      %2713 = vmatprep.subr.mxu0 0.0
      %2714 = vmatpush1.msra.mxu0 0.0
      %2715 = vmatprep.mubr.f32.mxu0 0.0
      %2716 = vmatmul.mubr.f32.gmra.mrb[0].mxu0 %v2541
      %v2717 = vpop.f32.mrb[0].mxu0
      %v2718 = vadd.f32 0.0, %v2717
      %v2719 = vpop.f32.mrb[0].mxu0
      %2720 = vmatprep.mubr.f32.mxu0 0.0
      %2721 = vmatmul.mubr.f32.gmra.mrb[0].mxu0 %v2544
      %v2722 = vpop.f32.mrb[0].mxu0
      %v2723 = vadd.f32 0.0, %v2722
      %v2724 = vpop.f32.mrb[0].mxu0
      %2725 = vmatprep.mubr.f32.mxu0 0.0
      %2726 = vmatmul.mubr.f32.gmra.mrb[0].mxu0 %v2547
      %v2727 = vpop.f32.mrb[0].mxu0
      %v2728 = vadd.f32 0.0, %v2727
      %v2729 = vpop.f32.mrb[0].mxu0
      %2730 = vmatprep.mubr.f32.mxu0 0.0
      %2731 = vmatmul.mubr.f32.gmra.mrb[0].mxu0 %v2550
      %v2732 = vpop.f32.mrb[0].mxu0
      %v2733 = vadd.f32 0.0, %v2732
      %v2734 = vpop.f32.mrb[0].mxu0
      %2735 = vmatprep.mubr.f32.mxu0 0.0
      %2736 = vmatmul.mubr.f32.gmra.mrb[0].mxu0 %v2553
      %v2737 = vpop.f32.mrb[0].mxu0
      %v2738 = vadd.f32 0.0, %v2737
      %v2739 = vpop.f32.mrb[0].mxu0
      %2740 = vmatprep.mubr.f32.mxu0 0.0
      %2741 = vmatmul.mubr.f32.gmra.mrb[0].mxu0 %v2556
      %v2742 = vpop.f32.mrb[0].mxu0
      %v2743 = vadd.f32 0.0, %v2742
      %v2744 = vpop.f32.mrb[0].mxu0
      %2745 = vmatprep.mubr.f32.mxu0 0.0
      %2746 = vmatmul.mubr.f32.gmra.mrb[0].mxu0 %v2559
      %v2747 = vpop.f32.mrb[0].mxu0
      %v2748 = vadd.f32 0.0, %v2747
      %v2749 = vpop.f32.mrb[0].mxu0
      %2750 = vmatprep.mubr.f32.mxu0 0.0
      %2751 = vmatmul.mubr.f32.gmra.mrb[0].mxu0 %v2562
      %v2752 = vpop.f32.mrb[0].mxu0
      %v2753 = vadd.f32 0.0, %v2752
      %v2754 = vpop.f32.mrb[0].mxu0
      %2755 = vmatprep.mubr.f32.mxu0 0.0
      %2756 = vmatmul.mubr.f32.gmra.mrb[0].mxu0 %v2565
      %v2757 = vpop.f32.mrb[0].mxu0
      %v2758 = vadd.f32 0.0, %v2757
      %v2759 = vpop.f32.mrb[0].mxu0
      %2760 = vmatprep.mubr.f32.mxu0 0.0
      %2761 = vmatmul.mubr.f32.gmra.mrb[0].mxu0 %v2568
      %v2762 = vpop.f32.mrb[0].mxu0
      %v2763 = vadd.f32 0.0, %v2762
      %v2764 = vpop.f32.mrb[0].mxu0
      %2765 = vmatprep.mubr.f32.mxu0 0.0
      %2766 = vmatmul.mubr.f32.gmra.mrb[0].mxu0 %v2571
      %v2767 = vpop.f32.mrb[0].mxu0
      %v2768 = vadd.f32 0.0, %v2767
      %v2769 = vpop.f32.mrb[0].mxu0
      %2770 = vmatprep.mubr.f32.mxu0 0.0
      %2771 = vmatmul.mubr.f32.gmra.mrb[0].mxu0 %v2574
      %v2772 = vpop.f32.mrb[0].mxu0
      %v2773 = vadd.f32 0.0, %v2772
      %v2774 = vpop.f32.mrb[0].mxu0
      %2775 = vmatprep.mubr.f32.mxu0 0.0
      %2776 = vmatmul.mubr.f32.gmra.mrb[0].mxu0 %v2577
      %v2777 = vpop.f32.mrb[0].mxu0
      %v2778 = vadd.f32 0.0, %v2777
      %v2779 = vpop.f32.mrb[0].mxu0
      %2780 = vmatprep.mubr.f32.mxu0 0.0
      %2781 = vmatmul.mubr.f32.gmra.mrb[0].mxu0 %v2580
      %v2782 = vpop.f32.mrb[0].mxu0
      %v2783 = vadd.f32 0.0, %v2782
      %v2784 = vpop.f32.mrb[0].mxu0
      %2785 = vmatprep.mubr.f32.mxu0 0.0
      %2786 = vmatmul.mubr.f32.gmra.mrb[0].mxu0 %v2583
      %v2787 = vpop.f32.mrb[0].mxu0
      %v2788 = vadd.f32 0.0, %v2787
      %v2789 = vpop.f32.mrb[0].mxu0
      %2790 = vmatprep.mubr.f32.mxu0 0.0
      %2791 = vmatmul.mubr.f32.gmra.mrb[0].mxu0 %v2586
      %v2792 = vpop.f32.mrb[0].mxu0
      %v2793 = vadd.f32 0.0, %v2792
      %v2794 = vpop.f32.mrb[0].mxu0
      %2795 = vmatprep.mubr.f32.mxu0 0.0
      %2796 = vmatmul.mubr.f32.gmra.mrb[0].mxu0 %v2589
      %v2797 = vpop.f32.mrb[0].mxu0
      %v2798 = vadd.f32 0.0, %v2797
      %v2799 = vpop.f32.mrb[0].mxu0
      %2800 = vmatprep.mubr.f32.mxu0 0.0
      %2801 = vmatmul.mubr.f32.gmra.mrb[0].mxu0 %v2592
      %v2802 = vpop.f32.mrb[0].mxu0
      %v2803 = vadd.f32 0.0, %v2802
      %v2804 = vpop.f32.mrb[0].mxu0
      %2805 = vmatprep.mubr.f32.mxu0 0.0
      %2806 = vmatmul.mubr.f32.gmra.mrb[0].mxu0 %v2595
      %v2807 = vpop.f32.mrb[0].mxu0
      %v2808 = vadd.f32 0.0, %v2807
      %v2809 = vpop.f32.mrb[0].mxu0
      %2810 = vmatprep.mubr.f32.mxu0 0.0
      %2811 = vmatmul.mubr.f32.gmra.mrb[0].mxu0 %v2598
      %v2812 = vpop.f32.mrb[0].mxu0
      %v2813 = vadd.f32 0.0, %v2812
      %v2814 = vpop.f32.mrb[0].mxu0
      %2815 = vmatprep.mubr.f32.mxu0 0.0
      %2816 = vmatmul.mubr.f32.gmra.mrb[0].mxu0 %v2601
      %v2817 = vpop.f32.mrb[0].mxu0
      %v2818 = vadd.f32 0.0, %v2817
      %v2819 = vpop.f32.mrb[0].mxu0
      %2820 = vmatprep.mubr.f32.mxu0 0.0
      %2821 = vmatmul.mubr.f32.gmra.mrb[0].mxu0 %v2604
      %v2822 = vpop.f32.mrb[0].mxu0
      %v2823 = vadd.f32 0.0, %v2822
      %v2824 = vpop.f32.mrb[0].mxu0
      %2825 = vmatprep.mubr.f32.mxu0 0.0
      %2826 = vmatmul.mubr.f32.gmra.mrb[0].mxu0 %v2607
      %v2827 = vpop.f32.mrb[0].mxu0
      %v2828 = vadd.f32 0.0, %v2827
      %v2829 = vpop.f32.mrb[0].mxu0
      %2830 = vmatprep.mubr.f32.mxu0 0.0
      %2831 = vmatmul.mubr.f32.gmra.mrb[0].mxu0 %v2610
      %v2832 = vpop.f32.mrb[0].mxu0
      %v2833 = vadd.f32 0.0, %v2832
      %v2834 = vpop.f32.mrb[0].mxu0
      %2835 = vmatprep.mubr.f32.mxu0 0.0
      %2836 = vmatmul.mubr.f32.gmra.mrb[0].mxu0 %v2613
      %v2837 = vpop.f32.mrb[0].mxu0
      %v2838 = vadd.f32 0.0, %v2837
      %v2839 = vpop.f32.mrb[0].mxu0
      %2840 = vmatprep.mubr.f32.mxu0 0.0
      %2841 = vmatmul.mubr.f32.gmra.mrb[0].mxu0 %v2616
      %v2842 = vpop.f32.mrb[0].mxu0
      %v2843 = vadd.f32 0.0, %v2842
      %v2844 = vpop.f32.mrb[0].mxu0
      %2845 = vmatprep.mubr.f32.mxu0 0.0
      %2846 = vmatmul.mubr.f32.gmra.mrb[0].mxu0 %v2619
      %v2847 = vpop.f32.mrb[0].mxu0
      %v2848 = vadd.f32 0.0, %v2847
      %v2849 = vpop.f32.mrb[0].mxu0
      %2850 = vmatprep.mubr.f32.mxu0 0.0
      %2851 = vmatmul.mubr.f32.gmra.mrb[0].mxu0 %v2622
      %v2852 = vpop.f32.mrb[0].mxu0
      %v2853 = vadd.f32 0.0, %v2852
      %v2854 = vpop.f32.mrb[0].mxu0
      %2855 = vmatprep.mubr.f32.mxu0 0.0
      %2856 = vmatmul.mubr.f32.gmra.mrb[0].mxu0 %v2625
      %v2857 = vpop.f32.mrb[0].mxu0
      %v2858 = vadd.f32 0.0, %v2857
      %v2859 = vpop.f32.mrb[0].mxu0
      %2860 = vmatprep.mubr.f32.mxu0 0.0
      %2861 = vmatmul.mubr.f32.gmra.mrb[0].mxu0 %v2628
      %v2862 = vpop.f32.mrb[0].mxu0
      %v2863 = vadd.f32 0.0, %v2862
      %v2864 = vpop.f32.mrb[0].mxu0
      %2865 = vmatprep.mubr.f32.mxu0 0.0
      %2866 = vmatmul.mubr.f32.gmra.mrb[0].mxu0 %v2631
      %v2867 = vpop.f32.mrb[0].mxu0
      %v2868 = vadd.f32 0.0, %v2867
      %v2869 = vpop.f32.mrb[0].mxu0
      %2870 = vmatprep.mubr.f32.mxu0 0.0
      %2871 = vmatmul.mubr.f32.gmra.mrb[0].mxu0 %v2634
      %v2872 = vpop.f32.mrb[0].mxu0
      %v2873 = vadd.f32 0.0, %v2872
      %v2874 = vpop.f32.mrb[0].mxu0
      %2875 = vmatprep.mubr.f32.mxu0 0.0
      %2876 = vmatmul.mubr.f32.gmra.mrb[0].mxu0 %v2637
      %v2877 = vpop.f32.mrb[0].mxu0
      %v2878 = vadd.f32 0.0, %v2877
      %v2879 = vpop.f32.mrb[0].mxu0
      %2880 = vmatprep.mubr.f32.mxu0 0.0
      %2881 = vmatmul.mubr.f32.gmra.mrb[0].mxu0 %v2640
      %v2882 = vpop.f32.mrb[0].mxu0
      %v2883 = vadd.f32 0.0, %v2882
      %v2884 = vpop.f32.mrb[0].mxu0
      %2885 = vmatprep.mubr.f32.mxu0 0.0
      %2886 = vmatmul.mubr.f32.gmra.mrb[0].mxu0 %v2643
      %v2887 = vpop.f32.mrb[0].mxu0
      %v2888 = vadd.f32 0.0, %v2887
      %v2889 = vpop.f32.mrb[0].mxu0
      %2890 = vmatprep.mubr.f32.mxu0 0.0
      %2891 = vmatmul.mubr.f32.gmra.mrb[0].mxu0 %v2646
      %v2892 = vpop.f32.mrb[0].mxu0
      %v2893 = vadd.f32 0.0, %v2892
      %v2894 = vpop.f32.mrb[0].mxu0
      %2895 = vdwg.mxu0
      %v2896 = vadd.f32 %v2466, %v2718
      %v2897 = vadd.f32 %v2467, %v2723
      %v2898 = vadd.f32 %v2468, %v2728
      %v2899 = vadd.f32 %v2469, %v2733
      %v2900 = vadd.f32 %v2470, %v2738
      %v2901 = vadd.f32 %v2471, %v2743
      %v2902 = vadd.f32 %v2472, %v2748
      %v2903 = vadd.f32 %v2473, %v2753
      %v2904 = vadd.f32 %v2474, %v2758
      %v2905 = vadd.f32 %v2475, %v2763
      %v2906 = vadd.f32 %v2476, %v2768
      %v2907 = vadd.f32 %v2477, %v2773
      %v2908 = vadd.f32 %v2478, %v2778
      %v2909 = vadd.f32 %v2479, %v2783
      %v2910 = vadd.f32 %v2480, %v2788
      %v2911 = vadd.f32 %v2481, %v2793
      %v2912 = vadd.f32 %v2482, %v2798
      %v2913 = vadd.f32 %v2483, %v2803
      %v2914 = vadd.f32 %v2484, %v2808
      %v2915 = vadd.f32 %v2485, %v2813
      %v2916 = vadd.f32 %v2486, %v2818
      %v2917 = vadd.f32 %v2487, %v2823
      %v2918 = vadd.f32 %v2488, %v2828
      %v2919 = vadd.f32 %v2489, %v2833
      %v2920 = vadd.f32 %v2490, %v2838
      %v2921 = vadd.f32 %v2491, %v2843
      %v2922 = vadd.f32 %v2492, %v2848
      %v2923 = vadd.f32 %v2493, %v2853
      %v2924 = vadd.f32 %v2494, %v2858
      %v2925 = vadd.f32 %v2495, %v2863
      %v2926 = vadd.f32 %v2496, %v2868
      %v2927 = vadd.f32 %v2497, %v2873
      %v2928 = vadd.f32 %v2498, %v2878
      %v2929 = vadd.f32 %v2499, %v2883
      %v2930 = vadd.f32 %v2500, %v2888
      %v2931 = vadd.f32 %v2501, %v2893
      %v2932 = vld [vmem:[%s273 + $0x24] sm:$0xff]
      %v2933 = vld [vmem:[%s273 + $0x2c] sm:$0xff]
      %v2934 = vld [vmem:[%s273 + $0x34] sm:$0xff]
      %v2935 = vld [vmem:[%s273 + $0x3c] sm:$0xff]
      %v2936 = vld [vmem:[%s273 + $0x44] sm:$0xff]
      %v2937 = vld [vmem:[%s273 + $0x4c] sm:$0xff]
      %v2938 = vld [vmem:[%s273 + $0x54] sm:$0xff]
      %v2939 = vld [vmem:[%s273 + $0x5c] sm:$0xff]
      %v2940 = vld [vmem:[%s273 + $0x64] sm:$0xff]
      %v2941 = vld [vmem:[%s273 + $0x6c] sm:$0xff]
      %v2942 = vld [vmem:[%s273 + $0x74] sm:$0xff]
      %v2943 = vld [vmem:[%s273 + $0x7c] sm:$0xff]
      %v2944 = vld [vmem:[%s273 + $0x84] sm:$0xff]
      %v2945 = vld [vmem:[%s273 + $0x8c] sm:$0xff]
      %v2946 = vld [vmem:[%s273 + $0x94] sm:$0xff]
      %v2947 = vld [vmem:[%s273 + $0x9c] sm:$0xff]
      %v2948 = vld [vmem:[%s273 + $0xa4] sm:$0xff]
      %v2949 = vld [vmem:[%s273 + $0xac] sm:$0xff]
      %v2950 = vld [vmem:[%s273 + $0xb4] sm:$0xff]
      %v2951 = vld [vmem:[%s273 + $0xbc] sm:$0xff]
      %v2952 = vld [vmem:[%s273 + $0xc4] sm:$0xff]
      %v2953 = vld [vmem:[%s273 + $0xcc] sm:$0xff]
      %v2954 = vld [vmem:[%s273 + $0xd4] sm:$0xff]
      %v2955 = vld [vmem:[%s273 + $0xdc] sm:$0xff]
      %v2956 = vld [vmem:[%s273 + $0xe4] sm:$0xff]
      %v2957 = vld [vmem:[%s273 + $0xec] sm:$0xff]
      %v2958 = vld [vmem:[%s273 + $0xf4] sm:$0xff]
      %v2959 = vld [vmem:[%s273 + $0xfc] sm:$0xff]
      %v2960 = vld [vmem:[%s273 + $0x104] sm:$0xff]
      %v2961 = vld [vmem:[%s273 + $0x10c] sm:$0xff]
      %v2962 = vld [vmem:[%s273 + $0x114] sm:$0xff]
      %v2963 = vld [vmem:[%s273 + $0x11c] sm:$0xff]
      %v2964 = vld [vmem:[%s273 + $0x124] sm:$0xff]
      %v2965 = vld [vmem:[%s273 + $0x12c] sm:$0xff]
      %v2966 = vld [vmem:[%s273 + $0x134] sm:$0xff]
      %v2967 = vld [vmem:[%s273 + $0x13c] sm:$0xff]
      %s2968 = scalar_lea.vmem %s3, 24
      %v2969 = vld [vmem:[%s2968] sm:$0xf]
      %v2971 = vsel %vm498, %v2932, 0
      %v2974 = vsel %vm498, %v2933, 0
      %v2977 = vsel %vm498, %v2934, 0
      %v2980 = vsel %vm498, %v2935, 0
      %v2983 = vsel %vm498, %v2936, 0
      %v2986 = vsel %vm498, %v2937, 0
      %v2989 = vsel %vm498, %v2938, 0
      %v2992 = vsel %vm498, %v2939, 0
      %v2995 = vsel %vm498, %v2940, 0
      %v2998 = vsel %vm498, %v2941, 0
      %v3001 = vsel %vm498, %v2942, 0
      %v3004 = vsel %vm498, %v2943, 0
      %v3007 = vsel %vm498, %v2944, 0
      %v3010 = vsel %vm498, %v2945, 0
      %v3013 = vsel %vm498, %v2946, 0
      %v3016 = vsel %vm498, %v2947, 0
      %v3019 = vsel %vm498, %v2948, 0
      %v3022 = vsel %vm498, %v2949, 0
      %v3025 = vsel %vm498, %v2950, 0
      %v3028 = vsel %vm498, %v2951, 0
      %v3031 = vsel %vm498, %v2952, 0
      %v3034 = vsel %vm498, %v2953, 0
      %v3037 = vsel %vm498, %v2954, 0
      %v3040 = vsel %vm498, %v2955, 0
      %v3043 = vsel %vm498, %v2956, 0
      %v3046 = vsel %vm498, %v2957, 0
      %v3049 = vsel %vm498, %v2958, 0
      %v3052 = vsel %vm498, %v2959, 0
      %v3055 = vsel %vm498, %v2960, 0
      %v3058 = vsel %vm498, %v2961, 0
      %v3061 = vsel %vm498, %v2962, 0
      %v3064 = vsel %vm498, %v2963, 0
      %v3067 = vsel %vm498, %v2964, 0
      %v3070 = vsel %vm498, %v2965, 0
      %v3073 = vsel %vm498, %v2966, 0
      %v3076 = vsel %vm498, %v2967, 0
      %v3079 = vsel %vm607, %v2969, 0
      %3081 = vmatprep.subr.mxu0 0.0
      %3082 = vmatpush1.msra.mxu0 %v3079
      %3083 = vmatprep.subr.mxu0 0.0
      %3084 = vmatpush1.msra.mxu0 0.0
      %3085 = vmatprep.subr.mxu0 0.0
      %3086 = vmatpush1.msra.mxu0 0.0
      %3087 = vmatprep.subr.mxu0 0.0
      %3088 = vmatpush1.msra.mxu0 0.0
      %3089 = vmatprep.subr.mxu0 0.0
      %3090 = vmatpush1.msra.mxu0 0.0
      %3091 = vmatprep.subr.mxu0 0.0
      %3092 = vmatpush1.msra.mxu0 0.0
      %3093 = vmatprep.subr.mxu0 0.0
      %3094 = vmatpush1.msra.mxu0 0.0
      %3095 = vmatprep.subr.mxu0 0.0
      %3096 = vmatpush1.msra.mxu0 0.0
      %3097 = vmatprep.subr.mxu0 0.0
      %3098 = vmatpush1.msra.mxu0 0.0
      %3099 = vmatprep.subr.mxu0 0.0
      %3100 = vmatpush1.msra.mxu0 0.0
      %3101 = vmatprep.subr.mxu0 0.0
      %3102 = vmatpush1.msra.mxu0 0.0
      %3103 = vmatprep.subr.mxu0 0.0
      %3104 = vmatpush1.msra.mxu0 0.0
      %3105 = vmatprep.subr.mxu0 0.0
      %3106 = vmatpush1.msra.mxu0 0.0
      %3107 = vmatprep.subr.mxu0 0.0
      %3108 = vmatpush1.msra.mxu0 0.0
      %3109 = vmatprep.subr.mxu0 0.0
      %3110 = vmatpush1.msra.mxu0 0.0
      %3111 = vmatprep.subr.mxu0 0.0
      %3112 = vmatpush1.msra.mxu0 0.0
      %3113 = vmatprep.subr.mxu0 0.0
      %3114 = vmatpush1.msra.mxu0 0.0
      %3115 = vmatprep.subr.mxu0 0.0
      %3116 = vmatpush1.msra.mxu0 0.0
      %3117 = vmatprep.subr.mxu0 0.0
      %3118 = vmatpush1.msra.mxu0 0.0
      %3119 = vmatprep.subr.mxu0 0.0
      %3120 = vmatpush1.msra.mxu0 0.0
      %3121 = vmatprep.subr.mxu0 0.0
      %3122 = vmatpush1.msra.mxu0 0.0
      %3123 = vmatprep.subr.mxu0 0.0
      %3124 = vmatpush1.msra.mxu0 0.0
      %3125 = vmatprep.subr.mxu0 0.0
      %3126 = vmatpush1.msra.mxu0 0.0
      %3127 = vmatprep.subr.mxu0 0.0
      %3128 = vmatpush1.msra.mxu0 0.0
      %3129 = vmatprep.subr.mxu0 0.0
      %3130 = vmatpush1.msra.mxu0 0.0
      %3131 = vmatprep.subr.mxu0 0.0
      %3132 = vmatpush1.msra.mxu0 0.0
      %3133 = vmatprep.subr.mxu0 0.0
      %3134 = vmatpush1.msra.mxu0 0.0
      %3135 = vmatprep.subr.mxu0 0.0
      %3136 = vmatpush1.msra.mxu0 0.0
      %3137 = vmatprep.subr.mxu0 0.0
      %3138 = vmatpush1.msra.mxu0 0.0
      %3139 = vmatprep.subr.mxu0 0.0
      %3140 = vmatpush1.msra.mxu0 0.0
      %3141 = vmatprep.subr.mxu0 0.0
      %3142 = vmatpush1.msra.mxu0 0.0
      %3143 = vmatprep.subr.mxu0 0.0
      %3144 = vmatpush1.msra.mxu0 0.0
      %3145 = vmatprep.mubr.f32.mxu0 0.0
      %3146 = vmatmul.mubr.f32.gmra.mrb[0].mxu0 %v2971
      %v3147 = vpop.f32.mrb[0].mxu0
      %v3148 = vadd.f32 0.0, %v3147
      %v3149 = vpop.f32.mrb[0].mxu0
      %3150 = vmatprep.mubr.f32.mxu0 0.0
      %3151 = vmatmul.mubr.f32.gmra.mrb[0].mxu0 %v2974
      %v3152 = vpop.f32.mrb[0].mxu0
      %v3153 = vadd.f32 0.0, %v3152
      %v3154 = vpop.f32.mrb[0].mxu0
      %3155 = vmatprep.mubr.f32.mxu0 0.0
      %3156 = vmatmul.mubr.f32.gmra.mrb[0].mxu0 %v2977
      %v3157 = vpop.f32.mrb[0].mxu0
      %v3158 = vadd.f32 0.0, %v3157
      %v3159 = vpop.f32.mrb[0].mxu0
      %3160 = vmatprep.mubr.f32.mxu0 0.0
      %3161 = vmatmul.mubr.f32.gmra.mrb[0].mxu0 %v2980
      %v3162 = vpop.f32.mrb[0].mxu0
      %v3163 = vadd.f32 0.0, %v3162
      %v3164 = vpop.f32.mrb[0].mxu0
      %3165 = vmatprep.mubr.f32.mxu0 0.0
      %3166 = vmatmul.mubr.f32.gmra.mrb[0].mxu0 %v2983
      %v3167 = vpop.f32.mrb[0].mxu0
      %v3168 = vadd.f32 0.0, %v3167
      %v3169 = vpop.f32.mrb[0].mxu0
      %3170 = vmatprep.mubr.f32.mxu0 0.0
      %3171 = vmatmul.mubr.f32.gmra.mrb[0].mxu0 %v2986
      %v3172 = vpop.f32.mrb[0].mxu0
      %v3173 = vadd.f32 0.0, %v3172
      %v3174 = vpop.f32.mrb[0].mxu0
      %3175 = vmatprep.mubr.f32.mxu0 0.0
      %3176 = vmatmul.mubr.f32.gmra.mrb[0].mxu0 %v2989
      %v3177 = vpop.f32.mrb[0].mxu0
      %v3178 = vadd.f32 0.0, %v3177
      %v3179 = vpop.f32.mrb[0].mxu0
      %3180 = vmatprep.mubr.f32.mxu0 0.0
      %3181 = vmatmul.mubr.f32.gmra.mrb[0].mxu0 %v2992
      %v3182 = vpop.f32.mrb[0].mxu0
      %v3183 = vadd.f32 0.0, %v3182
      %v3184 = vpop.f32.mrb[0].mxu0
      %3185 = vmatprep.mubr.f32.mxu0 0.0
      %3186 = vmatmul.mubr.f32.gmra.mrb[0].mxu0 %v2995
      %v3187 = vpop.f32.mrb[0].mxu0
      %v3188 = vadd.f32 0.0, %v3187
      %v3189 = vpop.f32.mrb[0].mxu0
      %3190 = vmatprep.mubr.f32.mxu0 0.0
      %3191 = vmatmul.mubr.f32.gmra.mrb[0].mxu0 %v2998
      %v3192 = vpop.f32.mrb[0].mxu0
      %v3193 = vadd.f32 0.0, %v3192
      %v3194 = vpop.f32.mrb[0].mxu0
      %3195 = vmatprep.mubr.f32.mxu0 0.0
      %3196 = vmatmul.mubr.f32.gmra.mrb[0].mxu0 %v3001
      %v3197 = vpop.f32.mrb[0].mxu0
      %v3198 = vadd.f32 0.0, %v3197
      %v3199 = vpop.f32.mrb[0].mxu0
      %3200 = vmatprep.mubr.f32.mxu0 0.0
      %3201 = vmatmul.mubr.f32.gmra.mrb[0].mxu0 %v3004
      %v3202 = vpop.f32.mrb[0].mxu0
      %v3203 = vadd.f32 0.0, %v3202
      %v3204 = vpop.f32.mrb[0].mxu0
      %3205 = vmatprep.mubr.f32.mxu0 0.0
      %3206 = vmatmul.mubr.f32.gmra.mrb[0].mxu0 %v3007
      %v3207 = vpop.f32.mrb[0].mxu0
      %v3208 = vadd.f32 0.0, %v3207
      %v3209 = vpop.f32.mrb[0].mxu0
      %3210 = vmatprep.mubr.f32.mxu0 0.0
      %3211 = vmatmul.mubr.f32.gmra.mrb[0].mxu0 %v3010
      %v3212 = vpop.f32.mrb[0].mxu0
      %v3213 = vadd.f32 0.0, %v3212
      %v3214 = vpop.f32.mrb[0].mxu0
      %3215 = vmatprep.mubr.f32.mxu0 0.0
      %3216 = vmatmul.mubr.f32.gmra.mrb[0].mxu0 %v3013
      %v3217 = vpop.f32.mrb[0].mxu0
      %v3218 = vadd.f32 0.0, %v3217
      %v3219 = vpop.f32.mrb[0].mxu0
      %3220 = vmatprep.mubr.f32.mxu0 0.0
      %3221 = vmatmul.mubr.f32.gmra.mrb[0].mxu0 %v3016
      %v3222 = vpop.f32.mrb[0].mxu0
      %v3223 = vadd.f32 0.0, %v3222
      %v3224 = vpop.f32.mrb[0].mxu0
      %3225 = vmatprep.mubr.f32.mxu0 0.0
      %3226 = vmatmul.mubr.f32.gmra.mrb[0].mxu0 %v3019
      %v3227 = vpop.f32.mrb[0].mxu0
      %v3228 = vadd.f32 0.0, %v3227
      %v3229 = vpop.f32.mrb[0].mxu0
      %3230 = vmatprep.mubr.f32.mxu0 0.0
      %3231 = vmatmul.mubr.f32.gmra.mrb[0].mxu0 %v3022
      %v3232 = vpop.f32.mrb[0].mxu0
      %v3233 = vadd.f32 0.0, %v3232
      %v3234 = vpop.f32.mrb[0].mxu0
      %3235 = vmatprep.mubr.f32.mxu0 0.0
      %3236 = vmatmul.mubr.f32.gmra.mrb[0].mxu0 %v3025
      %v3237 = vpop.f32.mrb[0].mxu0
      %v3238 = vadd.f32 0.0, %v3237
      %v3239 = vpop.f32.mrb[0].mxu0
      %3240 = vmatprep.mubr.f32.mxu0 0.0
      %3241 = vmatmul.mubr.f32.gmra.mrb[0].mxu0 %v3028
      %v3242 = vpop.f32.mrb[0].mxu0
      %v3243 = vadd.f32 0.0, %v3242
      %v3244 = vpop.f32.mrb[0].mxu0
      %3245 = vmatprep.mubr.f32.mxu0 0.0
      %3246 = vmatmul.mubr.f32.gmra.mrb[0].mxu0 %v3031
      %v3247 = vpop.f32.mrb[0].mxu0
      %v3248 = vadd.f32 0.0, %v3247
      %v3249 = vpop.f32.mrb[0].mxu0
      %3250 = vmatprep.mubr.f32.mxu0 0.0
      %3251 = vmatmul.mubr.f32.gmra.mrb[0].mxu0 %v3034
      %v3252 = vpop.f32.mrb[0].mxu0
      %v3253 = vadd.f32 0.0, %v3252
      %v3254 = vpop.f32.mrb[0].mxu0
      %3255 = vmatprep.mubr.f32.mxu0 0.0
      %3256 = vmatmul.mubr.f32.gmra.mrb[0].mxu0 %v3037
      %v3257 = vpop.f32.mrb[0].mxu0
      %v3258 = vadd.f32 0.0, %v3257
      %v3259 = vpop.f32.mrb[0].mxu0
      %3260 = vmatprep.mubr.f32.mxu0 0.0
      %3261 = vmatmul.mubr.f32.gmra.mrb[0].mxu0 %v3040
      %v3262 = vpop.f32.mrb[0].mxu0
      %v3263 = vadd.f32 0.0, %v3262
      %v3264 = vpop.f32.mrb[0].mxu0
      %3265 = vmatprep.mubr.f32.mxu0 0.0
      %3266 = vmatmul.mubr.f32.gmra.mrb[0].mxu0 %v3043
      %v3267 = vpop.f32.mrb[0].mxu0
      %v3268 = vadd.f32 0.0, %v3267
      %v3269 = vpop.f32.mrb[0].mxu0
      %3270 = vmatprep.mubr.f32.mxu0 0.0
      %3271 = vmatmul.mubr.f32.gmra.mrb[0].mxu0 %v3046
      %v3272 = vpop.f32.mrb[0].mxu0
      %v3273 = vadd.f32 0.0, %v3272
      %v3274 = vpop.f32.mrb[0].mxu0
      %3275 = vmatprep.mubr.f32.mxu0 0.0
      %3276 = vmatmul.mubr.f32.gmra.mrb[0].mxu0 %v3049
      %v3277 = vpop.f32.mrb[0].mxu0
      %v3278 = vadd.f32 0.0, %v3277
      %v3279 = vpop.f32.mrb[0].mxu0
      %3280 = vmatprep.mubr.f32.mxu0 0.0
      %3281 = vmatmul.mubr.f32.gmra.mrb[0].mxu0 %v3052
      %v3282 = vpop.f32.mrb[0].mxu0
      %v3283 = vadd.f32 0.0, %v3282
      %v3284 = vpop.f32.mrb[0].mxu0
      %3285 = vmatprep.mubr.f32.mxu0 0.0
      %3286 = vmatmul.mubr.f32.gmra.mrb[0].mxu0 %v3055
      %v3287 = vpop.f32.mrb[0].mxu0
      %v3288 = vadd.f32 0.0, %v3287
      %v3289 = vpop.f32.mrb[0].mxu0
      %3290 = vmatprep.mubr.f32.mxu0 0.0
      %3291 = vmatmul.mubr.f32.gmra.mrb[0].mxu0 %v3058
      %v3292 = vpop.f32.mrb[0].mxu0
      %v3293 = vadd.f32 0.0, %v3292
      %v3294 = vpop.f32.mrb[0].mxu0
      %3295 = vmatprep.mubr.f32.mxu0 0.0
      %3296 = vmatmul.mubr.f32.gmra.mrb[0].mxu0 %v3061
      %v3297 = vpop.f32.mrb[0].mxu0
      %v3298 = vadd.f32 0.0, %v3297
      %v3299 = vpop.f32.mrb[0].mxu0
      %3300 = vmatprep.mubr.f32.mxu0 0.0
      %3301 = vmatmul.mubr.f32.gmra.mrb[0].mxu0 %v3064
      %v3302 = vpop.f32.mrb[0].mxu0
      %v3303 = vadd.f32 0.0, %v3302
      %v3304 = vpop.f32.mrb[0].mxu0
      %3305 = vmatprep.mubr.f32.mxu0 0.0
      %3306 = vmatmul.mubr.f32.gmra.mrb[0].mxu0 %v3067
      %v3307 = vpop.f32.mrb[0].mxu0
      %v3308 = vadd.f32 0.0, %v3307
      %v3309 = vpop.f32.mrb[0].mxu0
      %3310 = vmatprep.mubr.f32.mxu0 0.0
      %3311 = vmatmul.mubr.f32.gmra.mrb[0].mxu0 %v3070
      %v3312 = vpop.f32.mrb[0].mxu0
      %v3313 = vadd.f32 0.0, %v3312
      %v3314 = vpop.f32.mrb[0].mxu0
      %3315 = vmatprep.mubr.f32.mxu0 0.0
      %3316 = vmatmul.mubr.f32.gmra.mrb[0].mxu0 %v3073
      %v3317 = vpop.f32.mrb[0].mxu0
      %v3318 = vadd.f32 0.0, %v3317
      %v3319 = vpop.f32.mrb[0].mxu0
      %3320 = vmatprep.mubr.f32.mxu0 0.0
      %3321 = vmatmul.mubr.f32.gmra.mrb[0].mxu0 %v3076
      %v3322 = vpop.f32.mrb[0].mxu0
      %v3323 = vadd.f32 0.0, %v3322
      %v3324 = vpop.f32.mrb[0].mxu0
      %3325 = vdwg.mxu0
      %v3326 = vadd.f32 %v2896, %v3148
      %v3327 = vadd.f32 %v2897, %v3153
      %v3328 = vadd.f32 %v2898, %v3158
      %v3329 = vadd.f32 %v2899, %v3163
      %v3330 = vadd.f32 %v2900, %v3168
      %v3331 = vadd.f32 %v2901, %v3173
      %v3332 = vadd.f32 %v2902, %v3178
      %v3333 = vadd.f32 %v2903, %v3183
      %v3334 = vadd.f32 %v2904, %v3188
      %v3335 = vadd.f32 %v2905, %v3193
      %v3336 = vadd.f32 %v2906, %v3198
      %v3337 = vadd.f32 %v2907, %v3203
      %v3338 = vadd.f32 %v2908, %v3208
      %v3339 = vadd.f32 %v2909, %v3213
      %v3340 = vadd.f32 %v2910, %v3218
      %v3341 = vadd.f32 %v2911, %v3223
      %v3342 = vadd.f32 %v2912, %v3228
      %v3343 = vadd.f32 %v2913, %v3233
      %v3344 = vadd.f32 %v2914, %v3238
      %v3345 = vadd.f32 %v2915, %v3243
      %v3346 = vadd.f32 %v2916, %v3248
      %v3347 = vadd.f32 %v2917, %v3253
      %v3348 = vadd.f32 %v2918, %v3258
      %v3349 = vadd.f32 %v2919, %v3263
      %v3350 = vadd.f32 %v2920, %v3268
      %v3351 = vadd.f32 %v2921, %v3273
      %v3352 = vadd.f32 %v2922, %v3278
      %v3353 = vadd.f32 %v2923, %v3283
      %v3354 = vadd.f32 %v2924, %v3288
      %v3355 = vadd.f32 %v2925, %v3293
      %v3356 = vadd.f32 %v2926, %v3298
      %v3357 = vadd.f32 %v2927, %v3303
      %v3358 = vadd.f32 %v2928, %v3308
      %v3359 = vadd.f32 %v2929, %v3313
      %v3360 = vadd.f32 %v2930, %v3318
      %v3361 = vadd.f32 %v2931, %v3323
      %v3362 = vld [vmem:[%s273 + $0x25] sm:$0xff]
      %v3363 = vld [vmem:[%s273 + $0x2d] sm:$0xff]
      %v3364 = vld [vmem:[%s273 + $0x35] sm:$0xff]
      %v3365 = vld [vmem:[%s273 + $0x3d] sm:$0xff]
      %v3366 = vld [vmem:[%s273 + $0x45] sm:$0xff]
      %v3367 = vld [vmem:[%s273 + $0x4d] sm:$0xff]
      %v3368 = vld [vmem:[%s273 + $0x55] sm:$0xff]
      %v3369 = vld [vmem:[%s273 + $0x5d] sm:$0xff]
      %v3370 = vld [vmem:[%s273 + $0x65] sm:$0xff]
      %v3371 = vld [vmem:[%s273 + $0x6d] sm:$0xff]
      %v3372 = vld [vmem:[%s273 + $0x75] sm:$0xff]
      %v3373 = vld [vmem:[%s273 + $0x7d] sm:$0xff]
      %v3374 = vld [vmem:[%s273 + $0x85] sm:$0xff]
      %v3375 = vld [vmem:[%s273 + $0x8d] sm:$0xff]
      %v3376 = vld [vmem:[%s273 + $0x95] sm:$0xff]
      %v3377 = vld [vmem:[%s273 + $0x9d] sm:$0xff]
      %v3378 = vld [vmem:[%s273 + $0xa5] sm:$0xff]
      %v3379 = vld [vmem:[%s273 + $0xad] sm:$0xff]
      %v3380 = vld [vmem:[%s273 + $0xb5] sm:$0xff]
      %v3381 = vld [vmem:[%s273 + $0xbd] sm:$0xff]
      %v3382 = vld [vmem:[%s273 + $0xc5] sm:$0xff]
      %v3383 = vld [vmem:[%s273 + $0xcd] sm:$0xff]
      %v3384 = vld [vmem:[%s273 + $0xd5] sm:$0xff]
      %v3385 = vld [vmem:[%s273 + $0xdd] sm:$0xff]
      %v3386 = vld [vmem:[%s273 + $0xe5] sm:$0xff]
      %v3387 = vld [vmem:[%s273 + $0xed] sm:$0xff]
      %v3388 = vld [vmem:[%s273 + $0xf5] sm:$0xff]
      %v3389 = vld [vmem:[%s273 + $0xfd] sm:$0xff]
      %v3390 = vld [vmem:[%s273 + $0x105] sm:$0xff]
      %v3391 = vld [vmem:[%s273 + $0x10d] sm:$0xff]
      %v3392 = vld [vmem:[%s273 + $0x115] sm:$0xff]
      %v3393 = vld [vmem:[%s273 + $0x11d] sm:$0xff]
      %v3394 = vld [vmem:[%s273 + $0x125] sm:$0xff]
      %v3395 = vld [vmem:[%s273 + $0x12d] sm:$0xff]
      %v3396 = vld [vmem:[%s273 + $0x135] sm:$0xff]
      %v3397 = vld [vmem:[%s273 + $0x13d] sm:$0xff]
      %s3398 = scalar_lea.vmem %s3, 28
      %v3399 = vld [vmem:[%s3398] sm:$0xf]
      %v3401 = vsel %vm498, %v3362, 0
      %v3404 = vsel %vm498, %v3363, 0
      %v3407 = vsel %vm498, %v3364, 0
      %v3410 = vsel %vm498, %v3365, 0
      %v3413 = vsel %vm498, %v3366, 0
      %v3416 = vsel %vm498, %v3367, 0
      %v3419 = vsel %vm498, %v3368, 0
      %v3422 = vsel %vm498, %v3369, 0
      %v3425 = vsel %vm498, %v3370, 0
      %v3428 = vsel %vm498, %v3371, 0
      %v3431 = vsel %vm498, %v3372, 0
      %v3434 = vsel %vm498, %v3373, 0
      %v3437 = vsel %vm498, %v3374, 0
      %v3440 = vsel %vm498, %v3375, 0
      %v3443 = vsel %vm498, %v3376, 0
      %v3446 = vsel %vm498, %v3377, 0
      %v3449 = vsel %vm498, %v3378, 0
      %v3452 = vsel %vm498, %v3379, 0
      %v3455 = vsel %vm498, %v3380, 0
      %v3458 = vsel %vm498, %v3381, 0
      %v3461 = vsel %vm498, %v3382, 0
      %v3464 = vsel %vm498, %v3383, 0
      %v3467 = vsel %vm498, %v3384, 0
      %v3470 = vsel %vm498, %v3385, 0
      %v3473 = vsel %vm498, %v3386, 0
      %v3476 = vsel %vm498, %v3387, 0
      %v3479 = vsel %vm498, %v3388, 0
      %v3482 = vsel %vm498, %v3389, 0
      %v3485 = vsel %vm498, %v3390, 0
      %v3488 = vsel %vm498, %v3391, 0
      %v3491 = vsel %vm498, %v3392, 0
      %v3494 = vsel %vm498, %v3393, 0
      %v3497 = vsel %vm498, %v3394, 0
      %v3500 = vsel %vm498, %v3395, 0
      %v3503 = vsel %vm498, %v3396, 0
      %v3506 = vsel %vm498, %v3397, 0
      %v3509 = vsel %vm607, %v3399, 0
      %3511 = vmatprep.subr.mxu0 0.0
      %3512 = vmatpush1.msra.mxu0 %v3509
      %3513 = vmatprep.subr.mxu0 0.0
      %3514 = vmatpush1.msra.mxu0 0.0
      %3515 = vmatprep.subr.mxu0 0.0
      %3516 = vmatpush1.msra.mxu0 0.0
      %3517 = vmatprep.subr.mxu0 0.0
      %3518 = vmatpush1.msra.mxu0 0.0
      %3519 = vmatprep.subr.mxu0 0.0
      %3520 = vmatpush1.msra.mxu0 0.0
      %3521 = vmatprep.subr.mxu0 0.0
      %3522 = vmatpush1.msra.mxu0 0.0
      %3523 = vmatprep.subr.mxu0 0.0
      %3524 = vmatpush1.msra.mxu0 0.0
      %3525 = vmatprep.subr.mxu0 0.0
      %3526 = vmatpush1.msra.mxu0 0.0
      %3527 = vmatprep.subr.mxu0 0.0
      %3528 = vmatpush1.msra.mxu0 0.0
      %3529 = vmatprep.subr.mxu0 0.0
      %3530 = vmatpush1.msra.mxu0 0.0
      %3531 = vmatprep.subr.mxu0 0.0
      %3532 = vmatpush1.msra.mxu0 0.0
      %3533 = vmatprep.subr.mxu0 0.0
      %3534 = vmatpush1.msra.mxu0 0.0
      %3535 = vmatprep.subr.mxu0 0.0
      %3536 = vmatpush1.msra.mxu0 0.0
      %3537 = vmatprep.subr.mxu0 0.0
      %3538 = vmatpush1.msra.mxu0 0.0
      %3539 = vmatprep.subr.mxu0 0.0
      %3540 = vmatpush1.msra.mxu0 0.0
      %3541 = vmatprep.subr.mxu0 0.0
      %3542 = vmatpush1.msra.mxu0 0.0
      %3543 = vmatprep.subr.mxu0 0.0
      %3544 = vmatpush1.msra.mxu0 0.0
      %3545 = vmatprep.subr.mxu0 0.0
      %3546 = vmatpush1.msra.mxu0 0.0
      %3547 = vmatprep.subr.mxu0 0.0
      %3548 = vmatpush1.msra.mxu0 0.0
      %3549 = vmatprep.subr.mxu0 0.0
      %3550 = vmatpush1.msra.mxu0 0.0
      %3551 = vmatprep.subr.mxu0 0.0
      %3552 = vmatpush1.msra.mxu0 0.0
      %3553 = vmatprep.subr.mxu0 0.0
      %3554 = vmatpush1.msra.mxu0 0.0
      %3555 = vmatprep.subr.mxu0 0.0
      %3556 = vmatpush1.msra.mxu0 0.0
      %3557 = vmatprep.subr.mxu0 0.0
      %3558 = vmatpush1.msra.mxu0 0.0
      %3559 = vmatprep.subr.mxu0 0.0
      %3560 = vmatpush1.msra.mxu0 0.0
      %3561 = vmatprep.subr.mxu0 0.0
      %3562 = vmatpush1.msra.mxu0 0.0
      %3563 = vmatprep.subr.mxu0 0.0
      %3564 = vmatpush1.msra.mxu0 0.0
      %3565 = vmatprep.subr.mxu0 0.0
      %3566 = vmatpush1.msra.mxu0 0.0
      %3567 = vmatprep.subr.mxu0 0.0
      %3568 = vmatpush1.msra.mxu0 0.0
      %3569 = vmatprep.subr.mxu0 0.0
      %3570 = vmatpush1.msra.mxu0 0.0
      %3571 = vmatprep.subr.mxu0 0.0
      %3572 = vmatpush1.msra.mxu0 0.0
      %3573 = vmatprep.subr.mxu0 0.0
      %3574 = vmatpush1.msra.mxu0 0.0
      %3575 = vmatprep.mubr.f32.mxu0 0.0
      %3576 = vmatmul.mubr.f32.gmra.mrb[0].mxu0 %v3401
      %v3577 = vpop.f32.mrb[0].mxu0
      %v3578 = vadd.f32 0.0, %v3577
      %v3579 = vpop.f32.mrb[0].mxu0
      %3580 = vmatprep.mubr.f32.mxu0 0.0
      %3581 = vmatmul.mubr.f32.gmra.mrb[0].mxu0 %v3404
      %v3582 = vpop.f32.mrb[0].mxu0
      %v3583 = vadd.f32 0.0, %v3582
      %v3584 = vpop.f32.mrb[0].mxu0
      %3585 = vmatprep.mubr.f32.mxu0 0.0
      %3586 = vmatmul.mubr.f32.gmra.mrb[0].mxu0 %v3407
      %v3587 = vpop.f32.mrb[0].mxu0
      %v3588 = vadd.f32 0.0, %v3587
      %v3589 = vpop.f32.mrb[0].mxu0
      %3590 = vmatprep.mubr.f32.mxu0 0.0
      %3591 = vmatmul.mubr.f32.gmra.mrb[0].mxu0 %v3410
      %v3592 = vpop.f32.mrb[0].mxu0
      %v3593 = vadd.f32 0.0, %v3592
      %v3594 = vpop.f32.mrb[0].mxu0
      %3595 = vmatprep.mubr.f32.mxu0 0.0
      %3596 = vmatmul.mubr.f32.gmra.mrb[0].mxu0 %v3413
      %v3597 = vpop.f32.mrb[0].mxu0
      %v3598 = vadd.f32 0.0, %v3597
      %v3599 = vpop.f32.mrb[0].mxu0
      %3600 = vmatprep.mubr.f32.mxu0 0.0
      %3601 = vmatmul.mubr.f32.gmra.mrb[0].mxu0 %v3416
      %v3602 = vpop.f32.mrb[0].mxu0
      %v3603 = vadd.f32 0.0, %v3602
      %v3604 = vpop.f32.mrb[0].mxu0
      %3605 = vmatprep.mubr.f32.mxu0 0.0
      %3606 = vmatmul.mubr.f32.gmra.mrb[0].mxu0 %v3419
      %v3607 = vpop.f32.mrb[0].mxu0
      %v3608 = vadd.f32 0.0, %v3607
      %v3609 = vpop.f32.mrb[0].mxu0
      %3610 = vmatprep.mubr.f32.mxu0 0.0
      %3611 = vmatmul.mubr.f32.gmra.mrb[0].mxu0 %v3422
      %v3612 = vpop.f32.mrb[0].mxu0
      %v3613 = vadd.f32 0.0, %v3612
      %v3614 = vpop.f32.mrb[0].mxu0
      %3615 = vmatprep.mubr.f32.mxu0 0.0
      %3616 = vmatmul.mubr.f32.gmra.mrb[0].mxu0 %v3425
      %v3617 = vpop.f32.mrb[0].mxu0
      %v3618 = vadd.f32 0.0, %v3617
      %v3619 = vpop.f32.mrb[0].mxu0
      %3620 = vmatprep.mubr.f32.mxu0 0.0
      %3621 = vmatmul.mubr.f32.gmra.mrb[0].mxu0 %v3428
      %v3622 = vpop.f32.mrb[0].mxu0
      %v3623 = vadd.f32 0.0, %v3622
      %v3624 = vpop.f32.mrb[0].mxu0
      %3625 = vmatprep.mubr.f32.mxu0 0.0
      %3626 = vmatmul.mubr.f32.gmra.mrb[0].mxu0 %v3431
      %v3627 = vpop.f32.mrb[0].mxu0
      %v3628 = vadd.f32 0.0, %v3627
      %v3629 = vpop.f32.mrb[0].mxu0
      %3630 = vmatprep.mubr.f32.mxu0 0.0
      %3631 = vmatmul.mubr.f32.gmra.mrb[0].mxu0 %v3434
      %v3632 = vpop.f32.mrb[0].mxu0
      %v3633 = vadd.f32 0.0, %v3632
      %v3634 = vpop.f32.mrb[0].mxu0
      %3635 = vmatprep.mubr.f32.mxu0 0.0
      %3636 = vmatmul.mubr.f32.gmra.mrb[0].mxu0 %v3437
      %v3637 = vpop.f32.mrb[0].mxu0
      %v3638 = vadd.f32 0.0, %v3637
      %v3639 = vpop.f32.mrb[0].mxu0
      %3640 = vmatprep.mubr.f32.mxu0 0.0
      %3641 = vmatmul.mubr.f32.gmra.mrb[0].mxu0 %v3440
      %v3642 = vpop.f32.mrb[0].mxu0
      %v3643 = vadd.f32 0.0, %v3642
      %v3644 = vpop.f32.mrb[0].mxu0
      %3645 = vmatprep.mubr.f32.mxu0 0.0
      %3646 = vmatmul.mubr.f32.gmra.mrb[0].mxu0 %v3443
      %v3647 = vpop.f32.mrb[0].mxu0
      %v3648 = vadd.f32 0.0, %v3647
      %v3649 = vpop.f32.mrb[0].mxu0
      %3650 = vmatprep.mubr.f32.mxu0 0.0
      %3651 = vmatmul.mubr.f32.gmra.mrb[0].mxu0 %v3446
      %v3652 = vpop.f32.mrb[0].mxu0
      %v3653 = vadd.f32 0.0, %v3652
      %v3654 = vpop.f32.mrb[0].mxu0
      %3655 = vmatprep.mubr.f32.mxu0 0.0
      %3656 = vmatmul.mubr.f32.gmra.mrb[0].mxu0 %v3449
      %v3657 = vpop.f32.mrb[0].mxu0
      %v3658 = vadd.f32 0.0, %v3657
      %v3659 = vpop.f32.mrb[0].mxu0
      %3660 = vmatprep.mubr.f32.mxu0 0.0
      %3661 = vmatmul.mubr.f32.gmra.mrb[0].mxu0 %v3452
      %v3662 = vpop.f32.mrb[0].mxu0
      %v3663 = vadd.f32 0.0, %v3662
      %v3664 = vpop.f32.mrb[0].mxu0
      %3665 = vmatprep.mubr.f32.mxu0 0.0
      %3666 = vmatmul.mubr.f32.gmra.mrb[0].mxu0 %v3455
      %v3667 = vpop.f32.mrb[0].mxu0
      %v3668 = vadd.f32 0.0, %v3667
      %v3669 = vpop.f32.mrb[0].mxu0
      %3670 = vmatprep.mubr.f32.mxu0 0.0
      %3671 = vmatmul.mubr.f32.gmra.mrb[0].mxu0 %v3458
      %v3672 = vpop.f32.mrb[0].mxu0
      %v3673 = vadd.f32 0.0, %v3672
      %v3674 = vpop.f32.mrb[0].mxu0
      %3675 = vmatprep.mubr.f32.mxu0 0.0
      %3676 = vmatmul.mubr.f32.gmra.mrb[0].mxu0 %v3461
      %v3677 = vpop.f32.mrb[0].mxu0
      %v3678 = vadd.f32 0.0, %v3677
      %v3679 = vpop.f32.mrb[0].mxu0
      %3680 = vmatprep.mubr.f32.mxu0 0.0
      %3681 = vmatmul.mubr.f32.gmra.mrb[0].mxu0 %v3464
      %v3682 = vpop.f32.mrb[0].mxu0
      %v3683 = vadd.f32 0.0, %v3682
      %v3684 = vpop.f32.mrb[0].mxu0
      %3685 = vmatprep.mubr.f32.mxu0 0.0
      %3686 = vmatmul.mubr.f32.gmra.mrb[0].mxu0 %v3467
      %v3687 = vpop.f32.mrb[0].mxu0
      %v3688 = vadd.f32 0.0, %v3687
      %v3689 = vpop.f32.mrb[0].mxu0
      %3690 = vmatprep.mubr.f32.mxu0 0.0
      %3691 = vmatmul.mubr.f32.gmra.mrb[0].mxu0 %v3470
      %v3692 = vpop.f32.mrb[0].mxu0
      %v3693 = vadd.f32 0.0, %v3692
      %v3694 = vpop.f32.mrb[0].mxu0
      %3695 = vmatprep.mubr.f32.mxu0 0.0
      %3696 = vmatmul.mubr.f32.gmra.mrb[0].mxu0 %v3473
      %v3697 = vpop.f32.mrb[0].mxu0
      %v3698 = vadd.f32 0.0, %v3697
      %v3699 = vpop.f32.mrb[0].mxu0
      %3700 = vmatprep.mubr.f32.mxu0 0.0
      %3701 = vmatmul.mubr.f32.gmra.mrb[0].mxu0 %v3476
      %v3702 = vpop.f32.mrb[0].mxu0
      %v3703 = vadd.f32 0.0, %v3702
      %v3704 = vpop.f32.mrb[0].mxu0
      %3705 = vmatprep.mubr.f32.mxu0 0.0
      %3706 = vmatmul.mubr.f32.gmra.mrb[0].mxu0 %v3479
      %v3707 = vpop.f32.mrb[0].mxu0
      %v3708 = vadd.f32 0.0, %v3707
      %v3709 = vpop.f32.mrb[0].mxu0
      %3710 = vmatprep.mubr.f32.mxu0 0.0
      %3711 = vmatmul.mubr.f32.gmra.mrb[0].mxu0 %v3482
      %v3712 = vpop.f32.mrb[0].mxu0
      %v3713 = vadd.f32 0.0, %v3712
      %v3714 = vpop.f32.mrb[0].mxu0
      %3715 = vmatprep.mubr.f32.mxu0 0.0
      %3716 = vmatmul.mubr.f32.gmra.mrb[0].mxu0 %v3485
      %v3717 = vpop.f32.mrb[0].mxu0
      %v3718 = vadd.f32 0.0, %v3717
      %v3719 = vpop.f32.mrb[0].mxu0
      %3720 = vmatprep.mubr.f32.mxu0 0.0
      %3721 = vmatmul.mubr.f32.gmra.mrb[0].mxu0 %v3488
      %v3722 = vpop.f32.mrb[0].mxu0
      %v3723 = vadd.f32 0.0, %v3722
      %v3724 = vpop.f32.mrb[0].mxu0
      %3725 = vmatprep.mubr.f32.mxu0 0.0
      %3726 = vmatmul.mubr.f32.gmra.mrb[0].mxu0 %v3491
      %v3727 = vpop.f32.mrb[0].mxu0
      %v3728 = vadd.f32 0.0, %v3727
      %v3729 = vpop.f32.mrb[0].mxu0
      %3730 = vmatprep.mubr.f32.mxu0 0.0
      %3731 = vmatmul.mubr.f32.gmra.mrb[0].mxu0 %v3494
      %v3732 = vpop.f32.mrb[0].mxu0
      %v3733 = vadd.f32 0.0, %v3732
      %v3734 = vpop.f32.mrb[0].mxu0
      %3735 = vmatprep.mubr.f32.mxu0 0.0
      %3736 = vmatmul.mubr.f32.gmra.mrb[0].mxu0 %v3497
      %v3737 = vpop.f32.mrb[0].mxu0
      %v3738 = vadd.f32 0.0, %v3737
      %v3739 = vpop.f32.mrb[0].mxu0
      %3740 = vmatprep.mubr.f32.mxu0 0.0
      %3741 = vmatmul.mubr.f32.gmra.mrb[0].mxu0 %v3500
      %v3742 = vpop.f32.mrb[0].mxu0
      %v3743 = vadd.f32 0.0, %v3742
      %v3744 = vpop.f32.mrb[0].mxu0
      %3745 = vmatprep.mubr.f32.mxu0 0.0
      %3746 = vmatmul.mubr.f32.gmra.mrb[0].mxu0 %v3503
      %v3747 = vpop.f32.mrb[0].mxu0
      %v3748 = vadd.f32 0.0, %v3747
      %v3749 = vpop.f32.mrb[0].mxu0
      %3750 = vmatprep.mubr.f32.mxu0 0.0
      %3751 = vmatmul.mubr.f32.gmra.mrb[0].mxu0 %v3506
      %v3752 = vpop.f32.mrb[0].mxu0
      %v3753 = vadd.f32 0.0, %v3752
      %v3754 = vpop.f32.mrb[0].mxu0
      %3755 = vdwg.mxu0
      %v3756 = vadd.f32 %v3326, %v3578
      %v3757 = vadd.f32 %v3327, %v3583
      %v3758 = vadd.f32 %v3328, %v3588
      %v3759 = vadd.f32 %v3329, %v3593
      %v3760 = vadd.f32 %v3330, %v3598
      %v3761 = vadd.f32 %v3331, %v3603
      %v3762 = vadd.f32 %v3332, %v3608
      %v3763 = vadd.f32 %v3333, %v3613
      %v3764 = vadd.f32 %v3334, %v3618
      %v3765 = vadd.f32 %v3335, %v3623
      %v3766 = vadd.f32 %v3336, %v3628
      %v3767 = vadd.f32 %v3337, %v3633
      %v3768 = vadd.f32 %v3338, %v3638
      %v3769 = vadd.f32 %v3339, %v3643
      %v3770 = vadd.f32 %v3340, %v3648
      %v3771 = vadd.f32 %v3341, %v3653
      %v3772 = vadd.f32 %v3342, %v3658
      %v3773 = vadd.f32 %v3343, %v3663
      %v3774 = vadd.f32 %v3344, %v3668
      %v3775 = vadd.f32 %v3345, %v3673
      %v3776 = vadd.f32 %v3346, %v3678
      %v3777 = vadd.f32 %v3347, %v3683
      %v3778 = vadd.f32 %v3348, %v3688
      %v3779 = vadd.f32 %v3349, %v3693
      %v3780 = vadd.f32 %v3350, %v3698
      %v3781 = vadd.f32 %v3351, %v3703
      %v3782 = vadd.f32 %v3352, %v3708
      %v3783 = vadd.f32 %v3353, %v3713
      %v3784 = vadd.f32 %v3354, %v3718
      %v3785 = vadd.f32 %v3355, %v3723
      %v3786 = vadd.f32 %v3356, %v3728
      %v3787 = vadd.f32 %v3357, %v3733
      %v3788 = vadd.f32 %v3358, %v3738
      %v3789 = vadd.f32 %v3359, %v3743
      %v3790 = vadd.f32 %v3360, %v3748
      %v3791 = vadd.f32 %v3361, %v3753
      %v3792 = vld [vmem:[%s273 + $0x26] sm:$0xff]
      %v3793 = vld [vmem:[%s273 + $0x2e] sm:$0xff]
      %v3794 = vld [vmem:[%s273 + $0x36] sm:$0xff]
      %v3795 = vld [vmem:[%s273 + $0x3e] sm:$0xff]
      %v3796 = vld [vmem:[%s273 + $0x46] sm:$0xff]
      %v3797 = vld [vmem:[%s273 + $0x4e] sm:$0xff]
      %v3798 = vld [vmem:[%s273 + $0x56] sm:$0xff]
      %v3799 = vld [vmem:[%s273 + $0x5e] sm:$0xff]
      %v3800 = vld [vmem:[%s273 + $0x66] sm:$0xff]
      %v3801 = vld [vmem:[%s273 + $0x6e] sm:$0xff]
      %v3802 = vld [vmem:[%s273 + $0x76] sm:$0xff]
      %v3803 = vld [vmem:[%s273 + $0x7e] sm:$0xff]
      %v3804 = vld [vmem:[%s273 + $0x86] sm:$0xff]
      %v3805 = vld [vmem:[%s273 + $0x8e] sm:$0xff]
      %v3806 = vld [vmem:[%s273 + $0x96] sm:$0xff]
      %v3807 = vld [vmem:[%s273 + $0x9e] sm:$0xff]
      %v3808 = vld [vmem:[%s273 + $0xa6] sm:$0xff]
      %v3809 = vld [vmem:[%s273 + $0xae] sm:$0xff]
      %v3810 = vld [vmem:[%s273 + $0xb6] sm:$0xff]
      %v3811 = vld [vmem:[%s273 + $0xbe] sm:$0xff]
      %v3812 = vld [vmem:[%s273 + $0xc6] sm:$0xff]
      %v3813 = vld [vmem:[%s273 + $0xce] sm:$0xff]
      %v3814 = vld [vmem:[%s273 + $0xd6] sm:$0xff]
      %v3815 = vld [vmem:[%s273 + $0xde] sm:$0xff]
      %v3816 = vld [vmem:[%s273 + $0xe6] sm:$0xff]
      %v3817 = vld [vmem:[%s273 + $0xee] sm:$0xff]
      %v3818 = vld [vmem:[%s273 + $0xf6] sm:$0xff]
      %v3819 = vld [vmem:[%s273 + $0xfe] sm:$0xff]
      %v3820 = vld [vmem:[%s273 + $0x106] sm:$0xff]
      %v3821 = vld [vmem:[%s273 + $0x10e] sm:$0xff]
      %v3822 = vld [vmem:[%s273 + $0x116] sm:$0xff]
      %v3823 = vld [vmem:[%s273 + $0x11e] sm:$0xff]
      %v3824 = vld [vmem:[%s273 + $0x126] sm:$0xff]
      %v3825 = vld [vmem:[%s273 + $0x12e] sm:$0xff]
      %v3826 = vld [vmem:[%s273 + $0x136] sm:$0xff]
      %v3827 = vld [vmem:[%s273 + $0x13e] sm:$0xff]
      %s3828 = scalar_lea.vmem %s3, 32
      %v3829 = vld [vmem:[%s3828] sm:$0xf]
      %v3831 = vsel %vm498, %v3792, 0
      %v3834 = vsel %vm498, %v3793, 0
      %v3837 = vsel %vm498, %v3794, 0
      %v3840 = vsel %vm498, %v3795, 0
      %v3843 = vsel %vm498, %v3796, 0
      %v3846 = vsel %vm498, %v3797, 0
      %v3849 = vsel %vm498, %v3798, 0
      %v3852 = vsel %vm498, %v3799, 0
      %v3855 = vsel %vm498, %v3800, 0
      %v3858 = vsel %vm498, %v3801, 0
      %v3861 = vsel %vm498, %v3802, 0
      %v3864 = vsel %vm498, %v3803, 0
      %v3867 = vsel %vm498, %v3804, 0
      %v3870 = vsel %vm498, %v3805, 0
      %v3873 = vsel %vm498, %v3806, 0
      %v3876 = vsel %vm498, %v3807, 0
      %v3879 = vsel %vm498, %v3808, 0
      %v3882 = vsel %vm498, %v3809, 0
      %v3885 = vsel %vm498, %v3810, 0
      %v3888 = vsel %vm498, %v3811, 0
      %v3891 = vsel %vm498, %v3812, 0
      %v3894 = vsel %vm498, %v3813, 0
      %v3897 = vsel %vm498, %v3814, 0
      %v3900 = vsel %vm498, %v3815, 0
      %v3903 = vsel %vm498, %v3816, 0
      %v3906 = vsel %vm498, %v3817, 0
      %v3909 = vsel %vm498, %v3818, 0
      %v3912 = vsel %vm498, %v3819, 0
      %v3915 = vsel %vm498, %v3820, 0
      %v3918 = vsel %vm498, %v3821, 0
      %v3921 = vsel %vm498, %v3822, 0
      %v3924 = vsel %vm498, %v3823, 0
      %v3927 = vsel %vm498, %v3824, 0
      %v3930 = vsel %vm498, %v3825, 0
      %v3933 = vsel %vm498, %v3826, 0
      %v3936 = vsel %vm498, %v3827, 0
      %v3939 = vsel %vm607, %v3829, 0
      %3941 = vmatprep.subr.mxu0 0.0
      %3942 = vmatpush1.msra.mxu0 %v3939
      %3943 = vmatprep.subr.mxu0 0.0
      %3944 = vmatpush1.msra.mxu0 0.0
      %3945 = vmatprep.subr.mxu0 0.0
      %3946 = vmatpush1.msra.mxu0 0.0
      %3947 = vmatprep.subr.mxu0 0.0
      %3948 = vmatpush1.msra.mxu0 0.0
      %3949 = vmatprep.subr.mxu0 0.0
      %3950 = vmatpush1.msra.mxu0 0.0
      %3951 = vmatprep.subr.mxu0 0.0
      %3952 = vmatpush1.msra.mxu0 0.0
      %3953 = vmatprep.subr.mxu0 0.0
      %3954 = vmatpush1.msra.mxu0 0.0
      %3955 = vmatprep.subr.mxu0 0.0
      %3956 = vmatpush1.msra.mxu0 0.0
      %3957 = vmatprep.subr.mxu0 0.0
      %3958 = vmatpush1.msra.mxu0 0.0
      %3959 = vmatprep.subr.mxu0 0.0
      %3960 = vmatpush1.msra.mxu0 0.0
      %3961 = vmatprep.subr.mxu0 0.0
      %3962 = vmatpush1.msra.mxu0 0.0
      %3963 = vmatprep.subr.mxu0 0.0
      %3964 = vmatpush1.msra.mxu0 0.0
      %3965 = vmatprep.subr.mxu0 0.0
      %3966 = vmatpush1.msra.mxu0 0.0
      %3967 = vmatprep.subr.mxu0 0.0
      %3968 = vmatpush1.msra.mxu0 0.0
      %3969 = vmatprep.subr.mxu0 0.0
      %3970 = vmatpush1.msra.mxu0 0.0
      %3971 = vmatprep.subr.mxu0 0.0
      %3972 = vmatpush1.msra.mxu0 0.0
      %3973 = vmatprep.subr.mxu0 0.0
      %3974 = vmatpush1.msra.mxu0 0.0
      %3975 = vmatprep.subr.mxu0 0.0
      %3976 = vmatpush1.msra.mxu0 0.0
      %3977 = vmatprep.subr.mxu0 0.0
      %3978 = vmatpush1.msra.mxu0 0.0
      %3979 = vmatprep.subr.mxu0 0.0
      %3980 = vmatpush1.msra.mxu0 0.0
      %3981 = vmatprep.subr.mxu0 0.0
      %3982 = vmatpush1.msra.mxu0 0.0
      %3983 = vmatprep.subr.mxu0 0.0
      %3984 = vmatpush1.msra.mxu0 0.0
      %3985 = vmatprep.subr.mxu0 0.0
      %3986 = vmatpush1.msra.mxu0 0.0
      %3987 = vmatprep.subr.mxu0 0.0
      %3988 = vmatpush1.msra.mxu0 0.0
      %3989 = vmatprep.subr.mxu0 0.0
      %3990 = vmatpush1.msra.mxu0 0.0
      %3991 = vmatprep.subr.mxu0 0.0
      %3992 = vmatpush1.msra.mxu0 0.0
      %3993 = vmatprep.subr.mxu0 0.0
      %3994 = vmatpush1.msra.mxu0 0.0
      %3995 = vmatprep.subr.mxu0 0.0
      %3996 = vmatpush1.msra.mxu0 0.0
      %3997 = vmatprep.subr.mxu0 0.0
      %3998 = vmatpush1.msra.mxu0 0.0
      %3999 = vmatprep.subr.mxu0 0.0
      %4000 = vmatpush1.msra.mxu0 0.0
      %4001 = vmatprep.subr.mxu0 0.0
      %4002 = vmatpush1.msra.mxu0 0.0
      %4003 = vmatprep.subr.mxu0 0.0
      %4004 = vmatpush1.msra.mxu0 0.0
      %4005 = vmatprep.mubr.f32.mxu0 0.0
      %4006 = vmatmul.mubr.f32.gmra.mrb[0].mxu0 %v3831
      %v4007 = vpop.f32.mrb[0].mxu0
      %v4008 = vadd.f32 0.0, %v4007
      %v4009 = vpop.f32.mrb[0].mxu0
      %4010 = vmatprep.mubr.f32.mxu0 0.0
      %4011 = vmatmul.mubr.f32.gmra.mrb[0].mxu0 %v3834
      %v4012 = vpop.f32.mrb[0].mxu0
      %v4013 = vadd.f32 0.0, %v4012
      %v4014 = vpop.f32.mrb[0].mxu0
      %4015 = vmatprep.mubr.f32.mxu0 0.0
      %4016 = vmatmul.mubr.f32.gmra.mrb[0].mxu0 %v3837
      %v4017 = vpop.f32.mrb[0].mxu0
      %v4018 = vadd.f32 0.0, %v4017
      %v4019 = vpop.f32.mrb[0].mxu0
      %4020 = vmatprep.mubr.f32.mxu0 0.0
      %4021 = vmatmul.mubr.f32.gmra.mrb[0].mxu0 %v3840
      %v4022 = vpop.f32.mrb[0].mxu0
      %v4023 = vadd.f32 0.0, %v4022
      %v4024 = vpop.f32.mrb[0].mxu0
      %4025 = vmatprep.mubr.f32.mxu0 0.0
      %4026 = vmatmul.mubr.f32.gmra.mrb[0].mxu0 %v3843
      %v4027 = vpop.f32.mrb[0].mxu0
      %v4028 = vadd.f32 0.0, %v4027
      %v4029 = vpop.f32.mrb[0].mxu0
      %4030 = vmatprep.mubr.f32.mxu0 0.0
      %4031 = vmatmul.mubr.f32.gmra.mrb[0].mxu0 %v3846
      %v4032 = vpop.f32.mrb[0].mxu0
      %v4033 = vadd.f32 0.0, %v4032
      %v4034 = vpop.f32.mrb[0].mxu0
      %4035 = vmatprep.mubr.f32.mxu0 0.0
      %4036 = vmatmul.mubr.f32.gmra.mrb[0].mxu0 %v3849
      %v4037 = vpop.f32.mrb[0].mxu0
      %v4038 = vadd.f32 0.0, %v4037
      %v4039 = vpop.f32.mrb[0].mxu0
      %4040 = vmatprep.mubr.f32.mxu0 0.0
      %4041 = vmatmul.mubr.f32.gmra.mrb[0].mxu0 %v3852
      %v4042 = vpop.f32.mrb[0].mxu0
      %v4043 = vadd.f32 0.0, %v4042
      %v4044 = vpop.f32.mrb[0].mxu0
      %4045 = vmatprep.mubr.f32.mxu0 0.0
      %4046 = vmatmul.mubr.f32.gmra.mrb[0].mxu0 %v3855
      %v4047 = vpop.f32.mrb[0].mxu0
      %v4048 = vadd.f32 0.0, %v4047
      %v4049 = vpop.f32.mrb[0].mxu0
      %4050 = vmatprep.mubr.f32.mxu0 0.0
      %4051 = vmatmul.mubr.f32.gmra.mrb[0].mxu0 %v3858
      %v4052 = vpop.f32.mrb[0].mxu0
      %v4053 = vadd.f32 0.0, %v4052
      %v4054 = vpop.f32.mrb[0].mxu0
      %4055 = vmatprep.mubr.f32.mxu0 0.0
      %4056 = vmatmul.mubr.f32.gmra.mrb[0].mxu0 %v3861
      %v4057 = vpop.f32.mrb[0].mxu0
      %v4058 = vadd.f32 0.0, %v4057
      %v4059 = vpop.f32.mrb[0].mxu0
      %4060 = vmatprep.mubr.f32.mxu0 0.0
      %4061 = vmatmul.mubr.f32.gmra.mrb[0].mxu0 %v3864
      %v4062 = vpop.f32.mrb[0].mxu0
      %v4063 = vadd.f32 0.0, %v4062
      %v4064 = vpop.f32.mrb[0].mxu0
      %4065 = vmatprep.mubr.f32.mxu0 0.0
      %4066 = vmatmul.mubr.f32.gmra.mrb[0].mxu0 %v3867
      %v4067 = vpop.f32.mrb[0].mxu0
      %v4068 = vadd.f32 0.0, %v4067
      %v4069 = vpop.f32.mrb[0].mxu0
      %4070 = vmatprep.mubr.f32.mxu0 0.0
      %4071 = vmatmul.mubr.f32.gmra.mrb[0].mxu0 %v3870
      %v4072 = vpop.f32.mrb[0].mxu0
      %v4073 = vadd.f32 0.0, %v4072
      %v4074 = vpop.f32.mrb[0].mxu0
      %4075 = vmatprep.mubr.f32.mxu0 0.0
      %4076 = vmatmul.mubr.f32.gmra.mrb[0].mxu0 %v3873
      %v4077 = vpop.f32.mrb[0].mxu0
      %v4078 = vadd.f32 0.0, %v4077
      %v4079 = vpop.f32.mrb[0].mxu0
      %4080 = vmatprep.mubr.f32.mxu0 0.0
      %4081 = vmatmul.mubr.f32.gmra.mrb[0].mxu0 %v3876
      %v4082 = vpop.f32.mrb[0].mxu0
      %v4083 = vadd.f32 0.0, %v4082
      %v4084 = vpop.f32.mrb[0].mxu0
      %4085 = vmatprep.mubr.f32.mxu0 0.0
      %4086 = vmatmul.mubr.f32.gmra.mrb[0].mxu0 %v3879
      %v4087 = vpop.f32.mrb[0].mxu0
      %v4088 = vadd.f32 0.0, %v4087
      %v4089 = vpop.f32.mrb[0].mxu0
      %4090 = vmatprep.mubr.f32.mxu0 0.0
      %4091 = vmatmul.mubr.f32.gmra.mrb[0].mxu0 %v3882
      %v4092 = vpop.f32.mrb[0].mxu0
      %v4093 = vadd.f32 0.0, %v4092
      %v4094 = vpop.f32.mrb[0].mxu0
      %4095 = vmatprep.mubr.f32.mxu0 0.0
      %4096 = vmatmul.mubr.f32.gmra.mrb[0].mxu0 %v3885
      %v4097 = vpop.f32.mrb[0].mxu0
      %v4098 = vadd.f32 0.0, %v4097
      %v4099 = vpop.f32.mrb[0].mxu0
      %4100 = vmatprep.mubr.f32.mxu0 0.0
      %4101 = vmatmul.mubr.f32.gmra.mrb[0].mxu0 %v3888
      %v4102 = vpop.f32.mrb[0].mxu0
      %v4103 = vadd.f32 0.0, %v4102
      %v4104 = vpop.f32.mrb[0].mxu0
      %4105 = vmatprep.mubr.f32.mxu0 0.0
      %4106 = vmatmul.mubr.f32.gmra.mrb[0].mxu0 %v3891
      %v4107 = vpop.f32.mrb[0].mxu0
      %v4108 = vadd.f32 0.0, %v4107
      %v4109 = vpop.f32.mrb[0].mxu0
      %4110 = vmatprep.mubr.f32.mxu0 0.0
      %4111 = vmatmul.mubr.f32.gmra.mrb[0].mxu0 %v3894
      %v4112 = vpop.f32.mrb[0].mxu0
      %v4113 = vadd.f32 0.0, %v4112
      %v4114 = vpop.f32.mrb[0].mxu0
      %4115 = vmatprep.mubr.f32.mxu0 0.0
      %4116 = vmatmul.mubr.f32.gmra.mrb[0].mxu0 %v3897
      %v4117 = vpop.f32.mrb[0].mxu0
      %v4118 = vadd.f32 0.0, %v4117
      %v4119 = vpop.f32.mrb[0].mxu0
      %4120 = vmatprep.mubr.f32.mxu0 0.0
      %4121 = vmatmul.mubr.f32.gmra.mrb[0].mxu0 %v3900
      %v4122 = vpop.f32.mrb[0].mxu0
      %v4123 = vadd.f32 0.0, %v4122
      %v4124 = vpop.f32.mrb[0].mxu0
      %4125 = vmatprep.mubr.f32.mxu0 0.0
      %4126 = vmatmul.mubr.f32.gmra.mrb[0].mxu0 %v3903
      %v4127 = vpop.f32.mrb[0].mxu0
      %v4128 = vadd.f32 0.0, %v4127
      %v4129 = vpop.f32.mrb[0].mxu0
      %4130 = vmatprep.mubr.f32.mxu0 0.0
      %4131 = vmatmul.mubr.f32.gmra.mrb[0].mxu0 %v3906
      %v4132 = vpop.f32.mrb[0].mxu0
      %v4133 = vadd.f32 0.0, %v4132
      %v4134 = vpop.f32.mrb[0].mxu0
      %4135 = vmatprep.mubr.f32.mxu0 0.0
      %4136 = vmatmul.mubr.f32.gmra.mrb[0].mxu0 %v3909
      %v4137 = vpop.f32.mrb[0].mxu0
      %v4138 = vadd.f32 0.0, %v4137
      %v4139 = vpop.f32.mrb[0].mxu0
      %4140 = vmatprep.mubr.f32.mxu0 0.0
      %4141 = vmatmul.mubr.f32.gmra.mrb[0].mxu0 %v3912
      %v4142 = vpop.f32.mrb[0].mxu0
      %v4143 = vadd.f32 0.0, %v4142
      %v4144 = vpop.f32.mrb[0].mxu0
      %4145 = vmatprep.mubr.f32.mxu0 0.0
      %4146 = vmatmul.mubr.f32.gmra.mrb[0].mxu0 %v3915
      %v4147 = vpop.f32.mrb[0].mxu0
      %v4148 = vadd.f32 0.0, %v4147
      %v4149 = vpop.f32.mrb[0].mxu0
      %4150 = vmatprep.mubr.f32.mxu0 0.0
      %4151 = vmatmul.mubr.f32.gmra.mrb[0].mxu0 %v3918
      %v4152 = vpop.f32.mrb[0].mxu0
      %v4153 = vadd.f32 0.0, %v4152
      %v4154 = vpop.f32.mrb[0].mxu0
      %4155 = vmatprep.mubr.f32.mxu0 0.0
      %4156 = vmatmul.mubr.f32.gmra.mrb[0].mxu0 %v3921
      %v4157 = vpop.f32.mrb[0].mxu0
      %v4158 = vadd.f32 0.0, %v4157
      %v4159 = vpop.f32.mrb[0].mxu0
      %4160 = vmatprep.mubr.f32.mxu0 0.0
      %4161 = vmatmul.mubr.f32.gmra.mrb[0].mxu0 %v3924
      %v4162 = vpop.f32.mrb[0].mxu0
      %v4163 = vadd.f32 0.0, %v4162
      %v4164 = vpop.f32.mrb[0].mxu0
      %4165 = vmatprep.mubr.f32.mxu0 0.0
      %4166 = vmatmul.mubr.f32.gmra.mrb[0].mxu0 %v3927
      %v4167 = vpop.f32.mrb[0].mxu0
      %v4168 = vadd.f32 0.0, %v4167
      %v4169 = vpop.f32.mrb[0].mxu0
      %4170 = vmatprep.mubr.f32.mxu0 0.0
      %4171 = vmatmul.mubr.f32.gmra.mrb[0].mxu0 %v3930
      %v4172 = vpop.f32.mrb[0].mxu0
      %v4173 = vadd.f32 0.0, %v4172
      %v4174 = vpop.f32.mrb[0].mxu0
      %4175 = vmatprep.mubr.f32.mxu0 0.0
      %4176 = vmatmul.mubr.f32.gmra.mrb[0].mxu0 %v3933
      %v4177 = vpop.f32.mrb[0].mxu0
      %v4178 = vadd.f32 0.0, %v4177
      %v4179 = vpop.f32.mrb[0].mxu0
      %4180 = vmatprep.mubr.f32.mxu0 0.0
      %4181 = vmatmul.mubr.f32.gmra.mrb[0].mxu0 %v3936
      %v4182 = vpop.f32.mrb[0].mxu0
      %v4183 = vadd.f32 0.0, %v4182
      %v4184 = vpop.f32.mrb[0].mxu0
      %4185 = vdwg.mxu0
      %v4186 = vadd.f32 %v3756, %v4008
      %v4187 = vadd.f32 %v3757, %v4013
      %v4188 = vadd.f32 %v3758, %v4018
      %v4189 = vadd.f32 %v3759, %v4023
      %v4190 = vadd.f32 %v3760, %v4028
      %v4191 = vadd.f32 %v3761, %v4033
      %v4192 = vadd.f32 %v3762, %v4038
      %v4193 = vadd.f32 %v3763, %v4043
      %v4194 = vadd.f32 %v3764, %v4048
      %v4195 = vadd.f32 %v3765, %v4053
      %v4196 = vadd.f32 %v3766, %v4058
      %v4197 = vadd.f32 %v3767, %v4063
      %v4198 = vadd.f32 %v3768, %v4068
      %v4199 = vadd.f32 %v3769, %v4073
      %v4200 = vadd.f32 %v3770, %v4078
      %v4201 = vadd.f32 %v3771, %v4083
      %v4202 = vadd.f32 %v3772, %v4088
      %v4203 = vadd.f32 %v3773, %v4093
      %v4204 = vadd.f32 %v3774, %v4098
      %v4205 = vadd.f32 %v3775, %v4103
      %v4206 = vadd.f32 %v3776, %v4108
      %v4207 = vadd.f32 %v3777, %v4113
      %v4208 = vadd.f32 %v3778, %v4118
      %v4209 = vadd.f32 %v3779, %v4123
      %v4210 = vadd.f32 %v3780, %v4128
      %v4211 = vadd.f32 %v3781, %v4133
      %v4212 = vadd.f32 %v3782, %v4138
      %v4213 = vadd.f32 %v3783, %v4143
      %v4214 = vadd.f32 %v3784, %v4148
      %v4215 = vadd.f32 %v3785, %v4153
      %v4216 = vadd.f32 %v3786, %v4158
      %v4217 = vadd.f32 %v3787, %v4163
      %v4218 = vadd.f32 %v3788, %v4168
      %v4219 = vadd.f32 %v3789, %v4173
      %v4220 = vadd.f32 %v3790, %v4178
      %v4221 = vadd.f32 %v3791, %v4183
      %v4222 = vld [vmem:[%s4] sm:$0x1]
      %v4224 = vlaneseq
      %v4225 = vshrl.u32 %v4224, 7
      %v4226 = vsub.s32 0, %v4225
      %v4227 = vrot.slane %v4222, %v4226
      %v4229 = vadd.f32 %v4186, %v4227
      %v4230 = vadd.f32 %v4187, %v4227
      %v4231 = vadd.f32 %v4188, %v4227
      %v4232 = vadd.f32 %v4189, %v4227
      %v4233 = vadd.f32 %v4190, %v4227
      %v4234 = vadd.f32 %v4191, %v4227
      %v4235 = vadd.f32 %v4192, %v4227
      %v4236 = vadd.f32 %v4193, %v4227
      %v4237 = vadd.f32 %v4194, %v4227
      %v4238 = vadd.f32 %v4195, %v4227
      %v4239 = vadd.f32 %v4196, %v4227
      %v4240 = vadd.f32 %v4197, %v4227
      %v4241 = vadd.f32 %v4198, %v4227
      %v4242 = vadd.f32 %v4199, %v4227
      %v4243 = vadd.f32 %v4200, %v4227
      %v4244 = vadd.f32 %v4201, %v4227
      %v4245 = vadd.f32 %v4202, %v4227
      %v4246 = vadd.f32 %v4203, %v4227
      %v4247 = vadd.f32 %v4204, %v4227
      %v4248 = vadd.f32 %v4205, %v4227
      %v4249 = vadd.f32 %v4206, %v4227
      %v4250 = vadd.f32 %v4207, %v4227
      %v4251 = vadd.f32 %v4208, %v4227
      %v4252 = vadd.f32 %v4209, %v4227
      %v4253 = vadd.f32 %v4210, %v4227
      %v4254 = vadd.f32 %v4211, %v4227
      %v4255 = vadd.f32 %v4212, %v4227
      %v4256 = vadd.f32 %v4213, %v4227
      %v4257 = vadd.f32 %v4214, %v4227
      %v4258 = vadd.f32 %v4215, %v4227
      %v4259 = vadd.f32 %v4216, %v4227
      %v4260 = vadd.f32 %v4217, %v4227
      %v4261 = vadd.f32 %v4218, %v4227
      %v4262 = vadd.f32 %v4219, %v4227
      %v4263 = vadd.f32 %v4220, %v4227
      %v4264 = vadd.f32 %v4221, %v4227
      %4266 = vset.pattern.permute.xlu0 0
      %4267 = vperm.xlu0 %4266, %v387
      %v4268 = vpop.permute.xlu0 %4267
      %4271 = vset.pattern.permute.xlu0 0
      %4272 = vperm.xlu0 %4271, %v388
      %v4273 = vpop.permute.xlu0 %4272
      %4276 = vset.pattern.permute.xlu0 0
      %4277 = vperm.xlu0 %4276, %v389
      %v4278 = vpop.permute.xlu0 %4277
      %4281 = vset.pattern.permute.xlu0 0
      %4282 = vperm.xlu0 %4281, %v390
      %v4283 = vpop.permute.xlu0 %4282
      %4286 = vset.pattern.permute.xlu0 0
      %4287 = vperm.xlu0 %4286, %v391
      %v4288 = vpop.permute.xlu0 %4287
      %4291 = vset.pattern.permute.xlu0 0
      %4292 = vperm.xlu0 %4291, %v392
      %v4293 = vpop.permute.xlu0 %4292
      %4296 = vset.pattern.permute.xlu0 0
      %4297 = vperm.xlu0 %4296, %v393
      %v4298 = vpop.permute.xlu0 %4297
      %4301 = vset.pattern.permute.xlu0 0
      %4302 = vperm.xlu0 %4301, %v394
      %v4303 = vpop.permute.xlu0 %4302
      %4306 = vset.pattern.permute.xlu0 0
      %4307 = vperm.xlu0 %4306, %v395
      %v4308 = vpop.permute.xlu0 %4307
      %4311 = vset.pattern.permute.xlu0 0
      %4312 = vperm.xlu0 %4311, %v396
      %v4313 = vpop.permute.xlu0 %4312
      %4316 = vset.pattern.permute.xlu0 0
      %4317 = vperm.xlu0 %4316, %v397
      %v4318 = vpop.permute.xlu0 %4317
      %4321 = vset.pattern.permute.xlu0 0
      %4322 = vperm.xlu0 %4321, %v398
      %v4323 = vpop.permute.xlu0 %4322
      %4326 = vset.pattern.permute.xlu0 0
      %4327 = vperm.xlu0 %4326, %v399
      %v4328 = vpop.permute.xlu0 %4327
      %4331 = vset.pattern.permute.xlu0 0
      %4332 = vperm.xlu0 %4331, %v400
      %v4333 = vpop.permute.xlu0 %4332
      %4336 = vset.pattern.permute.xlu0 0
      %4337 = vperm.xlu0 %4336, %v401
      %v4338 = vpop.permute.xlu0 %4337
      %4341 = vset.pattern.permute.xlu0 0
      %4342 = vperm.xlu0 %4341, %v402
      %v4343 = vpop.permute.xlu0 %4342
      %4346 = vset.pattern.permute.xlu0 0
      %4347 = vperm.xlu0 %4346, %v403
      %v4348 = vpop.permute.xlu0 %4347
      %4351 = vset.pattern.permute.xlu0 0
      %4352 = vperm.xlu0 %4351, %v404
      %v4353 = vpop.permute.xlu0 %4352
      %4356 = vset.pattern.permute.xlu0 0
      %4357 = vperm.xlu0 %4356, %v405
      %v4358 = vpop.permute.xlu0 %4357
      %4361 = vset.pattern.permute.xlu0 0
      %4362 = vperm.xlu0 %4361, %v406
      %v4363 = vpop.permute.xlu0 %4362
      %4366 = vset.pattern.permute.xlu0 0
      %4367 = vperm.xlu0 %4366, %v407
      %v4368 = vpop.permute.xlu0 %4367
      %4371 = vset.pattern.permute.xlu0 0
      %4372 = vperm.xlu0 %4371, %v408
      %v4373 = vpop.permute.xlu0 %4372
      %4376 = vset.pattern.permute.xlu0 0
      %4377 = vperm.xlu0 %4376, %v409
      %v4378 = vpop.permute.xlu0 %4377
      %4381 = vset.pattern.permute.xlu0 0
      %4382 = vperm.xlu0 %4381, %v410
      %v4383 = vpop.permute.xlu0 %4382
      %4386 = vset.pattern.permute.xlu0 0
      %4387 = vperm.xlu0 %4386, %v411
      %v4388 = vpop.permute.xlu0 %4387
      %4391 = vset.pattern.permute.xlu0 0
      %4392 = vperm.xlu0 %4391, %v412
      %v4393 = vpop.permute.xlu0 %4392
      %4396 = vset.pattern.permute.xlu0 0
      %4397 = vperm.xlu0 %4396, %v413
      %v4398 = vpop.permute.xlu0 %4397
      %4401 = vset.pattern.permute.xlu0 0
      %4402 = vperm.xlu0 %4401, %v414
      %v4403 = vpop.permute.xlu0 %4402
      %4406 = vset.pattern.permute.xlu0 0
      %4407 = vperm.xlu0 %4406, %v415
      %v4408 = vpop.permute.xlu0 %4407
      %4411 = vset.pattern.permute.xlu0 0
      %4412 = vperm.xlu0 %4411, %v416
      %v4413 = vpop.permute.xlu0 %4412
      %4416 = vset.pattern.permute.xlu0 0
      %4417 = vperm.xlu0 %4416, %v417
      %v4418 = vpop.permute.xlu0 %4417
      %4421 = vset.pattern.permute.xlu0 0
      %4422 = vperm.xlu0 %4421, %v418
      %v4423 = vpop.permute.xlu0 %4422
      %4426 = vset.pattern.permute.xlu0 0
      %4427 = vperm.xlu0 %4426, %v419
      %v4428 = vpop.permute.xlu0 %4427
      %4431 = vset.pattern.permute.xlu0 0
      %4432 = vperm.xlu0 %4431, %v420
      %v4433 = vpop.permute.xlu0 %4432
      %4436 = vset.pattern.permute.xlu0 0
      %4437 = vperm.xlu0 %4436, %v421
      %v4438 = vpop.permute.xlu0 %4437
      %4441 = vset.pattern.permute.xlu0 0
      %4442 = vperm.xlu0 %4441, %v422
      %v4443 = vpop.permute.xlu0 %4442
      %v4445 = vmul.f32 %v4229, %v4268
      %v4446 = vmul.f32 %v4230, %v4273
      %v4447 = vmul.f32 %v4231, %v4278
      %v4448 = vmul.f32 %v4232, %v4283
      %v4449 = vmul.f32 %v4233, %v4288
      %v4450 = vmul.f32 %v4234, %v4293
      %v4451 = vmul.f32 %v4235, %v4298
      %v4452 = vmul.f32 %v4236, %v4303
      %v4453 = vmul.f32 %v4237, %v4308
      %v4454 = vmul.f32 %v4238, %v4313
      %v4455 = vmul.f32 %v4239, %v4318
      %v4456 = vmul.f32 %v4240, %v4323
      %v4457 = vmul.f32 %v4241, %v4328
      %v4458 = vmul.f32 %v4242, %v4333
      %v4459 = vmul.f32 %v4243, %v4338
      %v4460 = vmul.f32 %v4244, %v4343
      %v4461 = vmul.f32 %v4245, %v4348
      %v4462 = vmul.f32 %v4246, %v4353
      %v4463 = vmul.f32 %v4247, %v4358
      %v4464 = vmul.f32 %v4248, %v4363
      %v4465 = vmul.f32 %v4249, %v4368
      %v4466 = vmul.f32 %v4250, %v4373
      %v4467 = vmul.f32 %v4251, %v4378
      %v4468 = vmul.f32 %v4252, %v4383
      %v4469 = vmul.f32 %v4253, %v4388
      %v4470 = vmul.f32 %v4254, %v4393
      %v4471 = vmul.f32 %v4255, %v4398
      %v4472 = vmul.f32 %v4256, %v4403
      %v4473 = vmul.f32 %v4257, %v4408
      %v4474 = vmul.f32 %v4258, %v4413
      %v4475 = vmul.f32 %v4259, %v4418
      %v4476 = vmul.f32 %v4260, %v4423
      %v4477 = vmul.f32 %v4261, %v4428
      %v4478 = vmul.f32 %v4262, %v4433
      %v4479 = vmul.f32 %v4263, %v4438
      %v4480 = vmul.f32 %v4264, %v4443
      %v4481 = vsel %vm498, %v4445, 0.0
      %v4482 = vsel %vm498, %v4446, 0.0
      %v4483 = vadd.f32 %v4481, %v4482
      %v4484 = vsel %vm498, %v4447, 0.0
      %v4485 = vadd.f32 %v4483, %v4484
      %v4486 = vsel %vm498, %v4448, 0.0
      %v4487 = vadd.f32 %v4485, %v4486
      %v4488 = vsel %vm498, %v4449, 0.0
      %v4489 = vadd.f32 %v4487, %v4488
      %v4490 = vsel %vm498, %v4450, 0.0
      %v4491 = vadd.f32 %v4489, %v4490
      %v4492 = vsel %vm498, %v4451, 0.0
      %v4493 = vadd.f32 %v4491, %v4492
      %v4494 = vsel %vm498, %v4452, 0.0
      %v4495 = vadd.f32 %v4493, %v4494
      %v4496 = vsel %vm498, %v4453, 0.0
      %v4497 = vadd.f32 %v4495, %v4496
      %v4498 = vsel %vm498, %v4454, 0.0
      %v4499 = vadd.f32 %v4497, %v4498
      %v4500 = vsel %vm498, %v4455, 0.0
      %v4501 = vadd.f32 %v4499, %v4500
      %v4502 = vsel %vm498, %v4456, 0.0
      %v4503 = vadd.f32 %v4501, %v4502
      %v4504 = vsel %vm498, %v4457, 0.0
      %v4505 = vadd.f32 %v4503, %v4504
      %v4506 = vsel %vm498, %v4458, 0.0
      %v4507 = vadd.f32 %v4505, %v4506
      %v4508 = vsel %vm498, %v4459, 0.0
      %v4509 = vadd.f32 %v4507, %v4508
      %v4510 = vsel %vm498, %v4460, 0.0
      %v4511 = vadd.f32 %v4509, %v4510
      %v4512 = vsel %vm498, %v4461, 0.0
      %v4513 = vadd.f32 %v4511, %v4512
      %v4514 = vsel %vm498, %v4462, 0.0
      %v4515 = vadd.f32 %v4513, %v4514
      %v4516 = vsel %vm498, %v4463, 0.0
      %v4517 = vadd.f32 %v4515, %v4516
      %v4518 = vsel %vm498, %v4464, 0.0
      %v4519 = vadd.f32 %v4517, %v4518
      %v4520 = vsel %vm498, %v4465, 0.0
      %v4521 = vadd.f32 %v4519, %v4520
      %v4522 = vsel %vm498, %v4466, 0.0
      %v4523 = vadd.f32 %v4521, %v4522
      %v4524 = vsel %vm498, %v4467, 0.0
      %v4525 = vadd.f32 %v4523, %v4524
      %v4526 = vsel %vm498, %v4468, 0.0
      %v4527 = vadd.f32 %v4525, %v4526
      %v4528 = vsel %vm498, %v4469, 0.0
      %v4529 = vadd.f32 %v4527, %v4528
      %v4530 = vsel %vm498, %v4470, 0.0
      %v4531 = vadd.f32 %v4529, %v4530
      %v4532 = vsel %vm498, %v4471, 0.0
      %v4533 = vadd.f32 %v4531, %v4532
      %v4534 = vsel %vm498, %v4472, 0.0
      %v4535 = vadd.f32 %v4533, %v4534
      %v4536 = vsel %vm498, %v4473, 0.0
      %v4537 = vadd.f32 %v4535, %v4536
      %v4538 = vsel %vm498, %v4474, 0.0
      %v4539 = vadd.f32 %v4537, %v4538
      %v4540 = vsel %vm498, %v4475, 0.0
      %v4541 = vadd.f32 %v4539, %v4540
      %v4542 = vsel %vm498, %v4476, 0.0
      %v4543 = vadd.f32 %v4541, %v4542
      %v4544 = vsel %vm498, %v4477, 0.0
      %v4545 = vadd.f32 %v4543, %v4544
      %v4546 = vsel %vm498, %v4478, 0.0
      %v4547 = vadd.f32 %v4545, %v4546
      %v4548 = vsel %vm498, %v4479, 0.0
      %v4549 = vadd.f32 %v4547, %v4548
      %v4550 = vsel %vm498, %v4480, 0.0
      %v4551 = vadd.f32 %v4549, %v4550
      %v4552 = vrot.slane %v4551, 4
      %v4553 = vadd.f32 %v4551, %v4552
      %v4554 = vrot.slane %v4553, 2
      %v4555 = vadd.f32 %v4553, %v4554
      %v4556 = vrot.slane %v4555, 1
      %v4557 = vadd.f32 %v4555, %v4556
      %v4558 = vmul.f32 %v4445, %v4229
      %v4559 = vmul.f32 %v4446, %v4230
      %v4560 = vmul.f32 %v4447, %v4231
      %v4561 = vmul.f32 %v4448, %v4232
      %v4562 = vmul.f32 %v4449, %v4233
      %v4563 = vmul.f32 %v4450, %v4234
      %v4564 = vmul.f32 %v4451, %v4235
      %v4565 = vmul.f32 %v4452, %v4236
      %v4566 = vmul.f32 %v4453, %v4237
      %v4567 = vmul.f32 %v4454, %v4238
      %v4568 = vmul.f32 %v4455, %v4239
      %v4569 = vmul.f32 %v4456, %v4240
      %v4570 = vmul.f32 %v4457, %v4241
      %v4571 = vmul.f32 %v4458, %v4242
      %v4572 = vmul.f32 %v4459, %v4243
      %v4573 = vmul.f32 %v4460, %v4244
      %v4574 = vmul.f32 %v4461, %v4245
      %v4575 = vmul.f32 %v4462, %v4246
      %v4576 = vmul.f32 %v4463, %v4247
      %v4577 = vmul.f32 %v4464, %v4248
      %v4578 = vmul.f32 %v4465, %v4249
      %v4579 = vmul.f32 %v4466, %v4250
      %v4580 = vmul.f32 %v4467, %v4251
      %v4581 = vmul.f32 %v4468, %v4252
      %v4582 = vmul.f32 %v4469, %v4253
      %v4583 = vmul.f32 %v4470, %v4254
      %v4584 = vmul.f32 %v4471, %v4255
      %v4585 = vmul.f32 %v4472, %v4256
      %v4586 = vmul.f32 %v4473, %v4257
      %v4587 = vmul.f32 %v4474, %v4258
      %v4588 = vmul.f32 %v4475, %v4259
      %v4589 = vmul.f32 %v4476, %v4260
      %v4590 = vmul.f32 %v4477, %v4261
      %v4591 = vmul.f32 %v4478, %v4262
      %v4592 = vmul.f32 %v4479, %v4263
      %v4593 = vmul.f32 %v4480, %v4264
      %v4594 = vsel %vm498, %v4558, 0.0
      %v4595 = vsel %vm498, %v4559, 0.0
      %v4596 = vadd.f32 %v4594, %v4595
      %v4597 = vsel %vm498, %v4560, 0.0
      %v4598 = vadd.f32 %v4596, %v4597
      %v4599 = vsel %vm498, %v4561, 0.0
      %v4600 = vadd.f32 %v4598, %v4599
      %v4601 = vsel %vm498, %v4562, 0.0
      %v4602 = vadd.f32 %v4600, %v4601
      %v4603 = vsel %vm498, %v4563, 0.0
      %v4604 = vadd.f32 %v4602, %v4603
      %v4605 = vsel %vm498, %v4564, 0.0
      %v4606 = vadd.f32 %v4604, %v4605
      %v4607 = vsel %vm498, %v4565, 0.0
      %v4608 = vadd.f32 %v4606, %v4607
      %v4609 = vsel %vm498, %v4566, 0.0
      %v4610 = vadd.f32 %v4608, %v4609
      %v4611 = vsel %vm498, %v4567, 0.0
      %v4612 = vadd.f32 %v4610, %v4611
      %v4613 = vsel %vm498, %v4568, 0.0
      %v4614 = vadd.f32 %v4612, %v4613
      %v4615 = vsel %vm498, %v4569, 0.0
      %v4616 = vadd.f32 %v4614, %v4615
      %v4617 = vsel %vm498, %v4570, 0.0
      %v4618 = vadd.f32 %v4616, %v4617
      %v4619 = vsel %vm498, %v4571, 0.0
      %v4620 = vadd.f32 %v4618, %v4619
      %v4621 = vsel %vm498, %v4572, 0.0
      %v4622 = vadd.f32 %v4620, %v4621
      %v4623 = vsel %vm498, %v4573, 0.0
      %v4624 = vadd.f32 %v4622, %v4623
      %v4625 = vsel %vm498, %v4574, 0.0
      %v4626 = vadd.f32 %v4624, %v4625
      %v4627 = vsel %vm498, %v4575, 0.0
      %v4628 = vadd.f32 %v4626, %v4627
      %v4629 = vsel %vm498, %v4576, 0.0
      %v4630 = vadd.f32 %v4628, %v4629
      %v4631 = vsel %vm498, %v4577, 0.0
      %v4632 = vadd.f32 %v4630, %v4631
      %v4633 = vsel %vm498, %v4578, 0.0
      %v4634 = vadd.f32 %v4632, %v4633
      %v4635 = vsel %vm498, %v4579, 0.0
      %v4636 = vadd.f32 %v4634, %v4635
      %v4637 = vsel %vm498, %v4580, 0.0
      %v4638 = vadd.f32 %v4636, %v4637
      %v4639 = vsel %vm498, %v4581, 0.0
      %v4640 = vadd.f32 %v4638, %v4639
      %v4641 = vsel %vm498, %v4582, 0.0
      %v4642 = vadd.f32 %v4640, %v4641
      %v4643 = vsel %vm498, %v4583, 0.0
      %v4644 = vadd.f32 %v4642, %v4643
      %v4645 = vsel %vm498, %v4584, 0.0
      %v4646 = vadd.f32 %v4644, %v4645
      %v4647 = vsel %vm498, %v4585, 0.0
      %v4648 = vadd.f32 %v4646, %v4647
      %v4649 = vsel %vm498, %v4586, 0.0
      %v4650 = vadd.f32 %v4648, %v4649
      %v4651 = vsel %vm498, %v4587, 0.0
      %v4652 = vadd.f32 %v4650, %v4651
      %v4653 = vsel %vm498, %v4588, 0.0
      %v4654 = vadd.f32 %v4652, %v4653
      %v4655 = vsel %vm498, %v4589, 0.0
      %v4656 = vadd.f32 %v4654, %v4655
      %v4657 = vsel %vm498, %v4590, 0.0
      %v4658 = vadd.f32 %v4656, %v4657
      %v4659 = vsel %vm498, %v4591, 0.0
      %v4660 = vadd.f32 %v4658, %v4659
      %v4661 = vsel %vm498, %v4592, 0.0
      %v4662 = vadd.f32 %v4660, %v4661
      %v4663 = vsel %vm498, %v4593, 0.0
      %v4664 = vadd.f32 %v4662, %v4663
      %v4665 = vrot.slane %v4664, 4
      %v4666 = vadd.f32 %v4664, %v4665
      %v4667 = vrot.slane %v4666, 2
      %v4668 = vadd.f32 %v4666, %v4667
      %v4669 = vrot.slane %v4668, 1
      %v4670 = vadd.f32 %v4668, %v4669
      %v4671 = vmul.f32 %v4557, 0.00390625
      %v4672 = vmul.f32 %v4670, 0.00390625
      %v4673 = vmul.f32 %v4671, %v4671
      %v4674 = vsub.f32 %v4672, %v4673
      %v4675 = vsub.f32 %v4229, %v4671
      %v4676 = vsub.f32 %v4230, %v4671
      %v4677 = vsub.f32 %v4231, %v4671
      %v4678 = vsub.f32 %v4232, %v4671
      %v4679 = vsub.f32 %v4233, %v4671
      %v4680 = vsub.f32 %v4234, %v4671
      %v4681 = vsub.f32 %v4235, %v4671
      %v4682 = vsub.f32 %v4236, %v4671
      %v4683 = vsub.f32 %v4237, %v4671
      %v4684 = vsub.f32 %v4238, %v4671
      %v4685 = vsub.f32 %v4239, %v4671
      %v4686 = vsub.f32 %v4240, %v4671
      %v4687 = vsub.f32 %v4241, %v4671
      %v4688 = vsub.f32 %v4242, %v4671
      %v4689 = vsub.f32 %v4243, %v4671
      %v4690 = vsub.f32 %v4244, %v4671
      %v4691 = vsub.f32 %v4245, %v4671
      %v4692 = vsub.f32 %v4246, %v4671
      %v4693 = vsub.f32 %v4247, %v4671
      %v4694 = vsub.f32 %v4248, %v4671
      %v4695 = vsub.f32 %v4249, %v4671
      %v4696 = vsub.f32 %v4250, %v4671
      %v4697 = vsub.f32 %v4251, %v4671
      %v4698 = vsub.f32 %v4252, %v4671
      %v4699 = vsub.f32 %v4253, %v4671
      %v4700 = vsub.f32 %v4254, %v4671
      %v4701 = vsub.f32 %v4255, %v4671
      %v4702 = vsub.f32 %v4256, %v4671
      %v4703 = vsub.f32 %v4257, %v4671
      %v4704 = vsub.f32 %v4258, %v4671
      %v4705 = vsub.f32 %v4259, %v4671
      %v4706 = vsub.f32 %v4260, %v4671
      %v4707 = vsub.f32 %v4261, %v4671
      %v4708 = vsub.f32 %v4262, %v4671
      %v4709 = vsub.f32 %v4263, %v4671
      %v4710 = vsub.f32 %v4264, %v4671
      %v4711 = vadd.f32 %v4674, 1e-05
      %v4712 = vrsqrt.pop %v4711
      %v4713 = vmul.f32 %v4675, %v4712
      %v4714 = vmul.f32 %v4676, %v4712
      %v4715 = vmul.f32 %v4677, %v4712
      %v4716 = vmul.f32 %v4678, %v4712
      %v4717 = vmul.f32 %v4679, %v4712
      %v4718 = vmul.f32 %v4680, %v4712
      %v4719 = vmul.f32 %v4681, %v4712
      %v4720 = vmul.f32 %v4682, %v4712
      %v4721 = vmul.f32 %v4683, %v4712
      %v4722 = vmul.f32 %v4684, %v4712
      %v4723 = vmul.f32 %v4685, %v4712
      %v4724 = vmul.f32 %v4686, %v4712
      %v4725 = vmul.f32 %v4687, %v4712
      %v4726 = vmul.f32 %v4688, %v4712
      %v4727 = vmul.f32 %v4689, %v4712
      %v4728 = vmul.f32 %v4690, %v4712
      %v4729 = vmul.f32 %v4691, %v4712
      %v4730 = vmul.f32 %v4692, %v4712
      %v4731 = vmul.f32 %v4693, %v4712
      %v4732 = vmul.f32 %v4694, %v4712
      %v4733 = vmul.f32 %v4695, %v4712
      %v4734 = vmul.f32 %v4696, %v4712
      %v4735 = vmul.f32 %v4697, %v4712
      %v4736 = vmul.f32 %v4698, %v4712
      %v4737 = vmul.f32 %v4699, %v4712
      %v4738 = vmul.f32 %v4700, %v4712
      %v4739 = vmul.f32 %v4701, %v4712
      %v4740 = vmul.f32 %v4702, %v4712
      %v4741 = vmul.f32 %v4703, %v4712
      %v4742 = vmul.f32 %v4704, %v4712
      %v4743 = vmul.f32 %v4705, %v4712
      %v4744 = vmul.f32 %v4706, %v4712
      %v4745 = vmul.f32 %v4707, %v4712
      %v4746 = vmul.f32 %v4708, %v4712
      %v4747 = vmul.f32 %v4709, %v4712
      %v4748 = vmul.f32 %v4710, %v4712
      %v4749 = vmax.f32 %v4713, 0.0
      %v4750 = vmax.f32 %v4714, 0.0
      %v4751 = vmax.f32 %v4715, 0.0
      %v4752 = vmax.f32 %v4716, 0.0
      %v4753 = vmax.f32 %v4717, 0.0
      %v4754 = vmax.f32 %v4718, 0.0
      %v4755 = vmax.f32 %v4719, 0.0
      %v4756 = vmax.f32 %v4720, 0.0
      %v4757 = vmax.f32 %v4721, 0.0
      %v4758 = vmax.f32 %v4722, 0.0
      %v4759 = vmax.f32 %v4723, 0.0
      %v4760 = vmax.f32 %v4724, 0.0
      %v4761 = vmax.f32 %v4725, 0.0
      %v4762 = vmax.f32 %v4726, 0.0
      %v4763 = vmax.f32 %v4727, 0.0
      %v4764 = vmax.f32 %v4728, 0.0
      %v4765 = vmax.f32 %v4729, 0.0
      %v4766 = vmax.f32 %v4730, 0.0
      %v4767 = vmax.f32 %v4731, 0.0
      %v4768 = vmax.f32 %v4732, 0.0
      %v4769 = vmax.f32 %v4733, 0.0
      %v4770 = vmax.f32 %v4734, 0.0
      %v4771 = vmax.f32 %v4735, 0.0
      %v4772 = vmax.f32 %v4736, 0.0
      %v4773 = vmax.f32 %v4737, 0.0
      %v4774 = vmax.f32 %v4738, 0.0
      %v4775 = vmax.f32 %v4739, 0.0
      %v4776 = vmax.f32 %v4740, 0.0
      %v4777 = vmax.f32 %v4741, 0.0
      %v4778 = vmax.f32 %v4742, 0.0
      %v4779 = vmax.f32 %v4743, 0.0
      %v4780 = vmax.f32 %v4744, 0.0
      %v4781 = vmax.f32 %v4745, 0.0
      %v4782 = vmax.f32 %v4746, 0.0
      %v4783 = vmax.f32 %v4747, 0.0
      %v4784 = vmax.f32 %v4748, 0.0
      %4785 = vst.msk [vmem:[#allocation2] sm:$0xff] %vm498, 0.0
      %4786 = vst.msk [vmem:[#allocation2 + $0x8] sm:$0xff] %vm498, 0.0
      %4787 = vst.msk [vmem:[#allocation2 + $0x10] sm:$0xff] %vm498, 0.0
      %4788 = vst.msk [vmem:[#allocation2 + $0x18] sm:$0xff] %vm498, 0.0
      %4789 = vst.msk [vmem:[#allocation2 + $0x20] sm:$0xff] %vm498, 0.0
      %4790 = vst.msk [vmem:[#allocation2 + $0x28] sm:$0xff] %vm498, 0.0
      %4791 = vst.msk [vmem:[#allocation2 + $0x30] sm:$0xff] %vm498, 0.0
      %4792 = vst.msk [vmem:[#allocation2 + $0x38] sm:$0xff] %vm498, 0.0
      %4793 = vst.msk [vmem:[#allocation2 + $0x40] sm:$0xff] %vm498, 0.0
      %4794 = vst.msk [vmem:[#allocation2 + $0x48] sm:$0xff] %vm498, 0.0
      %4795 = vst.msk [vmem:[#allocation2 + $0x50] sm:$0xff] %vm498, 0.0
      %4796 = vst.msk [vmem:[#allocation2 + $0x58] sm:$0xff] %vm498, 0.0
      %4797 = vst.msk [vmem:[#allocation2 + $0x60] sm:$0xff] %vm498, 0.0
      %4798 = vst.msk [vmem:[#allocation2 + $0x68] sm:$0xff] %vm498, 0.0
      %4799 = vst.msk [vmem:[#allocation2 + $0x70] sm:$0xff] %vm498, 0.0
      %4800 = vst.msk [vmem:[#allocation2 + $0x78] sm:$0xff] %vm498, 0.0
      %4801 = vst.msk [vmem:[#allocation2 + $0x80] sm:$0xff] %vm498, 0.0
      %4802 = vst.msk [vmem:[#allocation2 + $0x88] sm:$0xff] %vm498, 0.0
      %4803 = vst.msk [vmem:[#allocation2 + $0x90] sm:$0xff] %vm498, 0.0
      %4804 = vst.msk [vmem:[#allocation2 + $0x98] sm:$0xff] %vm498, 0.0
      %4805 = vst.msk [vmem:[#allocation2 + $0xa0] sm:$0xff] %vm498, 0.0
      %4806 = vst.msk [vmem:[#allocation2 + $0xa8] sm:$0xff] %vm498, 0.0
      %4807 = vst.msk [vmem:[#allocation2 + $0xb0] sm:$0xff] %vm498, 0.0
      %4808 = vst.msk [vmem:[#allocation2 + $0xb8] sm:$0xff] %vm498, 0.0
      %4809 = vst.msk [vmem:[#allocation2 + $0xc0] sm:$0xff] %vm498, 0.0
      %4810 = vst.msk [vmem:[#allocation2 + $0xc8] sm:$0xff] %vm498, 0.0
      %4811 = vst.msk [vmem:[#allocation2 + $0xd0] sm:$0xff] %vm498, 0.0
      %4812 = vst.msk [vmem:[#allocation2 + $0xd8] sm:$0xff] %vm498, 0.0
      %4813 = vst.msk [vmem:[#allocation2 + $0xe0] sm:$0xff] %vm498, 0.0
      %4814 = vst.msk [vmem:[#allocation2 + $0xe8] sm:$0xff] %vm498, 0.0
      %4815 = vst.msk [vmem:[#allocation2 + $0xf0] sm:$0xff] %vm498, 0.0
      %4816 = vst.msk [vmem:[#allocation2 + $0xf8] sm:$0xff] %vm498, 0.0
      %4817 = vst.msk [vmem:[#allocation2 + $0x100] sm:$0xff] %vm498, 0.0
      %4818 = vst.msk [vmem:[#allocation2 + $0x108] sm:$0xff] %vm498, 0.0
      %4819 = vst.msk [vmem:[#allocation2 + $0x110] sm:$0xff] %vm498, 0.0
      %4820 = vst.msk [vmem:[#allocation2 + $0x118] sm:$0xff] %vm498, 0.0
      %4821 = vst.msk [vmem:[#allocation2 + $0x120] sm:$0xff] %vm498, 0.0
      %4822 = vst.msk [vmem:[#allocation2 + $0x128] sm:$0xff] %vm498, 0.0
      %4823 = vst.msk [vmem:[#allocation2 + $0x130] sm:$0xff] %vm498, 0.0
      %4824 = vst.msk [vmem:[#allocation2 + $0x138] sm:$0xff] %vm498, 0.0
      %4825 = vst.msk [vmem:[#allocation2 + $0x140] sm:$0xff] %vm498, 0.0
      %4826 = vst.msk [vmem:[#allocation2 + $0x148] sm:$0xff] %vm498, 0.0
      %4827 = vst.msk [vmem:[#allocation2 + $0x150] sm:$0xff] %vm498, 0.0
      %4828 = vst.msk [vmem:[#allocation2 + $0x158] sm:$0xff] %vm498, 0.0
      %4829 = vst.msk [vmem:[#allocation2 + $0x160] sm:$0xff] %vm498, 0.0
      %4830 = vst.msk [vmem:[#allocation2 + $0x168] sm:$0xff] %vm498, 0.0
      %4831 = vst.msk [vmem:[#allocation2 + $0x170] sm:$0xff] %vm498, 0.0
      %4832 = vst.msk [vmem:[#allocation2 + $0x178] sm:$0xff] %vm498, 0.0
      %4833 = vst.msk [vmem:[#allocation2 + $0x180] sm:$0xff] %vm498, 0.0
      %4834 = vst.msk [vmem:[#allocation2 + $0x188] sm:$0xff] %vm498, 0.0
      %4835 = vst.msk [vmem:[#allocation2 + $0x190] sm:$0xff] %vm498, 0.0
      %4836 = vst.msk [vmem:[#allocation2 + $0x38] sm:$0xff] %vm498, %v4749
      %4837 = vst.msk [vmem:[#allocation2 + $0x40] sm:$0xff] %vm498, %v4750
      %4838 = vst.msk [vmem:[#allocation2 + $0x48] sm:$0xff] %vm498, %v4751
      %4839 = vst.msk [vmem:[#allocation2 + $0x50] sm:$0xff] %vm498, %v4752
      %4840 = vst.msk [vmem:[#allocation2 + $0x58] sm:$0xff] %vm498, %v4753
      %4841 = vst.msk [vmem:[#allocation2 + $0x60] sm:$0xff] %vm498, %v4754
      %4842 = vst.msk [vmem:[#allocation2 + $0x68] sm:$0xff] %vm498, %v4755
      %4843 = vst.msk [vmem:[#allocation2 + $0x70] sm:$0xff] %vm498, %v4756
      %4844 = vst.msk [vmem:[#allocation2 + $0x78] sm:$0xff] %vm498, %v4757
      %4845 = vst.msk [vmem:[#allocation2 + $0x80] sm:$0xff] %vm498, %v4758
      %4846 = vst.msk [vmem:[#allocation2 + $0x88] sm:$0xff] %vm498, %v4759
      %4847 = vst.msk [vmem:[#allocation2 + $0x90] sm:$0xff] %vm498, %v4760
      %4848 = vst.msk [vmem:[#allocation2 + $0x98] sm:$0xff] %vm498, %v4761
      %4849 = vst.msk [vmem:[#allocation2 + $0xa0] sm:$0xff] %vm498, %v4762
      %4850 = vst.msk [vmem:[#allocation2 + $0xa8] sm:$0xff] %vm498, %v4763
      %4851 = vst.msk [vmem:[#allocation2 + $0xb0] sm:$0xff] %vm498, %v4764
      %4852 = vst.msk [vmem:[#allocation2 + $0xb8] sm:$0xff] %vm498, %v4765
      %4853 = vst.msk [vmem:[#allocation2 + $0xc0] sm:$0xff] %vm498, %v4766
      %4854 = vst.msk [vmem:[#allocation2 + $0xc8] sm:$0xff] %vm498, %v4767
      %4855 = vst.msk [vmem:[#allocation2 + $0xd0] sm:$0xff] %vm498, %v4768
      %4856 = vst.msk [vmem:[#allocation2 + $0xd8] sm:$0xff] %vm498, %v4769
      %4857 = vst.msk [vmem:[#allocation2 + $0xe0] sm:$0xff] %vm498, %v4770
      %4858 = vst.msk [vmem:[#allocation2 + $0xe8] sm:$0xff] %vm498, %v4771
      %4859 = vst.msk [vmem:[#allocation2 + $0xf0] sm:$0xff] %vm498, %v4772
      %4860 = vst.msk [vmem:[#allocation2 + $0xf8] sm:$0xff] %vm498, %v4773
      %4861 = vst.msk [vmem:[#allocation2 + $0x100] sm:$0xff] %vm498, %v4774
      %4862 = vst.msk [vmem:[#allocation2 + $0x108] sm:$0xff] %vm498, %v4775
      %4863 = vst.msk [vmem:[#allocation2 + $0x110] sm:$0xff] %vm498, %v4776
      %4864 = vst.msk [vmem:[#allocation2 + $0x118] sm:$0xff] %vm498, %v4777
      %4865 = vst.msk [vmem:[#allocation2 + $0x120] sm:$0xff] %vm498, %v4778
      %4866 = vst.msk [vmem:[#allocation2 + $0x128] sm:$0xff] %vm498, %v4779
      %4867 = vst.msk [vmem:[#allocation2 + $0x130] sm:$0xff] %vm498, %v4780
      %4868 = vst.msk [vmem:[#allocation2 + $0x138] sm:$0xff] %vm498, %v4781
      %4869 = vst.msk [vmem:[#allocation2 + $0x140] sm:$0xff] %vm498, %v4782
      %4870 = vst.msk [vmem:[#allocation2 + $0x148] sm:$0xff] %vm498, %v4783
      %4871 = vst.msk [vmem:[#allocation2 + $0x150] sm:$0xff] %vm498, %v4784
      %v4872 = vld [vmem:[#allocation2 + $0x39] sm:$0xff]
      %v4873 = vld [vmem:[#allocation2 + $0x41] sm:$0xff]
      %v4874 = vld [vmem:[#allocation2 + $0x49] sm:$0xff]
      %v4875 = vld [vmem:[#allocation2 + $0x51] sm:$0xff]
      %v4876 = vld [vmem:[#allocation2 + $0x59] sm:$0xff]
      %v4877 = vld [vmem:[#allocation2 + $0x61] sm:$0xff]
      %v4878 = vld [vmem:[#allocation2 + $0x69] sm:$0xff]
      %v4879 = vld [vmem:[#allocation2 + $0x71] sm:$0xff]
      %v4880 = vld [vmem:[#allocation2 + $0x79] sm:$0xff]
      %v4881 = vld [vmem:[#allocation2 + $0x81] sm:$0xff]
      %v4882 = vld [vmem:[#allocation2 + $0x89] sm:$0xff]
      %v4883 = vld [vmem:[#allocation2 + $0x91] sm:$0xff]
      %v4884 = vld [vmem:[#allocation2 + $0x99] sm:$0xff]
      %v4885 = vld [vmem:[#allocation2 + $0xa1] sm:$0xff]
      %v4886 = vld [vmem:[#allocation2 + $0xa9] sm:$0xff]
      %v4887 = vld [vmem:[#allocation2 + $0xb1] sm:$0xff]
      %v4888 = vld [vmem:[#allocation2 + $0xb9] sm:$0xff]
      %v4889 = vld [vmem:[#allocation2 + $0xc1] sm:$0xff]
      %v4890 = vld [vmem:[#allocation2 + $0xc9] sm:$0xff]
      %v4891 = vld [vmem:[#allocation2 + $0xd1] sm:$0xff]
      %v4892 = vld [vmem:[#allocation2 + $0xd9] sm:$0xff]
      %v4893 = vld [vmem:[#allocation2 + $0xe1] sm:$0xff]
      %v4894 = vld [vmem:[#allocation2 + $0xe9] sm:$0xff]
      %v4895 = vld [vmem:[#allocation2 + $0xf1] sm:$0xff]
      %v4896 = vld [vmem:[#allocation2 + $0xf9] sm:$0xff]
      %v4897 = vld [vmem:[#allocation2 + $0x101] sm:$0xff]
      %v4898 = vld [vmem:[#allocation2 + $0x109] sm:$0xff]
      %v4899 = vld [vmem:[#allocation2 + $0x111] sm:$0xff]
      %v4900 = vld [vmem:[#allocation2 + $0x119] sm:$0xff]
      %v4901 = vld [vmem:[#allocation2 + $0x121] sm:$0xff]
      %v4902 = vld [vmem:[#allocation2 + $0x129] sm:$0xff]
      %v4903 = vld [vmem:[#allocation2 + $0x131] sm:$0xff]
      %v4904 = vld [vmem:[#allocation2 + $0x139] sm:$0xff]
      %v4905 = vld [vmem:[#allocation2 + $0x141] sm:$0xff]
      %v4906 = vld [vmem:[#allocation2 + $0x149] sm:$0xff]
      %v4907 = vld [vmem:[#allocation2 + $0x151] sm:$0xff]
      %v4908 = vld [vmem:[#allocation2 + $0x37] sm:$0xff]
      %v4909 = vld [vmem:[#allocation2 + $0x3f] sm:$0xff]
      %v4910 = vld [vmem:[#allocation2 + $0x47] sm:$0xff]
      %v4911 = vld [vmem:[#allocation2 + $0x4f] sm:$0xff]
      %v4912 = vld [vmem:[#allocation2 + $0x57] sm:$0xff]
      %v4913 = vld [vmem:[#allocation2 + $0x5f] sm:$0xff]
      %v4914 = vld [vmem:[#allocation2 + $0x67] sm:$0xff]
      %v4915 = vld [vmem:[#allocation2 + $0x6f] sm:$0xff]
      %v4916 = vld [vmem:[#allocation2 + $0x77] sm:$0xff]
      %v4917 = vld [vmem:[#allocation2 + $0x7f] sm:$0xff]
      %v4918 = vld [vmem:[#allocation2 + $0x87] sm:$0xff]
      %v4919 = vld [vmem:[#allocation2 + $0x8f] sm:$0xff]
      %v4920 = vld [vmem:[#allocation2 + $0x97] sm:$0xff]
      %v4921 = vld [vmem:[#allocation2 + $0x9f] sm:$0xff]
      %v4922 = vld [vmem:[#allocation2 + $0xa7] sm:$0xff]
      %v4923 = vld [vmem:[#allocation2 + $0xaf] sm:$0xff]
      %v4924 = vld [vmem:[#allocation2 + $0xb7] sm:$0xff]
      %v4925 = vld [vmem:[#allocation2 + $0xbf] sm:$0xff]
      %v4926 = vld [vmem:[#allocation2 + $0xc7] sm:$0xff]
      %v4927 = vld [vmem:[#allocation2 + $0xcf] sm:$0xff]
      %v4928 = vld [vmem:[#allocation2 + $0xd7] sm:$0xff]
      %v4929 = vld [vmem:[#allocation2 + $0xdf] sm:$0xff]
      %v4930 = vld [vmem:[#allocation2 + $0xe7] sm:$0xff]
      %v4931 = vld [vmem:[#allocation2 + $0xef] sm:$0xff]
      %v4932 = vld [vmem:[#allocation2 + $0xf7] sm:$0xff]
      %v4933 = vld [vmem:[#allocation2 + $0xff] sm:$0xff]
      %v4934 = vld [vmem:[#allocation2 + $0x107] sm:$0xff]
      %v4935 = vld [vmem:[#allocation2 + $0x10f] sm:$0xff]
      %v4936 = vld [vmem:[#allocation2 + $0x117] sm:$0xff]
      %v4937 = vld [vmem:[#allocation2 + $0x11f] sm:$0xff]
      %v4938 = vld [vmem:[#allocation2 + $0x127] sm:$0xff]
      %v4939 = vld [vmem:[#allocation2 + $0x12f] sm:$0xff]
      %v4940 = vld [vmem:[#allocation2 + $0x137] sm:$0xff]
      %v4941 = vld [vmem:[#allocation2 + $0x13f] sm:$0xff]
      %v4942 = vld [vmem:[#allocation2 + $0x147] sm:$0xff]
      %v4943 = vld [vmem:[#allocation2 + $0x14f] sm:$0xff]
      %v4944 = vld [vmem:[#allocation2 + $0x35] sm:$0xff]
      %v4945 = vld [vmem:[#allocation2 + $0x3d] sm:$0xff]
      %v4946 = vld [vmem:[#allocation2 + $0x45] sm:$0xff]
      %v4947 = vld [vmem:[#allocation2 + $0x4d] sm:$0xff]
      %v4948 = vld [vmem:[#allocation2 + $0x55] sm:$0xff]
      %v4949 = vld [vmem:[#allocation2 + $0x5d] sm:$0xff]
      %v4950 = vld [vmem:[#allocation2 + $0x65] sm:$0xff]
      %v4951 = vld [vmem:[#allocation2 + $0x6d] sm:$0xff]
      %v4952 = vld [vmem:[#allocation2 + $0x75] sm:$0xff]
      %v4953 = vld [vmem:[#allocation2 + $0x7d] sm:$0xff]
      %v4954 = vld [vmem:[#allocation2 + $0x85] sm:$0xff]
      %v4955 = vld [vmem:[#allocation2 + $0x8d] sm:$0xff]
      %v4956 = vld [vmem:[#allocation2 + $0x95] sm:$0xff]
      %v4957 = vld [vmem:[#allocation2 + $0x9d] sm:$0xff]
      %v4958 = vld [vmem:[#allocation2 + $0xa5] sm:$0xff]
      %v4959 = vld [vmem:[#allocation2 + $0xad] sm:$0xff]
      %v4960 = vld [vmem:[#allocation2 + $0xb5] sm:$0xff]
      %v4961 = vld [vmem:[#allocation2 + $0xbd] sm:$0xff]
      %v4962 = vld [vmem:[#allocation2 + $0xc5] sm:$0xff]
      %v4963 = vld [vmem:[#allocation2 + $0xcd] sm:$0xff]
      %v4964 = vld [vmem:[#allocation2 + $0xd5] sm:$0xff]
      %v4965 = vld [vmem:[#allocation2 + $0xdd] sm:$0xff]
      %v4966 = vld [vmem:[#allocation2 + $0xe5] sm:$0xff]
      %v4967 = vld [vmem:[#allocation2 + $0xed] sm:$0xff]
      %v4968 = vld [vmem:[#allocation2 + $0xf5] sm:$0xff]
      %v4969 = vld [vmem:[#allocation2 + $0xfd] sm:$0xff]
      %v4970 = vld [vmem:[#allocation2 + $0x105] sm:$0xff]
      %v4971 = vld [vmem:[#allocation2 + $0x10d] sm:$0xff]
      %v4972 = vld [vmem:[#allocation2 + $0x115] sm:$0xff]
      %v4973 = vld [vmem:[#allocation2 + $0x11d] sm:$0xff]
      %v4974 = vld [vmem:[#allocation2 + $0x125] sm:$0xff]
      %v4975 = vld [vmem:[#allocation2 + $0x12d] sm:$0xff]
      %v4976 = vld [vmem:[#allocation2 + $0x135] sm:$0xff]
      %v4977 = vld [vmem:[#allocation2 + $0x13d] sm:$0xff]
      %v4978 = vld [vmem:[#allocation2 + $0x145] sm:$0xff]
      %v4979 = vld [vmem:[#allocation2 + $0x14d] sm:$0xff]
      %vm4980 = vcmp.eq.f32.partialorder %v279, 0.0
      %vm4981 = vcmp.eq.f32.partialorder %v280, 0.0
      %vm4982 = vcmp.eq.f32.partialorder %v281, 0.0
      %vm4983 = vcmp.eq.f32.partialorder %v282, 0.0
      %vm4984 = vcmp.eq.f32.partialorder %v283, 0.0
      %vm4985 = vcmp.eq.f32.partialorder %v284, 0.0
      %vm4986 = vcmp.eq.f32.partialorder %v285, 0.0
      %vm4987 = vcmp.eq.f32.partialorder %v286, 0.0
      %vm4988 = vcmp.eq.f32.partialorder %v287, 0.0
      %vm4989 = vcmp.eq.f32.partialorder %v288, 0.0
      %vm4990 = vcmp.eq.f32.partialorder %v289, 0.0
      %vm4991 = vcmp.eq.f32.partialorder %v290, 0.0
      %vm4992 = vcmp.eq.f32.partialorder %v291, 0.0
      %vm4993 = vcmp.eq.f32.partialorder %v292, 0.0
      %vm4994 = vcmp.eq.f32.partialorder %v293, 0.0
      %vm4995 = vcmp.eq.f32.partialorder %v294, 0.0
      %vm4996 = vcmp.eq.f32.partialorder %v295, 0.0
      %vm4997 = vcmp.eq.f32.partialorder %v296, 0.0
      %vm4998 = vcmp.eq.f32.partialorder %v297, 0.0
      %vm4999 = vcmp.eq.f32.partialorder %v298, 0.0
      %vm5000 = vcmp.eq.f32.partialorder %v299, 0.0
      %vm5001 = vcmp.eq.f32.partialorder %v300, 0.0
      %vm5002 = vcmp.eq.f32.partialorder %v301, 0.0
      %vm5003 = vcmp.eq.f32.partialorder %v302, 0.0
      %vm5004 = vcmp.eq.f32.partialorder %v303, 0.0
      %vm5005 = vcmp.eq.f32.partialorder %v304, 0.0
      %vm5006 = vcmp.eq.f32.partialorder %v305, 0.0
      %vm5007 = vcmp.eq.f32.partialorder %v306, 0.0
      %vm5008 = vcmp.eq.f32.partialorder %v307, 0.0
      %vm5009 = vcmp.eq.f32.partialorder %v308, 0.0
      %vm5010 = vcmp.eq.f32.partialorder %v309, 0.0
      %vm5011 = vcmp.eq.f32.partialorder %v310, 0.0
      %vm5012 = vcmp.eq.f32.partialorder %v311, 0.0
      %vm5013 = vcmp.eq.f32.partialorder %v312, 0.0
      %vm5014 = vcmp.eq.f32.partialorder %v313, 0.0
      %vm5015 = vcmp.eq.f32.partialorder %v314, 0.0
      %vm5016 = vcmp.eq.f32.partialorder %v279, 17.0
      %vm5017 = vcmp.eq.f32.partialorder %v280, 17.0
      %vm5018 = vcmp.eq.f32.partialorder %v281, 17.0
      %vm5019 = vcmp.eq.f32.partialorder %v282, 17.0
      %vm5020 = vcmp.eq.f32.partialorder %v283, 17.0
      %vm5021 = vcmp.eq.f32.partialorder %v284, 17.0
      %vm5022 = vcmp.eq.f32.partialorder %v285, 17.0
      %vm5023 = vcmp.eq.f32.partialorder %v286, 17.0
      %vm5024 = vcmp.eq.f32.partialorder %v287, 17.0
      %vm5025 = vcmp.eq.f32.partialorder %v288, 17.0
      %vm5026 = vcmp.eq.f32.partialorder %v289, 17.0
      %vm5027 = vcmp.eq.f32.partialorder %v290, 17.0
      %vm5028 = vcmp.eq.f32.partialorder %v291, 17.0
      %vm5029 = vcmp.eq.f32.partialorder %v292, 17.0
      %vm5030 = vcmp.eq.f32.partialorder %v293, 17.0
      %vm5031 = vcmp.eq.f32.partialorder %v294, 17.0
      %vm5032 = vcmp.eq.f32.partialorder %v295, 17.0
      %vm5033 = vcmp.eq.f32.partialorder %v296, 17.0
      %vm5034 = vcmp.eq.f32.partialorder %v297, 17.0
      %vm5035 = vcmp.eq.f32.partialorder %v298, 17.0
      %vm5036 = vcmp.eq.f32.partialorder %v299, 17.0
      %vm5037 = vcmp.eq.f32.partialorder %v300, 17.0
      %vm5038 = vcmp.eq.f32.partialorder %v301, 17.0
      %vm5039 = vcmp.eq.f32.partialorder %v302, 17.0
      %vm5040 = vcmp.eq.f32.partialorder %v303, 17.0
      %vm5041 = vcmp.eq.f32.partialorder %v304, 17.0
      %vm5042 = vcmp.eq.f32.partialorder %v305, 17.0
      %vm5043 = vcmp.eq.f32.partialorder %v306, 17.0
      %vm5044 = vcmp.eq.f32.partialorder %v307, 17.0
      %vm5045 = vcmp.eq.f32.partialorder %v308, 17.0
      %vm5046 = vcmp.eq.f32.partialorder %v309, 17.0
      %vm5047 = vcmp.eq.f32.partialorder %v310, 17.0
      %vm5048 = vcmp.eq.f32.partialorder %v311, 17.0
      %vm5049 = vcmp.eq.f32.partialorder %v312, 17.0
      %vm5050 = vcmp.eq.f32.partialorder %v313, 17.0
      %vm5051 = vcmp.eq.f32.partialorder %v314, 17.0
      %v5052 = vsel %vm5016, 1, 0
      %v5053 = vsel %vm5017, 1, 0
      %v5054 = vsel %vm5018, 1, 0
      %v5055 = vsel %vm5019, 1, 0
      %v5056 = vsel %vm5020, 1, 0
      %v5057 = vsel %vm5021, 1, 0
      %v5058 = vsel %vm5022, 1, 0
      %v5059 = vsel %vm5023, 1, 0
      %v5060 = vsel %vm5024, 1, 0
      %v5061 = vsel %vm5025, 1, 0
      %v5062 = vsel %vm5026, 1, 0
      %v5063 = vsel %vm5027, 1, 0
      %v5064 = vsel %vm5028, 1, 0
      %v5065 = vsel %vm5029, 1, 0
      %v5066 = vsel %vm5030, 1, 0
      %v5067 = vsel %vm5031, 1, 0
      %v5068 = vsel %vm5032, 1, 0
      %v5069 = vsel %vm5033, 1, 0
      %v5070 = vsel %vm5034, 1, 0
      %v5071 = vsel %vm5035, 1, 0
      %v5072 = vsel %vm5036, 1, 0
      %v5073 = vsel %vm5037, 1, 0
      %v5074 = vsel %vm5038, 1, 0
      %v5075 = vsel %vm5039, 1, 0
      %v5076 = vsel %vm5040, 1, 0
      %v5077 = vsel %vm5041, 1, 0
      %v5078 = vsel %vm5042, 1, 0
      %v5079 = vsel %vm5043, 1, 0
      %v5080 = vsel %vm5044, 1, 0
      %v5081 = vsel %vm5045, 1, 0
      %v5082 = vsel %vm5046, 1, 0
      %v5083 = vsel %vm5047, 1, 0
      %v5084 = vsel %vm5048, 1, 0
      %v5085 = vsel %vm5049, 1, 0
      %v5086 = vsel %vm5050, 1, 0
      %v5087 = vsel %vm5051, 1, 0
      %5088 = vset.pattern.permute.xlu0 0
      %5089 = vperm.xlu0 %5088, %v5052
      %v5090 = vpop.permute.xlu0 %5089
      %5091 = vset.pattern.permute.xlu0 0
      %5092 = vperm.xlu0 %5091, %v5053
      %v5093 = vpop.permute.xlu0 %5092
      %5094 = vset.pattern.permute.xlu0 0
      %5095 = vperm.xlu0 %5094, %v5054
      %v5096 = vpop.permute.xlu0 %5095
      %5097 = vset.pattern.permute.xlu0 0
      %5098 = vperm.xlu0 %5097, %v5055
      %v5099 = vpop.permute.xlu0 %5098
      %5100 = vset.pattern.permute.xlu0 0
      %5101 = vperm.xlu0 %5100, %v5056
      %v5102 = vpop.permute.xlu0 %5101
      %5103 = vset.pattern.permute.xlu0 0
      %5104 = vperm.xlu0 %5103, %v5057
      %v5105 = vpop.permute.xlu0 %5104
      %5106 = vset.pattern.permute.xlu0 0
      %5107 = vperm.xlu0 %5106, %v5058
      %v5108 = vpop.permute.xlu0 %5107
      %5109 = vset.pattern.permute.xlu0 0
      %5110 = vperm.xlu0 %5109, %v5059
      %v5111 = vpop.permute.xlu0 %5110
      %5112 = vset.pattern.permute.xlu0 0
      %5113 = vperm.xlu0 %5112, %v5060
      %v5114 = vpop.permute.xlu0 %5113
      %5115 = vset.pattern.permute.xlu0 0
      %5116 = vperm.xlu0 %5115, %v5061
      %v5117 = vpop.permute.xlu0 %5116
      %5118 = vset.pattern.permute.xlu0 0
      %5119 = vperm.xlu0 %5118, %v5062
      %v5120 = vpop.permute.xlu0 %5119
      %5121 = vset.pattern.permute.xlu0 0
      %5122 = vperm.xlu0 %5121, %v5063
      %v5123 = vpop.permute.xlu0 %5122
      %5124 = vset.pattern.permute.xlu0 0
      %5125 = vperm.xlu0 %5124, %v5064
      %v5126 = vpop.permute.xlu0 %5125
      %5127 = vset.pattern.permute.xlu0 0
      %5128 = vperm.xlu0 %5127, %v5065
      %v5129 = vpop.permute.xlu0 %5128
      %5130 = vset.pattern.permute.xlu0 0
      %5131 = vperm.xlu0 %5130, %v5066
      %v5132 = vpop.permute.xlu0 %5131
      %5133 = vset.pattern.permute.xlu0 0
      %5134 = vperm.xlu0 %5133, %v5067
      %v5135 = vpop.permute.xlu0 %5134
      %5136 = vset.pattern.permute.xlu0 0
      %5137 = vperm.xlu0 %5136, %v5068
      %v5138 = vpop.permute.xlu0 %5137
      %5139 = vset.pattern.permute.xlu0 0
      %5140 = vperm.xlu0 %5139, %v5069
      %v5141 = vpop.permute.xlu0 %5140
      %5142 = vset.pattern.permute.xlu0 0
      %5143 = vperm.xlu0 %5142, %v5070
      %v5144 = vpop.permute.xlu0 %5143
      %5145 = vset.pattern.permute.xlu0 0
      %5146 = vperm.xlu0 %5145, %v5071
      %v5147 = vpop.permute.xlu0 %5146
      %5148 = vset.pattern.permute.xlu0 0
      %5149 = vperm.xlu0 %5148, %v5072
      %v5150 = vpop.permute.xlu0 %5149
      %5151 = vset.pattern.permute.xlu0 0
      %5152 = vperm.xlu0 %5151, %v5073
      %v5153 = vpop.permute.xlu0 %5152
      %5154 = vset.pattern.permute.xlu0 0
      %5155 = vperm.xlu0 %5154, %v5074
      %v5156 = vpop.permute.xlu0 %5155
      %5157 = vset.pattern.permute.xlu0 0
      %5158 = vperm.xlu0 %5157, %v5075
      %v5159 = vpop.permute.xlu0 %5158
      %5160 = vset.pattern.permute.xlu0 0
      %5161 = vperm.xlu0 %5160, %v5076
      %v5162 = vpop.permute.xlu0 %5161
      %5163 = vset.pattern.permute.xlu0 0
      %5164 = vperm.xlu0 %5163, %v5077
      %v5165 = vpop.permute.xlu0 %5164
      %5166 = vset.pattern.permute.xlu0 0
      %5167 = vperm.xlu0 %5166, %v5078
      %v5168 = vpop.permute.xlu0 %5167
      %5169 = vset.pattern.permute.xlu0 0
      %5170 = vperm.xlu0 %5169, %v5079
      %v5171 = vpop.permute.xlu0 %5170
      %5172 = vset.pattern.permute.xlu0 0
      %5173 = vperm.xlu0 %5172, %v5080
      %v5174 = vpop.permute.xlu0 %5173
      %5175 = vset.pattern.permute.xlu0 0
      %5176 = vperm.xlu0 %5175, %v5081
      %v5177 = vpop.permute.xlu0 %5176
      %5178 = vset.pattern.permute.xlu0 0
      %5179 = vperm.xlu0 %5178, %v5082
      %v5180 = vpop.permute.xlu0 %5179
      %5181 = vset.pattern.permute.xlu0 0
      %5182 = vperm.xlu0 %5181, %v5083
      %v5183 = vpop.permute.xlu0 %5182
      %5184 = vset.pattern.permute.xlu0 0
      %5185 = vperm.xlu0 %5184, %v5084
      %v5186 = vpop.permute.xlu0 %5185
      %5187 = vset.pattern.permute.xlu0 0
      %5188 = vperm.xlu0 %5187, %v5085
      %v5189 = vpop.permute.xlu0 %5188
      %5190 = vset.pattern.permute.xlu0 0
      %5191 = vperm.xlu0 %5190, %v5086
      %v5192 = vpop.permute.xlu0 %5191
      %5193 = vset.pattern.permute.xlu0 0
      %5194 = vperm.xlu0 %5193, %v5087
      %v5195 = vpop.permute.xlu0 %5194
      %vm5196 = vcmp.eq.s32.totalorder %v5090, 1
      %vm5197 = vcmp.eq.s32.totalorder %v5093, 1
      %vm5198 = vcmp.eq.s32.totalorder %v5096, 1
      %vm5199 = vcmp.eq.s32.totalorder %v5099, 1
      %vm5200 = vcmp.eq.s32.totalorder %v5102, 1
      %vm5201 = vcmp.eq.s32.totalorder %v5105, 1
      %vm5202 = vcmp.eq.s32.totalorder %v5108, 1
      %vm5203 = vcmp.eq.s32.totalorder %v5111, 1
      %vm5204 = vcmp.eq.s32.totalorder %v5114, 1
      %vm5205 = vcmp.eq.s32.totalorder %v5117, 1
      %vm5206 = vcmp.eq.s32.totalorder %v5120, 1
      %vm5207 = vcmp.eq.s32.totalorder %v5123, 1
      %vm5208 = vcmp.eq.s32.totalorder %v5126, 1
      %vm5209 = vcmp.eq.s32.totalorder %v5129, 1
      %vm5210 = vcmp.eq.s32.totalorder %v5132, 1
      %vm5211 = vcmp.eq.s32.totalorder %v5135, 1
      %vm5212 = vcmp.eq.s32.totalorder %v5138, 1
      %vm5213 = vcmp.eq.s32.totalorder %v5141, 1
      %vm5214 = vcmp.eq.s32.totalorder %v5144, 1
      %vm5215 = vcmp.eq.s32.totalorder %v5147, 1
      %vm5216 = vcmp.eq.s32.totalorder %v5150, 1
      %vm5217 = vcmp.eq.s32.totalorder %v5153, 1
      %vm5218 = vcmp.eq.s32.totalorder %v5156, 1
      %vm5219 = vcmp.eq.s32.totalorder %v5159, 1
      %vm5220 = vcmp.eq.s32.totalorder %v5162, 1
      %vm5221 = vcmp.eq.s32.totalorder %v5165, 1
      %vm5222 = vcmp.eq.s32.totalorder %v5168, 1
      %vm5223 = vcmp.eq.s32.totalorder %v5171, 1
      %vm5224 = vcmp.eq.s32.totalorder %v5174, 1
      %vm5225 = vcmp.eq.s32.totalorder %v5177, 1
      %vm5226 = vcmp.eq.s32.totalorder %v5180, 1
      %vm5227 = vcmp.eq.s32.totalorder %v5183, 1
      %vm5228 = vcmp.eq.s32.totalorder %v5186, 1
      %vm5229 = vcmp.eq.s32.totalorder %v5189, 1
      %vm5230 = vcmp.eq.s32.totalorder %v5192, 1
      %vm5231 = vcmp.eq.s32.totalorder %v5195, 1
      %v5232 = vsel %vm5196, %v4944, %v4908
      %v5233 = vsel %vm5197, %v4945, %v4909
      %v5234 = vsel %vm5198, %v4946, %v4910
      %v5235 = vsel %vm5199, %v4947, %v4911
      %v5236 = vsel %vm5200, %v4948, %v4912
      %v5237 = vsel %vm5201, %v4949, %v4913
      %v5238 = vsel %vm5202, %v4950, %v4914
      %v5239 = vsel %vm5203, %v4951, %v4915
      %v5240 = vsel %vm5204, %v4952, %v4916
      %v5241 = vsel %vm5205, %v4953, %v4917
      %v5242 = vsel %vm5206, %v4954, %v4918
      %v5243 = vsel %vm5207, %v4955, %v4919
      %v5244 = vsel %vm5208, %v4956, %v4920
      %v5245 = vsel %vm5209, %v4957, %v4921
      %v5246 = vsel %vm5210, %v4958, %v4922
      %v5247 = vsel %vm5211, %v4959, %v4923
      %v5248 = vsel %vm5212, %v4960, %v4924
      %v5249 = vsel %vm5213, %v4961, %v4925
      %v5250 = vsel %vm5214, %v4962, %v4926
      %v5251 = vsel %vm5215, %v4963, %v4927
      %v5252 = vsel %vm5216, %v4964, %v4928
      %v5253 = vsel %vm5217, %v4965, %v4929
      %v5254 = vsel %vm5218, %v4966, %v4930
      %v5255 = vsel %vm5219, %v4967, %v4931
      %v5256 = vsel %vm5220, %v4968, %v4932
      %v5257 = vsel %vm5221, %v4969, %v4933
      %v5258 = vsel %vm5222, %v4970, %v4934
      %v5259 = vsel %vm5223, %v4971, %v4935
      %v5260 = vsel %vm5224, %v4972, %v4936
      %v5261 = vsel %vm5225, %v4973, %v4937
      %v5262 = vsel %vm5226, %v4974, %v4938
      %v5263 = vsel %vm5227, %v4975, %v4939
      %v5264 = vsel %vm5228, %v4976, %v4940
      %v5265 = vsel %vm5229, %v4977, %v4941
      %v5266 = vsel %vm5230, %v4978, %v4942
      %v5267 = vsel %vm5231, %v4979, %v4943
      %v5268 = vsel %vm4980, 1, 0
      %v5269 = vsel %vm4981, 1, 0
      %v5270 = vsel %vm4982, 1, 0
      %v5271 = vsel %vm4983, 1, 0
      %v5272 = vsel %vm4984, 1, 0
      %v5273 = vsel %vm4985, 1, 0
      %v5274 = vsel %vm4986, 1, 0
      %v5275 = vsel %vm4987, 1, 0
      %v5276 = vsel %vm4988, 1, 0
      %v5277 = vsel %vm4989, 1, 0
      %v5278 = vsel %vm4990, 1, 0
      %v5279 = vsel %vm4991, 1, 0
      %v5280 = vsel %vm4992, 1, 0
      %v5281 = vsel %vm4993, 1, 0
      %v5282 = vsel %vm4994, 1, 0
      %v5283 = vsel %vm4995, 1, 0
      %v5284 = vsel %vm4996, 1, 0
      %v5285 = vsel %vm4997, 1, 0
      %v5286 = vsel %vm4998, 1, 0
      %v5287 = vsel %vm4999, 1, 0
      %v5288 = vsel %vm5000, 1, 0
      %v5289 = vsel %vm5001, 1, 0
      %v5290 = vsel %vm5002, 1, 0
      %v5291 = vsel %vm5003, 1, 0
      %v5292 = vsel %vm5004, 1, 0
      %v5293 = vsel %vm5005, 1, 0
      %v5294 = vsel %vm5006, 1, 0
      %v5295 = vsel %vm5007, 1, 0
      %v5296 = vsel %vm5008, 1, 0
      %v5297 = vsel %vm5009, 1, 0
      %v5298 = vsel %vm5010, 1, 0
      %v5299 = vsel %vm5011, 1, 0
      %v5300 = vsel %vm5012, 1, 0
      %v5301 = vsel %vm5013, 1, 0
      %v5302 = vsel %vm5014, 1, 0
      %v5303 = vsel %vm5015, 1, 0
      %5304 = vset.pattern.permute.xlu0 0
      %5305 = vperm.xlu0 %5304, %v5268
      %v5306 = vpop.permute.xlu0 %5305
      %5307 = vset.pattern.permute.xlu0 0
      %5308 = vperm.xlu0 %5307, %v5269
      %v5309 = vpop.permute.xlu0 %5308
      %5310 = vset.pattern.permute.xlu0 0
      %5311 = vperm.xlu0 %5310, %v5270
      %v5312 = vpop.permute.xlu0 %5311
      %5313 = vset.pattern.permute.xlu0 0
      %5314 = vperm.xlu0 %5313, %v5271
      %v5315 = vpop.permute.xlu0 %5314
      %5316 = vset.pattern.permute.xlu0 0
      %5317 = vperm.xlu0 %5316, %v5272
      %v5318 = vpop.permute.xlu0 %5317
      %5319 = vset.pattern.permute.xlu0 0
      %5320 = vperm.xlu0 %5319, %v5273
      %v5321 = vpop.permute.xlu0 %5320
      %5322 = vset.pattern.permute.xlu0 0
      %5323 = vperm.xlu0 %5322, %v5274
      %v5324 = vpop.permute.xlu0 %5323
      %5325 = vset.pattern.permute.xlu0 0
      %5326 = vperm.xlu0 %5325, %v5275
      %v5327 = vpop.permute.xlu0 %5326
      %5328 = vset.pattern.permute.xlu0 0
      %5329 = vperm.xlu0 %5328, %v5276
      %v5330 = vpop.permute.xlu0 %5329
      %5331 = vset.pattern.permute.xlu0 0
      %5332 = vperm.xlu0 %5331, %v5277
      %v5333 = vpop.permute.xlu0 %5332
      %5334 = vset.pattern.permute.xlu0 0
      %5335 = vperm.xlu0 %5334, %v5278
      %v5336 = vpop.permute.xlu0 %5335
      %5337 = vset.pattern.permute.xlu0 0
      %5338 = vperm.xlu0 %5337, %v5279
      %v5339 = vpop.permute.xlu0 %5338
      %5340 = vset.pattern.permute.xlu0 0
      %5341 = vperm.xlu0 %5340, %v5280
      %v5342 = vpop.permute.xlu0 %5341
      %5343 = vset.pattern.permute.xlu0 0
      %5344 = vperm.xlu0 %5343, %v5281
      %v5345 = vpop.permute.xlu0 %5344
      %5346 = vset.pattern.permute.xlu0 0
      %5347 = vperm.xlu0 %5346, %v5282
      %v5348 = vpop.permute.xlu0 %5347
      %5349 = vset.pattern.permute.xlu0 0
      %5350 = vperm.xlu0 %5349, %v5283
      %v5351 = vpop.permute.xlu0 %5350
      %5352 = vset.pattern.permute.xlu0 0
      %5353 = vperm.xlu0 %5352, %v5284
      %v5354 = vpop.permute.xlu0 %5353
      %5355 = vset.pattern.permute.xlu0 0
      %5356 = vperm.xlu0 %5355, %v5285
      %v5357 = vpop.permute.xlu0 %5356
      %5358 = vset.pattern.permute.xlu0 0
      %5359 = vperm.xlu0 %5358, %v5286
      %v5360 = vpop.permute.xlu0 %5359
      %5361 = vset.pattern.permute.xlu0 0
      %5362 = vperm.xlu0 %5361, %v5287
      %v5363 = vpop.permute.xlu0 %5362
      %5364 = vset.pattern.permute.xlu0 0
      %5365 = vperm.xlu0 %5364, %v5288
      %v5366 = vpop.permute.xlu0 %5365
      %5367 = vset.pattern.permute.xlu0 0
      %5368 = vperm.xlu0 %5367, %v5289
      %v5369 = vpop.permute.xlu0 %5368
      %5370 = vset.pattern.permute.xlu0 0
      %5371 = vperm.xlu0 %5370, %v5290
      %v5372 = vpop.permute.xlu0 %5371
      %5373 = vset.pattern.permute.xlu0 0
      %5374 = vperm.xlu0 %5373, %v5291
      %v5375 = vpop.permute.xlu0 %5374
      %5376 = vset.pattern.permute.xlu0 0
      %5377 = vperm.xlu0 %5376, %v5292
      %v5378 = vpop.permute.xlu0 %5377
      %5379 = vset.pattern.permute.xlu0 0
      %5380 = vperm.xlu0 %5379, %v5293
      %v5381 = vpop.permute.xlu0 %5380
      %5382 = vset.pattern.permute.xlu0 0
      %5383 = vperm.xlu0 %5382, %v5294
      %v5384 = vpop.permute.xlu0 %5383
      %5385 = vset.pattern.permute.xlu0 0
      %5386 = vperm.xlu0 %5385, %v5295
      %v5387 = vpop.permute.xlu0 %5386
      %5388 = vset.pattern.permute.xlu0 0
      %5389 = vperm.xlu0 %5388, %v5296
      %v5390 = vpop.permute.xlu0 %5389
      %5391 = vset.pattern.permute.xlu0 0
      %5392 = vperm.xlu0 %5391, %v5297
      %v5393 = vpop.permute.xlu0 %5392
      %5394 = vset.pattern.permute.xlu0 0
      %5395 = vperm.xlu0 %5394, %v5298
      %v5396 = vpop.permute.xlu0 %5395
      %5397 = vset.pattern.permute.xlu0 0
      %5398 = vperm.xlu0 %5397, %v5299
      %v5399 = vpop.permute.xlu0 %5398
      %5400 = vset.pattern.permute.xlu0 0
      %5401 = vperm.xlu0 %5400, %v5300
      %v5402 = vpop.permute.xlu0 %5401
      %5403 = vset.pattern.permute.xlu0 0
      %5404 = vperm.xlu0 %5403, %v5301
      %v5405 = vpop.permute.xlu0 %5404
      %5406 = vset.pattern.permute.xlu0 0
      %5407 = vperm.xlu0 %5406, %v5302
      %v5408 = vpop.permute.xlu0 %5407
      %5409 = vset.pattern.permute.xlu0 0
      %5410 = vperm.xlu0 %5409, %v5303
      %v5411 = vpop.permute.xlu0 %5410
      %vm5412 = vcmp.eq.s32.totalorder %v5306, 1
      %vm5413 = vcmp.eq.s32.totalorder %v5309, 1
      %vm5414 = vcmp.eq.s32.totalorder %v5312, 1
      %vm5415 = vcmp.eq.s32.totalorder %v5315, 1
      %vm5416 = vcmp.eq.s32.totalorder %v5318, 1
      %vm5417 = vcmp.eq.s32.totalorder %v5321, 1
      %vm5418 = vcmp.eq.s32.totalorder %v5324, 1
      %vm5419 = vcmp.eq.s32.totalorder %v5327, 1
      %vm5420 = vcmp.eq.s32.totalorder %v5330, 1
      %vm5421 = vcmp.eq.s32.totalorder %v5333, 1
      %vm5422 = vcmp.eq.s32.totalorder %v5336, 1
      %vm5423 = vcmp.eq.s32.totalorder %v5339, 1
      %vm5424 = vcmp.eq.s32.totalorder %v5342, 1
      %vm5425 = vcmp.eq.s32.totalorder %v5345, 1
      %vm5426 = vcmp.eq.s32.totalorder %v5348, 1
      %vm5427 = vcmp.eq.s32.totalorder %v5351, 1
      %vm5428 = vcmp.eq.s32.totalorder %v5354, 1
      %vm5429 = vcmp.eq.s32.totalorder %v5357, 1
      %vm5430 = vcmp.eq.s32.totalorder %v5360, 1
      %vm5431 = vcmp.eq.s32.totalorder %v5363, 1
      %vm5432 = vcmp.eq.s32.totalorder %v5366, 1
      %vm5433 = vcmp.eq.s32.totalorder %v5369, 1
      %vm5434 = vcmp.eq.s32.totalorder %v5372, 1
      %vm5435 = vcmp.eq.s32.totalorder %v5375, 1
      %vm5436 = vcmp.eq.s32.totalorder %v5378, 1
      %vm5437 = vcmp.eq.s32.totalorder %v5381, 1
      %vm5438 = vcmp.eq.s32.totalorder %v5384, 1
      %vm5439 = vcmp.eq.s32.totalorder %v5387, 1
      %vm5440 = vcmp.eq.s32.totalorder %v5390, 1
      %vm5441 = vcmp.eq.s32.totalorder %v5393, 1
      %vm5442 = vcmp.eq.s32.totalorder %v5396, 1
      %vm5443 = vcmp.eq.s32.totalorder %v5399, 1
      %vm5444 = vcmp.eq.s32.totalorder %v5402, 1
      %vm5445 = vcmp.eq.s32.totalorder %v5405, 1
      %vm5446 = vcmp.eq.s32.totalorder %v5408, 1
      %vm5447 = vcmp.eq.s32.totalorder %v5411, 1
      %v5448 = vsel %vm5412, %v4872, %v5232
      %v5449 = vsel %vm5413, %v4873, %v5233
      %v5450 = vsel %vm5414, %v4874, %v5234
      %v5451 = vsel %vm5415, %v4875, %v5235
      %v5452 = vsel %vm5416, %v4876, %v5236
      %v5453 = vsel %vm5417, %v4877, %v5237
      %v5454 = vsel %vm5418, %v4878, %v5238
      %v5455 = vsel %vm5419, %v4879, %v5239
      %v5456 = vsel %vm5420, %v4880, %v5240
      %v5457 = vsel %vm5421, %v4881, %v5241
      %v5458 = vsel %vm5422, %v4882, %v5242
      %v5459 = vsel %vm5423, %v4883, %v5243
      %v5460 = vsel %vm5424, %v4884, %v5244
      %v5461 = vsel %vm5425, %v4885, %v5245
      %v5462 = vsel %vm5426, %v4886, %v5246
      %v5463 = vsel %vm5427, %v4887, %v5247
      %v5464 = vsel %vm5428, %v4888, %v5248
      %v5465 = vsel %vm5429, %v4889, %v5249
      %v5466 = vsel %vm5430, %v4890, %v5250
      %v5467 = vsel %vm5431, %v4891, %v5251
      %v5468 = vsel %vm5432, %v4892, %v5252
      %v5469 = vsel %vm5433, %v4893, %v5253
      %v5470 = vsel %vm5434, %v4894, %v5254
      %v5471 = vsel %vm5435, %v4895, %v5255
      %v5472 = vsel %vm5436, %v4896, %v5256
      %v5473 = vsel %vm5437, %v4897, %v5257
      %v5474 = vsel %vm5438, %v4898, %v5258
      %v5475 = vsel %vm5439, %v4899, %v5259
      %v5476 = vsel %vm5440, %v4900, %v5260
      %v5477 = vsel %vm5441, %v4901, %v5261
      %v5478 = vsel %vm5442, %v4902, %v5262
      %v5479 = vsel %vm5443, %v4903, %v5263
      %v5480 = vsel %vm5444, %v4904, %v5264
      %v5481 = vsel %vm5445, %v4905, %v5265
      %v5482 = vsel %vm5446, %v4906, %v5266
      %v5483 = vsel %vm5447, %v4907, %v5267
      %5484 = vst.msk [vmem:[#allocation2 + $0x38] sm:$0xff] %vm498, %v5448
      %5485 = vst.msk [vmem:[#allocation2 + $0x40] sm:$0xff] %vm498, %v5449
      %5486 = vst.msk [vmem:[#allocation2 + $0x48] sm:$0xff] %vm498, %v5450
      %5487 = vst.msk [vmem:[#allocation2 + $0x50] sm:$0xff] %vm498, %v5451
      %5488 = vst.msk [vmem:[#allocation2 + $0x58] sm:$0xff] %vm498, %v5452
      %5489 = vst.msk [vmem:[#allocation2 + $0x60] sm:$0xff] %vm498, %v5453
      %5490 = vst.msk [vmem:[#allocation2 + $0x68] sm:$0xff] %vm498, %v5454
      %5491 = vst.msk [vmem:[#allocation2 + $0x70] sm:$0xff] %vm498, %v5455
      %5492 = vst.msk [vmem:[#allocation2 + $0x78] sm:$0xff] %vm498, %v5456
      %5493 = vst.msk [vmem:[#allocation2 + $0x80] sm:$0xff] %vm498, %v5457
      %5494 = vst.msk [vmem:[#allocation2 + $0x88] sm:$0xff] %vm498, %v5458
      %5495 = vst.msk [vmem:[#allocation2 + $0x90] sm:$0xff] %vm498, %v5459
      %5496 = vst.msk [vmem:[#allocation2 + $0x98] sm:$0xff] %vm498, %v5460
      %5497 = vst.msk [vmem:[#allocation2 + $0xa0] sm:$0xff] %vm498, %v5461
      %5498 = vst.msk [vmem:[#allocation2 + $0xa8] sm:$0xff] %vm498, %v5462
      %5499 = vst.msk [vmem:[#allocation2 + $0xb0] sm:$0xff] %vm498, %v5463
      %5500 = vst.msk [vmem:[#allocation2 + $0xb8] sm:$0xff] %vm498, %v5464
      %5501 = vst.msk [vmem:[#allocation2 + $0xc0] sm:$0xff] %vm498, %v5465
      %5502 = vst.msk [vmem:[#allocation2 + $0xc8] sm:$0xff] %vm498, %v5466
      %5503 = vst.msk [vmem:[#allocation2 + $0xd0] sm:$0xff] %vm498, %v5467
      %5504 = vst.msk [vmem:[#allocation2 + $0xd8] sm:$0xff] %vm498, %v5468
      %5505 = vst.msk [vmem:[#allocation2 + $0xe0] sm:$0xff] %vm498, %v5469
      %5506 = vst.msk [vmem:[#allocation2 + $0xe8] sm:$0xff] %vm498, %v5470
      %5507 = vst.msk [vmem:[#allocation2 + $0xf0] sm:$0xff] %vm498, %v5471
      %5508 = vst.msk [vmem:[#allocation2 + $0xf8] sm:$0xff] %vm498, %v5472
      %5509 = vst.msk [vmem:[#allocation2 + $0x100] sm:$0xff] %vm498, %v5473
      %5510 = vst.msk [vmem:[#allocation2 + $0x108] sm:$0xff] %vm498, %v5474
      %5511 = vst.msk [vmem:[#allocation2 + $0x110] sm:$0xff] %vm498, %v5475
      %5512 = vst.msk [vmem:[#allocation2 + $0x118] sm:$0xff] %vm498, %v5476
      %5513 = vst.msk [vmem:[#allocation2 + $0x120] sm:$0xff] %vm498, %v5477
      %5514 = vst.msk [vmem:[#allocation2 + $0x128] sm:$0xff] %vm498, %v5478
      %5515 = vst.msk [vmem:[#allocation2 + $0x130] sm:$0xff] %vm498, %v5479
      %5516 = vst.msk [vmem:[#allocation2 + $0x138] sm:$0xff] %vm498, %v5480
      %5517 = vst.msk [vmem:[#allocation2 + $0x140] sm:$0xff] %vm498, %v5481
      %5518 = vst.msk [vmem:[#allocation2 + $0x148] sm:$0xff] %vm498, %v5482
      %5519 = vst.msk [vmem:[#allocation2 + $0x150] sm:$0xff] %vm498, %v5483
      %v5520 = vld [vmem:[#allocation2 + $0x4a] sm:$0xff]
      %v5521 = vld [vmem:[#allocation2 + $0x52] sm:$0xff]
      %v5522 = vld [vmem:[#allocation2 + $0x5a] sm:$0xff]
      %v5523 = vld [vmem:[#allocation2 + $0x62] sm:$0xff]
      %v5524 = vld [vmem:[#allocation2 + $0x6a] sm:$0xff]
      %v5525 = vld [vmem:[#allocation2 + $0x72] sm:$0xff]
      %v5526 = vld [vmem:[#allocation2 + $0x7a] sm:$0xff]
      %v5527 = vld [vmem:[#allocation2 + $0x82] sm:$0xff]
      %v5528 = vld [vmem:[#allocation2 + $0x8a] sm:$0xff]
      %v5529 = vld [vmem:[#allocation2 + $0x92] sm:$0xff]
      %v5530 = vld [vmem:[#allocation2 + $0x9a] sm:$0xff]
      %v5531 = vld [vmem:[#allocation2 + $0xa2] sm:$0xff]
      %v5532 = vld [vmem:[#allocation2 + $0xaa] sm:$0xff]
      %v5533 = vld [vmem:[#allocation2 + $0xb2] sm:$0xff]
      %v5534 = vld [vmem:[#allocation2 + $0xba] sm:$0xff]
      %v5535 = vld [vmem:[#allocation2 + $0xc2] sm:$0xff]
      %v5536 = vld [vmem:[#allocation2 + $0xca] sm:$0xff]
      %v5537 = vld [vmem:[#allocation2 + $0xd2] sm:$0xff]
      %v5538 = vld [vmem:[#allocation2 + $0xda] sm:$0xff]
      %v5539 = vld [vmem:[#allocation2 + $0xe2] sm:$0xff]
      %v5540 = vld [vmem:[#allocation2 + $0xea] sm:$0xff]
      %v5541 = vld [vmem:[#allocation2 + $0xf2] sm:$0xff]
      %v5542 = vld [vmem:[#allocation2 + $0xfa] sm:$0xff]
      %v5543 = vld [vmem:[#allocation2 + $0x102] sm:$0xff]
      %v5544 = vld [vmem:[#allocation2 + $0x10a] sm:$0xff]
      %v5545 = vld [vmem:[#allocation2 + $0x112] sm:$0xff]
      %v5546 = vld [vmem:[#allocation2 + $0x11a] sm:$0xff]
      %v5547 = vld [vmem:[#allocation2 + $0x122] sm:$0xff]
      %v5548 = vld [vmem:[#allocation2 + $0x12a] sm:$0xff]
      %v5549 = vld [vmem:[#allocation2 + $0x132] sm:$0xff]
      %v5550 = vld [vmem:[#allocation2 + $0x13a] sm:$0xff]
      %v5551 = vld [vmem:[#allocation2 + $0x142] sm:$0xff]
      %v5552 = vld [vmem:[#allocation2 + $0x14a] sm:$0xff]
      %v5553 = vld [vmem:[#allocation2 + $0x152] sm:$0xff]
      %v5554 = vld [vmem:[#allocation2 + $0x15a] sm:$0xff]
      %v5555 = vld [vmem:[#allocation2 + $0x162] sm:$0xff]
      %v5556 = vld [vmem:[#allocation2 + $0x16a] sm:$0xff]
      %v5557 = vld [vmem:[#allocation2 + $0x172] sm:$0xff]
      %v5558 = vld [vmem:[#allocation2 + $0x17a] sm:$0xff]
      %v5559 = vld [vmem:[#allocation2 + $0x182] sm:$0xff]
      %v5560 = vld [vmem:[#allocation2 + $0x18a] sm:$0x3f]
      %v5561 = vld [vmem:[#allocation2 + $0x26] sm:$0xff]
      %v5562 = vld [vmem:[#allocation2 + $0x2e] sm:$0xff]
      %v5563 = vld [vmem:[#allocation2 + $0x36] sm:$0xff]
      %v5564 = vld [vmem:[#allocation2 + $0x3e] sm:$0xff]
      %v5565 = vld [vmem:[#allocation2 + $0x46] sm:$0xff]
      %v5566 = vld [vmem:[#allocation2 + $0x4e] sm:$0xff]
      %v5567 = vld [vmem:[#allocation2 + $0x56] sm:$0xff]
      %v5568 = vld [vmem:[#allocation2 + $0x5e] sm:$0xff]
      %v5569 = vld [vmem:[#allocation2 + $0x66] sm:$0xff]
      %v5570 = vld [vmem:[#allocation2 + $0x6e] sm:$0xff]
      %v5571 = vld [vmem:[#allocation2 + $0x76] sm:$0xff]
      %v5572 = vld [vmem:[#allocation2 + $0x7e] sm:$0xff]
      %v5573 = vld [vmem:[#allocation2 + $0x86] sm:$0xff]
      %v5574 = vld [vmem:[#allocation2 + $0x8e] sm:$0xff]
      %v5575 = vld [vmem:[#allocation2 + $0x96] sm:$0xff]
      %v5576 = vld [vmem:[#allocation2 + $0x9e] sm:$0xff]
      %v5577 = vld [vmem:[#allocation2 + $0xa6] sm:$0xff]
      %v5578 = vld [vmem:[#allocation2 + $0xae] sm:$0xff]
      %v5579 = vld [vmem:[#allocation2 + $0xb6] sm:$0xff]
      %v5580 = vld [vmem:[#allocation2 + $0xbe] sm:$0xff]
      %v5581 = vld [vmem:[#allocation2 + $0xc6] sm:$0xff]
      %v5582 = vld [vmem:[#allocation2 + $0xce] sm:$0xff]
      %v5583 = vld [vmem:[#allocation2 + $0xd6] sm:$0xff]
      %v5584 = vld [vmem:[#allocation2 + $0xde] sm:$0xff]
      %v5585 = vld [vmem:[#allocation2 + $0xe6] sm:$0xff]
      %v5586 = vld [vmem:[#allocation2 + $0xee] sm:$0xff]
      %v5587 = vld [vmem:[#allocation2 + $0xf6] sm:$0xff]
      %v5588 = vld [vmem:[#allocation2 + $0xfe] sm:$0xff]
      %v5589 = vld [vmem:[#allocation2 + $0x106] sm:$0xff]
      %v5590 = vld [vmem:[#allocation2 + $0x10e] sm:$0xff]
      %v5591 = vld [vmem:[#allocation2 + $0x116] sm:$0xff]
      %v5592 = vld [vmem:[#allocation2 + $0x11e] sm:$0xff]
      %v5593 = vld [vmem:[#allocation2 + $0x126] sm:$0xff]
      %v5594 = vld [vmem:[#allocation2 + $0x12e] sm:$0xff]
      %v5595 = vld [vmem:[#allocation2 + $0x136] sm:$0xff]
      %v5596 = vld [vmem:[#allocation2 + $0x13e] sm:$0xff]
      %v5597 = vld [vmem:[#allocation2 + $0x146] sm:$0xff]
      %v5598 = vld [vmem:[#allocation2 + $0x14e] sm:$0xff]
      %v5599 = vld [vmem:[#allocation2 + $0x156] sm:$0xff]
      %v5600 = vld [vmem:[#allocation2 + $0x15e] sm:$0xff]
      %v5601 = vld [vmem:[#allocation2 + $0x166] sm:$0x3f]
      %v5602 = vld [vmem:[#allocation2 + $0x2] sm:$0xff]
      %v5603 = vld [vmem:[#allocation2 + $0xa] sm:$0xff]
      %v5604 = vld [vmem:[#allocation2 + $0x12] sm:$0xff]
      %v5605 = vld [vmem:[#allocation2 + $0x1a] sm:$0xff]
      %v5606 = vld [vmem:[#allocation2 + $0x22] sm:$0xff]
      %v5607 = vld [vmem:[#allocation2 + $0x2a] sm:$0xff]
      %v5608 = vld [vmem:[#allocation2 + $0x32] sm:$0xff]
      %v5609 = vld [vmem:[#allocation2 + $0x3a] sm:$0xff]
      %v5610 = vld [vmem:[#allocation2 + $0x42] sm:$0xff]
      %v5611 = vld [vmem:[#allocation2 + $0x142] sm:$0x3f]
      %v5612 = vld [vmem:[%s2] sm:$0xff]
      %v5613 = vld [vmem:[%s2 + $0x8] sm:$0xff]
      %v5614 = vld [vmem:[%s2 + $0x10] sm:$0xff]
      %v5615 = vld [vmem:[%s2 + $0x18] sm:$0xff]
      %v5616 = vld [vmem:[%s2 + $0x20] sm:$0xff]
      %v5617 = vld [vmem:[%s2 + $0x28] sm:$0xff]
      %v5618 = vld [vmem:[%s2 + $0x30] sm:$0xff]
      %v5619 = vld [vmem:[%s2 + $0x38] sm:$0xff]
      %v5620 = vld [vmem:[%s2 + $0x40] sm:$0xff]
      %v5621 = vld [vmem:[%s2 + $0x48] sm:$0xff]
      %v5622 = vld [vmem:[%s2 + $0x50] sm:$0xff]
      %v5623 = vld [vmem:[%s2 + $0x58] sm:$0xff]
      %v5624 = vld [vmem:[%s2 + $0x60] sm:$0xff]
      %v5625 = vld [vmem:[%s2 + $0x68] sm:$0xff]
      %v5626 = vld [vmem:[%s2 + $0x70] sm:$0xff]
      %v5627 = vld [vmem:[%s2 + $0x78] sm:$0xff]
      %v5628 = vld [vmem:[%s2 + $0x80] sm:$0xff]
      %v5629 = vld [vmem:[%s2 + $0x88] sm:$0xff]
      %v5630 = vld [vmem:[%s2 + $0x90] sm:$0xff]
      %v5631 = vld [vmem:[%s2 + $0x98] sm:$0xff]
      %v5632 = vld [vmem:[%s2 + $0xa0] sm:$0xff]
      %v5633 = vld [vmem:[%s2 + $0xa8] sm:$0xff]
      %v5634 = vld [vmem:[%s2 + $0xb0] sm:$0xff]
      %v5635 = vld [vmem:[%s2 + $0xb8] sm:$0xff]
      %v5636 = vld [vmem:[%s2 + $0xc0] sm:$0xff]
      %v5637 = vld [vmem:[%s2 + $0xc8] sm:$0xff]
      %v5638 = vld [vmem:[%s2 + $0xd0] sm:$0xff]
      %v5639 = vld [vmem:[%s2 + $0xd8] sm:$0xff]
      %v5640 = vld [vmem:[%s2 + $0xe0] sm:$0xff]
      %v5641 = vld [vmem:[%s2 + $0xe8] sm:$0xff]
      %v5642 = vld [vmem:[%s2 + $0xf0] sm:$0xff]
      %v5643 = vld [vmem:[%s2 + $0xf8] sm:$0xff]
      %v5644 = vld [vmem:[%s2 + $0x100] sm:$0xff]
      %v5645 = vld [vmem:[%s2 + $0x108] sm:$0xff]
      %v5646 = vld [vmem:[%s2 + $0x110] sm:$0xff]
      %v5647 = vld [vmem:[%s2 + $0x118] sm:$0xff]
      %v5648 = vld [vmem:[%s2 + $0x120] sm:$0xff]
      %v5649 = vld [vmem:[%s2 + $0x128] sm:$0xff]
      %v5650 = vld [vmem:[%s2 + $0x130] sm:$0xff]
      %v5651 = vld [vmem:[%s2 + $0x138] sm:$0xff]
      %v5652 = vld [vmem:[%s2 + $0x140] sm:$0x3f]
      %vm5653 = vcmp.lt.f32.partialorder %v5612, 18.0
      %vm5654 = vcmp.lt.f32.partialorder %v5613, 18.0
      %vm5655 = vcmp.lt.f32.partialorder %v5614, 18.0
      %vm5656 = vcmp.lt.f32.partialorder %v5615, 18.0
      %vm5657 = vcmp.lt.f32.partialorder %v5616, 18.0
      %vm5658 = vcmp.lt.f32.partialorder %v5617, 18.0
      %vm5659 = vcmp.lt.f32.partialorder %v5618, 18.0
      %vm5660 = vcmp.lt.f32.partialorder %v5619, 18.0
      %vm5661 = vcmp.lt.f32.partialorder %v5620, 18.0
      %vm5662 = vcmp.lt.f32.partialorder %v5621, 18.0
      %vm5663 = vcmp.lt.f32.partialorder %v5622, 18.0
      %vm5664 = vcmp.lt.f32.partialorder %v5623, 18.0
      %vm5665 = vcmp.lt.f32.partialorder %v5624, 18.0
      %vm5666 = vcmp.lt.f32.partialorder %v5625, 18.0
      %vm5667 = vcmp.lt.f32.partialorder %v5626, 18.0
      %vm5668 = vcmp.lt.f32.partialorder %v5627, 18.0
      %vm5669 = vcmp.lt.f32.partialorder %v5628, 18.0
      %vm5670 = vcmp.lt.f32.partialorder %v5629, 18.0
      %vm5671 = vcmp.lt.f32.partialorder %v5630, 18.0
      %vm5672 = vcmp.lt.f32.partialorder %v5631, 18.0
      %vm5673 = vcmp.lt.f32.partialorder %v5632, 18.0
      %vm5674 = vcmp.lt.f32.partialorder %v5633, 18.0
      %vm5675 = vcmp.lt.f32.partialorder %v5634, 18.0
      %vm5676 = vcmp.lt.f32.partialorder %v5635, 18.0
      %vm5677 = vcmp.lt.f32.partialorder %v5636, 18.0
      %vm5678 = vcmp.lt.f32.partialorder %v5637, 18.0
      %vm5679 = vcmp.lt.f32.partialorder %v5638, 18.0
      %vm5680 = vcmp.lt.f32.partialorder %v5639, 18.0
      %vm5681 = vcmp.lt.f32.partialorder %v5640, 18.0
      %vm5682 = vcmp.lt.f32.partialorder %v5641, 18.0
      %vm5683 = vcmp.lt.f32.partialorder %v5642, 18.0
      %vm5684 = vcmp.lt.f32.partialorder %v5643, 18.0
      %vm5685 = vcmp.lt.f32.partialorder %v5644, 18.0
      %vm5686 = vcmp.lt.f32.partialorder %v5645, 18.0
      %vm5687 = vcmp.lt.f32.partialorder %v5646, 18.0
      %vm5688 = vcmp.lt.f32.partialorder %v5647, 18.0
      %vm5689 = vcmp.lt.f32.partialorder %v5648, 18.0
      %vm5690 = vcmp.lt.f32.partialorder %v5649, 18.0
      %vm5691 = vcmp.lt.f32.partialorder %v5650, 18.0
      %vm5692 = vcmp.lt.f32.partialorder %v5651, 18.0
      %vm5693 = vcmp.lt.f32.partialorder %v5652, 18.0
      %vm5694 = vcmp.lt.f32.partialorder %v5612, 306.0
      %vm5695 = vcmp.lt.f32.partialorder %v5613, 306.0
      %vm5696 = vcmp.lt.f32.partialorder %v5614, 306.0
      %vm5697 = vcmp.lt.f32.partialorder %v5615, 306.0
      %vm5698 = vcmp.lt.f32.partialorder %v5616, 306.0
      %vm5699 = vcmp.lt.f32.partialorder %v5617, 306.0
      %vm5700 = vcmp.lt.f32.partialorder %v5618, 306.0
      %vm5701 = vcmp.lt.f32.partialorder %v5619, 306.0
      %vm5702 = vcmp.lt.f32.partialorder %v5620, 306.0
      %vm5703 = vcmp.lt.f32.partialorder %v5621, 306.0
      %vm5704 = vcmp.lt.f32.partialorder %v5622, 306.0
      %vm5705 = vcmp.lt.f32.partialorder %v5623, 306.0
      %vm5706 = vcmp.lt.f32.partialorder %v5624, 306.0
      %vm5707 = vcmp.lt.f32.partialorder %v5625, 306.0
      %vm5708 = vcmp.lt.f32.partialorder %v5626, 306.0
      %vm5709 = vcmp.lt.f32.partialorder %v5627, 306.0
      %vm5710 = vcmp.lt.f32.partialorder %v5628, 306.0
      %vm5711 = vcmp.lt.f32.partialorder %v5629, 306.0
      %vm5712 = vcmp.lt.f32.partialorder %v5630, 306.0
      %vm5713 = vcmp.lt.f32.partialorder %v5631, 306.0
      %vm5714 = vcmp.lt.f32.partialorder %v5632, 306.0
      %vm5715 = vcmp.lt.f32.partialorder %v5633, 306.0
      %vm5716 = vcmp.lt.f32.partialorder %v5634, 306.0
      %vm5717 = vcmp.lt.f32.partialorder %v5635, 306.0
      %vm5718 = vcmp.lt.f32.partialorder %v5636, 306.0
      %vm5719 = vcmp.lt.f32.partialorder %v5637, 306.0
      %vm5720 = vcmp.lt.f32.partialorder %v5638, 306.0
      %vm5721 = vcmp.lt.f32.partialorder %v5639, 306.0
      %vm5722 = vcmp.lt.f32.partialorder %v5640, 306.0
      %vm5723 = vcmp.lt.f32.partialorder %v5641, 306.0
      %vm5724 = vcmp.lt.f32.partialorder %v5642, 306.0
      %vm5725 = vcmp.lt.f32.partialorder %v5643, 306.0
      %vm5726 = vcmp.lt.f32.partialorder %v5644, 306.0
      %vm5727 = vcmp.lt.f32.partialorder %v5645, 306.0
      %vm5728 = vcmp.lt.f32.partialorder %v5646, 306.0
      %vm5729 = vcmp.lt.f32.partialorder %v5647, 306.0
      %vm5730 = vcmp.lt.f32.partialorder %v5648, 306.0
      %vm5731 = vcmp.lt.f32.partialorder %v5649, 306.0
      %vm5732 = vcmp.lt.f32.partialorder %v5650, 306.0
      %vm5733 = vcmp.lt.f32.partialorder %v5651, 306.0
      %vm5734 = vcmp.lt.f32.partialorder %v5652, 306.0
      %v5735 = vsel %vm5694, 1, 0
      %v5736 = vsel %vm5695, 1, 0
      %v5737 = vsel %vm5696, 1, 0
      %v5738 = vsel %vm5697, 1, 0
      %v5739 = vsel %vm5698, 1, 0
      %v5740 = vsel %vm5699, 1, 0
      %v5741 = vsel %vm5700, 1, 0
      %v5742 = vsel %vm5701, 1, 0
      %v5743 = vsel %vm5702, 1, 0
      %v5744 = vsel %vm5703, 1, 0
      %v5745 = vsel %vm5704, 1, 0
      %v5746 = vsel %vm5705, 1, 0
      %v5747 = vsel %vm5706, 1, 0
      %v5748 = vsel %vm5707, 1, 0
      %v5749 = vsel %vm5708, 1, 0
      %v5750 = vsel %vm5709, 1, 0
      %v5751 = vsel %vm5710, 1, 0
      %v5752 = vsel %vm5711, 1, 0
      %v5753 = vsel %vm5712, 1, 0
      %v5754 = vsel %vm5713, 1, 0
      %v5755 = vsel %vm5714, 1, 0
      %v5756 = vsel %vm5715, 1, 0
      %v5757 = vsel %vm5716, 1, 0
      %v5758 = vsel %vm5717, 1, 0
      %v5759 = vsel %vm5718, 1, 0
      %v5760 = vsel %vm5719, 1, 0
      %v5761 = vsel %vm5720, 1, 0
      %v5762 = vsel %vm5721, 1, 0
      %v5763 = vsel %vm5722, 1, 0
      %v5764 = vsel %vm5723, 1, 0
      %v5765 = vsel %vm5724, 1, 0
      %v5766 = vsel %vm5725, 1, 0
      %v5767 = vsel %vm5726, 1, 0
      %v5768 = vsel %vm5727, 1, 0
      %v5769 = vsel %vm5728, 1, 0
      %v5770 = vsel %vm5729, 1, 0
      %v5771 = vsel %vm5730, 1, 0
      %v5772 = vsel %vm5731, 1, 0
      %v5773 = vsel %vm5732, 1, 0
      %v5774 = vsel %vm5733, 1, 0
      %v5775 = vsel %vm5734, 1, 0
      %5776 = vset.pattern.permute.xlu0 0
      %5777 = vperm.xlu0 %5776, %v5735
      %v5778 = vpop.permute.xlu0 %5777
      %5779 = vset.pattern.permute.xlu0 0
      %5780 = vperm.xlu0 %5779, %v5736
      %v5781 = vpop.permute.xlu0 %5780
      %5782 = vset.pattern.permute.xlu0 0
      %5783 = vperm.xlu0 %5782, %v5737
      %v5784 = vpop.permute.xlu0 %5783
      %5785 = vset.pattern.permute.xlu0 0
      %5786 = vperm.xlu0 %5785, %v5738
      %v5787 = vpop.permute.xlu0 %5786
      %5788 = vset.pattern.permute.xlu0 0
      %5789 = vperm.xlu0 %5788, %v5739
      %v5790 = vpop.permute.xlu0 %5789
      %5791 = vset.pattern.permute.xlu0 0
      %5792 = vperm.xlu0 %5791, %v5740
      %v5793 = vpop.permute.xlu0 %5792
      %5794 = vset.pattern.permute.xlu0 0
      %5795 = vperm.xlu0 %5794, %v5741
      %v5796 = vpop.permute.xlu0 %5795
      %5797 = vset.pattern.permute.xlu0 0
      %5798 = vperm.xlu0 %5797, %v5742
      %v5799 = vpop.permute.xlu0 %5798
      %5800 = vset.pattern.permute.xlu0 0
      %5801 = vperm.xlu0 %5800, %v5743
      %v5802 = vpop.permute.xlu0 %5801
      %5803 = vset.pattern.permute.xlu0 0
      %5804 = vperm.xlu0 %5803, %v5744
      %v5805 = vpop.permute.xlu0 %5804
      %5806 = vset.pattern.permute.xlu0 0
      %5807 = vperm.xlu0 %5806, %v5745
      %v5808 = vpop.permute.xlu0 %5807
      %5809 = vset.pattern.permute.xlu0 0
      %5810 = vperm.xlu0 %5809, %v5746
      %v5811 = vpop.permute.xlu0 %5810
      %5812 = vset.pattern.permute.xlu0 0
      %5813 = vperm.xlu0 %5812, %v5747
      %v5814 = vpop.permute.xlu0 %5813
      %5815 = vset.pattern.permute.xlu0 0
      %5816 = vperm.xlu0 %5815, %v5748
      %v5817 = vpop.permute.xlu0 %5816
      %5818 = vset.pattern.permute.xlu0 0
      %5819 = vperm.xlu0 %5818, %v5749
      %v5820 = vpop.permute.xlu0 %5819
      %5821 = vset.pattern.permute.xlu0 0
      %5822 = vperm.xlu0 %5821, %v5750
      %v5823 = vpop.permute.xlu0 %5822
      %5824 = vset.pattern.permute.xlu0 0
      %5825 = vperm.xlu0 %5824, %v5751
      %v5826 = vpop.permute.xlu0 %5825
      %5827 = vset.pattern.permute.xlu0 0
      %5828 = vperm.xlu0 %5827, %v5752
      %v5829 = vpop.permute.xlu0 %5828
      %5830 = vset.pattern.permute.xlu0 0
      %5831 = vperm.xlu0 %5830, %v5753
      %v5832 = vpop.permute.xlu0 %5831
      %5833 = vset.pattern.permute.xlu0 0
      %5834 = vperm.xlu0 %5833, %v5754
      %v5835 = vpop.permute.xlu0 %5834
      %5836 = vset.pattern.permute.xlu0 0
      %5837 = vperm.xlu0 %5836, %v5755
      %v5838 = vpop.permute.xlu0 %5837
      %5839 = vset.pattern.permute.xlu0 0
      %5840 = vperm.xlu0 %5839, %v5756
      %v5841 = vpop.permute.xlu0 %5840
      %5842 = vset.pattern.permute.xlu0 0
      %5843 = vperm.xlu0 %5842, %v5757
      %v5844 = vpop.permute.xlu0 %5843
      %5845 = vset.pattern.permute.xlu0 0
      %5846 = vperm.xlu0 %5845, %v5758
      %v5847 = vpop.permute.xlu0 %5846
      %5848 = vset.pattern.permute.xlu0 0
      %5849 = vperm.xlu0 %5848, %v5759
      %v5850 = vpop.permute.xlu0 %5849
      %5851 = vset.pattern.permute.xlu0 0
      %5852 = vperm.xlu0 %5851, %v5760
      %v5853 = vpop.permute.xlu0 %5852
      %5854 = vset.pattern.permute.xlu0 0
      %5855 = vperm.xlu0 %5854, %v5761
      %v5856 = vpop.permute.xlu0 %5855
      %5857 = vset.pattern.permute.xlu0 0
      %5858 = vperm.xlu0 %5857, %v5762
      %v5859 = vpop.permute.xlu0 %5858
      %5860 = vset.pattern.permute.xlu0 0
      %5861 = vperm.xlu0 %5860, %v5763
      %v5862 = vpop.permute.xlu0 %5861
      %5863 = vset.pattern.permute.xlu0 0
      %5864 = vperm.xlu0 %5863, %v5764
      %v5865 = vpop.permute.xlu0 %5864
      %5866 = vset.pattern.permute.xlu0 0
      %5867 = vperm.xlu0 %5866, %v5765
      %v5868 = vpop.permute.xlu0 %5867
      %5869 = vset.pattern.permute.xlu0 0
      %5870 = vperm.xlu0 %5869, %v5766
      %v5871 = vpop.permute.xlu0 %5870
      %5872 = vset.pattern.permute.xlu0 0
      %5873 = vperm.xlu0 %5872, %v5767
      %v5874 = vpop.permute.xlu0 %5873
      %5875 = vset.pattern.permute.xlu0 0
      %5876 = vperm.xlu0 %5875, %v5768
      %v5877 = vpop.permute.xlu0 %5876
      %5878 = vset.pattern.permute.xlu0 0
      %5879 = vperm.xlu0 %5878, %v5769
      %v5880 = vpop.permute.xlu0 %5879
      %5881 = vset.pattern.permute.xlu0 0
      %5882 = vperm.xlu0 %5881, %v5770
      %v5883 = vpop.permute.xlu0 %5882
      %5884 = vset.pattern.permute.xlu0 0
      %5885 = vperm.xlu0 %5884, %v5771
      %v5886 = vpop.permute.xlu0 %5885
      %5887 = vset.pattern.permute.xlu0 0
      %5888 = vperm.xlu0 %5887, %v5772
      %v5889 = vpop.permute.xlu0 %5888
      %5890 = vset.pattern.permute.xlu0 0
      %5891 = vperm.xlu0 %5890, %v5773
      %v5892 = vpop.permute.xlu0 %5891
      %5893 = vset.pattern.permute.xlu0 0
      %5894 = vperm.xlu0 %5893, %v5774
      %v5895 = vpop.permute.xlu0 %5894
      %5896 = vset.pattern.permute.xlu0 0
      %5897 = vperm.xlu0 %5896, %v5775
      %v5898 = vpop.permute.xlu0 %5897
      %vm5899 = vcmp.eq.s32.totalorder %v5778, 1
      %vm5900 = vcmp.eq.s32.totalorder %v5781, 1
      %vm5901 = vcmp.eq.s32.totalorder %v5784, 1
      %vm5902 = vcmp.eq.s32.totalorder %v5787, 1
      %vm5903 = vcmp.eq.s32.totalorder %v5790, 1
      %vm5904 = vcmp.eq.s32.totalorder %v5793, 1
      %vm5905 = vcmp.eq.s32.totalorder %v5796, 1
      %vm5906 = vcmp.eq.s32.totalorder %v5799, 1
      %vm5907 = vcmp.eq.s32.totalorder %v5802, 1
      %vm5908 = vcmp.eq.s32.totalorder %v5805, 1
      %vm5909 = vcmp.eq.s32.totalorder %v5808, 1
      %vm5910 = vcmp.eq.s32.totalorder %v5811, 1
      %vm5911 = vcmp.eq.s32.totalorder %v5814, 1
      %vm5912 = vcmp.eq.s32.totalorder %v5817, 1
      %vm5913 = vcmp.eq.s32.totalorder %v5820, 1
      %vm5914 = vcmp.eq.s32.totalorder %v5823, 1
      %vm5915 = vcmp.eq.s32.totalorder %v5826, 1
      %vm5916 = vcmp.eq.s32.totalorder %v5829, 1
      %vm5917 = vcmp.eq.s32.totalorder %v5832, 1
      %vm5918 = vcmp.eq.s32.totalorder %v5835, 1
      %vm5919 = vcmp.eq.s32.totalorder %v5838, 1
      %vm5920 = vcmp.eq.s32.totalorder %v5841, 1
      %vm5921 = vcmp.eq.s32.totalorder %v5844, 1
      %vm5922 = vcmp.eq.s32.totalorder %v5847, 1
      %vm5923 = vcmp.eq.s32.totalorder %v5850, 1
      %vm5924 = vcmp.eq.s32.totalorder %v5853, 1
      %vm5925 = vcmp.eq.s32.totalorder %v5856, 1
      %vm5926 = vcmp.eq.s32.totalorder %v5859, 1
      %vm5927 = vcmp.eq.s32.totalorder %v5862, 1
      %vm5928 = vcmp.eq.s32.totalorder %v5865, 1
      %vm5929 = vcmp.eq.s32.totalorder %v5868, 1
      %vm5930 = vcmp.eq.s32.totalorder %v5871, 1
      %vm5931 = vcmp.eq.s32.totalorder %v5874, 1
      %vm5932 = vcmp.eq.s32.totalorder %v5877, 1
      %vm5933 = vcmp.eq.s32.totalorder %v5880, 1
      %vm5934 = vcmp.eq.s32.totalorder %v5883, 1
      %vm5935 = vcmp.eq.s32.totalorder %v5886, 1
      %vm5936 = vcmp.eq.s32.totalorder %v5889, 1
      %vm5937 = vcmp.eq.s32.totalorder %v5892, 1
      %vm5938 = vcmp.eq.s32.totalorder %v5895, 1
      %vm5939 = vcmp.eq.s32.totalorder %v5898, 1
      %v5940 = vsel %vm5899, %v5561, %v5602
      %v5941 = vsel %vm5900, %v5562, %v5603
      %v5942 = vsel %vm5901, %v5563, %v5604
      %v5943 = vsel %vm5902, %v5564, %v5605
      %v5944 = vsel %vm5903, %v5565, %v5606
      %v5945 = vsel %vm5904, %v5566, %v5607
      %v5946 = vsel %vm5905, %v5567, %v5608
      %v5947 = vsel %vm5906, %v5568, %v5609
      %v5948 = vsel %vm5907, %v5569, %v5610
      %v5949 = vsel %vm5908, %v5570, %v5520
      %v5950 = vsel %vm5909, %v5571, %v5521
      %v5951 = vsel %vm5910, %v5572, %v5522
      %v5952 = vsel %vm5911, %v5573, %v5523
      %v5953 = vsel %vm5912, %v5574, %v5524
      %v5954 = vsel %vm5913, %v5575, %v5525
      %v5955 = vsel %vm5914, %v5576, %v5526
      %v5956 = vsel %vm5915, %v5577, %v5527
      %v5957 = vsel %vm5916, %v5578, %v5528
      %v5958 = vsel %vm5917, %v5579, %v5529
      %v5959 = vsel %vm5918, %v5580, %v5530
      %v5960 = vsel %vm5919, %v5581, %v5531
      %v5961 = vsel %vm5920, %v5582, %v5532
      %v5962 = vsel %vm5921, %v5583, %v5533
      %v5963 = vsel %vm5922, %v5584, %v5534
      %v5964 = vsel %vm5923, %v5585, %v5535
      %v5965 = vsel %vm5924, %v5586, %v5536
      %v5966 = vsel %vm5925, %v5587, %v5537
      %v5967 = vsel %vm5926, %v5588, %v5538
      %v5968 = vsel %vm5927, %v5589, %v5539
      %v5969 = vsel %vm5928, %v5590, %v5540
      %v5970 = vsel %vm5929, %v5591, %v5541
      %v5971 = vsel %vm5930, %v5592, %v5542
      %v5972 = vsel %vm5931, %v5593, %v5543
      %v5973 = vsel %vm5932, %v5594, %v5544
      %v5974 = vsel %vm5933, %v5595, %v5545
      %v5975 = vsel %vm5934, %v5596, %v5546
      %v5976 = vsel %vm5935, %v5597, %v5547
      %v5977 = vsel %vm5936, %v5598, %v5548
      %v5978 = vsel %vm5937, %v5599, %v5549
      %v5979 = vsel %vm5938, %v5600, %v5550
      %v5980 = vsel %vm5939, %v5601, %v5611
      %v5981 = vsel %vm5653, 1, 0
      %v5982 = vsel %vm5654, 1, 0
      %v5983 = vsel %vm5655, 1, 0
      %v5984 = vsel %vm5656, 1, 0
      %v5985 = vsel %vm5657, 1, 0
      %v5986 = vsel %vm5658, 1, 0
      %v5987 = vsel %vm5659, 1, 0
      %v5988 = vsel %vm5660, 1, 0
      %v5989 = vsel %vm5661, 1, 0
      %v5990 = vsel %vm5662, 1, 0
      %v5991 = vsel %vm5663, 1, 0
      %v5992 = vsel %vm5664, 1, 0
      %v5993 = vsel %vm5665, 1, 0
      %v5994 = vsel %vm5666, 1, 0
      %v5995 = vsel %vm5667, 1, 0
      %v5996 = vsel %vm5668, 1, 0
      %v5997 = vsel %vm5669, 1, 0
      %v5998 = vsel %vm5670, 1, 0
      %v5999 = vsel %vm5671, 1, 0
      %v6000 = vsel %vm5672, 1, 0
      %v6001 = vsel %vm5673, 1, 0
      %v6002 = vsel %vm5674, 1, 0
      %v6003 = vsel %vm5675, 1, 0
      %v6004 = vsel %vm5676, 1, 0
      %v6005 = vsel %vm5677, 1, 0
      %v6006 = vsel %vm5678, 1, 0
      %v6007 = vsel %vm5679, 1, 0
      %v6008 = vsel %vm5680, 1, 0
      %v6009 = vsel %vm5681, 1, 0
      %v6010 = vsel %vm5682, 1, 0
      %v6011 = vsel %vm5683, 1, 0
      %v6012 = vsel %vm5684, 1, 0
      %v6013 = vsel %vm5685, 1, 0
      %v6014 = vsel %vm5686, 1, 0
      %v6015 = vsel %vm5687, 1, 0
      %v6016 = vsel %vm5688, 1, 0
      %v6017 = vsel %vm5689, 1, 0
      %v6018 = vsel %vm5690, 1, 0
      %v6019 = vsel %vm5691, 1, 0
      %v6020 = vsel %vm5692, 1, 0
      %v6021 = vsel %vm5693, 1, 0
      %6022 = vset.pattern.permute.xlu0 0
      %6023 = vperm.xlu0 %6022, %v5981
      %v6024 = vpop.permute.xlu0 %6023
      %6025 = vset.pattern.permute.xlu0 0
      %6026 = vperm.xlu0 %6025, %v5982
      %v6027 = vpop.permute.xlu0 %6026
      %6028 = vset.pattern.permute.xlu0 0
      %6029 = vperm.xlu0 %6028, %v5983
      %v6030 = vpop.permute.xlu0 %6029
      %6031 = vset.pattern.permute.xlu0 0
      %6032 = vperm.xlu0 %6031, %v5984
      %v6033 = vpop.permute.xlu0 %6032
      %6034 = vset.pattern.permute.xlu0 0
      %6035 = vperm.xlu0 %6034, %v5985
      %v6036 = vpop.permute.xlu0 %6035
      %6037 = vset.pattern.permute.xlu0 0
      %6038 = vperm.xlu0 %6037, %v5986
      %v6039 = vpop.permute.xlu0 %6038
      %6040 = vset.pattern.permute.xlu0 0
      %6041 = vperm.xlu0 %6040, %v5987
      %v6042 = vpop.permute.xlu0 %6041
      %6043 = vset.pattern.permute.xlu0 0
      %6044 = vperm.xlu0 %6043, %v5988
      %v6045 = vpop.permute.xlu0 %6044
      %6046 = vset.pattern.permute.xlu0 0
      %6047 = vperm.xlu0 %6046, %v5989
      %v6048 = vpop.permute.xlu0 %6047
      %6049 = vset.pattern.permute.xlu0 0
      %6050 = vperm.xlu0 %6049, %v5990
      %v6051 = vpop.permute.xlu0 %6050
      %6052 = vset.pattern.permute.xlu0 0
      %6053 = vperm.xlu0 %6052, %v5991
      %v6054 = vpop.permute.xlu0 %6053
      %6055 = vset.pattern.permute.xlu0 0
      %6056 = vperm.xlu0 %6055, %v5992
      %v6057 = vpop.permute.xlu0 %6056
      %6058 = vset.pattern.permute.xlu0 0
      %6059 = vperm.xlu0 %6058, %v5993
      %v6060 = vpop.permute.xlu0 %6059
      %6061 = vset.pattern.permute.xlu0 0
      %6062 = vperm.xlu0 %6061, %v5994
      %v6063 = vpop.permute.xlu0 %6062
      %6064 = vset.pattern.permute.xlu0 0
      %6065 = vperm.xlu0 %6064, %v5995
      %v6066 = vpop.permute.xlu0 %6065
      %6067 = vset.pattern.permute.xlu0 0
      %6068 = vperm.xlu0 %6067, %v5996
      %v6069 = vpop.permute.xlu0 %6068
      %6070 = vset.pattern.permute.xlu0 0
      %6071 = vperm.xlu0 %6070, %v5997
      %v6072 = vpop.permute.xlu0 %6071
      %6073 = vset.pattern.permute.xlu0 0
      %6074 = vperm.xlu0 %6073, %v5998
      %v6075 = vpop.permute.xlu0 %6074
      %6076 = vset.pattern.permute.xlu0 0
      %6077 = vperm.xlu0 %6076, %v5999
      %v6078 = vpop.permute.xlu0 %6077
      %6079 = vset.pattern.permute.xlu0 0
      %6080 = vperm.xlu0 %6079, %v6000
      %v6081 = vpop.permute.xlu0 %6080
      %6082 = vset.pattern.permute.xlu0 0
      %6083 = vperm.xlu0 %6082, %v6001
      %v6084 = vpop.permute.xlu0 %6083
      %6085 = vset.pattern.permute.xlu0 0
      %6086 = vperm.xlu0 %6085, %v6002
      %v6087 = vpop.permute.xlu0 %6086
      %6088 = vset.pattern.permute.xlu0 0
      %6089 = vperm.xlu0 %6088, %v6003
      %v6090 = vpop.permute.xlu0 %6089
      %6091 = vset.pattern.permute.xlu0 0
      %6092 = vperm.xlu0 %6091, %v6004
      %v6093 = vpop.permute.xlu0 %6092
      %6094 = vset.pattern.permute.xlu0 0
      %6095 = vperm.xlu0 %6094, %v6005
      %v6096 = vpop.permute.xlu0 %6095
      %6097 = vset.pattern.permute.xlu0 0
      %6098 = vperm.xlu0 %6097, %v6006
      %v6099 = vpop.permute.xlu0 %6098
      %6100 = vset.pattern.permute.xlu0 0
      %6101 = vperm.xlu0 %6100, %v6007
      %v6102 = vpop.permute.xlu0 %6101
      %6103 = vset.pattern.permute.xlu0 0
      %6104 = vperm.xlu0 %6103, %v6008
      %v6105 = vpop.permute.xlu0 %6104
      %6106 = vset.pattern.permute.xlu0 0
      %6107 = vperm.xlu0 %6106, %v6009
      %v6108 = vpop.permute.xlu0 %6107
      %6109 = vset.pattern.permute.xlu0 0
      %6110 = vperm.xlu0 %6109, %v6010
      %v6111 = vpop.permute.xlu0 %6110
      %6112 = vset.pattern.permute.xlu0 0
      %6113 = vperm.xlu0 %6112, %v6011
      %v6114 = vpop.permute.xlu0 %6113
      %6115 = vset.pattern.permute.xlu0 0
      %6116 = vperm.xlu0 %6115, %v6012
      %v6117 = vpop.permute.xlu0 %6116
      %6118 = vset.pattern.permute.xlu0 0
      %6119 = vperm.xlu0 %6118, %v6013
      %v6120 = vpop.permute.xlu0 %6119
      %6121 = vset.pattern.permute.xlu0 0
      %6122 = vperm.xlu0 %6121, %v6014
      %v6123 = vpop.permute.xlu0 %6122
      %6124 = vset.pattern.permute.xlu0 0
      %6125 = vperm.xlu0 %6124, %v6015
      %v6126 = vpop.permute.xlu0 %6125
      %6127 = vset.pattern.permute.xlu0 0
      %6128 = vperm.xlu0 %6127, %v6016
      %v6129 = vpop.permute.xlu0 %6128
      %6130 = vset.pattern.permute.xlu0 0
      %6131 = vperm.xlu0 %6130, %v6017
      %v6132 = vpop.permute.xlu0 %6131
      %6133 = vset.pattern.permute.xlu0 0
      %6134 = vperm.xlu0 %6133, %v6018
      %v6135 = vpop.permute.xlu0 %6134
      %6136 = vset.pattern.permute.xlu0 0
      %6137 = vperm.xlu0 %6136, %v6019
      %v6138 = vpop.permute.xlu0 %6137
      %6139 = vset.pattern.permute.xlu0 0
      %6140 = vperm.xlu0 %6139, %v6020
      %v6141 = vpop.permute.xlu0 %6140
      %6142 = vset.pattern.permute.xlu0 0
      %6143 = vperm.xlu0 %6142, %v6021
      %v6144 = vpop.permute.xlu0 %6143
      %vm6145 = vcmp.eq.s32.totalorder %v6024, 1
      %vm6146 = vcmp.eq.s32.totalorder %v6027, 1
      %vm6147 = vcmp.eq.s32.totalorder %v6030, 1
      %vm6148 = vcmp.eq.s32.totalorder %v6033, 1
      %vm6149 = vcmp.eq.s32.totalorder %v6036, 1
      %vm6150 = vcmp.eq.s32.totalorder %v6039, 1
      %vm6151 = vcmp.eq.s32.totalorder %v6042, 1
      %vm6152 = vcmp.eq.s32.totalorder %v6045, 1
      %vm6153 = vcmp.eq.s32.totalorder %v6048, 1
      %vm6154 = vcmp.eq.s32.totalorder %v6051, 1
      %vm6155 = vcmp.eq.s32.totalorder %v6054, 1
      %vm6156 = vcmp.eq.s32.totalorder %v6057, 1
      %vm6157 = vcmp.eq.s32.totalorder %v6060, 1
      %vm6158 = vcmp.eq.s32.totalorder %v6063, 1
      %vm6159 = vcmp.eq.s32.totalorder %v6066, 1
      %vm6160 = vcmp.eq.s32.totalorder %v6069, 1
      %vm6161 = vcmp.eq.s32.totalorder %v6072, 1
      %vm6162 = vcmp.eq.s32.totalorder %v6075, 1
      %vm6163 = vcmp.eq.s32.totalorder %v6078, 1
      %vm6164 = vcmp.eq.s32.totalorder %v6081, 1
      %vm6165 = vcmp.eq.s32.totalorder %v6084, 1
      %vm6166 = vcmp.eq.s32.totalorder %v6087, 1
      %vm6167 = vcmp.eq.s32.totalorder %v6090, 1
      %vm6168 = vcmp.eq.s32.totalorder %v6093, 1
      %vm6169 = vcmp.eq.s32.totalorder %v6096, 1
      %vm6170 = vcmp.eq.s32.totalorder %v6099, 1
      %vm6171 = vcmp.eq.s32.totalorder %v6102, 1
      %vm6172 = vcmp.eq.s32.totalorder %v6105, 1
      %vm6173 = vcmp.eq.s32.totalorder %v6108, 1
      %vm6174 = vcmp.eq.s32.totalorder %v6111, 1
      %vm6175 = vcmp.eq.s32.totalorder %v6114, 1
      %vm6176 = vcmp.eq.s32.totalorder %v6117, 1
      %vm6177 = vcmp.eq.s32.totalorder %v6120, 1
      %vm6178 = vcmp.eq.s32.totalorder %v6123, 1
      %vm6179 = vcmp.eq.s32.totalorder %v6126, 1
      %vm6180 = vcmp.eq.s32.totalorder %v6129, 1
      %vm6181 = vcmp.eq.s32.totalorder %v6132, 1
      %vm6182 = vcmp.eq.s32.totalorder %v6135, 1
      %vm6183 = vcmp.eq.s32.totalorder %v6138, 1
      %vm6184 = vcmp.eq.s32.totalorder %v6141, 1
      %vm6185 = vcmp.eq.s32.totalorder %v6144, 1
      %v6186 = vsel %vm6145, %v5520, %v5940
      %v6187 = vsel %vm6146, %v5521, %v5941
      %v6188 = vsel %vm6147, %v5522, %v5942
      %v6189 = vsel %vm6148, %v5523, %v5943
      %v6190 = vsel %vm6149, %v5524, %v5944
      %v6191 = vsel %vm6150, %v5525, %v5945
      %v6192 = vsel %vm6151, %v5526, %v5946
      %v6193 = vsel %vm6152, %v5527, %v5947
      %v6194 = vsel %vm6153, %v5528, %v5948
      %v6195 = vsel %vm6154, %v5529, %v5949
      %v6196 = vsel %vm6155, %v5530, %v5950
      %v6197 = vsel %vm6156, %v5531, %v5951
      %v6198 = vsel %vm6157, %v5532, %v5952
      %v6199 = vsel %vm6158, %v5533, %v5953
      %v6200 = vsel %vm6159, %v5534, %v5954
      %v6201 = vsel %vm6160, %v5535, %v5955
      %v6202 = vsel %vm6161, %v5536, %v5956
      %v6203 = vsel %vm6162, %v5537, %v5957
      %v6204 = vsel %vm6163, %v5538, %v5958
      %v6205 = vsel %vm6164, %v5539, %v5959
      %v6206 = vsel %vm6165, %v5540, %v5960
      %v6207 = vsel %vm6166, %v5541, %v5961
      %v6208 = vsel %vm6167, %v5542, %v5962
      %v6209 = vsel %vm6168, %v5543, %v5963
      %v6210 = vsel %vm6169, %v5544, %v5964
      %v6211 = vsel %vm6170, %v5545, %v5965
      %v6212 = vsel %vm6171, %v5546, %v5966
      %v6213 = vsel %vm6172, %v5547, %v5967
      %v6214 = vsel %vm6173, %v5548, %v5968
      %v6215 = vsel %vm6174, %v5549, %v5969
      %v6216 = vsel %vm6175, %v5550, %v5970
      %v6217 = vsel %vm6176, %v5551, %v5971
      %v6218 = vsel %vm6177, %v5552, %v5972
      %v6219 = vsel %vm6178, %v5553, %v5973
      %v6220 = vsel %vm6179, %v5554, %v5974
      %v6221 = vsel %vm6180, %v5555, %v5975
      %v6222 = vsel %vm6181, %v5556, %v5976
      %v6223 = vsel %vm6182, %v5557, %v5977
      %v6224 = vsel %vm6183, %v5558, %v5978
      %v6225 = vsel %vm6184, %v5559, %v5979
      %v6226 = vsel %vm6185, %v5560, %v5980
      %6227 = vst.msk [vmem:[#allocation3] sm:$0xff] %vm498, %v6186
      %6228 = vst.msk [vmem:[#allocation3 + $0x8] sm:$0xff] %vm498, %v6187
      %6229 = vst.msk [vmem:[#allocation3 + $0x10] sm:$0xff] %vm498, %v6188
      %6230 = vst.msk [vmem:[#allocation3 + $0x18] sm:$0xff] %vm498, %v6189
      %6231 = vst.msk [vmem:[#allocation3 + $0x20] sm:$0xff] %vm498, %v6190
      %6232 = vst.msk [vmem:[#allocation3 + $0x28] sm:$0xff] %vm498, %v6191
      %6233 = vst.msk [vmem:[#allocation3 + $0x30] sm:$0xff] %vm498, %v6192
      %6234 = vst.msk [vmem:[#allocation3 + $0x38] sm:$0xff] %vm498, %v6193
      %6235 = vst.msk [vmem:[#allocation3 + $0x40] sm:$0xff] %vm498, %v6194
      %6236 = vst.msk [vmem:[#allocation3 + $0x48] sm:$0xff] %vm498, %v6195
      %6237 = vst.msk [vmem:[#allocation3 + $0x50] sm:$0xff] %vm498, %v6196
      %6238 = vst.msk [vmem:[#allocation3 + $0x58] sm:$0xff] %vm498, %v6197
      %6239 = vst.msk [vmem:[#allocation3 + $0x60] sm:$0xff] %vm498, %v6198
      %6240 = vst.msk [vmem:[#allocation3 + $0x68] sm:$0xff] %vm498, %v6199
      %6241 = vst.msk [vmem:[#allocation3 + $0x70] sm:$0xff] %vm498, %v6200
      %6242 = vst.msk [vmem:[#allocation3 + $0x78] sm:$0xff] %vm498, %v6201
      %6243 = vst.msk [vmem:[#allocation3 + $0x80] sm:$0xff] %vm498, %v6202
      %6244 = vst.msk [vmem:[#allocation3 + $0x88] sm:$0xff] %vm498, %v6203
      %6245 = vst.msk [vmem:[#allocation3 + $0x90] sm:$0xff] %vm498, %v6204
      %6246 = vst.msk [vmem:[#allocation3 + $0x98] sm:$0xff] %vm498, %v6205
      %6247 = vst.msk [vmem:[#allocation3 + $0xa0] sm:$0xff] %vm498, %v6206
      %6248 = vst.msk [vmem:[#allocation3 + $0xa8] sm:$0xff] %vm498, %v6207
      %6249 = vst.msk [vmem:[#allocation3 + $0xb0] sm:$0xff] %vm498, %v6208
      %6250 = vst.msk [vmem:[#allocation3 + $0xb8] sm:$0xff] %vm498, %v6209
      %6251 = vst.msk [vmem:[#allocation3 + $0xc0] sm:$0xff] %vm498, %v6210
      %6252 = vst.msk [vmem:[#allocation3 + $0xc8] sm:$0xff] %vm498, %v6211
      %6253 = vst.msk [vmem:[#allocation3 + $0xd0] sm:$0xff] %vm498, %v6212
      %6254 = vst.msk [vmem:[#allocation3 + $0xd8] sm:$0xff] %vm498, %v6213
      %6255 = vst.msk [vmem:[#allocation3 + $0xe0] sm:$0xff] %vm498, %v6214
      %6256 = vst.msk [vmem:[#allocation3 + $0xe8] sm:$0xff] %vm498, %v6215
      %6257 = vst.msk [vmem:[#allocation3 + $0xf0] sm:$0xff] %vm498, %v6216
      %6258 = vst.msk [vmem:[#allocation3 + $0xf8] sm:$0xff] %vm498, %v6217
      %6259 = vst.msk [vmem:[#allocation3 + $0x100] sm:$0xff] %vm498, %v6218
      %6260 = vst.msk [vmem:[#allocation3 + $0x108] sm:$0xff] %vm498, %v6219
      %6261 = vst.msk [vmem:[#allocation3 + $0x110] sm:$0xff] %vm498, %v6220
      %6262 = vst.msk [vmem:[#allocation3 + $0x118] sm:$0xff] %vm498, %v6221
      %6263 = vst.msk [vmem:[#allocation3 + $0x120] sm:$0xff] %vm498, %v6222
      %6264 = vst.msk [vmem:[#allocation3 + $0x128] sm:$0xff] %vm498, %v6223
      %6265 = vst.msk [vmem:[#allocation3 + $0x130] sm:$0xff] %vm498, %v6224
      %6266 = vst.msk [vmem:[#allocation3 + $0x138] sm:$0xff] %vm498, %v6225
      %vm6267 = vcmask 29696
      %6268 = vst.msk [vmem:[#allocation3 + $0x140] sm:$0x3f] %vm6267, %v6226
      %v6269 = vld [vmem:[#allocation3] sm:$0xff]
      %v6270 = vld [vmem:[#allocation3 + $0x8] sm:$0xff]
      %v6271 = vld [vmem:[#allocation3 + $0x10] sm:$0xff]
      %v6272 = vld [vmem:[#allocation3 + $0x18] sm:$0xff]
      %v6273 = vld [vmem:[#allocation3 + $0x20] sm:$0xff]
      %v6274 = vld [vmem:[#allocation3 + $0x28] sm:$0xff]
      %v6275 = vld [vmem:[#allocation3 + $0x30] sm:$0xff]
      %v6276 = vld [vmem:[#allocation3 + $0x38] sm:$0xff]
      %v6277 = vld [vmem:[#allocation3 + $0x40] sm:$0xff]
      %v6278 = vld [vmem:[#allocation3 + $0x48] sm:$0xff]
      %v6279 = vld [vmem:[#allocation3 + $0x50] sm:$0xff]
      %v6280 = vld [vmem:[#allocation3 + $0x58] sm:$0xff]
      %v6281 = vld [vmem:[#allocation3 + $0x60] sm:$0xff]
      %v6282 = vld [vmem:[#allocation3 + $0x68] sm:$0xff]
      %v6283 = vld [vmem:[#allocation3 + $0x70] sm:$0xff]
      %v6284 = vld [vmem:[#allocation3 + $0x78] sm:$0xff]
      %v6285 = vld [vmem:[#allocation3 + $0x80] sm:$0xff]
      %v6286 = vld [vmem:[#allocation3 + $0x88] sm:$0xff]
      %v6287 = vld [vmem:[#allocation3 + $0x90] sm:$0xff]
      %v6288 = vld [vmem:[#allocation3 + $0x98] sm:$0xff]
      %v6289 = vld [vmem:[#allocation3 + $0xa0] sm:$0xff]
      %v6290 = vld [vmem:[#allocation3 + $0xa8] sm:$0xff]
      %v6291 = vld [vmem:[#allocation3 + $0xb0] sm:$0xff]
      %v6292 = vld [vmem:[#allocation3 + $0xb8] sm:$0xff]
      %v6293 = vld [vmem:[#allocation3 + $0xc0] sm:$0xff]
      %v6294 = vld [vmem:[#allocation3 + $0xc8] sm:$0xff]
      %v6295 = vld [vmem:[#allocation3 + $0xd0] sm:$0xff]
      %v6296 = vld [vmem:[#allocation3 + $0xd8] sm:$0xff]
      %v6297 = vld [vmem:[#allocation3 + $0xe0] sm:$0xff]
      %v6298 = vld [vmem:[#allocation3 + $0xe8] sm:$0xff]
      %v6299 = vld [vmem:[#allocation3 + $0xf0] sm:$0xff]
      %v6300 = vld [vmem:[#allocation3 + $0xf8] sm:$0xff]
      %v6301 = vld [vmem:[#allocation3 + $0x100] sm:$0xff]
      %v6302 = vld [vmem:[#allocation3 + $0x108] sm:$0xff]
      %v6303 = vld [vmem:[#allocation3 + $0x110] sm:$0xff]
      %v6304 = vld [vmem:[#allocation3 + $0x118] sm:$0xff]
      %v6305 = vld [vmem:[%s5] sm:$0xf]
      %v6306 = vld [vmem:[#allocation3 + $0x1] sm:$0xff]
      %v6307 = vld [vmem:[#allocation3 + $0x9] sm:$0xff]
      %v6308 = vld [vmem:[#allocation3 + $0x11] sm:$0xff]
      %v6309 = vld [vmem:[#allocation3 + $0x19] sm:$0xff]
      %v6310 = vld [vmem:[#allocation3 + $0x21] sm:$0xff]
      %v6311 = vld [vmem:[#allocation3 + $0x29] sm:$0xff]
      %v6312 = vld [vmem:[#allocation3 + $0x31] sm:$0xff]
      %v6313 = vld [vmem:[#allocation3 + $0x39] sm:$0xff]
      %v6314 = vld [vmem:[#allocation3 + $0x41] sm:$0xff]
      %v6315 = vld [vmem:[#allocation3 + $0x49] sm:$0xff]
      %v6316 = vld [vmem:[#allocation3 + $0x51] sm:$0xff]
      %v6317 = vld [vmem:[#allocation3 + $0x59] sm:$0xff]
      %v6318 = vld [vmem:[#allocation3 + $0x61] sm:$0xff]
      %v6319 = vld [vmem:[#allocation3 + $0x69] sm:$0xff]
      %v6320 = vld [vmem:[#allocation3 + $0x71] sm:$0xff]
      %v6321 = vld [vmem:[#allocation3 + $0x79] sm:$0xff]
      %v6322 = vld [vmem:[#allocation3 + $0x81] sm:$0xff]
      %v6323 = vld [vmem:[#allocation3 + $0x89] sm:$0xff]
      %v6324 = vld [vmem:[#allocation3 + $0x91] sm:$0xff]
      %v6325 = vld [vmem:[#allocation3 + $0x99] sm:$0xff]
      %v6326 = vld [vmem:[#allocation3 + $0xa1] sm:$0xff]
      %v6327 = vld [vmem:[#allocation3 + $0xa9] sm:$0xff]
      %v6328 = vld [vmem:[#allocation3 + $0xb1] sm:$0xff]
      %v6329 = vld [vmem:[#allocation3 + $0xb9] sm:$0xff]
      %v6330 = vld [vmem:[#allocation3 + $0xc1] sm:$0xff]
      %v6331 = vld [vmem:[#allocation3 + $0xc9] sm:$0xff]
      %v6332 = vld [vmem:[#allocation3 + $0xd1] sm:$0xff]
      %v6333 = vld [vmem:[#allocation3 + $0xd9] sm:$0xff]
      %v6334 = vld [vmem:[#allocation3 + $0xe1] sm:$0xff]
      %v6335 = vld [vmem:[#allocation3 + $0xe9] sm:$0xff]
      %v6336 = vld [vmem:[#allocation3 + $0xf1] sm:$0xff]
      %v6337 = vld [vmem:[#allocation3 + $0xf9] sm:$0xff]
      %v6338 = vld [vmem:[#allocation3 + $0x101] sm:$0xff]
      %v6339 = vld [vmem:[#allocation3 + $0x109] sm:$0xff]
      %v6340 = vld [vmem:[#allocation3 + $0x111] sm:$0xff]
      %v6341 = vld [vmem:[#allocation3 + $0x119] sm:$0xff]
      %s6342 = scalar_lea.vmem %s5, 4
      %v6343 = vld [vmem:[%s6342] sm:$0xf]
      %v6345 = vsel %vm498, %v6306, 0
      %v6348 = vsel %vm498, %v6307, 0
      %v6351 = vsel %vm498, %v6308, 0
      %v6354 = vsel %vm498, %v6309, 0
      %v6357 = vsel %vm498, %v6310, 0
      %v6360 = vsel %vm498, %v6311, 0
      %v6363 = vsel %vm498, %v6312, 0
      %v6366 = vsel %vm498, %v6313, 0
      %v6369 = vsel %vm498, %v6314, 0
      %v6372 = vsel %vm498, %v6315, 0
      %v6375 = vsel %vm498, %v6316, 0
      %v6378 = vsel %vm498, %v6317, 0
      %v6381 = vsel %vm498, %v6318, 0
      %v6384 = vsel %vm498, %v6319, 0
      %v6387 = vsel %vm498, %v6320, 0
      %v6390 = vsel %vm498, %v6321, 0
      %v6393 = vsel %vm498, %v6322, 0
      %v6396 = vsel %vm498, %v6323, 0
      %v6399 = vsel %vm498, %v6324, 0
      %v6402 = vsel %vm498, %v6325, 0
      %v6405 = vsel %vm498, %v6326, 0
      %v6408 = vsel %vm498, %v6327, 0
      %v6411 = vsel %vm498, %v6328, 0
      %v6414 = vsel %vm498, %v6329, 0
      %v6417 = vsel %vm498, %v6330, 0
      %v6420 = vsel %vm498, %v6331, 0
      %v6423 = vsel %vm498, %v6332, 0
      %v6426 = vsel %vm498, %v6333, 0
      %v6429 = vsel %vm498, %v6334, 0
      %v6432 = vsel %vm498, %v6335, 0
      %v6435 = vsel %vm498, %v6336, 0
      %v6438 = vsel %vm498, %v6337, 0
      %v6441 = vsel %vm498, %v6338, 0
      %v6444 = vsel %vm498, %v6339, 0
      %v6447 = vsel %vm498, %v6340, 0
      %v6450 = vsel %vm498, %v6341, 0
      %v6453 = vsel %vm607, %v6343, 0
      %6455 = vmatprep.subr.mxu0 0.0
      %6456 = vmatpush1.msra.mxu0 %v6453
      %6457 = vmatprep.subr.mxu0 0.0
      %6458 = vmatpush1.msra.mxu0 0.0
      %6459 = vmatprep.subr.mxu0 0.0
      %6460 = vmatpush1.msra.mxu0 0.0
      %6461 = vmatprep.subr.mxu0 0.0
      %6462 = vmatpush1.msra.mxu0 0.0
      %6463 = vmatprep.subr.mxu0 0.0
      %6464 = vmatpush1.msra.mxu0 0.0
      %6465 = vmatprep.subr.mxu0 0.0
      %6466 = vmatpush1.msra.mxu0 0.0
      %6467 = vmatprep.subr.mxu0 0.0
      %6468 = vmatpush1.msra.mxu0 0.0
      %6469 = vmatprep.subr.mxu0 0.0
      %6470 = vmatpush1.msra.mxu0 0.0
      %6471 = vmatprep.subr.mxu0 0.0
      %6472 = vmatpush1.msra.mxu0 0.0
      %6473 = vmatprep.subr.mxu0 0.0
      %6474 = vmatpush1.msra.mxu0 0.0
      %6475 = vmatprep.subr.mxu0 0.0
      %6476 = vmatpush1.msra.mxu0 0.0
      %6477 = vmatprep.subr.mxu0 0.0
      %6478 = vmatpush1.msra.mxu0 0.0
      %6479 = vmatprep.subr.mxu0 0.0
      %6480 = vmatpush1.msra.mxu0 0.0
      %6481 = vmatprep.subr.mxu0 0.0
      %6482 = vmatpush1.msra.mxu0 0.0
      %6483 = vmatprep.subr.mxu0 0.0
      %6484 = vmatpush1.msra.mxu0 0.0
      %6485 = vmatprep.subr.mxu0 0.0
      %6486 = vmatpush1.msra.mxu0 0.0
      %6487 = vmatprep.subr.mxu0 0.0
      %6488 = vmatpush1.msra.mxu0 0.0
      %6489 = vmatprep.subr.mxu0 0.0
      %6490 = vmatpush1.msra.mxu0 0.0
      %6491 = vmatprep.subr.mxu0 0.0
      %6492 = vmatpush1.msra.mxu0 0.0
      %6493 = vmatprep.subr.mxu0 0.0
      %6494 = vmatpush1.msra.mxu0 0.0
      %6495 = vmatprep.subr.mxu0 0.0
      %6496 = vmatpush1.msra.mxu0 0.0
      %6497 = vmatprep.subr.mxu0 0.0
      %6498 = vmatpush1.msra.mxu0 0.0
      %6499 = vmatprep.subr.mxu0 0.0
      %6500 = vmatpush1.msra.mxu0 0.0
      %6501 = vmatprep.subr.mxu0 0.0
      %6502 = vmatpush1.msra.mxu0 0.0
      %6503 = vmatprep.subr.mxu0 0.0
      %6504 = vmatpush1.msra.mxu0 0.0
      %6505 = vmatprep.subr.mxu0 0.0
      %6506 = vmatpush1.msra.mxu0 0.0
      %6507 = vmatprep.subr.mxu0 0.0
      %6508 = vmatpush1.msra.mxu0 0.0
      %6509 = vmatprep.subr.mxu0 0.0
      %6510 = vmatpush1.msra.mxu0 0.0
      %6511 = vmatprep.subr.mxu0 0.0
      %6512 = vmatpush1.msra.mxu0 0.0
      %6513 = vmatprep.subr.mxu0 0.0
      %6514 = vmatpush1.msra.mxu0 0.0
      %6515 = vmatprep.subr.mxu0 0.0
      %6516 = vmatpush1.msra.mxu0 0.0
      %6517 = vmatprep.subr.mxu0 0.0
      %6518 = vmatpush1.msra.mxu0 0.0
      %6519 = vmatprep.mubr.f32.mxu0 0.0
      %6520 = vmatmul.mubr.f32.gmra.mrb[0].mxu0 %v6345
      %v6521 = vpop.f32.mrb[0].mxu0
      %v6522 = vadd.f32 0.0, %v6521
      %v6523 = vpop.f32.mrb[0].mxu0
      %6524 = vmatprep.mubr.f32.mxu0 0.0
      %6525 = vmatmul.mubr.f32.gmra.mrb[0].mxu0 %v6348
      %v6526 = vpop.f32.mrb[0].mxu0
      %v6527 = vadd.f32 0.0, %v6526
      %v6528 = vpop.f32.mrb[0].mxu0
      %6529 = vmatprep.mubr.f32.mxu0 0.0
      %6530 = vmatmul.mubr.f32.gmra.mrb[0].mxu0 %v6351
      %v6531 = vpop.f32.mrb[0].mxu0
      %v6532 = vadd.f32 0.0, %v6531
      %v6533 = vpop.f32.mrb[0].mxu0
      %6534 = vmatprep.mubr.f32.mxu0 0.0
      %6535 = vmatmul.mubr.f32.gmra.mrb[0].mxu0 %v6354
      %v6536 = vpop.f32.mrb[0].mxu0
      %v6537 = vadd.f32 0.0, %v6536
      %v6538 = vpop.f32.mrb[0].mxu0
      %6539 = vmatprep.mubr.f32.mxu0 0.0
      %6540 = vmatmul.mubr.f32.gmra.mrb[0].mxu0 %v6357
      %v6541 = vpop.f32.mrb[0].mxu0
      %v6542 = vadd.f32 0.0, %v6541
      %v6543 = vpop.f32.mrb[0].mxu0
      %6544 = vmatprep.mubr.f32.mxu0 0.0
      %6545 = vmatmul.mubr.f32.gmra.mrb[0].mxu0 %v6360
      %v6546 = vpop.f32.mrb[0].mxu0
      %v6547 = vadd.f32 0.0, %v6546
      %v6548 = vpop.f32.mrb[0].mxu0
      %6549 = vmatprep.mubr.f32.mxu0 0.0
      %6550 = vmatmul.mubr.f32.gmra.mrb[0].mxu0 %v6363
      %v6551 = vpop.f32.mrb[0].mxu0
      %v6552 = vadd.f32 0.0, %v6551
      %v6553 = vpop.f32.mrb[0].mxu0
      %6554 = vmatprep.mubr.f32.mxu0 0.0
      %6555 = vmatmul.mubr.f32.gmra.mrb[0].mxu0 %v6366
      %v6556 = vpop.f32.mrb[0].mxu0
      %v6557 = vadd.f32 0.0, %v6556
      %v6558 = vpop.f32.mrb[0].mxu0
      %6559 = vmatprep.mubr.f32.mxu0 0.0
      %6560 = vmatmul.mubr.f32.gmra.mrb[0].mxu0 %v6369
      %v6561 = vpop.f32.mrb[0].mxu0
      %v6562 = vadd.f32 0.0, %v6561
      %v6563 = vpop.f32.mrb[0].mxu0
      %6564 = vmatprep.mubr.f32.mxu0 0.0
      %6565 = vmatmul.mubr.f32.gmra.mrb[0].mxu0 %v6372
      %v6566 = vpop.f32.mrb[0].mxu0
      %v6567 = vadd.f32 0.0, %v6566
      %v6568 = vpop.f32.mrb[0].mxu0
      %6569 = vmatprep.mubr.f32.mxu0 0.0
      %6570 = vmatmul.mubr.f32.gmra.mrb[0].mxu0 %v6375
      %v6571 = vpop.f32.mrb[0].mxu0
      %v6572 = vadd.f32 0.0, %v6571
      %v6573 = vpop.f32.mrb[0].mxu0
      %6574 = vmatprep.mubr.f32.mxu0 0.0
      %6575 = vmatmul.mubr.f32.gmra.mrb[0].mxu0 %v6378
      %v6576 = vpop.f32.mrb[0].mxu0
      %v6577 = vadd.f32 0.0, %v6576
      %v6578 = vpop.f32.mrb[0].mxu0
      %6579 = vmatprep.mubr.f32.mxu0 0.0
      %6580 = vmatmul.mubr.f32.gmra.mrb[0].mxu0 %v6381
      %v6581 = vpop.f32.mrb[0].mxu0
      %v6582 = vadd.f32 0.0, %v6581
      %v6583 = vpop.f32.mrb[0].mxu0
      %6584 = vmatprep.mubr.f32.mxu0 0.0
      %6585 = vmatmul.mubr.f32.gmra.mrb[0].mxu0 %v6384
      %v6586 = vpop.f32.mrb[0].mxu0
      %v6587 = vadd.f32 0.0, %v6586
      %v6588 = vpop.f32.mrb[0].mxu0
      %6589 = vmatprep.mubr.f32.mxu0 0.0
      %6590 = vmatmul.mubr.f32.gmra.mrb[0].mxu0 %v6387
      %v6591 = vpop.f32.mrb[0].mxu0
      %v6592 = vadd.f32 0.0, %v6591
      %v6593 = vpop.f32.mrb[0].mxu0
      %6594 = vmatprep.mubr.f32.mxu0 0.0
      %6595 = vmatmul.mubr.f32.gmra.mrb[0].mxu0 %v6390
      %v6596 = vpop.f32.mrb[0].mxu0
      %v6597 = vadd.f32 0.0, %v6596
      %v6598 = vpop.f32.mrb[0].mxu0
      %6599 = vmatprep.mubr.f32.mxu0 0.0
      %6600 = vmatmul.mubr.f32.gmra.mrb[0].mxu0 %v6393
      %v6601 = vpop.f32.mrb[0].mxu0
      %v6602 = vadd.f32 0.0, %v6601
      %v6603 = vpop.f32.mrb[0].mxu0
      %6604 = vmatprep.mubr.f32.mxu0 0.0
      %6605 = vmatmul.mubr.f32.gmra.mrb[0].mxu0 %v6396
      %v6606 = vpop.f32.mrb[0].mxu0
      %v6607 = vadd.f32 0.0, %v6606
      %v6608 = vpop.f32.mrb[0].mxu0
      %6609 = vmatprep.mubr.f32.mxu0 0.0
      %6610 = vmatmul.mubr.f32.gmra.mrb[0].mxu0 %v6399
      %v6611 = vpop.f32.mrb[0].mxu0
      %v6612 = vadd.f32 0.0, %v6611
      %v6613 = vpop.f32.mrb[0].mxu0
      %6614 = vmatprep.mubr.f32.mxu0 0.0
      %6615 = vmatmul.mubr.f32.gmra.mrb[0].mxu0 %v6402
      %v6616 = vpop.f32.mrb[0].mxu0
      %v6617 = vadd.f32 0.0, %v6616
      %v6618 = vpop.f32.mrb[0].mxu0
      %6619 = vmatprep.mubr.f32.mxu0 0.0
      %6620 = vmatmul.mubr.f32.gmra.mrb[0].mxu0 %v6405
      %v6621 = vpop.f32.mrb[0].mxu0
      %v6622 = vadd.f32 0.0, %v6621
      %v6623 = vpop.f32.mrb[0].mxu0
      %6624 = vmatprep.mubr.f32.mxu0 0.0
      %6625 = vmatmul.mubr.f32.gmra.mrb[0].mxu0 %v6408
      %v6626 = vpop.f32.mrb[0].mxu0
      %v6627 = vadd.f32 0.0, %v6626
      %v6628 = vpop.f32.mrb[0].mxu0
      %6629 = vmatprep.mubr.f32.mxu0 0.0
      %6630 = vmatmul.mubr.f32.gmra.mrb[0].mxu0 %v6411
      %v6631 = vpop.f32.mrb[0].mxu0
      %v6632 = vadd.f32 0.0, %v6631
      %v6633 = vpop.f32.mrb[0].mxu0
      %6634 = vmatprep.mubr.f32.mxu0 0.0
      %6635 = vmatmul.mubr.f32.gmra.mrb[0].mxu0 %v6414
      %v6636 = vpop.f32.mrb[0].mxu0
      %v6637 = vadd.f32 0.0, %v6636
      %v6638 = vpop.f32.mrb[0].mxu0
      %6639 = vmatprep.mubr.f32.mxu0 0.0
      %6640 = vmatmul.mubr.f32.gmra.mrb[0].mxu0 %v6417
      %v6641 = vpop.f32.mrb[0].mxu0
      %v6642 = vadd.f32 0.0, %v6641
      %v6643 = vpop.f32.mrb[0].mxu0
      %6644 = vmatprep.mubr.f32.mxu0 0.0
      %6645 = vmatmul.mubr.f32.gmra.mrb[0].mxu0 %v6420
      %v6646 = vpop.f32.mrb[0].mxu0
      %v6647 = vadd.f32 0.0, %v6646
      %v6648 = vpop.f32.mrb[0].mxu0
      %6649 = vmatprep.mubr.f32.mxu0 0.0
      %6650 = vmatmul.mubr.f32.gmra.mrb[0].mxu0 %v6423
      %v6651 = vpop.f32.mrb[0].mxu0
      %v6652 = vadd.f32 0.0, %v6651
      %v6653 = vpop.f32.mrb[0].mxu0
      %6654 = vmatprep.mubr.f32.mxu0 0.0
      %6655 = vmatmul.mubr.f32.gmra.mrb[0].mxu0 %v6426
      %v6656 = vpop.f32.mrb[0].mxu0
      %v6657 = vadd.f32 0.0, %v6656
      %v6658 = vpop.f32.mrb[0].mxu0
      %6659 = vmatprep.mubr.f32.mxu0 0.0
      %6660 = vmatmul.mubr.f32.gmra.mrb[0].mxu0 %v6429
      %v6661 = vpop.f32.mrb[0].mxu0
      %v6662 = vadd.f32 0.0, %v6661
      %v6663 = vpop.f32.mrb[0].mxu0
      %6664 = vmatprep.mubr.f32.mxu0 0.0
      %6665 = vmatmul.mubr.f32.gmra.mrb[0].mxu0 %v6432
      %v6666 = vpop.f32.mrb[0].mxu0
      %v6667 = vadd.f32 0.0, %v6666
      %v6668 = vpop.f32.mrb[0].mxu0
      %6669 = vmatprep.mubr.f32.mxu0 0.0
      %6670 = vmatmul.mubr.f32.gmra.mrb[0].mxu0 %v6435
      %v6671 = vpop.f32.mrb[0].mxu0
      %v6672 = vadd.f32 0.0, %v6671
      %v6673 = vpop.f32.mrb[0].mxu0
      %6674 = vmatprep.mubr.f32.mxu0 0.0
      %6675 = vmatmul.mubr.f32.gmra.mrb[0].mxu0 %v6438
      %v6676 = vpop.f32.mrb[0].mxu0
      %v6677 = vadd.f32 0.0, %v6676
      %v6678 = vpop.f32.mrb[0].mxu0
      %6679 = vmatprep.mubr.f32.mxu0 0.0
      %6680 = vmatmul.mubr.f32.gmra.mrb[0].mxu0 %v6441
      %v6681 = vpop.f32.mrb[0].mxu0
      %v6682 = vadd.f32 0.0, %v6681
      %v6683 = vpop.f32.mrb[0].mxu0
      %6684 = vmatprep.mubr.f32.mxu0 0.0
      %6685 = vmatmul.mubr.f32.gmra.mrb[0].mxu0 %v6444
      %v6686 = vpop.f32.mrb[0].mxu0
      %v6687 = vadd.f32 0.0, %v6686
      %v6688 = vpop.f32.mrb[0].mxu0
      %6689 = vmatprep.mubr.f32.mxu0 0.0
      %6690 = vmatmul.mubr.f32.gmra.mrb[0].mxu0 %v6447
      %v6691 = vpop.f32.mrb[0].mxu0
      %v6692 = vadd.f32 0.0, %v6691
      %v6693 = vpop.f32.mrb[0].mxu0
      %6694 = vmatprep.mubr.f32.mxu0 0.0
      %6695 = vmatmul.mubr.f32.gmra.mrb[0].mxu0 %v6450
      %v6696 = vpop.f32.mrb[0].mxu0
      %v6697 = vadd.f32 0.0, %v6696
      %v6698 = vpop.f32.mrb[0].mxu0
      %6699 = vdwg.mxu0
      %v6701 = vsel %vm498, %v6269, 0
      %v6704 = vsel %vm498, %v6270, 0
      %v6707 = vsel %vm498, %v6271, 0
      %v6710 = vsel %vm498, %v6272, 0
      %v6713 = vsel %vm498, %v6273, 0
      %v6716 = vsel %vm498, %v6274, 0
      %v6719 = vsel %vm498, %v6275, 0
      %v6722 = vsel %vm498, %v6276, 0
      %v6725 = vsel %vm498, %v6277, 0
      %v6728 = vsel %vm498, %v6278, 0
      %v6731 = vsel %vm498, %v6279, 0
      %v6734 = vsel %vm498, %v6280, 0
      %v6737 = vsel %vm498, %v6281, 0
      %v6740 = vsel %vm498, %v6282, 0
      %v6743 = vsel %vm498, %v6283, 0
      %v6746 = vsel %vm498, %v6284, 0
      %v6749 = vsel %vm498, %v6285, 0
      %v6752 = vsel %vm498, %v6286, 0
      %v6755 = vsel %vm498, %v6287, 0
      %v6758 = vsel %vm498, %v6288, 0
      %v6761 = vsel %vm498, %v6289, 0
      %v6764 = vsel %vm498, %v6290, 0
      %v6767 = vsel %vm498, %v6291, 0
      %v6770 = vsel %vm498, %v6292, 0
      %v6773 = vsel %vm498, %v6293, 0
      %v6776 = vsel %vm498, %v6294, 0
      %v6779 = vsel %vm498, %v6295, 0
      %v6782 = vsel %vm498, %v6296, 0
      %v6785 = vsel %vm498, %v6297, 0
      %v6788 = vsel %vm498, %v6298, 0
      %v6791 = vsel %vm498, %v6299, 0
      %v6794 = vsel %vm498, %v6300, 0
      %v6797 = vsel %vm498, %v6301, 0
      %v6800 = vsel %vm498, %v6302, 0
      %v6803 = vsel %vm498, %v6303, 0
      %v6806 = vsel %vm498, %v6304, 0
      %v6809 = vsel %vm607, %v6305, 0
      %6811 = vmatprep.subr.mxu0 0.0
      %6812 = vmatpush1.msra.mxu0 %v6809
      %6813 = vmatprep.subr.mxu0 0.0
      %6814 = vmatpush1.msra.mxu0 0.0
      %6815 = vmatprep.subr.mxu0 0.0
      %6816 = vmatpush1.msra.mxu0 0.0
      %6817 = vmatprep.subr.mxu0 0.0
      %6818 = vmatpush1.msra.mxu0 0.0
      %6819 = vmatprep.subr.mxu0 0.0
      %6820 = vmatpush1.msra.mxu0 0.0
      %6821 = vmatprep.subr.mxu0 0.0
      %6822 = vmatpush1.msra.mxu0 0.0
      %6823 = vmatprep.subr.mxu0 0.0
      %6824 = vmatpush1.msra.mxu0 0.0
      %6825 = vmatprep.subr.mxu0 0.0
      %6826 = vmatpush1.msra.mxu0 0.0
      %6827 = vmatprep.subr.mxu0 0.0
      %6828 = vmatpush1.msra.mxu0 0.0
      %6829 = vmatprep.subr.mxu0 0.0
      %6830 = vmatpush1.msra.mxu0 0.0
      %6831 = vmatprep.subr.mxu0 0.0
      %6832 = vmatpush1.msra.mxu0 0.0
      %6833 = vmatprep.subr.mxu0 0.0
      %6834 = vmatpush1.msra.mxu0 0.0
      %6835 = vmatprep.subr.mxu0 0.0
      %6836 = vmatpush1.msra.mxu0 0.0
      %6837 = vmatprep.subr.mxu0 0.0
      %6838 = vmatpush1.msra.mxu0 0.0
      %6839 = vmatprep.subr.mxu0 0.0
      %6840 = vmatpush1.msra.mxu0 0.0
      %6841 = vmatprep.subr.mxu0 0.0
      %6842 = vmatpush1.msra.mxu0 0.0
      %6843 = vmatprep.subr.mxu0 0.0
      %6844 = vmatpush1.msra.mxu0 0.0
      %6845 = vmatprep.subr.mxu0 0.0
      %6846 = vmatpush1.msra.mxu0 0.0
      %6847 = vmatprep.subr.mxu0 0.0
      %6848 = vmatpush1.msra.mxu0 0.0
      %6849 = vmatprep.subr.mxu0 0.0
      %6850 = vmatpush1.msra.mxu0 0.0
      %6851 = vmatprep.subr.mxu0 0.0
      %6852 = vmatpush1.msra.mxu0 0.0
      %6853 = vmatprep.subr.mxu0 0.0
      %6854 = vmatpush1.msra.mxu0 0.0
      %6855 = vmatprep.subr.mxu0 0.0
      %6856 = vmatpush1.msra.mxu0 0.0
      %6857 = vmatprep.subr.mxu0 0.0
      %6858 = vmatpush1.msra.mxu0 0.0
      %6859 = vmatprep.subr.mxu0 0.0
      %6860 = vmatpush1.msra.mxu0 0.0
      %6861 = vmatprep.subr.mxu0 0.0
      %6862 = vmatpush1.msra.mxu0 0.0
      %6863 = vmatprep.subr.mxu0 0.0
      %6864 = vmatpush1.msra.mxu0 0.0
      %6865 = vmatprep.subr.mxu0 0.0
      %6866 = vmatpush1.msra.mxu0 0.0
      %6867 = vmatprep.subr.mxu0 0.0
      %6868 = vmatpush1.msra.mxu0 0.0
      %6869 = vmatprep.subr.mxu0 0.0
      %6870 = vmatpush1.msra.mxu0 0.0
      %6871 = vmatprep.subr.mxu0 0.0
      %6872 = vmatpush1.msra.mxu0 0.0
      %6873 = vmatprep.subr.mxu0 0.0
      %6874 = vmatpush1.msra.mxu0 0.0
      %6875 = vmatprep.mubr.f32.mxu0 0.0
      %6876 = vmatmul.mubr.f32.gmra.mrb[0].mxu0 %v6701
      %v6877 = vpop.f32.mrb[0].mxu0
      %v6878 = vadd.f32 %v6522, %v6877
      %v6879 = vpop.f32.mrb[0].mxu0
      %6880 = vmatprep.mubr.f32.mxu0 0.0
      %6881 = vmatmul.mubr.f32.gmra.mrb[0].mxu0 %v6704
      %v6882 = vpop.f32.mrb[0].mxu0
      %v6883 = vadd.f32 %v6527, %v6882
      %v6884 = vpop.f32.mrb[0].mxu0
      %6885 = vmatprep.mubr.f32.mxu0 0.0
      %6886 = vmatmul.mubr.f32.gmra.mrb[0].mxu0 %v6707
      %v6887 = vpop.f32.mrb[0].mxu0
      %v6888 = vadd.f32 %v6532, %v6887
      %v6889 = vpop.f32.mrb[0].mxu0
      %6890 = vmatprep.mubr.f32.mxu0 0.0
      %6891 = vmatmul.mubr.f32.gmra.mrb[0].mxu0 %v6710
      %v6892 = vpop.f32.mrb[0].mxu0
      %v6893 = vadd.f32 %v6537, %v6892
      %v6894 = vpop.f32.mrb[0].mxu0
      %6895 = vmatprep.mubr.f32.mxu0 0.0
      %6896 = vmatmul.mubr.f32.gmra.mrb[0].mxu0 %v6713
      %v6897 = vpop.f32.mrb[0].mxu0
      %v6898 = vadd.f32 %v6542, %v6897
      %v6899 = vpop.f32.mrb[0].mxu0
      %6900 = vmatprep.mubr.f32.mxu0 0.0
      %6901 = vmatmul.mubr.f32.gmra.mrb[0].mxu0 %v6716
      %v6902 = vpop.f32.mrb[0].mxu0
      %v6903 = vadd.f32 %v6547, %v6902
      %v6904 = vpop.f32.mrb[0].mxu0
      %6905 = vmatprep.mubr.f32.mxu0 0.0
      %6906 = vmatmul.mubr.f32.gmra.mrb[0].mxu0 %v6719
      %v6907 = vpop.f32.mrb[0].mxu0
      %v6908 = vadd.f32 %v6552, %v6907
      %v6909 = vpop.f32.mrb[0].mxu0
      %6910 = vmatprep.mubr.f32.mxu0 0.0
      %6911 = vmatmul.mubr.f32.gmra.mrb[0].mxu0 %v6722
      %v6912 = vpop.f32.mrb[0].mxu0
      %v6913 = vadd.f32 %v6557, %v6912
      %v6914 = vpop.f32.mrb[0].mxu0
      %6915 = vmatprep.mubr.f32.mxu0 0.0
      %6916 = vmatmul.mubr.f32.gmra.mrb[0].mxu0 %v6725
      %v6917 = vpop.f32.mrb[0].mxu0
      %v6918 = vadd.f32 %v6562, %v6917
      %v6919 = vpop.f32.mrb[0].mxu0
      %6920 = vmatprep.mubr.f32.mxu0 0.0
      %6921 = vmatmul.mubr.f32.gmra.mrb[0].mxu0 %v6728
      %v6922 = vpop.f32.mrb[0].mxu0
      %v6923 = vadd.f32 %v6567, %v6922
      %v6924 = vpop.f32.mrb[0].mxu0
      %6925 = vmatprep.mubr.f32.mxu0 0.0
      %6926 = vmatmul.mubr.f32.gmra.mrb[0].mxu0 %v6731
      %v6927 = vpop.f32.mrb[0].mxu0
      %v6928 = vadd.f32 %v6572, %v6927
      %v6929 = vpop.f32.mrb[0].mxu0
      %6930 = vmatprep.mubr.f32.mxu0 0.0
      %6931 = vmatmul.mubr.f32.gmra.mrb[0].mxu0 %v6734
      %v6932 = vpop.f32.mrb[0].mxu0
      %v6933 = vadd.f32 %v6577, %v6932
      %v6934 = vpop.f32.mrb[0].mxu0
      %6935 = vmatprep.mubr.f32.mxu0 0.0
      %6936 = vmatmul.mubr.f32.gmra.mrb[0].mxu0 %v6737
      %v6937 = vpop.f32.mrb[0].mxu0
      %v6938 = vadd.f32 %v6582, %v6937
      %v6939 = vpop.f32.mrb[0].mxu0
      %6940 = vmatprep.mubr.f32.mxu0 0.0
      %6941 = vmatmul.mubr.f32.gmra.mrb[0].mxu0 %v6740
      %v6942 = vpop.f32.mrb[0].mxu0
      %v6943 = vadd.f32 %v6587, %v6942
      %v6944 = vpop.f32.mrb[0].mxu0
      %6945 = vmatprep.mubr.f32.mxu0 0.0
      %6946 = vmatmul.mubr.f32.gmra.mrb[0].mxu0 %v6743
      %v6947 = vpop.f32.mrb[0].mxu0
      %v6948 = vadd.f32 %v6592, %v6947
      %v6949 = vpop.f32.mrb[0].mxu0
      %6950 = vmatprep.mubr.f32.mxu0 0.0
      %6951 = vmatmul.mubr.f32.gmra.mrb[0].mxu0 %v6746
      %v6952 = vpop.f32.mrb[0].mxu0
      %v6953 = vadd.f32 %v6597, %v6952
      %v6954 = vpop.f32.mrb[0].mxu0
      %6955 = vmatprep.mubr.f32.mxu0 0.0
      %6956 = vmatmul.mubr.f32.gmra.mrb[0].mxu0 %v6749
      %v6957 = vpop.f32.mrb[0].mxu0
      %v6958 = vadd.f32 %v6602, %v6957
      %v6959 = vpop.f32.mrb[0].mxu0
      %6960 = vmatprep.mubr.f32.mxu0 0.0
      %6961 = vmatmul.mubr.f32.gmra.mrb[0].mxu0 %v6752
      %v6962 = vpop.f32.mrb[0].mxu0
      %v6963 = vadd.f32 %v6607, %v6962
      %v6964 = vpop.f32.mrb[0].mxu0
      %6965 = vmatprep.mubr.f32.mxu0 0.0
      %6966 = vmatmul.mubr.f32.gmra.mrb[0].mxu0 %v6755
      %v6967 = vpop.f32.mrb[0].mxu0
      %v6968 = vadd.f32 %v6612, %v6967
      %v6969 = vpop.f32.mrb[0].mxu0
      %6970 = vmatprep.mubr.f32.mxu0 0.0
      %6971 = vmatmul.mubr.f32.gmra.mrb[0].mxu0 %v6758
      %v6972 = vpop.f32.mrb[0].mxu0
      %v6973 = vadd.f32 %v6617, %v6972
      %v6974 = vpop.f32.mrb[0].mxu0
      %6975 = vmatprep.mubr.f32.mxu0 0.0
      %6976 = vmatmul.mubr.f32.gmra.mrb[0].mxu0 %v6761
      %v6977 = vpop.f32.mrb[0].mxu0
      %v6978 = vadd.f32 %v6622, %v6977
      %v6979 = vpop.f32.mrb[0].mxu0
      %6980 = vmatprep.mubr.f32.mxu0 0.0
      %6981 = vmatmul.mubr.f32.gmra.mrb[0].mxu0 %v6764
      %v6982 = vpop.f32.mrb[0].mxu0
      %v6983 = vadd.f32 %v6627, %v6982
      %v6984 = vpop.f32.mrb[0].mxu0
      %6985 = vmatprep.mubr.f32.mxu0 0.0
      %6986 = vmatmul.mubr.f32.gmra.mrb[0].mxu0 %v6767
      %v6987 = vpop.f32.mrb[0].mxu0
      %v6988 = vadd.f32 %v6632, %v6987
      %v6989 = vpop.f32.mrb[0].mxu0
      %6990 = vmatprep.mubr.f32.mxu0 0.0
      %6991 = vmatmul.mubr.f32.gmra.mrb[0].mxu0 %v6770
      %v6992 = vpop.f32.mrb[0].mxu0
      %v6993 = vadd.f32 %v6637, %v6992
      %v6994 = vpop.f32.mrb[0].mxu0
      %6995 = vmatprep.mubr.f32.mxu0 0.0
      %6996 = vmatmul.mubr.f32.gmra.mrb[0].mxu0 %v6773
      %v6997 = vpop.f32.mrb[0].mxu0
      %v6998 = vadd.f32 %v6642, %v6997
      %v6999 = vpop.f32.mrb[0].mxu0
      %7000 = vmatprep.mubr.f32.mxu0 0.0
      %7001 = vmatmul.mubr.f32.gmra.mrb[0].mxu0 %v6776
      %v7002 = vpop.f32.mrb[0].mxu0
      %v7003 = vadd.f32 %v6647, %v7002
      %v7004 = vpop.f32.mrb[0].mxu0
      %7005 = vmatprep.mubr.f32.mxu0 0.0
      %7006 = vmatmul.mubr.f32.gmra.mrb[0].mxu0 %v6779
      %v7007 = vpop.f32.mrb[0].mxu0
      %v7008 = vadd.f32 %v6652, %v7007
      %v7009 = vpop.f32.mrb[0].mxu0
      %7010 = vmatprep.mubr.f32.mxu0 0.0
      %7011 = vmatmul.mubr.f32.gmra.mrb[0].mxu0 %v6782
      %v7012 = vpop.f32.mrb[0].mxu0
      %v7013 = vadd.f32 %v6657, %v7012
      %v7014 = vpop.f32.mrb[0].mxu0
      %7015 = vmatprep.mubr.f32.mxu0 0.0
      %7016 = vmatmul.mubr.f32.gmra.mrb[0].mxu0 %v6785
      %v7017 = vpop.f32.mrb[0].mxu0
      %v7018 = vadd.f32 %v6662, %v7017
      %v7019 = vpop.f32.mrb[0].mxu0
      %7020 = vmatprep.mubr.f32.mxu0 0.0
      %7021 = vmatmul.mubr.f32.gmra.mrb[0].mxu0 %v6788
      %v7022 = vpop.f32.mrb[0].mxu0
      %v7023 = vadd.f32 %v6667, %v7022
      %v7024 = vpop.f32.mrb[0].mxu0
      %7025 = vmatprep.mubr.f32.mxu0 0.0
      %7026 = vmatmul.mubr.f32.gmra.mrb[0].mxu0 %v6791
      %v7027 = vpop.f32.mrb[0].mxu0
      %v7028 = vadd.f32 %v6672, %v7027
      %v7029 = vpop.f32.mrb[0].mxu0
      %7030 = vmatprep.mubr.f32.mxu0 0.0
      %7031 = vmatmul.mubr.f32.gmra.mrb[0].mxu0 %v6794
      %v7032 = vpop.f32.mrb[0].mxu0
      %v7033 = vadd.f32 %v6677, %v7032
      %v7034 = vpop.f32.mrb[0].mxu0
      %7035 = vmatprep.mubr.f32.mxu0 0.0
      %7036 = vmatmul.mubr.f32.gmra.mrb[0].mxu0 %v6797
      %v7037 = vpop.f32.mrb[0].mxu0
      %v7038 = vadd.f32 %v6682, %v7037
      %v7039 = vpop.f32.mrb[0].mxu0
      %7040 = vmatprep.mubr.f32.mxu0 0.0
      %7041 = vmatmul.mubr.f32.gmra.mrb[0].mxu0 %v6800
      %v7042 = vpop.f32.mrb[0].mxu0
      %v7043 = vadd.f32 %v6687, %v7042
      %v7044 = vpop.f32.mrb[0].mxu0
      %7045 = vmatprep.mubr.f32.mxu0 0.0
      %7046 = vmatmul.mubr.f32.gmra.mrb[0].mxu0 %v6803
      %v7047 = vpop.f32.mrb[0].mxu0
      %v7048 = vadd.f32 %v6692, %v7047
      %v7049 = vpop.f32.mrb[0].mxu0
      %7050 = vmatprep.mubr.f32.mxu0 0.0
      %7051 = vmatmul.mubr.f32.gmra.mrb[0].mxu0 %v6806
      %v7052 = vpop.f32.mrb[0].mxu0
      %v7053 = vadd.f32 %v6697, %v7052
      %v7054 = vpop.f32.mrb[0].mxu0
      %7055 = vdwg.mxu0
      %v7056 = vld [vmem:[#allocation3 + $0x2] sm:$0xff]
      %v7057 = vld [vmem:[#allocation3 + $0xa] sm:$0xff]
      %v7058 = vld [vmem:[#allocation3 + $0x12] sm:$0xff]
      %v7059 = vld [vmem:[#allocation3 + $0x1a] sm:$0xff]
      %v7060 = vld [vmem:[#allocation3 + $0x22] sm:$0xff]
      %v7061 = vld [vmem:[#allocation3 + $0x2a] sm:$0xff]
      %v7062 = vld [vmem:[#allocation3 + $0x32] sm:$0xff]
      %v7063 = vld [vmem:[#allocation3 + $0x3a] sm:$0xff]
      %v7064 = vld [vmem:[#allocation3 + $0x42] sm:$0xff]
      %v7065 = vld [vmem:[#allocation3 + $0x4a] sm:$0xff]
      %v7066 = vld [vmem:[#allocation3 + $0x52] sm:$0xff]
      %v7067 = vld [vmem:[#allocation3 + $0x5a] sm:$0xff]
      %v7068 = vld [vmem:[#allocation3 + $0x62] sm:$0xff]
      %v7069 = vld [vmem:[#allocation3 + $0x6a] sm:$0xff]
      %v7070 = vld [vmem:[#allocation3 + $0x72] sm:$0xff]
      %v7071 = vld [vmem:[#allocation3 + $0x7a] sm:$0xff]
      %v7072 = vld [vmem:[#allocation3 + $0x82] sm:$0xff]
      %v7073 = vld [vmem:[#allocation3 + $0x8a] sm:$0xff]
      %v7074 = vld [vmem:[#allocation3 + $0x92] sm:$0xff]
      %v7075 = vld [vmem:[#allocation3 + $0x9a] sm:$0xff]
      %v7076 = vld [vmem:[#allocation3 + $0xa2] sm:$0xff]
      %v7077 = vld [vmem:[#allocation3 + $0xaa] sm:$0xff]
      %v7078 = vld [vmem:[#allocation3 + $0xb2] sm:$0xff]
      %v7079 = vld [vmem:[#allocation3 + $0xba] sm:$0xff]
      %v7080 = vld [vmem:[#allocation3 + $0xc2] sm:$0xff]
      %v7081 = vld [vmem:[#allocation3 + $0xca] sm:$0xff]
      %v7082 = vld [vmem:[#allocation3 + $0xd2] sm:$0xff]
      %v7083 = vld [vmem:[#allocation3 + $0xda] sm:$0xff]
      %v7084 = vld [vmem:[#allocation3 + $0xe2] sm:$0xff]
      %v7085 = vld [vmem:[#allocation3 + $0xea] sm:$0xff]
      %v7086 = vld [vmem:[#allocation3 + $0xf2] sm:$0xff]
      %v7087 = vld [vmem:[#allocation3 + $0xfa] sm:$0xff]
      %v7088 = vld [vmem:[#allocation3 + $0x102] sm:$0xff]
      %v7089 = vld [vmem:[#allocation3 + $0x10a] sm:$0xff]
      %v7090 = vld [vmem:[#allocation3 + $0x112] sm:$0xff]
      %v7091 = vld [vmem:[#allocation3 + $0x11a] sm:$0xff]
      %s7092 = scalar_lea.vmem %s5, 8
      %v7093 = vld [vmem:[%s7092] sm:$0xf]
      %v7095 = vsel %vm498, %v7056, 0
      %v7098 = vsel %vm498, %v7057, 0
      %v7101 = vsel %vm498, %v7058, 0
      %v7104 = vsel %vm498, %v7059, 0
      %v7107 = vsel %vm498, %v7060, 0
      %v7110 = vsel %vm498, %v7061, 0
      %v7113 = vsel %vm498, %v7062, 0
      %v7116 = vsel %vm498, %v7063, 0
      %v7119 = vsel %vm498, %v7064, 0
      %v7122 = vsel %vm498, %v7065, 0
      %v7125 = vsel %vm498, %v7066, 0
      %v7128 = vsel %vm498, %v7067, 0
      %v7131 = vsel %vm498, %v7068, 0
      %v7134 = vsel %vm498, %v7069, 0
      %v7137 = vsel %vm498, %v7070, 0
      %v7140 = vsel %vm498, %v7071, 0
      %v7143 = vsel %vm498, %v7072, 0
      %v7146 = vsel %vm498, %v7073, 0
      %v7149 = vsel %vm498, %v7074, 0
      %v7152 = vsel %vm498, %v7075, 0
      %v7155 = vsel %vm498, %v7076, 0
      %v7158 = vsel %vm498, %v7077, 0
      %v7161 = vsel %vm498, %v7078, 0
      %v7164 = vsel %vm498, %v7079, 0
      %v7167 = vsel %vm498, %v7080, 0
      %v7170 = vsel %vm498, %v7081, 0
      %v7173 = vsel %vm498, %v7082, 0
      %v7176 = vsel %vm498, %v7083, 0
      %v7179 = vsel %vm498, %v7084, 0
      %v7182 = vsel %vm498, %v7085, 0
      %v7185 = vsel %vm498, %v7086, 0
      %v7188 = vsel %vm498, %v7087, 0
      %v7191 = vsel %vm498, %v7088, 0
      %v7194 = vsel %vm498, %v7089, 0
      %v7197 = vsel %vm498, %v7090, 0
      %v7200 = vsel %vm498, %v7091, 0
      %v7203 = vsel %vm607, %v7093, 0
      %7205 = vmatprep.subr.mxu0 0.0
      %7206 = vmatpush1.msra.mxu0 %v7203
      %7207 = vmatprep.subr.mxu0 0.0
      %7208 = vmatpush1.msra.mxu0 0.0
      %7209 = vmatprep.subr.mxu0 0.0
      %7210 = vmatpush1.msra.mxu0 0.0
      %7211 = vmatprep.subr.mxu0 0.0
      %7212 = vmatpush1.msra.mxu0 0.0
      %7213 = vmatprep.subr.mxu0 0.0
      %7214 = vmatpush1.msra.mxu0 0.0
      %7215 = vmatprep.subr.mxu0 0.0
      %7216 = vmatpush1.msra.mxu0 0.0
      %7217 = vmatprep.subr.mxu0 0.0
      %7218 = vmatpush1.msra.mxu0 0.0
      %7219 = vmatprep.subr.mxu0 0.0
      %7220 = vmatpush1.msra.mxu0 0.0
      %7221 = vmatprep.subr.mxu0 0.0
      %7222 = vmatpush1.msra.mxu0 0.0
      %7223 = vmatprep.subr.mxu0 0.0
      %7224 = vmatpush1.msra.mxu0 0.0
      %7225 = vmatprep.subr.mxu0 0.0
      %7226 = vmatpush1.msra.mxu0 0.0
      %7227 = vmatprep.subr.mxu0 0.0
      %7228 = vmatpush1.msra.mxu0 0.0
      %7229 = vmatprep.subr.mxu0 0.0
      %7230 = vmatpush1.msra.mxu0 0.0
      %7231 = vmatprep.subr.mxu0 0.0
      %7232 = vmatpush1.msra.mxu0 0.0
      %7233 = vmatprep.subr.mxu0 0.0
      %7234 = vmatpush1.msra.mxu0 0.0
      %7235 = vmatprep.subr.mxu0 0.0
      %7236 = vmatpush1.msra.mxu0 0.0
      %7237 = vmatprep.subr.mxu0 0.0
      %7238 = vmatpush1.msra.mxu0 0.0
      %7239 = vmatprep.subr.mxu0 0.0
      %7240 = vmatpush1.msra.mxu0 0.0
      %7241 = vmatprep.subr.mxu0 0.0
      %7242 = vmatpush1.msra.mxu0 0.0
      %7243 = vmatprep.subr.mxu0 0.0
      %7244 = vmatpush1.msra.mxu0 0.0
      %7245 = vmatprep.subr.mxu0 0.0
      %7246 = vmatpush1.msra.mxu0 0.0
      %7247 = vmatprep.subr.mxu0 0.0
      %7248 = vmatpush1.msra.mxu0 0.0
      %7249 = vmatprep.subr.mxu0 0.0
      %7250 = vmatpush1.msra.mxu0 0.0
      %7251 = vmatprep.subr.mxu0 0.0
      %7252 = vmatpush1.msra.mxu0 0.0
      %7253 = vmatprep.subr.mxu0 0.0
      %7254 = vmatpush1.msra.mxu0 0.0
      %7255 = vmatprep.subr.mxu0 0.0
      %7256 = vmatpush1.msra.mxu0 0.0
      %7257 = vmatprep.subr.mxu0 0.0
      %7258 = vmatpush1.msra.mxu0 0.0
      %7259 = vmatprep.subr.mxu0 0.0
      %7260 = vmatpush1.msra.mxu0 0.0
      %7261 = vmatprep.subr.mxu0 0.0
      %7262 = vmatpush1.msra.mxu0 0.0
      %7263 = vmatprep.subr.mxu0 0.0
      %7264 = vmatpush1.msra.mxu0 0.0
      %7265 = vmatprep.subr.mxu0 0.0
      %7266 = vmatpush1.msra.mxu0 0.0
      %7267 = vmatprep.subr.mxu0 0.0
      %7268 = vmatpush1.msra.mxu0 0.0
      %7269 = vmatprep.mubr.f32.mxu0 0.0
      %7270 = vmatmul.mubr.f32.gmra.mrb[0].mxu0 %v7095
      %v7271 = vpop.f32.mrb[0].mxu0
      %v7272 = vadd.f32 0.0, %v7271
      %v7273 = vpop.f32.mrb[0].mxu0
      %7274 = vmatprep.mubr.f32.mxu0 0.0
      %7275 = vmatmul.mubr.f32.gmra.mrb[0].mxu0 %v7098
      %v7276 = vpop.f32.mrb[0].mxu0
      %v7277 = vadd.f32 0.0, %v7276
      %v7278 = vpop.f32.mrb[0].mxu0
      %7279 = vmatprep.mubr.f32.mxu0 0.0
      %7280 = vmatmul.mubr.f32.gmra.mrb[0].mxu0 %v7101
      %v7281 = vpop.f32.mrb[0].mxu0
      %v7282 = vadd.f32 0.0, %v7281
      %v7283 = vpop.f32.mrb[0].mxu0
      %7284 = vmatprep.mubr.f32.mxu0 0.0
      %7285 = vmatmul.mubr.f32.gmra.mrb[0].mxu0 %v7104
      %v7286 = vpop.f32.mrb[0].mxu0
      %v7287 = vadd.f32 0.0, %v7286
      %v7288 = vpop.f32.mrb[0].mxu0
      %7289 = vmatprep.mubr.f32.mxu0 0.0
      %7290 = vmatmul.mubr.f32.gmra.mrb[0].mxu0 %v7107
      %v7291 = vpop.f32.mrb[0].mxu0
      %v7292 = vadd.f32 0.0, %v7291
      %v7293 = vpop.f32.mrb[0].mxu0
      %7294 = vmatprep.mubr.f32.mxu0 0.0
      %7295 = vmatmul.mubr.f32.gmra.mrb[0].mxu0 %v7110
      %v7296 = vpop.f32.mrb[0].mxu0
      %v7297 = vadd.f32 0.0, %v7296
      %v7298 = vpop.f32.mrb[0].mxu0
      %7299 = vmatprep.mubr.f32.mxu0 0.0
      %7300 = vmatmul.mubr.f32.gmra.mrb[0].mxu0 %v7113
      %v7301 = vpop.f32.mrb[0].mxu0
      %v7302 = vadd.f32 0.0, %v7301
      %v7303 = vpop.f32.mrb[0].mxu0
      %7304 = vmatprep.mubr.f32.mxu0 0.0
      %7305 = vmatmul.mubr.f32.gmra.mrb[0].mxu0 %v7116
      %v7306 = vpop.f32.mrb[0].mxu0
      %v7307 = vadd.f32 0.0, %v7306
      %v7308 = vpop.f32.mrb[0].mxu0
      %7309 = vmatprep.mubr.f32.mxu0 0.0
      %7310 = vmatmul.mubr.f32.gmra.mrb[0].mxu0 %v7119
      %v7311 = vpop.f32.mrb[0].mxu0
      %v7312 = vadd.f32 0.0, %v7311
      %v7313 = vpop.f32.mrb[0].mxu0
      %7314 = vmatprep.mubr.f32.mxu0 0.0
      %7315 = vmatmul.mubr.f32.gmra.mrb[0].mxu0 %v7122
      %v7316 = vpop.f32.mrb[0].mxu0
      %v7317 = vadd.f32 0.0, %v7316
      %v7318 = vpop.f32.mrb[0].mxu0
      %7319 = vmatprep.mubr.f32.mxu0 0.0
      %7320 = vmatmul.mubr.f32.gmra.mrb[0].mxu0 %v7125
      %v7321 = vpop.f32.mrb[0].mxu0
      %v7322 = vadd.f32 0.0, %v7321
      %v7323 = vpop.f32.mrb[0].mxu0
      %7324 = vmatprep.mubr.f32.mxu0 0.0
      %7325 = vmatmul.mubr.f32.gmra.mrb[0].mxu0 %v7128
      %v7326 = vpop.f32.mrb[0].mxu0
      %v7327 = vadd.f32 0.0, %v7326
      %v7328 = vpop.f32.mrb[0].mxu0
      %7329 = vmatprep.mubr.f32.mxu0 0.0
      %7330 = vmatmul.mubr.f32.gmra.mrb[0].mxu0 %v7131
      %v7331 = vpop.f32.mrb[0].mxu0
      %v7332 = vadd.f32 0.0, %v7331
      %v7333 = vpop.f32.mrb[0].mxu0
      %7334 = vmatprep.mubr.f32.mxu0 0.0
      %7335 = vmatmul.mubr.f32.gmra.mrb[0].mxu0 %v7134
      %v7336 = vpop.f32.mrb[0].mxu0
      %v7337 = vadd.f32 0.0, %v7336
      %v7338 = vpop.f32.mrb[0].mxu0
      %7339 = vmatprep.mubr.f32.mxu0 0.0
      %7340 = vmatmul.mubr.f32.gmra.mrb[0].mxu0 %v7137
      %v7341 = vpop.f32.mrb[0].mxu0
      %v7342 = vadd.f32 0.0, %v7341
      %v7343 = vpop.f32.mrb[0].mxu0
      %7344 = vmatprep.mubr.f32.mxu0 0.0
      %7345 = vmatmul.mubr.f32.gmra.mrb[0].mxu0 %v7140
      %v7346 = vpop.f32.mrb[0].mxu0
      %v7347 = vadd.f32 0.0, %v7346
      %v7348 = vpop.f32.mrb[0].mxu0
      %7349 = vmatprep.mubr.f32.mxu0 0.0
      %7350 = vmatmul.mubr.f32.gmra.mrb[0].mxu0 %v7143
      %v7351 = vpop.f32.mrb[0].mxu0
      %v7352 = vadd.f32 0.0, %v7351
      %v7353 = vpop.f32.mrb[0].mxu0
      %7354 = vmatprep.mubr.f32.mxu0 0.0
      %7355 = vmatmul.mubr.f32.gmra.mrb[0].mxu0 %v7146
      %v7356 = vpop.f32.mrb[0].mxu0
      %v7357 = vadd.f32 0.0, %v7356
      %v7358 = vpop.f32.mrb[0].mxu0
      %7359 = vmatprep.mubr.f32.mxu0 0.0
      %7360 = vmatmul.mubr.f32.gmra.mrb[0].mxu0 %v7149
      %v7361 = vpop.f32.mrb[0].mxu0
      %v7362 = vadd.f32 0.0, %v7361
      %v7363 = vpop.f32.mrb[0].mxu0
      %7364 = vmatprep.mubr.f32.mxu0 0.0
      %7365 = vmatmul.mubr.f32.gmra.mrb[0].mxu0 %v7152
      %v7366 = vpop.f32.mrb[0].mxu0
      %v7367 = vadd.f32 0.0, %v7366
      %v7368 = vpop.f32.mrb[0].mxu0
      %7369 = vmatprep.mubr.f32.mxu0 0.0
      %7370 = vmatmul.mubr.f32.gmra.mrb[0].mxu0 %v7155
      %v7371 = vpop.f32.mrb[0].mxu0
      %v7372 = vadd.f32 0.0, %v7371
      %v7373 = vpop.f32.mrb[0].mxu0
      %7374 = vmatprep.mubr.f32.mxu0 0.0
      %7375 = vmatmul.mubr.f32.gmra.mrb[0].mxu0 %v7158
      %v7376 = vpop.f32.mrb[0].mxu0
      %v7377 = vadd.f32 0.0, %v7376
      %v7378 = vpop.f32.mrb[0].mxu0
      %7379 = vmatprep.mubr.f32.mxu0 0.0
      %7380 = vmatmul.mubr.f32.gmra.mrb[0].mxu0 %v7161
      %v7381 = vpop.f32.mrb[0].mxu0
      %v7382 = vadd.f32 0.0, %v7381
      %v7383 = vpop.f32.mrb[0].mxu0
      %7384 = vmatprep.mubr.f32.mxu0 0.0
      %7385 = vmatmul.mubr.f32.gmra.mrb[0].mxu0 %v7164
      %v7386 = vpop.f32.mrb[0].mxu0
      %v7387 = vadd.f32 0.0, %v7386
      %v7388 = vpop.f32.mrb[0].mxu0
      %7389 = vmatprep.mubr.f32.mxu0 0.0
      %7390 = vmatmul.mubr.f32.gmra.mrb[0].mxu0 %v7167
      %v7391 = vpop.f32.mrb[0].mxu0
      %v7392 = vadd.f32 0.0, %v7391
      %v7393 = vpop.f32.mrb[0].mxu0
      %7394 = vmatprep.mubr.f32.mxu0 0.0
      %7395 = vmatmul.mubr.f32.gmra.mrb[0].mxu0 %v7170
      %v7396 = vpop.f32.mrb[0].mxu0
      %v7397 = vadd.f32 0.0, %v7396
      %v7398 = vpop.f32.mrb[0].mxu0
      %7399 = vmatprep.mubr.f32.mxu0 0.0
      %7400 = vmatmul.mubr.f32.gmra.mrb[0].mxu0 %v7173
      %v7401 = vpop.f32.mrb[0].mxu0
      %v7402 = vadd.f32 0.0, %v7401
      %v7403 = vpop.f32.mrb[0].mxu0
      %7404 = vmatprep.mubr.f32.mxu0 0.0
      %7405 = vmatmul.mubr.f32.gmra.mrb[0].mxu0 %v7176
      %v7406 = vpop.f32.mrb[0].mxu0
      %v7407 = vadd.f32 0.0, %v7406
      %v7408 = vpop.f32.mrb[0].mxu0
      %7409 = vmatprep.mubr.f32.mxu0 0.0
      %7410 = vmatmul.mubr.f32.gmra.mrb[0].mxu0 %v7179
      %v7411 = vpop.f32.mrb[0].mxu0
      %v7412 = vadd.f32 0.0, %v7411
      %v7413 = vpop.f32.mrb[0].mxu0
      %7414 = vmatprep.mubr.f32.mxu0 0.0
      %7415 = vmatmul.mubr.f32.gmra.mrb[0].mxu0 %v7182
      %v7416 = vpop.f32.mrb[0].mxu0
      %v7417 = vadd.f32 0.0, %v7416
      %v7418 = vpop.f32.mrb[0].mxu0
      %7419 = vmatprep.mubr.f32.mxu0 0.0
      %7420 = vmatmul.mubr.f32.gmra.mrb[0].mxu0 %v7185
      %v7421 = vpop.f32.mrb[0].mxu0
      %v7422 = vadd.f32 0.0, %v7421
      %v7423 = vpop.f32.mrb[0].mxu0
      %7424 = vmatprep.mubr.f32.mxu0 0.0
      %7425 = vmatmul.mubr.f32.gmra.mrb[0].mxu0 %v7188
      %v7426 = vpop.f32.mrb[0].mxu0
      %v7427 = vadd.f32 0.0, %v7426
      %v7428 = vpop.f32.mrb[0].mxu0
      %7429 = vmatprep.mubr.f32.mxu0 0.0
      %7430 = vmatmul.mubr.f32.gmra.mrb[0].mxu0 %v7191
      %v7431 = vpop.f32.mrb[0].mxu0
      %v7432 = vadd.f32 0.0, %v7431
      %v7433 = vpop.f32.mrb[0].mxu0
      %7434 = vmatprep.mubr.f32.mxu0 0.0
      %7435 = vmatmul.mubr.f32.gmra.mrb[0].mxu0 %v7194
      %v7436 = vpop.f32.mrb[0].mxu0
      %v7437 = vadd.f32 0.0, %v7436
      %v7438 = vpop.f32.mrb[0].mxu0
      %7439 = vmatprep.mubr.f32.mxu0 0.0
      %7440 = vmatmul.mubr.f32.gmra.mrb[0].mxu0 %v7197
      %v7441 = vpop.f32.mrb[0].mxu0
      %v7442 = vadd.f32 0.0, %v7441
      %v7443 = vpop.f32.mrb[0].mxu0
      %7444 = vmatprep.mubr.f32.mxu0 0.0
      %7445 = vmatmul.mubr.f32.gmra.mrb[0].mxu0 %v7200
      %v7446 = vpop.f32.mrb[0].mxu0
      %v7447 = vadd.f32 0.0, %v7446
      %v7448 = vpop.f32.mrb[0].mxu0
      %7449 = vdwg.mxu0
      %v7450 = vadd.f32 %v6878, %v7272
      %v7451 = vadd.f32 %v6883, %v7277
      %v7452 = vadd.f32 %v6888, %v7282
      %v7453 = vadd.f32 %v6893, %v7287
      %v7454 = vadd.f32 %v6898, %v7292
      %v7455 = vadd.f32 %v6903, %v7297
      %v7456 = vadd.f32 %v6908, %v7302
      %v7457 = vadd.f32 %v6913, %v7307
      %v7458 = vadd.f32 %v6918, %v7312
      %v7459 = vadd.f32 %v6923, %v7317
      %v7460 = vadd.f32 %v6928, %v7322
      %v7461 = vadd.f32 %v6933, %v7327
      %v7462 = vadd.f32 %v6938, %v7332
      %v7463 = vadd.f32 %v6943, %v7337
      %v7464 = vadd.f32 %v6948, %v7342
      %v7465 = vadd.f32 %v6953, %v7347
      %v7466 = vadd.f32 %v6958, %v7352
      %v7467 = vadd.f32 %v6963, %v7357
      %v7468 = vadd.f32 %v6968, %v7362
      %v7469 = vadd.f32 %v6973, %v7367
      %v7470 = vadd.f32 %v6978, %v7372
      %v7471 = vadd.f32 %v6983, %v7377
      %v7472 = vadd.f32 %v6988, %v7382
      %v7473 = vadd.f32 %v6993, %v7387
      %v7474 = vadd.f32 %v6998, %v7392
      %v7475 = vadd.f32 %v7003, %v7397
      %v7476 = vadd.f32 %v7008, %v7402
      %v7477 = vadd.f32 %v7013, %v7407
      %v7478 = vadd.f32 %v7018, %v7412
      %v7479 = vadd.f32 %v7023, %v7417
      %v7480 = vadd.f32 %v7028, %v7422
      %v7481 = vadd.f32 %v7033, %v7427
      %v7482 = vadd.f32 %v7038, %v7432
      %v7483 = vadd.f32 %v7043, %v7437
      %v7484 = vadd.f32 %v7048, %v7442
      %v7485 = vadd.f32 %v7053, %v7447
      %v7486 = vld [vmem:[#allocation3 + $0x12] sm:$0xff]
      %v7487 = vld [vmem:[#allocation3 + $0x1a] sm:$0xff]
      %v7488 = vld [vmem:[#allocation3 + $0x22] sm:$0xff]
      %v7489 = vld [vmem:[#allocation3 + $0x2a] sm:$0xff]
      %v7490 = vld [vmem:[#allocation3 + $0x32] sm:$0xff]
      %v7491 = vld [vmem:[#allocation3 + $0x3a] sm:$0xff]
      %v7492 = vld [vmem:[#allocation3 + $0x42] sm:$0xff]
      %v7493 = vld [vmem:[#allocation3 + $0x4a] sm:$0xff]
      %v7494 = vld [vmem:[#allocation3 + $0x52] sm:$0xff]
      %v7495 = vld [vmem:[#allocation3 + $0x5a] sm:$0xff]
      %v7496 = vld [vmem:[#allocation3 + $0x62] sm:$0xff]
      %v7497 = vld [vmem:[#allocation3 + $0x6a] sm:$0xff]
      %v7498 = vld [vmem:[#allocation3 + $0x72] sm:$0xff]
      %v7499 = vld [vmem:[#allocation3 + $0x7a] sm:$0xff]
      %v7500 = vld [vmem:[#allocation3 + $0x82] sm:$0xff]
      %v7501 = vld [vmem:[#allocation3 + $0x8a] sm:$0xff]
      %v7502 = vld [vmem:[#allocation3 + $0x92] sm:$0xff]
      %v7503 = vld [vmem:[#allocation3 + $0x9a] sm:$0xff]
      %v7504 = vld [vmem:[#allocation3 + $0xa2] sm:$0xff]
      %v7505 = vld [vmem:[#allocation3 + $0xaa] sm:$0xff]
      %v7506 = vld [vmem:[#allocation3 + $0xb2] sm:$0xff]
      %v7507 = vld [vmem:[#allocation3 + $0xba] sm:$0xff]
      %v7508 = vld [vmem:[#allocation3 + $0xc2] sm:$0xff]
      %v7509 = vld [vmem:[#allocation3 + $0xca] sm:$0xff]
      %v7510 = vld [vmem:[#allocation3 + $0xd2] sm:$0xff]
      %v7511 = vld [vmem:[#allocation3 + $0xda] sm:$0xff]
      %v7512 = vld [vmem:[#allocation3 + $0xe2] sm:$0xff]
      %v7513 = vld [vmem:[#allocation3 + $0xea] sm:$0xff]
      %v7514 = vld [vmem:[#allocation3 + $0xf2] sm:$0xff]
      %v7515 = vld [vmem:[#allocation3 + $0xfa] sm:$0xff]
      %v7516 = vld [vmem:[#allocation3 + $0x102] sm:$0xff]
      %v7517 = vld [vmem:[#allocation3 + $0x10a] sm:$0xff]
      %v7518 = vld [vmem:[#allocation3 + $0x112] sm:$0xff]
      %v7519 = vld [vmem:[#allocation3 + $0x11a] sm:$0xff]
      %v7520 = vld [vmem:[#allocation3 + $0x122] sm:$0xff]
      %v7521 = vld [vmem:[#allocation3 + $0x12a] sm:$0xff]
      %s7522 = scalar_lea.vmem %s5, 12
      %v7523 = vld [vmem:[%s7522] sm:$0xf]
      %v7525 = vsel %vm498, %v7486, 0
      %v7528 = vsel %vm498, %v7487, 0
      %v7531 = vsel %vm498, %v7488, 0
      %v7534 = vsel %vm498, %v7489, 0
      %v7537 = vsel %vm498, %v7490, 0
      %v7540 = vsel %vm498, %v7491, 0
      %v7543 = vsel %vm498, %v7492, 0
      %v7546 = vsel %vm498, %v7493, 0
      %v7549 = vsel %vm498, %v7494, 0
      %v7552 = vsel %vm498, %v7495, 0
      %v7555 = vsel %vm498, %v7496, 0
      %v7558 = vsel %vm498, %v7497, 0
      %v7561 = vsel %vm498, %v7498, 0
      %v7564 = vsel %vm498, %v7499, 0
      %v7567 = vsel %vm498, %v7500, 0
      %v7570 = vsel %vm498, %v7501, 0
      %v7573 = vsel %vm498, %v7502, 0
      %v7576 = vsel %vm498, %v7503, 0
      %v7579 = vsel %vm498, %v7504, 0
      %v7582 = vsel %vm498, %v7505, 0
      %v7585 = vsel %vm498, %v7506, 0
      %v7588 = vsel %vm498, %v7507, 0
      %v7591 = vsel %vm498, %v7508, 0
      %v7594 = vsel %vm498, %v7509, 0
      %v7597 = vsel %vm498, %v7510, 0
      %v7600 = vsel %vm498, %v7511, 0
      %v7603 = vsel %vm498, %v7512, 0
      %v7606 = vsel %vm498, %v7513, 0
      %v7609 = vsel %vm498, %v7514, 0
      %v7612 = vsel %vm498, %v7515, 0
      %v7615 = vsel %vm498, %v7516, 0
      %v7618 = vsel %vm498, %v7517, 0
      %v7621 = vsel %vm498, %v7518, 0
      %v7624 = vsel %vm498, %v7519, 0
      %v7627 = vsel %vm498, %v7520, 0
      %v7630 = vsel %vm498, %v7521, 0
      %v7633 = vsel %vm607, %v7523, 0
      %7635 = vmatprep.subr.mxu0 0.0
      %7636 = vmatpush1.msra.mxu0 %v7633
      %7637 = vmatprep.subr.mxu0 0.0
      %7638 = vmatpush1.msra.mxu0 0.0
      %7639 = vmatprep.subr.mxu0 0.0
      %7640 = vmatpush1.msra.mxu0 0.0
      %7641 = vmatprep.subr.mxu0 0.0
      %7642 = vmatpush1.msra.mxu0 0.0
      %7643 = vmatprep.subr.mxu0 0.0
      %7644 = vmatpush1.msra.mxu0 0.0
      %7645 = vmatprep.subr.mxu0 0.0
      %7646 = vmatpush1.msra.mxu0 0.0
      %7647 = vmatprep.subr.mxu0 0.0
      %7648 = vmatpush1.msra.mxu0 0.0
      %7649 = vmatprep.subr.mxu0 0.0
      %7650 = vmatpush1.msra.mxu0 0.0
      %7651 = vmatprep.subr.mxu0 0.0
      %7652 = vmatpush1.msra.mxu0 0.0
      %7653 = vmatprep.subr.mxu0 0.0
      %7654 = vmatpush1.msra.mxu0 0.0
      %7655 = vmatprep.subr.mxu0 0.0
      %7656 = vmatpush1.msra.mxu0 0.0
      %7657 = vmatprep.subr.mxu0 0.0
      %7658 = vmatpush1.msra.mxu0 0.0
      %7659 = vmatprep.subr.mxu0 0.0
      %7660 = vmatpush1.msra.mxu0 0.0
      %7661 = vmatprep.subr.mxu0 0.0
      %7662 = vmatpush1.msra.mxu0 0.0
      %7663 = vmatprep.subr.mxu0 0.0
      %7664 = vmatpush1.msra.mxu0 0.0
      %7665 = vmatprep.subr.mxu0 0.0
      %7666 = vmatpush1.msra.mxu0 0.0
      %7667 = vmatprep.subr.mxu0 0.0
      %7668 = vmatpush1.msra.mxu0 0.0
      %7669 = vmatprep.subr.mxu0 0.0
      %7670 = vmatpush1.msra.mxu0 0.0
      %7671 = vmatprep.subr.mxu0 0.0
      %7672 = vmatpush1.msra.mxu0 0.0
      %7673 = vmatprep.subr.mxu0 0.0
      %7674 = vmatpush1.msra.mxu0 0.0
      %7675 = vmatprep.subr.mxu0 0.0
      %7676 = vmatpush1.msra.mxu0 0.0
      %7677 = vmatprep.subr.mxu0 0.0
      %7678 = vmatpush1.msra.mxu0 0.0
      %7679 = vmatprep.subr.mxu0 0.0
      %7680 = vmatpush1.msra.mxu0 0.0
      %7681 = vmatprep.subr.mxu0 0.0
      %7682 = vmatpush1.msra.mxu0 0.0
      %7683 = vmatprep.subr.mxu0 0.0
      %7684 = vmatpush1.msra.mxu0 0.0
      %7685 = vmatprep.subr.mxu0 0.0
      %7686 = vmatpush1.msra.mxu0 0.0
      %7687 = vmatprep.subr.mxu0 0.0
      %7688 = vmatpush1.msra.mxu0 0.0
      %7689 = vmatprep.subr.mxu0 0.0
      %7690 = vmatpush1.msra.mxu0 0.0
      %7691 = vmatprep.subr.mxu0 0.0
      %7692 = vmatpush1.msra.mxu0 0.0
      %7693 = vmatprep.subr.mxu0 0.0
      %7694 = vmatpush1.msra.mxu0 0.0
      %7695 = vmatprep.subr.mxu0 0.0
      %7696 = vmatpush1.msra.mxu0 0.0
      %7697 = vmatprep.subr.mxu0 0.0
      %7698 = vmatpush1.msra.mxu0 0.0
      %7699 = vmatprep.mubr.f32.mxu0 0.0
      %7700 = vmatmul.mubr.f32.gmra.mrb[0].mxu0 %v7525
      %v7701 = vpop.f32.mrb[0].mxu0
      %v7702 = vadd.f32 0.0, %v7701
      %v7703 = vpop.f32.mrb[0].mxu0
      %7704 = vmatprep.mubr.f32.mxu0 0.0
      %7705 = vmatmul.mubr.f32.gmra.mrb[0].mxu0 %v7528
      %v7706 = vpop.f32.mrb[0].mxu0
      %v7707 = vadd.f32 0.0, %v7706
      %v7708 = vpop.f32.mrb[0].mxu0
      %7709 = vmatprep.mubr.f32.mxu0 0.0
      %7710 = vmatmul.mubr.f32.gmra.mrb[0].mxu0 %v7531
      %v7711 = vpop.f32.mrb[0].mxu0
      %v7712 = vadd.f32 0.0, %v7711
      %v7713 = vpop.f32.mrb[0].mxu0
      %7714 = vmatprep.mubr.f32.mxu0 0.0
      %7715 = vmatmul.mubr.f32.gmra.mrb[0].mxu0 %v7534
      %v7716 = vpop.f32.mrb[0].mxu0
      %v7717 = vadd.f32 0.0, %v7716
      %v7718 = vpop.f32.mrb[0].mxu0
      %7719 = vmatprep.mubr.f32.mxu0 0.0
      %7720 = vmatmul.mubr.f32.gmra.mrb[0].mxu0 %v7537
      %v7721 = vpop.f32.mrb[0].mxu0
      %v7722 = vadd.f32 0.0, %v7721
      %v7723 = vpop.f32.mrb[0].mxu0
      %7724 = vmatprep.mubr.f32.mxu0 0.0
      %7725 = vmatmul.mubr.f32.gmra.mrb[0].mxu0 %v7540
      %v7726 = vpop.f32.mrb[0].mxu0
      %v7727 = vadd.f32 0.0, %v7726
      %v7728 = vpop.f32.mrb[0].mxu0
      %7729 = vmatprep.mubr.f32.mxu0 0.0
      %7730 = vmatmul.mubr.f32.gmra.mrb[0].mxu0 %v7543
      %v7731 = vpop.f32.mrb[0].mxu0
      %v7732 = vadd.f32 0.0, %v7731
      %v7733 = vpop.f32.mrb[0].mxu0
      %7734 = vmatprep.mubr.f32.mxu0 0.0
      %7735 = vmatmul.mubr.f32.gmra.mrb[0].mxu0 %v7546
      %v7736 = vpop.f32.mrb[0].mxu0
      %v7737 = vadd.f32 0.0, %v7736
      %v7738 = vpop.f32.mrb[0].mxu0
      %7739 = vmatprep.mubr.f32.mxu0 0.0
      %7740 = vmatmul.mubr.f32.gmra.mrb[0].mxu0 %v7549
      %v7741 = vpop.f32.mrb[0].mxu0
      %v7742 = vadd.f32 0.0, %v7741
      %v7743 = vpop.f32.mrb[0].mxu0
      %7744 = vmatprep.mubr.f32.mxu0 0.0
      %7745 = vmatmul.mubr.f32.gmra.mrb[0].mxu0 %v7552
      %v7746 = vpop.f32.mrb[0].mxu0
      %v7747 = vadd.f32 0.0, %v7746
      %v7748 = vpop.f32.mrb[0].mxu0
      %7749 = vmatprep.mubr.f32.mxu0 0.0
      %7750 = vmatmul.mubr.f32.gmra.mrb[0].mxu0 %v7555
      %v7751 = vpop.f32.mrb[0].mxu0
      %v7752 = vadd.f32 0.0, %v7751
      %v7753 = vpop.f32.mrb[0].mxu0
      %7754 = vmatprep.mubr.f32.mxu0 0.0
      %7755 = vmatmul.mubr.f32.gmra.mrb[0].mxu0 %v7558
      %v7756 = vpop.f32.mrb[0].mxu0
      %v7757 = vadd.f32 0.0, %v7756
      %v7758 = vpop.f32.mrb[0].mxu0
      %7759 = vmatprep.mubr.f32.mxu0 0.0
      %7760 = vmatmul.mubr.f32.gmra.mrb[0].mxu0 %v7561
      %v7761 = vpop.f32.mrb[0].mxu0
      %v7762 = vadd.f32 0.0, %v7761
      %v7763 = vpop.f32.mrb[0].mxu0
      %7764 = vmatprep.mubr.f32.mxu0 0.0
      %7765 = vmatmul.mubr.f32.gmra.mrb[0].mxu0 %v7564
      %v7766 = vpop.f32.mrb[0].mxu0
      %v7767 = vadd.f32 0.0, %v7766
      %v7768 = vpop.f32.mrb[0].mxu0
      %7769 = vmatprep.mubr.f32.mxu0 0.0
      %7770 = vmatmul.mubr.f32.gmra.mrb[0].mxu0 %v7567
      %v7771 = vpop.f32.mrb[0].mxu0
      %v7772 = vadd.f32 0.0, %v7771
      %v7773 = vpop.f32.mrb[0].mxu0
      %7774 = vmatprep.mubr.f32.mxu0 0.0
      %7775 = vmatmul.mubr.f32.gmra.mrb[0].mxu0 %v7570
      %v7776 = vpop.f32.mrb[0].mxu0
      %v7777 = vadd.f32 0.0, %v7776
      %v7778 = vpop.f32.mrb[0].mxu0
      %7779 = vmatprep.mubr.f32.mxu0 0.0
      %7780 = vmatmul.mubr.f32.gmra.mrb[0].mxu0 %v7573
      %v7781 = vpop.f32.mrb[0].mxu0
      %v7782 = vadd.f32 0.0, %v7781
      %v7783 = vpop.f32.mrb[0].mxu0
      %7784 = vmatprep.mubr.f32.mxu0 0.0
      %7785 = vmatmul.mubr.f32.gmra.mrb[0].mxu0 %v7576
      %v7786 = vpop.f32.mrb[0].mxu0
      %v7787 = vadd.f32 0.0, %v7786
      %v7788 = vpop.f32.mrb[0].mxu0
      %7789 = vmatprep.mubr.f32.mxu0 0.0
      %7790 = vmatmul.mubr.f32.gmra.mrb[0].mxu0 %v7579
      %v7791 = vpop.f32.mrb[0].mxu0
      %v7792 = vadd.f32 0.0, %v7791
      %v7793 = vpop.f32.mrb[0].mxu0
      %7794 = vmatprep.mubr.f32.mxu0 0.0
      %7795 = vmatmul.mubr.f32.gmra.mrb[0].mxu0 %v7582
      %v7796 = vpop.f32.mrb[0].mxu0
      %v7797 = vadd.f32 0.0, %v7796
      %v7798 = vpop.f32.mrb[0].mxu0
      %7799 = vmatprep.mubr.f32.mxu0 0.0
      %7800 = vmatmul.mubr.f32.gmra.mrb[0].mxu0 %v7585
      %v7801 = vpop.f32.mrb[0].mxu0
      %v7802 = vadd.f32 0.0, %v7801
      %v7803 = vpop.f32.mrb[0].mxu0
      %7804 = vmatprep.mubr.f32.mxu0 0.0
      %7805 = vmatmul.mubr.f32.gmra.mrb[0].mxu0 %v7588
      %v7806 = vpop.f32.mrb[0].mxu0
      %v7807 = vadd.f32 0.0, %v7806
      %v7808 = vpop.f32.mrb[0].mxu0
      %7809 = vmatprep.mubr.f32.mxu0 0.0
      %7810 = vmatmul.mubr.f32.gmra.mrb[0].mxu0 %v7591
      %v7811 = vpop.f32.mrb[0].mxu0
      %v7812 = vadd.f32 0.0, %v7811
      %v7813 = vpop.f32.mrb[0].mxu0
      %7814 = vmatprep.mubr.f32.mxu0 0.0
      %7815 = vmatmul.mubr.f32.gmra.mrb[0].mxu0 %v7594
      %v7816 = vpop.f32.mrb[0].mxu0
      %v7817 = vadd.f32 0.0, %v7816
      %v7818 = vpop.f32.mrb[0].mxu0
      %7819 = vmatprep.mubr.f32.mxu0 0.0
      %7820 = vmatmul.mubr.f32.gmra.mrb[0].mxu0 %v7597
      %v7821 = vpop.f32.mrb[0].mxu0
      %v7822 = vadd.f32 0.0, %v7821
      %v7823 = vpop.f32.mrb[0].mxu0
      %7824 = vmatprep.mubr.f32.mxu0 0.0
      %7825 = vmatmul.mubr.f32.gmra.mrb[0].mxu0 %v7600
      %v7826 = vpop.f32.mrb[0].mxu0
      %v7827 = vadd.f32 0.0, %v7826
      %v7828 = vpop.f32.mrb[0].mxu0
      %7829 = vmatprep.mubr.f32.mxu0 0.0
      %7830 = vmatmul.mubr.f32.gmra.mrb[0].mxu0 %v7603
      %v7831 = vpop.f32.mrb[0].mxu0
      %v7832 = vadd.f32 0.0, %v7831
      %v7833 = vpop.f32.mrb[0].mxu0
      %7834 = vmatprep.mubr.f32.mxu0 0.0
      %7835 = vmatmul.mubr.f32.gmra.mrb[0].mxu0 %v7606
      %v7836 = vpop.f32.mrb[0].mxu0
      %v7837 = vadd.f32 0.0, %v7836
      %v7838 = vpop.f32.mrb[0].mxu0
      %7839 = vmatprep.mubr.f32.mxu0 0.0
      %7840 = vmatmul.mubr.f32.gmra.mrb[0].mxu0 %v7609
      %v7841 = vpop.f32.mrb[0].mxu0
      %v7842 = vadd.f32 0.0, %v7841
      %v7843 = vpop.f32.mrb[0].mxu0
      %7844 = vmatprep.mubr.f32.mxu0 0.0
      %7845 = vmatmul.mubr.f32.gmra.mrb[0].mxu0 %v7612
      %v7846 = vpop.f32.mrb[0].mxu0
      %v7847 = vadd.f32 0.0, %v7846
      %v7848 = vpop.f32.mrb[0].mxu0
      %7849 = vmatprep.mubr.f32.mxu0 0.0
      %7850 = vmatmul.mubr.f32.gmra.mrb[0].mxu0 %v7615
      %v7851 = vpop.f32.mrb[0].mxu0
      %v7852 = vadd.f32 0.0, %v7851
      %v7853 = vpop.f32.mrb[0].mxu0
      %7854 = vmatprep.mubr.f32.mxu0 0.0
      %7855 = vmatmul.mubr.f32.gmra.mrb[0].mxu0 %v7618
      %v7856 = vpop.f32.mrb[0].mxu0
      %v7857 = vadd.f32 0.0, %v7856
      %v7858 = vpop.f32.mrb[0].mxu0
      %7859 = vmatprep.mubr.f32.mxu0 0.0
      %7860 = vmatmul.mubr.f32.gmra.mrb[0].mxu0 %v7621
      %v7861 = vpop.f32.mrb[0].mxu0
      %v7862 = vadd.f32 0.0, %v7861
      %v7863 = vpop.f32.mrb[0].mxu0
      %7864 = vmatprep.mubr.f32.mxu0 0.0
      %7865 = vmatmul.mubr.f32.gmra.mrb[0].mxu0 %v7624
      %v7866 = vpop.f32.mrb[0].mxu0
      %v7867 = vadd.f32 0.0, %v7866
      %v7868 = vpop.f32.mrb[0].mxu0
      %7869 = vmatprep.mubr.f32.mxu0 0.0
      %7870 = vmatmul.mubr.f32.gmra.mrb[0].mxu0 %v7627
      %v7871 = vpop.f32.mrb[0].mxu0
      %v7872 = vadd.f32 0.0, %v7871
      %v7873 = vpop.f32.mrb[0].mxu0
      %7874 = vmatprep.mubr.f32.mxu0 0.0
      %7875 = vmatmul.mubr.f32.gmra.mrb[0].mxu0 %v7630
      %v7876 = vpop.f32.mrb[0].mxu0
      %v7877 = vadd.f32 0.0, %v7876
      %v7878 = vpop.f32.mrb[0].mxu0
      %7879 = vdwg.mxu0
      %v7880 = vadd.f32 %v7450, %v7702
      %v7881 = vadd.f32 %v7451, %v7707
      %v7882 = vadd.f32 %v7452, %v7712
      %v7883 = vadd.f32 %v7453, %v7717
      %v7884 = vadd.f32 %v7454, %v7722
      %v7885 = vadd.f32 %v7455, %v7727
      %v7886 = vadd.f32 %v7456, %v7732
      %v7887 = vadd.f32 %v7457, %v7737
      %v7888 = vadd.f32 %v7458, %v7742
      %v7889 = vadd.f32 %v7459, %v7747
      %v7890 = vadd.f32 %v7460, %v7752
      %v7891 = vadd.f32 %v7461, %v7757
      %v7892 = vadd.f32 %v7462, %v7762
      %v7893 = vadd.f32 %v7463, %v7767
      %v7894 = vadd.f32 %v7464, %v7772
      %v7895 = vadd.f32 %v7465, %v7777
      %v7896 = vadd.f32 %v7466, %v7782
      %v7897 = vadd.f32 %v7467, %v7787
      %v7898 = vadd.f32 %v7468, %v7792
      %v7899 = vadd.f32 %v7469, %v7797
      %v7900 = vadd.f32 %v7470, %v7802
      %v7901 = vadd.f32 %v7471, %v7807
      %v7902 = vadd.f32 %v7472, %v7812
      %v7903 = vadd.f32 %v7473, %v7817
      %v7904 = vadd.f32 %v7474, %v7822
      %v7905 = vadd.f32 %v7475, %v7827
      %v7906 = vadd.f32 %v7476, %v7832
      %v7907 = vadd.f32 %v7477, %v7837
      %v7908 = vadd.f32 %v7478, %v7842
      %v7909 = vadd.f32 %v7479, %v7847
      %v7910 = vadd.f32 %v7480, %v7852
      %v7911 = vadd.f32 %v7481, %v7857
      %v7912 = vadd.f32 %v7482, %v7862
      %v7913 = vadd.f32 %v7483, %v7867
      %v7914 = vadd.f32 %v7484, %v7872
      %v7915 = vadd.f32 %v7485, %v7877
      %v7916 = vld [vmem:[#allocation3 + $0x13] sm:$0xff]
      %v7917 = vld [vmem:[#allocation3 + $0x1b] sm:$0xff]
      %v7918 = vld [vmem:[#allocation3 + $0x23] sm:$0xff]
      %v7919 = vld [vmem:[#allocation3 + $0x2b] sm:$0xff]
      %v7920 = vld [vmem:[#allocation3 + $0x33] sm:$0xff]
      %v7921 = vld [vmem:[#allocation3 + $0x3b] sm:$0xff]
      %v7922 = vld [vmem:[#allocation3 + $0x43] sm:$0xff]
      %v7923 = vld [vmem:[#allocation3 + $0x4b] sm:$0xff]
      %v7924 = vld [vmem:[#allocation3 + $0x53] sm:$0xff]
      %v7925 = vld [vmem:[#allocation3 + $0x5b] sm:$0xff]
      %v7926 = vld [vmem:[#allocation3 + $0x63] sm:$0xff]
      %v7927 = vld [vmem:[#allocation3 + $0x6b] sm:$0xff]
      %v7928 = vld [vmem:[#allocation3 + $0x73] sm:$0xff]
      %v7929 = vld [vmem:[#allocation3 + $0x7b] sm:$0xff]
      %v7930 = vld [vmem:[#allocation3 + $0x83] sm:$0xff]
      %v7931 = vld [vmem:[#allocation3 + $0x8b] sm:$0xff]
      %v7932 = vld [vmem:[#allocation3 + $0x93] sm:$0xff]
      %v7933 = vld [vmem:[#allocation3 + $0x9b] sm:$0xff]
      %v7934 = vld [vmem:[#allocation3 + $0xa3] sm:$0xff]
      %v7935 = vld [vmem:[#allocation3 + $0xab] sm:$0xff]
      %v7936 = vld [vmem:[#allocation3 + $0xb3] sm:$0xff]
      %v7937 = vld [vmem:[#allocation3 + $0xbb] sm:$0xff]
      %v7938 = vld [vmem:[#allocation3 + $0xc3] sm:$0xff]
      %v7939 = vld [vmem:[#allocation3 + $0xcb] sm:$0xff]
      %v7940 = vld [vmem:[#allocation3 + $0xd3] sm:$0xff]
      %v7941 = vld [vmem:[#allocation3 + $0xdb] sm:$0xff]
      %v7942 = vld [vmem:[#allocation3 + $0xe3] sm:$0xff]
      %v7943 = vld [vmem:[#allocation3 + $0xeb] sm:$0xff]
      %v7944 = vld [vmem:[#allocation3 + $0xf3] sm:$0xff]
      %v7945 = vld [vmem:[#allocation3 + $0xfb] sm:$0xff]
      %v7946 = vld [vmem:[#allocation3 + $0x103] sm:$0xff]
      %v7947 = vld [vmem:[#allocation3 + $0x10b] sm:$0xff]
      %v7948 = vld [vmem:[#allocation3 + $0x113] sm:$0xff]
      %v7949 = vld [vmem:[#allocation3 + $0x11b] sm:$0xff]
      %v7950 = vld [vmem:[#allocation3 + $0x123] sm:$0xff]
      %v7951 = vld [vmem:[#allocation3 + $0x12b] sm:$0xff]
      %s7952 = scalar_lea.vmem %s5, 16
      %v7953 = vld [vmem:[%s7952] sm:$0xf]
      %v7955 = vsel %vm498, %v7916, 0
      %v7958 = vsel %vm498, %v7917, 0
      %v7961 = vsel %vm498, %v7918, 0
      %v7964 = vsel %vm498, %v7919, 0
      %v7967 = vsel %vm498, %v7920, 0
      %v7970 = vsel %vm498, %v7921, 0
      %v7973 = vsel %vm498, %v7922, 0
      %v7976 = vsel %vm498, %v7923, 0
      %v7979 = vsel %vm498, %v7924, 0
      %v7982 = vsel %vm498, %v7925, 0
      %v7985 = vsel %vm498, %v7926, 0
      %v7988 = vsel %vm498, %v7927, 0
      %v7991 = vsel %vm498, %v7928, 0
      %v7994 = vsel %vm498, %v7929, 0
      %v7997 = vsel %vm498, %v7930, 0
      %v8000 = vsel %vm498, %v7931, 0
      %v8003 = vsel %vm498, %v7932, 0
      %v8006 = vsel %vm498, %v7933, 0
      %v8009 = vsel %vm498, %v7934, 0
      %v8012 = vsel %vm498, %v7935, 0
      %v8015 = vsel %vm498, %v7936, 0
      %v8018 = vsel %vm498, %v7937, 0
      %v8021 = vsel %vm498, %v7938, 0
      %v8024 = vsel %vm498, %v7939, 0
      %v8027 = vsel %vm498, %v7940, 0
      %v8030 = vsel %vm498, %v7941, 0
      %v8033 = vsel %vm498, %v7942, 0
      %v8036 = vsel %vm498, %v7943, 0
      %v8039 = vsel %vm498, %v7944, 0
      %v8042 = vsel %vm498, %v7945, 0
      %v8045 = vsel %vm498, %v7946, 0
      %v8048 = vsel %vm498, %v7947, 0
      %v8051 = vsel %vm498, %v7948, 0
      %v8054 = vsel %vm498, %v7949, 0
      %v8057 = vsel %vm498, %v7950, 0
      %v8060 = vsel %vm498, %v7951, 0
      %v8063 = vsel %vm607, %v7953, 0
      %8065 = vmatprep.subr.mxu0 0.0
      %8066 = vmatpush1.msra.mxu0 %v8063
      %8067 = vmatprep.subr.mxu0 0.0
      %8068 = vmatpush1.msra.mxu0 0.0
      %8069 = vmatprep.subr.mxu0 0.0
      %8070 = vmatpush1.msra.mxu0 0.0
      %8071 = vmatprep.subr.mxu0 0.0
      %8072 = vmatpush1.msra.mxu0 0.0
      %8073 = vmatprep.subr.mxu0 0.0
      %8074 = vmatpush1.msra.mxu0 0.0
      %8075 = vmatprep.subr.mxu0 0.0
      %8076 = vmatpush1.msra.mxu0 0.0
      %8077 = vmatprep.subr.mxu0 0.0
      %8078 = vmatpush1.msra.mxu0 0.0
      %8079 = vmatprep.subr.mxu0 0.0
      %8080 = vmatpush1.msra.mxu0 0.0
      %8081 = vmatprep.subr.mxu0 0.0
      %8082 = vmatpush1.msra.mxu0 0.0
      %8083 = vmatprep.subr.mxu0 0.0
      %8084 = vmatpush1.msra.mxu0 0.0
      %8085 = vmatprep.subr.mxu0 0.0
      %8086 = vmatpush1.msra.mxu0 0.0
      %8087 = vmatprep.subr.mxu0 0.0
      %8088 = vmatpush1.msra.mxu0 0.0
      %8089 = vmatprep.subr.mxu0 0.0
      %8090 = vmatpush1.msra.mxu0 0.0
      %8091 = vmatprep.subr.mxu0 0.0
      %8092 = vmatpush1.msra.mxu0 0.0
      %8093 = vmatprep.subr.mxu0 0.0
      %8094 = vmatpush1.msra.mxu0 0.0
      %8095 = vmatprep.subr.mxu0 0.0
      %8096 = vmatpush1.msra.mxu0 0.0
      %8097 = vmatprep.subr.mxu0 0.0
      %8098 = vmatpush1.msra.mxu0 0.0
      %8099 = vmatprep.subr.mxu0 0.0
      %8100 = vmatpush1.msra.mxu0 0.0
      %8101 = vmatprep.subr.mxu0 0.0
      %8102 = vmatpush1.msra.mxu0 0.0
      %8103 = vmatprep.subr.mxu0 0.0
      %8104 = vmatpush1.msra.mxu0 0.0
      %8105 = vmatprep.subr.mxu0 0.0
      %8106 = vmatpush1.msra.mxu0 0.0
      %8107 = vmatprep.subr.mxu0 0.0
      %8108 = vmatpush1.msra.mxu0 0.0
      %8109 = vmatprep.subr.mxu0 0.0
      %8110 = vmatpush1.msra.mxu0 0.0
      %8111 = vmatprep.subr.mxu0 0.0
      %8112 = vmatpush1.msra.mxu0 0.0
      %8113 = vmatprep.subr.mxu0 0.0
      %8114 = vmatpush1.msra.mxu0 0.0
      %8115 = vmatprep.subr.mxu0 0.0
      %8116 = vmatpush1.msra.mxu0 0.0
      %8117 = vmatprep.subr.mxu0 0.0
      %8118 = vmatpush1.msra.mxu0 0.0
      %8119 = vmatprep.subr.mxu0 0.0
      %8120 = vmatpush1.msra.mxu0 0.0
      %8121 = vmatprep.subr.mxu0 0.0
      %8122 = vmatpush1.msra.mxu0 0.0
      %8123 = vmatprep.subr.mxu0 0.0
      %8124 = vmatpush1.msra.mxu0 0.0
      %8125 = vmatprep.subr.mxu0 0.0
      %8126 = vmatpush1.msra.mxu0 0.0
      %8127 = vmatprep.subr.mxu0 0.0
      %8128 = vmatpush1.msra.mxu0 0.0
      %8129 = vmatprep.mubr.f32.mxu0 0.0
      %8130 = vmatmul.mubr.f32.gmra.mrb[0].mxu0 %v7955
      %v8131 = vpop.f32.mrb[0].mxu0
      %v8132 = vadd.f32 0.0, %v8131
      %v8133 = vpop.f32.mrb[0].mxu0
      %8134 = vmatprep.mubr.f32.mxu0 0.0
      %8135 = vmatmul.mubr.f32.gmra.mrb[0].mxu0 %v7958
      %v8136 = vpop.f32.mrb[0].mxu0
      %v8137 = vadd.f32 0.0, %v8136
      %v8138 = vpop.f32.mrb[0].mxu0
      %8139 = vmatprep.mubr.f32.mxu0 0.0
      %8140 = vmatmul.mubr.f32.gmra.mrb[0].mxu0 %v7961
      %v8141 = vpop.f32.mrb[0].mxu0
      %v8142 = vadd.f32 0.0, %v8141
      %v8143 = vpop.f32.mrb[0].mxu0
      %8144 = vmatprep.mubr.f32.mxu0 0.0
      %8145 = vmatmul.mubr.f32.gmra.mrb[0].mxu0 %v7964
      %v8146 = vpop.f32.mrb[0].mxu0
      %v8147 = vadd.f32 0.0, %v8146
      %v8148 = vpop.f32.mrb[0].mxu0
      %8149 = vmatprep.mubr.f32.mxu0 0.0
      %8150 = vmatmul.mubr.f32.gmra.mrb[0].mxu0 %v7967
      %v8151 = vpop.f32.mrb[0].mxu0
      %v8152 = vadd.f32 0.0, %v8151
      %v8153 = vpop.f32.mrb[0].mxu0
      %8154 = vmatprep.mubr.f32.mxu0 0.0
      %8155 = vmatmul.mubr.f32.gmra.mrb[0].mxu0 %v7970
      %v8156 = vpop.f32.mrb[0].mxu0
      %v8157 = vadd.f32 0.0, %v8156
      %v8158 = vpop.f32.mrb[0].mxu0
      %8159 = vmatprep.mubr.f32.mxu0 0.0
      %8160 = vmatmul.mubr.f32.gmra.mrb[0].mxu0 %v7973
      %v8161 = vpop.f32.mrb[0].mxu0
      %v8162 = vadd.f32 0.0, %v8161
      %v8163 = vpop.f32.mrb[0].mxu0
      %8164 = vmatprep.mubr.f32.mxu0 0.0
      %8165 = vmatmul.mubr.f32.gmra.mrb[0].mxu0 %v7976
      %v8166 = vpop.f32.mrb[0].mxu0
      %v8167 = vadd.f32 0.0, %v8166
      %v8168 = vpop.f32.mrb[0].mxu0
      %8169 = vmatprep.mubr.f32.mxu0 0.0
      %8170 = vmatmul.mubr.f32.gmra.mrb[0].mxu0 %v7979
      %v8171 = vpop.f32.mrb[0].mxu0
      %v8172 = vadd.f32 0.0, %v8171
      %v8173 = vpop.f32.mrb[0].mxu0
      %8174 = vmatprep.mubr.f32.mxu0 0.0
      %8175 = vmatmul.mubr.f32.gmra.mrb[0].mxu0 %v7982
      %v8176 = vpop.f32.mrb[0].mxu0
      %v8177 = vadd.f32 0.0, %v8176
      %v8178 = vpop.f32.mrb[0].mxu0
      %8179 = vmatprep.mubr.f32.mxu0 0.0
      %8180 = vmatmul.mubr.f32.gmra.mrb[0].mxu0 %v7985
      %v8181 = vpop.f32.mrb[0].mxu0
      %v8182 = vadd.f32 0.0, %v8181
      %v8183 = vpop.f32.mrb[0].mxu0
      %8184 = vmatprep.mubr.f32.mxu0 0.0
      %8185 = vmatmul.mubr.f32.gmra.mrb[0].mxu0 %v7988
      %v8186 = vpop.f32.mrb[0].mxu0
      %v8187 = vadd.f32 0.0, %v8186
      %v8188 = vpop.f32.mrb[0].mxu0
      %8189 = vmatprep.mubr.f32.mxu0 0.0
      %8190 = vmatmul.mubr.f32.gmra.mrb[0].mxu0 %v7991
      %v8191 = vpop.f32.mrb[0].mxu0
      %v8192 = vadd.f32 0.0, %v8191
      %v8193 = vpop.f32.mrb[0].mxu0
      %8194 = vmatprep.mubr.f32.mxu0 0.0
      %8195 = vmatmul.mubr.f32.gmra.mrb[0].mxu0 %v7994
      %v8196 = vpop.f32.mrb[0].mxu0
      %v8197 = vadd.f32 0.0, %v8196
      %v8198 = vpop.f32.mrb[0].mxu0
      %8199 = vmatprep.mubr.f32.mxu0 0.0
      %8200 = vmatmul.mubr.f32.gmra.mrb[0].mxu0 %v7997
      %v8201 = vpop.f32.mrb[0].mxu0
      %v8202 = vadd.f32 0.0, %v8201
      %v8203 = vpop.f32.mrb[0].mxu0
      %8204 = vmatprep.mubr.f32.mxu0 0.0
      %8205 = vmatmul.mubr.f32.gmra.mrb[0].mxu0 %v8000
      %v8206 = vpop.f32.mrb[0].mxu0
      %v8207 = vadd.f32 0.0, %v8206
      %v8208 = vpop.f32.mrb[0].mxu0
      %8209 = vmatprep.mubr.f32.mxu0 0.0
      %8210 = vmatmul.mubr.f32.gmra.mrb[0].mxu0 %v8003
      %v8211 = vpop.f32.mrb[0].mxu0
      %v8212 = vadd.f32 0.0, %v8211
      %v8213 = vpop.f32.mrb[0].mxu0
      %8214 = vmatprep.mubr.f32.mxu0 0.0
      %8215 = vmatmul.mubr.f32.gmra.mrb[0].mxu0 %v8006
      %v8216 = vpop.f32.mrb[0].mxu0
      %v8217 = vadd.f32 0.0, %v8216
      %v8218 = vpop.f32.mrb[0].mxu0
      %8219 = vmatprep.mubr.f32.mxu0 0.0
      %8220 = vmatmul.mubr.f32.gmra.mrb[0].mxu0 %v8009
      %v8221 = vpop.f32.mrb[0].mxu0
      %v8222 = vadd.f32 0.0, %v8221
      %v8223 = vpop.f32.mrb[0].mxu0
      %8224 = vmatprep.mubr.f32.mxu0 0.0
      %8225 = vmatmul.mubr.f32.gmra.mrb[0].mxu0 %v8012
      %v8226 = vpop.f32.mrb[0].mxu0
      %v8227 = vadd.f32 0.0, %v8226
      %v8228 = vpop.f32.mrb[0].mxu0
      %8229 = vmatprep.mubr.f32.mxu0 0.0
      %8230 = vmatmul.mubr.f32.gmra.mrb[0].mxu0 %v8015
      %v8231 = vpop.f32.mrb[0].mxu0
      %v8232 = vadd.f32 0.0, %v8231
      %v8233 = vpop.f32.mrb[0].mxu0
      %8234 = vmatprep.mubr.f32.mxu0 0.0
      %8235 = vmatmul.mubr.f32.gmra.mrb[0].mxu0 %v8018
      %v8236 = vpop.f32.mrb[0].mxu0
      %v8237 = vadd.f32 0.0, %v8236
      %v8238 = vpop.f32.mrb[0].mxu0
      %8239 = vmatprep.mubr.f32.mxu0 0.0
      %8240 = vmatmul.mubr.f32.gmra.mrb[0].mxu0 %v8021
      %v8241 = vpop.f32.mrb[0].mxu0
      %v8242 = vadd.f32 0.0, %v8241
      %v8243 = vpop.f32.mrb[0].mxu0
      %8244 = vmatprep.mubr.f32.mxu0 0.0
      %8245 = vmatmul.mubr.f32.gmra.mrb[0].mxu0 %v8024
      %v8246 = vpop.f32.mrb[0].mxu0
      %v8247 = vadd.f32 0.0, %v8246
      %v8248 = vpop.f32.mrb[0].mxu0
      %8249 = vmatprep.mubr.f32.mxu0 0.0
      %8250 = vmatmul.mubr.f32.gmra.mrb[0].mxu0 %v8027
      %v8251 = vpop.f32.mrb[0].mxu0
      %v8252 = vadd.f32 0.0, %v8251
      %v8253 = vpop.f32.mrb[0].mxu0
      %8254 = vmatprep.mubr.f32.mxu0 0.0
      %8255 = vmatmul.mubr.f32.gmra.mrb[0].mxu0 %v8030
      %v8256 = vpop.f32.mrb[0].mxu0
      %v8257 = vadd.f32 0.0, %v8256
      %v8258 = vpop.f32.mrb[0].mxu0
      %8259 = vmatprep.mubr.f32.mxu0 0.0
      %8260 = vmatmul.mubr.f32.gmra.mrb[0].mxu0 %v8033
      %v8261 = vpop.f32.mrb[0].mxu0
      %v8262 = vadd.f32 0.0, %v8261
      %v8263 = vpop.f32.mrb[0].mxu0
      %8264 = vmatprep.mubr.f32.mxu0 0.0
      %8265 = vmatmul.mubr.f32.gmra.mrb[0].mxu0 %v8036
      %v8266 = vpop.f32.mrb[0].mxu0
      %v8267 = vadd.f32 0.0, %v8266
      %v8268 = vpop.f32.mrb[0].mxu0
      %8269 = vmatprep.mubr.f32.mxu0 0.0
      %8270 = vmatmul.mubr.f32.gmra.mrb[0].mxu0 %v8039
      %v8271 = vpop.f32.mrb[0].mxu0
      %v8272 = vadd.f32 0.0, %v8271
      %v8273 = vpop.f32.mrb[0].mxu0
      %8274 = vmatprep.mubr.f32.mxu0 0.0
      %8275 = vmatmul.mubr.f32.gmra.mrb[0].mxu0 %v8042
      %v8276 = vpop.f32.mrb[0].mxu0
      %v8277 = vadd.f32 0.0, %v8276
      %v8278 = vpop.f32.mrb[0].mxu0
      %8279 = vmatprep.mubr.f32.mxu0 0.0
      %8280 = vmatmul.mubr.f32.gmra.mrb[0].mxu0 %v8045
      %v8281 = vpop.f32.mrb[0].mxu0
      %v8282 = vadd.f32 0.0, %v8281
      %v8283 = vpop.f32.mrb[0].mxu0
      %8284 = vmatprep.mubr.f32.mxu0 0.0
      %8285 = vmatmul.mubr.f32.gmra.mrb[0].mxu0 %v8048
      %v8286 = vpop.f32.mrb[0].mxu0
      %v8287 = vadd.f32 0.0, %v8286
      %v8288 = vpop.f32.mrb[0].mxu0
      %8289 = vmatprep.mubr.f32.mxu0 0.0
      %8290 = vmatmul.mubr.f32.gmra.mrb[0].mxu0 %v8051
      %v8291 = vpop.f32.mrb[0].mxu0
      %v8292 = vadd.f32 0.0, %v8291
      %v8293 = vpop.f32.mrb[0].mxu0
      %8294 = vmatprep.mubr.f32.mxu0 0.0
      %8295 = vmatmul.mubr.f32.gmra.mrb[0].mxu0 %v8054
      %v8296 = vpop.f32.mrb[0].mxu0
      %v8297 = vadd.f32 0.0, %v8296
      %v8298 = vpop.f32.mrb[0].mxu0
      %8299 = vmatprep.mubr.f32.mxu0 0.0
      %8300 = vmatmul.mubr.f32.gmra.mrb[0].mxu0 %v8057
      %v8301 = vpop.f32.mrb[0].mxu0
      %v8302 = vadd.f32 0.0, %v8301
      %v8303 = vpop.f32.mrb[0].mxu0
      %8304 = vmatprep.mubr.f32.mxu0 0.0
      %8305 = vmatmul.mubr.f32.gmra.mrb[0].mxu0 %v8060
      %v8306 = vpop.f32.mrb[0].mxu0
      %v8307 = vadd.f32 0.0, %v8306
      %v8308 = vpop.f32.mrb[0].mxu0
      %8309 = vdwg.mxu0
      %v8310 = vadd.f32 %v7880, %v8132
      %v8311 = vadd.f32 %v7881, %v8137
      %v8312 = vadd.f32 %v7882, %v8142
      %v8313 = vadd.f32 %v7883, %v8147
      %v8314 = vadd.f32 %v7884, %v8152
      %v8315 = vadd.f32 %v7885, %v8157
      %v8316 = vadd.f32 %v7886, %v8162
      %v8317 = vadd.f32 %v7887, %v8167
      %v8318 = vadd.f32 %v7888, %v8172
      %v8319 = vadd.f32 %v7889, %v8177
      %v8320 = vadd.f32 %v7890, %v8182
      %v8321 = vadd.f32 %v7891, %v8187
      %v8322 = vadd.f32 %v7892, %v8192
      %v8323 = vadd.f32 %v7893, %v8197
      %v8324 = vadd.f32 %v7894, %v8202
      %v8325 = vadd.f32 %v7895, %v8207
      %v8326 = vadd.f32 %v7896, %v8212
      %v8327 = vadd.f32 %v7897, %v8217
      %v8328 = vadd.f32 %v7898, %v8222
      %v8329 = vadd.f32 %v7899, %v8227
      %v8330 = vadd.f32 %v7900, %v8232
      %v8331 = vadd.f32 %v7901, %v8237
      %v8332 = vadd.f32 %v7902, %v8242
      %v8333 = vadd.f32 %v7903, %v8247
      %v8334 = vadd.f32 %v7904, %v8252
      %v8335 = vadd.f32 %v7905, %v8257
      %v8336 = vadd.f32 %v7906, %v8262
      %v8337 = vadd.f32 %v7907, %v8267
      %v8338 = vadd.f32 %v7908, %v8272
      %v8339 = vadd.f32 %v7909, %v8277
      %v8340 = vadd.f32 %v7910, %v8282
      %v8341 = vadd.f32 %v7911, %v8287
      %v8342 = vadd.f32 %v7912, %v8292
      %v8343 = vadd.f32 %v7913, %v8297
      %v8344 = vadd.f32 %v7914, %v8302
      %v8345 = vadd.f32 %v7915, %v8307
      %v8346 = vld [vmem:[#allocation3 + $0x14] sm:$0xff]
      %v8347 = vld [vmem:[#allocation3 + $0x1c] sm:$0xff]
      %v8348 = vld [vmem:[#allocation3 + $0x24] sm:$0xff]
      %v8349 = vld [vmem:[#allocation3 + $0x2c] sm:$0xff]
      %v8350 = vld [vmem:[#allocation3 + $0x34] sm:$0xff]
      %v8351 = vld [vmem:[#allocation3 + $0x3c] sm:$0xff]
      %v8352 = vld [vmem:[#allocation3 + $0x44] sm:$0xff]
      %v8353 = vld [vmem:[#allocation3 + $0x4c] sm:$0xff]
      %v8354 = vld [vmem:[#allocation3 + $0x54] sm:$0xff]
      %v8355 = vld [vmem:[#allocation3 + $0x5c] sm:$0xff]
      %v8356 = vld [vmem:[#allocation3 + $0x64] sm:$0xff]
      %v8357 = vld [vmem:[#allocation3 + $0x6c] sm:$0xff]
      %v8358 = vld [vmem:[#allocation3 + $0x74] sm:$0xff]
      %v8359 = vld [vmem:[#allocation3 + $0x7c] sm:$0xff]
      %v8360 = vld [vmem:[#allocation3 + $0x84] sm:$0xff]
      %v8361 = vld [vmem:[#allocation3 + $0x8c] sm:$0xff]
      %v8362 = vld [vmem:[#allocation3 + $0x94] sm:$0xff]
      %v8363 = vld [vmem:[#allocation3 + $0x9c] sm:$0xff]
      %v8364 = vld [vmem:[#allocation3 + $0xa4] sm:$0xff]
      %v8365 = vld [vmem:[#allocation3 + $0xac] sm:$0xff]
      %v8366 = vld [vmem:[#allocation3 + $0xb4] sm:$0xff]
      %v8367 = vld [vmem:[#allocation3 + $0xbc] sm:$0xff]
      %v8368 = vld [vmem:[#allocation3 + $0xc4] sm:$0xff]
      %v8369 = vld [vmem:[#allocation3 + $0xcc] sm:$0xff]
      %v8370 = vld [vmem:[#allocation3 + $0xd4] sm:$0xff]
      %v8371 = vld [vmem:[#allocation3 + $0xdc] sm:$0xff]
      %v8372 = vld [vmem:[#allocation3 + $0xe4] sm:$0xff]
      %v8373 = vld [vmem:[#allocation3 + $0xec] sm:$0xff]
      %v8374 = vld [vmem:[#allocation3 + $0xf4] sm:$0xff]
      %v8375 = vld [vmem:[#allocation3 + $0xfc] sm:$0xff]
      %v8376 = vld [vmem:[#allocation3 + $0x104] sm:$0xff]
      %v8377 = vld [vmem:[#allocation3 + $0x10c] sm:$0xff]
      %v8378 = vld [vmem:[#allocation3 + $0x114] sm:$0xff]
      %v8379 = vld [vmem:[#allocation3 + $0x11c] sm:$0xff]
      %v8380 = vld [vmem:[#allocation3 + $0x124] sm:$0xff]
      %v8381 = vld [vmem:[#allocation3 + $0x12c] sm:$0xff]
      %s8382 = scalar_lea.vmem %s5, 20
      %v8383 = vld [vmem:[%s8382] sm:$0xf]
      %v8385 = vsel %vm498, %v8346, 0
      %v8388 = vsel %vm498, %v8347, 0
      %v8391 = vsel %vm498, %v8348, 0
      %v8394 = vsel %vm498, %v8349, 0
      %v8397 = vsel %vm498, %v8350, 0
      %v8400 = vsel %vm498, %v8351, 0
      %v8403 = vsel %vm498, %v8352, 0
      %v8406 = vsel %vm498, %v8353, 0
      %v8409 = vsel %vm498, %v8354, 0
      %v8412 = vsel %vm498, %v8355, 0
      %v8415 = vsel %vm498, %v8356, 0
      %v8418 = vsel %vm498, %v8357, 0
      %v8421 = vsel %vm498, %v8358, 0
      %v8424 = vsel %vm498, %v8359, 0
      %v8427 = vsel %vm498, %v8360, 0
      %v8430 = vsel %vm498, %v8361, 0
      %v8433 = vsel %vm498, %v8362, 0
      %v8436 = vsel %vm498, %v8363, 0
      %v8439 = vsel %vm498, %v8364, 0
      %v8442 = vsel %vm498, %v8365, 0
      %v8445 = vsel %vm498, %v8366, 0
      %v8448 = vsel %vm498, %v8367, 0
      %v8451 = vsel %vm498, %v8368, 0
      %v8454 = vsel %vm498, %v8369, 0
      %v8457 = vsel %vm498, %v8370, 0
      %v8460 = vsel %vm498, %v8371, 0
      %v8463 = vsel %vm498, %v8372, 0
      %v8466 = vsel %vm498, %v8373, 0
      %v8469 = vsel %vm498, %v8374, 0
      %v8472 = vsel %vm498, %v8375, 0
      %v8475 = vsel %vm498, %v8376, 0
      %v8478 = vsel %vm498, %v8377, 0
      %v8481 = vsel %vm498, %v8378, 0
      %v8484 = vsel %vm498, %v8379, 0
      %v8487 = vsel %vm498, %v8380, 0
      %v8490 = vsel %vm498, %v8381, 0
      %v8493 = vsel %vm607, %v8383, 0
      %8495 = vmatprep.subr.mxu0 0.0
      %8496 = vmatpush1.msra.mxu0 %v8493
      %8497 = vmatprep.subr.mxu0 0.0
      %8498 = vmatpush1.msra.mxu0 0.0
      %8499 = vmatprep.subr.mxu0 0.0
      %8500 = vmatpush1.msra.mxu0 0.0
      %8501 = vmatprep.subr.mxu0 0.0
      %8502 = vmatpush1.msra.mxu0 0.0
      %8503 = vmatprep.subr.mxu0 0.0
      %8504 = vmatpush1.msra.mxu0 0.0
      %8505 = vmatprep.subr.mxu0 0.0
      %8506 = vmatpush1.msra.mxu0 0.0
      %8507 = vmatprep.subr.mxu0 0.0
      %8508 = vmatpush1.msra.mxu0 0.0
      %8509 = vmatprep.subr.mxu0 0.0
      %8510 = vmatpush1.msra.mxu0 0.0
      %8511 = vmatprep.subr.mxu0 0.0
      %8512 = vmatpush1.msra.mxu0 0.0
      %8513 = vmatprep.subr.mxu0 0.0
      %8514 = vmatpush1.msra.mxu0 0.0
      %8515 = vmatprep.subr.mxu0 0.0
      %8516 = vmatpush1.msra.mxu0 0.0
      %8517 = vmatprep.subr.mxu0 0.0
      %8518 = vmatpush1.msra.mxu0 0.0
      %8519 = vmatprep.subr.mxu0 0.0
      %8520 = vmatpush1.msra.mxu0 0.0
      %8521 = vmatprep.subr.mxu0 0.0
      %8522 = vmatpush1.msra.mxu0 0.0
      %8523 = vmatprep.subr.mxu0 0.0
      %8524 = vmatpush1.msra.mxu0 0.0
      %8525 = vmatprep.subr.mxu0 0.0
      %8526 = vmatpush1.msra.mxu0 0.0
      %8527 = vmatprep.subr.mxu0 0.0
      %8528 = vmatpush1.msra.mxu0 0.0
      %8529 = vmatprep.subr.mxu0 0.0
      %8530 = vmatpush1.msra.mxu0 0.0
      %8531 = vmatprep.subr.mxu0 0.0
      %8532 = vmatpush1.msra.mxu0 0.0
      %8533 = vmatprep.subr.mxu0 0.0
      %8534 = vmatpush1.msra.mxu0 0.0
      %8535 = vmatprep.subr.mxu0 0.0
      %8536 = vmatpush1.msra.mxu0 0.0
      %8537 = vmatprep.subr.mxu0 0.0
      %8538 = vmatpush1.msra.mxu0 0.0
      %8539 = vmatprep.subr.mxu0 0.0
      %8540 = vmatpush1.msra.mxu0 0.0
      %8541 = vmatprep.subr.mxu0 0.0
      %8542 = vmatpush1.msra.mxu0 0.0
      %8543 = vmatprep.subr.mxu0 0.0
      %8544 = vmatpush1.msra.mxu0 0.0
      %8545 = vmatprep.subr.mxu0 0.0
      %8546 = vmatpush1.msra.mxu0 0.0
      %8547 = vmatprep.subr.mxu0 0.0
      %8548 = vmatpush1.msra.mxu0 0.0
      %8549 = vmatprep.subr.mxu0 0.0
      %8550 = vmatpush1.msra.mxu0 0.0
      %8551 = vmatprep.subr.mxu0 0.0
      %8552 = vmatpush1.msra.mxu0 0.0
      %8553 = vmatprep.subr.mxu0 0.0
      %8554 = vmatpush1.msra.mxu0 0.0
      %8555 = vmatprep.subr.mxu0 0.0
      %8556 = vmatpush1.msra.mxu0 0.0
      %8557 = vmatprep.subr.mxu0 0.0
      %8558 = vmatpush1.msra.mxu0 0.0
      %8559 = vmatprep.mubr.f32.mxu0 0.0
      %8560 = vmatmul.mubr.f32.gmra.mrb[0].mxu0 %v8385
      %v8561 = vpop.f32.mrb[0].mxu0
      %v8562 = vadd.f32 0.0, %v8561
      %v8563 = vpop.f32.mrb[0].mxu0
      %8564 = vmatprep.mubr.f32.mxu0 0.0
      %8565 = vmatmul.mubr.f32.gmra.mrb[0].mxu0 %v8388
      %v8566 = vpop.f32.mrb[0].mxu0
      %v8567 = vadd.f32 0.0, %v8566
      %v8568 = vpop.f32.mrb[0].mxu0
      %8569 = vmatprep.mubr.f32.mxu0 0.0
      %8570 = vmatmul.mubr.f32.gmra.mrb[0].mxu0 %v8391
      %v8571 = vpop.f32.mrb[0].mxu0
      %v8572 = vadd.f32 0.0, %v8571
      %v8573 = vpop.f32.mrb[0].mxu0
      %8574 = vmatprep.mubr.f32.mxu0 0.0
      %8575 = vmatmul.mubr.f32.gmra.mrb[0].mxu0 %v8394
      %v8576 = vpop.f32.mrb[0].mxu0
      %v8577 = vadd.f32 0.0, %v8576
      %v8578 = vpop.f32.mrb[0].mxu0
      %8579 = vmatprep.mubr.f32.mxu0 0.0
      %8580 = vmatmul.mubr.f32.gmra.mrb[0].mxu0 %v8397
      %v8581 = vpop.f32.mrb[0].mxu0
      %v8582 = vadd.f32 0.0, %v8581
      %v8583 = vpop.f32.mrb[0].mxu0
      %8584 = vmatprep.mubr.f32.mxu0 0.0
      %8585 = vmatmul.mubr.f32.gmra.mrb[0].mxu0 %v8400
      %v8586 = vpop.f32.mrb[0].mxu0
      %v8587 = vadd.f32 0.0, %v8586
      %v8588 = vpop.f32.mrb[0].mxu0
      %8589 = vmatprep.mubr.f32.mxu0 0.0
      %8590 = vmatmul.mubr.f32.gmra.mrb[0].mxu0 %v8403
      %v8591 = vpop.f32.mrb[0].mxu0
      %v8592 = vadd.f32 0.0, %v8591
      %v8593 = vpop.f32.mrb[0].mxu0
      %8594 = vmatprep.mubr.f32.mxu0 0.0
      %8595 = vmatmul.mubr.f32.gmra.mrb[0].mxu0 %v8406
      %v8596 = vpop.f32.mrb[0].mxu0
      %v8597 = vadd.f32 0.0, %v8596
      %v8598 = vpop.f32.mrb[0].mxu0
      %8599 = vmatprep.mubr.f32.mxu0 0.0
      %8600 = vmatmul.mubr.f32.gmra.mrb[0].mxu0 %v8409
      %v8601 = vpop.f32.mrb[0].mxu0
      %v8602 = vadd.f32 0.0, %v8601
      %v8603 = vpop.f32.mrb[0].mxu0
      %8604 = vmatprep.mubr.f32.mxu0 0.0
      %8605 = vmatmul.mubr.f32.gmra.mrb[0].mxu0 %v8412
      %v8606 = vpop.f32.mrb[0].mxu0
      %v8607 = vadd.f32 0.0, %v8606
      %v8608 = vpop.f32.mrb[0].mxu0
      %8609 = vmatprep.mubr.f32.mxu0 0.0
      %8610 = vmatmul.mubr.f32.gmra.mrb[0].mxu0 %v8415
      %v8611 = vpop.f32.mrb[0].mxu0
      %v8612 = vadd.f32 0.0, %v8611
      %v8613 = vpop.f32.mrb[0].mxu0
      %8614 = vmatprep.mubr.f32.mxu0 0.0
      %8615 = vmatmul.mubr.f32.gmra.mrb[0].mxu0 %v8418
      %v8616 = vpop.f32.mrb[0].mxu0
      %v8617 = vadd.f32 0.0, %v8616
      %v8618 = vpop.f32.mrb[0].mxu0
      %8619 = vmatprep.mubr.f32.mxu0 0.0
      %8620 = vmatmul.mubr.f32.gmra.mrb[0].mxu0 %v8421
      %v8621 = vpop.f32.mrb[0].mxu0
      %v8622 = vadd.f32 0.0, %v8621
      %v8623 = vpop.f32.mrb[0].mxu0
      %8624 = vmatprep.mubr.f32.mxu0 0.0
      %8625 = vmatmul.mubr.f32.gmra.mrb[0].mxu0 %v8424
      %v8626 = vpop.f32.mrb[0].mxu0
      %v8627 = vadd.f32 0.0, %v8626
      %v8628 = vpop.f32.mrb[0].mxu0
      %8629 = vmatprep.mubr.f32.mxu0 0.0
      %8630 = vmatmul.mubr.f32.gmra.mrb[0].mxu0 %v8427
      %v8631 = vpop.f32.mrb[0].mxu0
      %v8632 = vadd.f32 0.0, %v8631
      %v8633 = vpop.f32.mrb[0].mxu0
      %8634 = vmatprep.mubr.f32.mxu0 0.0
      %8635 = vmatmul.mubr.f32.gmra.mrb[0].mxu0 %v8430
      %v8636 = vpop.f32.mrb[0].mxu0
      %v8637 = vadd.f32 0.0, %v8636
      %v8638 = vpop.f32.mrb[0].mxu0
      %8639 = vmatprep.mubr.f32.mxu0 0.0
      %8640 = vmatmul.mubr.f32.gmra.mrb[0].mxu0 %v8433
      %v8641 = vpop.f32.mrb[0].mxu0
      %v8642 = vadd.f32 0.0, %v8641
      %v8643 = vpop.f32.mrb[0].mxu0
      %8644 = vmatprep.mubr.f32.mxu0 0.0
      %8645 = vmatmul.mubr.f32.gmra.mrb[0].mxu0 %v8436
      %v8646 = vpop.f32.mrb[0].mxu0
      %v8647 = vadd.f32 0.0, %v8646
      %v8648 = vpop.f32.mrb[0].mxu0
      %8649 = vmatprep.mubr.f32.mxu0 0.0
      %8650 = vmatmul.mubr.f32.gmra.mrb[0].mxu0 %v8439
      %v8651 = vpop.f32.mrb[0].mxu0
      %v8652 = vadd.f32 0.0, %v8651
      %v8653 = vpop.f32.mrb[0].mxu0
      %8654 = vmatprep.mubr.f32.mxu0 0.0
      %8655 = vmatmul.mubr.f32.gmra.mrb[0].mxu0 %v8442
      %v8656 = vpop.f32.mrb[0].mxu0
      %v8657 = vadd.f32 0.0, %v8656
      %v8658 = vpop.f32.mrb[0].mxu0
      %8659 = vmatprep.mubr.f32.mxu0 0.0
      %8660 = vmatmul.mubr.f32.gmra.mrb[0].mxu0 %v8445
      %v8661 = vpop.f32.mrb[0].mxu0
      %v8662 = vadd.f32 0.0, %v8661
      %v8663 = vpop.f32.mrb[0].mxu0
      %8664 = vmatprep.mubr.f32.mxu0 0.0
      %8665 = vmatmul.mubr.f32.gmra.mrb[0].mxu0 %v8448
      %v8666 = vpop.f32.mrb[0].mxu0
      %v8667 = vadd.f32 0.0, %v8666
      %v8668 = vpop.f32.mrb[0].mxu0
      %8669 = vmatprep.mubr.f32.mxu0 0.0
      %8670 = vmatmul.mubr.f32.gmra.mrb[0].mxu0 %v8451
      %v8671 = vpop.f32.mrb[0].mxu0
      %v8672 = vadd.f32 0.0, %v8671
      %v8673 = vpop.f32.mrb[0].mxu0
      %8674 = vmatprep.mubr.f32.mxu0 0.0
      %8675 = vmatmul.mubr.f32.gmra.mrb[0].mxu0 %v8454
      %v8676 = vpop.f32.mrb[0].mxu0
      %v8677 = vadd.f32 0.0, %v8676
      %v8678 = vpop.f32.mrb[0].mxu0
      %8679 = vmatprep.mubr.f32.mxu0 0.0
      %8680 = vmatmul.mubr.f32.gmra.mrb[0].mxu0 %v8457
      %v8681 = vpop.f32.mrb[0].mxu0
      %v8682 = vadd.f32 0.0, %v8681
      %v8683 = vpop.f32.mrb[0].mxu0
      %8684 = vmatprep.mubr.f32.mxu0 0.0
      %8685 = vmatmul.mubr.f32.gmra.mrb[0].mxu0 %v8460
      %v8686 = vpop.f32.mrb[0].mxu0
      %v8687 = vadd.f32 0.0, %v8686
      %v8688 = vpop.f32.mrb[0].mxu0
      %8689 = vmatprep.mubr.f32.mxu0 0.0
      %8690 = vmatmul.mubr.f32.gmra.mrb[0].mxu0 %v8463
      %v8691 = vpop.f32.mrb[0].mxu0
      %v8692 = vadd.f32 0.0, %v8691
      %v8693 = vpop.f32.mrb[0].mxu0
      %8694 = vmatprep.mubr.f32.mxu0 0.0
      %8695 = vmatmul.mubr.f32.gmra.mrb[0].mxu0 %v8466
      %v8696 = vpop.f32.mrb[0].mxu0
      %v8697 = vadd.f32 0.0, %v8696
      %v8698 = vpop.f32.mrb[0].mxu0
      %8699 = vmatprep.mubr.f32.mxu0 0.0
      %8700 = vmatmul.mubr.f32.gmra.mrb[0].mxu0 %v8469
      %v8701 = vpop.f32.mrb[0].mxu0
      %v8702 = vadd.f32 0.0, %v8701
      %v8703 = vpop.f32.mrb[0].mxu0
      %8704 = vmatprep.mubr.f32.mxu0 0.0
      %8705 = vmatmul.mubr.f32.gmra.mrb[0].mxu0 %v8472
      %v8706 = vpop.f32.mrb[0].mxu0
      %v8707 = vadd.f32 0.0, %v8706
      %v8708 = vpop.f32.mrb[0].mxu0
      %8709 = vmatprep.mubr.f32.mxu0 0.0
      %8710 = vmatmul.mubr.f32.gmra.mrb[0].mxu0 %v8475
      %v8711 = vpop.f32.mrb[0].mxu0
      %v8712 = vadd.f32 0.0, %v8711
      %v8713 = vpop.f32.mrb[0].mxu0
      %8714 = vmatprep.mubr.f32.mxu0 0.0
      %8715 = vmatmul.mubr.f32.gmra.mrb[0].mxu0 %v8478
      %v8716 = vpop.f32.mrb[0].mxu0
      %v8717 = vadd.f32 0.0, %v8716
      %v8718 = vpop.f32.mrb[0].mxu0
      %8719 = vmatprep.mubr.f32.mxu0 0.0
      %8720 = vmatmul.mubr.f32.gmra.mrb[0].mxu0 %v8481
      %v8721 = vpop.f32.mrb[0].mxu0
      %v8722 = vadd.f32 0.0, %v8721
      %v8723 = vpop.f32.mrb[0].mxu0
      %8724 = vmatprep.mubr.f32.mxu0 0.0
      %8725 = vmatmul.mubr.f32.gmra.mrb[0].mxu0 %v8484
      %v8726 = vpop.f32.mrb[0].mxu0
      %v8727 = vadd.f32 0.0, %v8726
      %v8728 = vpop.f32.mrb[0].mxu0
      %8729 = vmatprep.mubr.f32.mxu0 0.0
      %8730 = vmatmul.mubr.f32.gmra.mrb[0].mxu0 %v8487
      %v8731 = vpop.f32.mrb[0].mxu0
      %v8732 = vadd.f32 0.0, %v8731
      %v8733 = vpop.f32.mrb[0].mxu0
      %8734 = vmatprep.mubr.f32.mxu0 0.0
      %8735 = vmatmul.mubr.f32.gmra.mrb[0].mxu0 %v8490
      %v8736 = vpop.f32.mrb[0].mxu0
      %v8737 = vadd.f32 0.0, %v8736
      %v8738 = vpop.f32.mrb[0].mxu0
      %8739 = vdwg.mxu0
      %v8740 = vadd.f32 %v8310, %v8562
      %v8741 = vadd.f32 %v8311, %v8567
      %v8742 = vadd.f32 %v8312, %v8572
      %v8743 = vadd.f32 %v8313, %v8577
      %v8744 = vadd.f32 %v8314, %v8582
      %v8745 = vadd.f32 %v8315, %v8587
      %v8746 = vadd.f32 %v8316, %v8592
      %v8747 = vadd.f32 %v8317, %v8597
      %v8748 = vadd.f32 %v8318, %v8602
      %v8749 = vadd.f32 %v8319, %v8607
      %v8750 = vadd.f32 %v8320, %v8612
      %v8751 = vadd.f32 %v8321, %v8617
      %v8752 = vadd.f32 %v8322, %v8622
      %v8753 = vadd.f32 %v8323, %v8627
      %v8754 = vadd.f32 %v8324, %v8632
      %v8755 = vadd.f32 %v8325, %v8637
      %v8756 = vadd.f32 %v8326, %v8642
      %v8757 = vadd.f32 %v8327, %v8647
      %v8758 = vadd.f32 %v8328, %v8652
      %v8759 = vadd.f32 %v8329, %v8657
      %v8760 = vadd.f32 %v8330, %v8662
      %v8761 = vadd.f32 %v8331, %v8667
      %v8762 = vadd.f32 %v8332, %v8672
      %v8763 = vadd.f32 %v8333, %v8677
      %v8764 = vadd.f32 %v8334, %v8682
      %v8765 = vadd.f32 %v8335, %v8687
      %v8766 = vadd.f32 %v8336, %v8692
      %v8767 = vadd.f32 %v8337, %v8697
      %v8768 = vadd.f32 %v8338, %v8702
      %v8769 = vadd.f32 %v8339, %v8707
      %v8770 = vadd.f32 %v8340, %v8712
      %v8771 = vadd.f32 %v8341, %v8717
      %v8772 = vadd.f32 %v8342, %v8722
      %v8773 = vadd.f32 %v8343, %v8727
      %v8774 = vadd.f32 %v8344, %v8732
      %v8775 = vadd.f32 %v8345, %v8737
      %v8776 = vld [vmem:[#allocation3 + $0x24] sm:$0xff]
      %v8777 = vld [vmem:[#allocation3 + $0x2c] sm:$0xff]
      %v8778 = vld [vmem:[#allocation3 + $0x34] sm:$0xff]
      %v8779 = vld [vmem:[#allocation3 + $0x3c] sm:$0xff]
      %v8780 = vld [vmem:[#allocation3 + $0x44] sm:$0xff]
      %v8781 = vld [vmem:[#allocation3 + $0x4c] sm:$0xff]
      %v8782 = vld [vmem:[#allocation3 + $0x54] sm:$0xff]
      %v8783 = vld [vmem:[#allocation3 + $0x5c] sm:$0xff]
      %v8784 = vld [vmem:[#allocation3 + $0x64] sm:$0xff]
      %v8785 = vld [vmem:[#allocation3 + $0x6c] sm:$0xff]
      %v8786 = vld [vmem:[#allocation3 + $0x74] sm:$0xff]
      %v8787 = vld [vmem:[#allocation3 + $0x7c] sm:$0xff]
      %v8788 = vld [vmem:[#allocation3 + $0x84] sm:$0xff]
      %v8789 = vld [vmem:[#allocation3 + $0x8c] sm:$0xff]
      %v8790 = vld [vmem:[#allocation3 + $0x94] sm:$0xff]
      %v8791 = vld [vmem:[#allocation3 + $0x9c] sm:$0xff]
      %v8792 = vld [vmem:[#allocation3 + $0xa4] sm:$0xff]
      %v8793 = vld [vmem:[#allocation3 + $0xac] sm:$0xff]
      %v8794 = vld [vmem:[#allocation3 + $0xb4] sm:$0xff]
      %v8795 = vld [vmem:[#allocation3 + $0xbc] sm:$0xff]
      %v8796 = vld [vmem:[#allocation3 + $0xc4] sm:$0xff]
      %v8797 = vld [vmem:[#allocation3 + $0xcc] sm:$0xff]
      %v8798 = vld [vmem:[#allocation3 + $0xd4] sm:$0xff]
      %v8799 = vld [vmem:[#allocation3 + $0xdc] sm:$0xff]
      %v8800 = vld [vmem:[#allocation3 + $0xe4] sm:$0xff]
      %v8801 = vld [vmem:[#allocation3 + $0xec] sm:$0xff]
      %v8802 = vld [vmem:[#allocation3 + $0xf4] sm:$0xff]
      %v8803 = vld [vmem:[#allocation3 + $0xfc] sm:$0xff]
      %v8804 = vld [vmem:[#allocation3 + $0x104] sm:$0xff]
      %v8805 = vld [vmem:[#allocation3 + $0x10c] sm:$0xff]
      %v8806 = vld [vmem:[#allocation3 + $0x114] sm:$0xff]
      %v8807 = vld [vmem:[#allocation3 + $0x11c] sm:$0xff]
      %v8808 = vld [vmem:[#allocation3 + $0x124] sm:$0xff]
      %v8809 = vld [vmem:[#allocation3 + $0x12c] sm:$0xff]
      %v8810 = vld [vmem:[#allocation3 + $0x134] sm:$0xff]
      %v8811 = vld [vmem:[#allocation3 + $0x13c] sm:$0xff]
      %s8812 = scalar_lea.vmem %s5, 24
      %v8813 = vld [vmem:[%s8812] sm:$0xf]
      %v8815 = vsel %vm498, %v8776, 0
      %v8818 = vsel %vm498, %v8777, 0
      %v8821 = vsel %vm498, %v8778, 0
      %v8824 = vsel %vm498, %v8779, 0
      %v8827 = vsel %vm498, %v8780, 0
      %v8830 = vsel %vm498, %v8781, 0
      %v8833 = vsel %vm498, %v8782, 0
      %v8836 = vsel %vm498, %v8783, 0
      %v8839 = vsel %vm498, %v8784, 0
      %v8842 = vsel %vm498, %v8785, 0
      %v8845 = vsel %vm498, %v8786, 0
      %v8848 = vsel %vm498, %v8787, 0
      %v8851 = vsel %vm498, %v8788, 0
      %v8854 = vsel %vm498, %v8789, 0
      %v8857 = vsel %vm498, %v8790, 0
      %v8860 = vsel %vm498, %v8791, 0
      %v8863 = vsel %vm498, %v8792, 0
      %v8866 = vsel %vm498, %v8793, 0
      %v8869 = vsel %vm498, %v8794, 0
      %v8872 = vsel %vm498, %v8795, 0
      %v8875 = vsel %vm498, %v8796, 0
      %v8878 = vsel %vm498, %v8797, 0
      %v8881 = vsel %vm498, %v8798, 0
      %v8884 = vsel %vm498, %v8799, 0
      %v8887 = vsel %vm498, %v8800, 0
      %v8890 = vsel %vm498, %v8801, 0
      %v8893 = vsel %vm498, %v8802, 0
      %v8896 = vsel %vm498, %v8803, 0
      %v8899 = vsel %vm498, %v8804, 0
      %v8902 = vsel %vm498, %v8805, 0
      %v8905 = vsel %vm498, %v8806, 0
      %v8908 = vsel %vm498, %v8807, 0
      %v8911 = vsel %vm498, %v8808, 0
      %v8914 = vsel %vm498, %v8809, 0
      %v8917 = vsel %vm498, %v8810, 0
      %v8920 = vsel %vm498, %v8811, 0
      %v8923 = vsel %vm607, %v8813, 0
      %8925 = vmatprep.subr.mxu0 0.0
      %8926 = vmatpush1.msra.mxu0 %v8923
      %8927 = vmatprep.subr.mxu0 0.0
      %8928 = vmatpush1.msra.mxu0 0.0
      %8929 = vmatprep.subr.mxu0 0.0
      %8930 = vmatpush1.msra.mxu0 0.0
      %8931 = vmatprep.subr.mxu0 0.0
      %8932 = vmatpush1.msra.mxu0 0.0
      %8933 = vmatprep.subr.mxu0 0.0
      %8934 = vmatpush1.msra.mxu0 0.0
      %8935 = vmatprep.subr.mxu0 0.0
      %8936 = vmatpush1.msra.mxu0 0.0
      %8937 = vmatprep.subr.mxu0 0.0
      %8938 = vmatpush1.msra.mxu0 0.0
      %8939 = vmatprep.subr.mxu0 0.0
      %8940 = vmatpush1.msra.mxu0 0.0
      %8941 = vmatprep.subr.mxu0 0.0
      %8942 = vmatpush1.msra.mxu0 0.0
      %8943 = vmatprep.subr.mxu0 0.0
      %8944 = vmatpush1.msra.mxu0 0.0
      %8945 = vmatprep.subr.mxu0 0.0
      %8946 = vmatpush1.msra.mxu0 0.0
      %8947 = vmatprep.subr.mxu0 0.0
      %8948 = vmatpush1.msra.mxu0 0.0
      %8949 = vmatprep.subr.mxu0 0.0
      %8950 = vmatpush1.msra.mxu0 0.0
      %8951 = vmatprep.subr.mxu0 0.0
      %8952 = vmatpush1.msra.mxu0 0.0
      %8953 = vmatprep.subr.mxu0 0.0
      %8954 = vmatpush1.msra.mxu0 0.0
      %8955 = vmatprep.subr.mxu0 0.0
      %8956 = vmatpush1.msra.mxu0 0.0
      %8957 = vmatprep.subr.mxu0 0.0
      %8958 = vmatpush1.msra.mxu0 0.0
      %8959 = vmatprep.subr.mxu0 0.0
      %8960 = vmatpush1.msra.mxu0 0.0
      %8961 = vmatprep.subr.mxu0 0.0
      %8962 = vmatpush1.msra.mxu0 0.0
      %8963 = vmatprep.subr.mxu0 0.0
      %8964 = vmatpush1.msra.mxu0 0.0
      %8965 = vmatprep.subr.mxu0 0.0
      %8966 = vmatpush1.msra.mxu0 0.0
      %8967 = vmatprep.subr.mxu0 0.0
      %8968 = vmatpush1.msra.mxu0 0.0
      %8969 = vmatprep.subr.mxu0 0.0
      %8970 = vmatpush1.msra.mxu0 0.0
      %8971 = vmatprep.subr.mxu0 0.0
      %8972 = vmatpush1.msra.mxu0 0.0
      %8973 = vmatprep.subr.mxu0 0.0
      %8974 = vmatpush1.msra.mxu0 0.0
      %8975 = vmatprep.subr.mxu0 0.0
      %8976 = vmatpush1.msra.mxu0 0.0
      %8977 = vmatprep.subr.mxu0 0.0
      %8978 = vmatpush1.msra.mxu0 0.0
      %8979 = vmatprep.subr.mxu0 0.0
      %8980 = vmatpush1.msra.mxu0 0.0
      %8981 = vmatprep.subr.mxu0 0.0
      %8982 = vmatpush1.msra.mxu0 0.0
      %8983 = vmatprep.subr.mxu0 0.0
      %8984 = vmatpush1.msra.mxu0 0.0
      %8985 = vmatprep.subr.mxu0 0.0
      %8986 = vmatpush1.msra.mxu0 0.0
      %8987 = vmatprep.subr.mxu0 0.0
      %8988 = vmatpush1.msra.mxu0 0.0
      %8989 = vmatprep.mubr.f32.mxu0 0.0
      %8990 = vmatmul.mubr.f32.gmra.mrb[0].mxu0 %v8815
      %v8991 = vpop.f32.mrb[0].mxu0
      %v8992 = vadd.f32 0.0, %v8991
      %v8993 = vpop.f32.mrb[0].mxu0
      %8994 = vmatprep.mubr.f32.mxu0 0.0
      %8995 = vmatmul.mubr.f32.gmra.mrb[0].mxu0 %v8818
      %v8996 = vpop.f32.mrb[0].mxu0
      %v8997 = vadd.f32 0.0, %v8996
      %v8998 = vpop.f32.mrb[0].mxu0
      %8999 = vmatprep.mubr.f32.mxu0 0.0
      %9000 = vmatmul.mubr.f32.gmra.mrb[0].mxu0 %v8821
      %v9001 = vpop.f32.mrb[0].mxu0
      %v9002 = vadd.f32 0.0, %v9001
      %v9003 = vpop.f32.mrb[0].mxu0
      %9004 = vmatprep.mubr.f32.mxu0 0.0
      %9005 = vmatmul.mubr.f32.gmra.mrb[0].mxu0 %v8824
      %v9006 = vpop.f32.mrb[0].mxu0
      %v9007 = vadd.f32 0.0, %v9006
      %v9008 = vpop.f32.mrb[0].mxu0
      %9009 = vmatprep.mubr.f32.mxu0 0.0
      %9010 = vmatmul.mubr.f32.gmra.mrb[0].mxu0 %v8827
      %v9011 = vpop.f32.mrb[0].mxu0
      %v9012 = vadd.f32 0.0, %v9011
      %v9013 = vpop.f32.mrb[0].mxu0
      %9014 = vmatprep.mubr.f32.mxu0 0.0
      %9015 = vmatmul.mubr.f32.gmra.mrb[0].mxu0 %v8830
      %v9016 = vpop.f32.mrb[0].mxu0
      %v9017 = vadd.f32 0.0, %v9016
      %v9018 = vpop.f32.mrb[0].mxu0
      %9019 = vmatprep.mubr.f32.mxu0 0.0
      %9020 = vmatmul.mubr.f32.gmra.mrb[0].mxu0 %v8833
      %v9021 = vpop.f32.mrb[0].mxu0
      %v9022 = vadd.f32 0.0, %v9021
      %v9023 = vpop.f32.mrb[0].mxu0
      %9024 = vmatprep.mubr.f32.mxu0 0.0
      %9025 = vmatmul.mubr.f32.gmra.mrb[0].mxu0 %v8836
      %v9026 = vpop.f32.mrb[0].mxu0
      %v9027 = vadd.f32 0.0, %v9026
      %v9028 = vpop.f32.mrb[0].mxu0
      %9029 = vmatprep.mubr.f32.mxu0 0.0
      %9030 = vmatmul.mubr.f32.gmra.mrb[0].mxu0 %v8839
      %v9031 = vpop.f32.mrb[0].mxu0
      %v9032 = vadd.f32 0.0, %v9031
      %v9033 = vpop.f32.mrb[0].mxu0
      %9034 = vmatprep.mubr.f32.mxu0 0.0
      %9035 = vmatmul.mubr.f32.gmra.mrb[0].mxu0 %v8842
      %v9036 = vpop.f32.mrb[0].mxu0
      %v9037 = vadd.f32 0.0, %v9036
      %v9038 = vpop.f32.mrb[0].mxu0
      %9039 = vmatprep.mubr.f32.mxu0 0.0
      %9040 = vmatmul.mubr.f32.gmra.mrb[0].mxu0 %v8845
      %v9041 = vpop.f32.mrb[0].mxu0
      %v9042 = vadd.f32 0.0, %v9041
      %v9043 = vpop.f32.mrb[0].mxu0
      %9044 = vmatprep.mubr.f32.mxu0 0.0
      %9045 = vmatmul.mubr.f32.gmra.mrb[0].mxu0 %v8848
      %v9046 = vpop.f32.mrb[0].mxu0
      %v9047 = vadd.f32 0.0, %v9046
      %v9048 = vpop.f32.mrb[0].mxu0
      %9049 = vmatprep.mubr.f32.mxu0 0.0
      %9050 = vmatmul.mubr.f32.gmra.mrb[0].mxu0 %v8851
      %v9051 = vpop.f32.mrb[0].mxu0
      %v9052 = vadd.f32 0.0, %v9051
      %v9053 = vpop.f32.mrb[0].mxu0
      %9054 = vmatprep.mubr.f32.mxu0 0.0
      %9055 = vmatmul.mubr.f32.gmra.mrb[0].mxu0 %v8854
      %v9056 = vpop.f32.mrb[0].mxu0
      %v9057 = vadd.f32 0.0, %v9056
      %v9058 = vpop.f32.mrb[0].mxu0
      %9059 = vmatprep.mubr.f32.mxu0 0.0
      %9060 = vmatmul.mubr.f32.gmra.mrb[0].mxu0 %v8857
      %v9061 = vpop.f32.mrb[0].mxu0
      %v9062 = vadd.f32 0.0, %v9061
      %v9063 = vpop.f32.mrb[0].mxu0
      %9064 = vmatprep.mubr.f32.mxu0 0.0
      %9065 = vmatmul.mubr.f32.gmra.mrb[0].mxu0 %v8860
      %v9066 = vpop.f32.mrb[0].mxu0
      %v9067 = vadd.f32 0.0, %v9066
      %v9068 = vpop.f32.mrb[0].mxu0
      %9069 = vmatprep.mubr.f32.mxu0 0.0
      %9070 = vmatmul.mubr.f32.gmra.mrb[0].mxu0 %v8863
      %v9071 = vpop.f32.mrb[0].mxu0
      %v9072 = vadd.f32 0.0, %v9071
      %v9073 = vpop.f32.mrb[0].mxu0
      %9074 = vmatprep.mubr.f32.mxu0 0.0
      %9075 = vmatmul.mubr.f32.gmra.mrb[0].mxu0 %v8866
      %v9076 = vpop.f32.mrb[0].mxu0
      %v9077 = vadd.f32 0.0, %v9076
      %v9078 = vpop.f32.mrb[0].mxu0
      %9079 = vmatprep.mubr.f32.mxu0 0.0
      %9080 = vmatmul.mubr.f32.gmra.mrb[0].mxu0 %v8869
      %v9081 = vpop.f32.mrb[0].mxu0
      %v9082 = vadd.f32 0.0, %v9081
      %v9083 = vpop.f32.mrb[0].mxu0
      %9084 = vmatprep.mubr.f32.mxu0 0.0
      %9085 = vmatmul.mubr.f32.gmra.mrb[0].mxu0 %v8872
      %v9086 = vpop.f32.mrb[0].mxu0
      %v9087 = vadd.f32 0.0, %v9086
      %v9088 = vpop.f32.mrb[0].mxu0
      %9089 = vmatprep.mubr.f32.mxu0 0.0
      %9090 = vmatmul.mubr.f32.gmra.mrb[0].mxu0 %v8875
      %v9091 = vpop.f32.mrb[0].mxu0
      %v9092 = vadd.f32 0.0, %v9091
      %v9093 = vpop.f32.mrb[0].mxu0
      %9094 = vmatprep.mubr.f32.mxu0 0.0
      %9095 = vmatmul.mubr.f32.gmra.mrb[0].mxu0 %v8878
      %v9096 = vpop.f32.mrb[0].mxu0
      %v9097 = vadd.f32 0.0, %v9096
      %v9098 = vpop.f32.mrb[0].mxu0
      %9099 = vmatprep.mubr.f32.mxu0 0.0
      %9100 = vmatmul.mubr.f32.gmra.mrb[0].mxu0 %v8881
      %v9101 = vpop.f32.mrb[0].mxu0
      %v9102 = vadd.f32 0.0, %v9101
      %v9103 = vpop.f32.mrb[0].mxu0
      %9104 = vmatprep.mubr.f32.mxu0 0.0
      %9105 = vmatmul.mubr.f32.gmra.mrb[0].mxu0 %v8884
      %v9106 = vpop.f32.mrb[0].mxu0
      %v9107 = vadd.f32 0.0, %v9106
      %v9108 = vpop.f32.mrb[0].mxu0
      %9109 = vmatprep.mubr.f32.mxu0 0.0
      %9110 = vmatmul.mubr.f32.gmra.mrb[0].mxu0 %v8887
      %v9111 = vpop.f32.mrb[0].mxu0
      %v9112 = vadd.f32 0.0, %v9111
      %v9113 = vpop.f32.mrb[0].mxu0
      %9114 = vmatprep.mubr.f32.mxu0 0.0
      %9115 = vmatmul.mubr.f32.gmra.mrb[0].mxu0 %v8890
      %v9116 = vpop.f32.mrb[0].mxu0
      %v9117 = vadd.f32 0.0, %v9116
      %v9118 = vpop.f32.mrb[0].mxu0
      %9119 = vmatprep.mubr.f32.mxu0 0.0
      %9120 = vmatmul.mubr.f32.gmra.mrb[0].mxu0 %v8893
      %v9121 = vpop.f32.mrb[0].mxu0
      %v9122 = vadd.f32 0.0, %v9121
      %v9123 = vpop.f32.mrb[0].mxu0
      %9124 = vmatprep.mubr.f32.mxu0 0.0
      %9125 = vmatmul.mubr.f32.gmra.mrb[0].mxu0 %v8896
      %v9126 = vpop.f32.mrb[0].mxu0
      %v9127 = vadd.f32 0.0, %v9126
      %v9128 = vpop.f32.mrb[0].mxu0
      %9129 = vmatprep.mubr.f32.mxu0 0.0
      %9130 = vmatmul.mubr.f32.gmra.mrb[0].mxu0 %v8899
      %v9131 = vpop.f32.mrb[0].mxu0
      %v9132 = vadd.f32 0.0, %v9131
      %v9133 = vpop.f32.mrb[0].mxu0
      %9134 = vmatprep.mubr.f32.mxu0 0.0
      %9135 = vmatmul.mubr.f32.gmra.mrb[0].mxu0 %v8902
      %v9136 = vpop.f32.mrb[0].mxu0
      %v9137 = vadd.f32 0.0, %v9136
      %v9138 = vpop.f32.mrb[0].mxu0
      %9139 = vmatprep.mubr.f32.mxu0 0.0
      %9140 = vmatmul.mubr.f32.gmra.mrb[0].mxu0 %v8905
      %v9141 = vpop.f32.mrb[0].mxu0
      %v9142 = vadd.f32 0.0, %v9141
      %v9143 = vpop.f32.mrb[0].mxu0
      %9144 = vmatprep.mubr.f32.mxu0 0.0
      %9145 = vmatmul.mubr.f32.gmra.mrb[0].mxu0 %v8908
      %v9146 = vpop.f32.mrb[0].mxu0
      %v9147 = vadd.f32 0.0, %v9146
      %v9148 = vpop.f32.mrb[0].mxu0
      %9149 = vmatprep.mubr.f32.mxu0 0.0
      %9150 = vmatmul.mubr.f32.gmra.mrb[0].mxu0 %v8911
      %v9151 = vpop.f32.mrb[0].mxu0
      %v9152 = vadd.f32 0.0, %v9151
      %v9153 = vpop.f32.mrb[0].mxu0
      %9154 = vmatprep.mubr.f32.mxu0 0.0
      %9155 = vmatmul.mubr.f32.gmra.mrb[0].mxu0 %v8914
      %v9156 = vpop.f32.mrb[0].mxu0
      %v9157 = vadd.f32 0.0, %v9156
      %v9158 = vpop.f32.mrb[0].mxu0
      %9159 = vmatprep.mubr.f32.mxu0 0.0
      %9160 = vmatmul.mubr.f32.gmra.mrb[0].mxu0 %v8917
      %v9161 = vpop.f32.mrb[0].mxu0
      %v9162 = vadd.f32 0.0, %v9161
      %v9163 = vpop.f32.mrb[0].mxu0
      %9164 = vmatprep.mubr.f32.mxu0 0.0
      %9165 = vmatmul.mubr.f32.gmra.mrb[0].mxu0 %v8920
      %v9166 = vpop.f32.mrb[0].mxu0
      %v9167 = vadd.f32 0.0, %v9166
      %v9168 = vpop.f32.mrb[0].mxu0
      %9169 = vdwg.mxu0
      %v9170 = vadd.f32 %v8740, %v8992
      %v9171 = vadd.f32 %v8741, %v8997
      %v9172 = vadd.f32 %v8742, %v9002
      %v9173 = vadd.f32 %v8743, %v9007
      %v9174 = vadd.f32 %v8744, %v9012
      %v9175 = vadd.f32 %v8745, %v9017
      %v9176 = vadd.f32 %v8746, %v9022
      %v9177 = vadd.f32 %v8747, %v9027
      %v9178 = vadd.f32 %v8748, %v9032
      %v9179 = vadd.f32 %v8749, %v9037
      %v9180 = vadd.f32 %v8750, %v9042
      %v9181 = vadd.f32 %v8751, %v9047
      %v9182 = vadd.f32 %v8752, %v9052
      %v9183 = vadd.f32 %v8753, %v9057
      %v9184 = vadd.f32 %v8754, %v9062
      %v9185 = vadd.f32 %v8755, %v9067
      %v9186 = vadd.f32 %v8756, %v9072
      %v9187 = vadd.f32 %v8757, %v9077
      %v9188 = vadd.f32 %v8758, %v9082
      %v9189 = vadd.f32 %v8759, %v9087
      %v9190 = vadd.f32 %v8760, %v9092
      %v9191 = vadd.f32 %v8761, %v9097
      %v9192 = vadd.f32 %v8762, %v9102
      %v9193 = vadd.f32 %v8763, %v9107
      %v9194 = vadd.f32 %v8764, %v9112
      %v9195 = vadd.f32 %v8765, %v9117
      %v9196 = vadd.f32 %v8766, %v9122
      %v9197 = vadd.f32 %v8767, %v9127
      %v9198 = vadd.f32 %v8768, %v9132
      %v9199 = vadd.f32 %v8769, %v9137
      %v9200 = vadd.f32 %v8770, %v9142
      %v9201 = vadd.f32 %v8771, %v9147
      %v9202 = vadd.f32 %v8772, %v9152
      %v9203 = vadd.f32 %v8773, %v9157
      %v9204 = vadd.f32 %v8774, %v9162
      %v9205 = vadd.f32 %v8775, %v9167
      %v9206 = vld [vmem:[#allocation3 + $0x25] sm:$0xff]
      %v9207 = vld [vmem:[#allocation3 + $0x2d] sm:$0xff]
      %v9208 = vld [vmem:[#allocation3 + $0x35] sm:$0xff]
      %v9209 = vld [vmem:[#allocation3 + $0x3d] sm:$0xff]
      %v9210 = vld [vmem:[#allocation3 + $0x45] sm:$0xff]
      %v9211 = vld [vmem:[#allocation3 + $0x4d] sm:$0xff]
      %v9212 = vld [vmem:[#allocation3 + $0x55] sm:$0xff]
      %v9213 = vld [vmem:[#allocation3 + $0x5d] sm:$0xff]
      %v9214 = vld [vmem:[#allocation3 + $0x65] sm:$0xff]
      %v9215 = vld [vmem:[#allocation3 + $0x6d] sm:$0xff]
      %v9216 = vld [vmem:[#allocation3 + $0x75] sm:$0xff]
      %v9217 = vld [vmem:[#allocation3 + $0x7d] sm:$0xff]
      %v9218 = vld [vmem:[#allocation3 + $0x85] sm:$0xff]
      %v9219 = vld [vmem:[#allocation3 + $0x8d] sm:$0xff]
      %v9220 = vld [vmem:[#allocation3 + $0x95] sm:$0xff]
      %v9221 = vld [vmem:[#allocation3 + $0x9d] sm:$0xff]
      %v9222 = vld [vmem:[#allocation3 + $0xa5] sm:$0xff]
      %v9223 = vld [vmem:[#allocation3 + $0xad] sm:$0xff]
      %v9224 = vld [vmem:[#allocation3 + $0xb5] sm:$0xff]
      %v9225 = vld [vmem:[#allocation3 + $0xbd] sm:$0xff]
      %v9226 = vld [vmem:[#allocation3 + $0xc5] sm:$0xff]
      %v9227 = vld [vmem:[#allocation3 + $0xcd] sm:$0xff]
      %v9228 = vld [vmem:[#allocation3 + $0xd5] sm:$0xff]
      %v9229 = vld [vmem:[#allocation3 + $0xdd] sm:$0xff]
      %v9230 = vld [vmem:[#allocation3 + $0xe5] sm:$0xff]
      %v9231 = vld [vmem:[#allocation3 + $0xed] sm:$0xff]
      %v9232 = vld [vmem:[#allocation3 + $0xf5] sm:$0xff]
      %v9233 = vld [vmem:[#allocation3 + $0xfd] sm:$0xff]
      %v9234 = vld [vmem:[#allocation3 + $0x105] sm:$0xff]
      %v9235 = vld [vmem:[#allocation3 + $0x10d] sm:$0xff]
      %v9236 = vld [vmem:[#allocation3 + $0x115] sm:$0xff]
      %v9237 = vld [vmem:[#allocation3 + $0x11d] sm:$0xff]
      %v9238 = vld [vmem:[#allocation3 + $0x125] sm:$0xff]
      %v9239 = vld [vmem:[#allocation3 + $0x12d] sm:$0xff]
      %v9240 = vld [vmem:[#allocation3 + $0x135] sm:$0xff]
      %v9241 = vld [vmem:[#allocation3 + $0x13d] sm:$0xff]
      %s9242 = scalar_lea.vmem %s5, 28
      %v9243 = vld [vmem:[%s9242] sm:$0xf]
      %v9245 = vsel %vm498, %v9206, 0
      %v9248 = vsel %vm498, %v9207, 0
      %v9251 = vsel %vm498, %v9208, 0
      %v9254 = vsel %vm498, %v9209, 0
      %v9257 = vsel %vm498, %v9210, 0
      %v9260 = vsel %vm498, %v9211, 0
      %v9263 = vsel %vm498, %v9212, 0
      %v9266 = vsel %vm498, %v9213, 0
      %v9269 = vsel %vm498, %v9214, 0
      %v9272 = vsel %vm498, %v9215, 0
      %v9275 = vsel %vm498, %v9216, 0
      %v9278 = vsel %vm498, %v9217, 0
      %v9281 = vsel %vm498, %v9218, 0
      %v9284 = vsel %vm498, %v9219, 0
      %v9287 = vsel %vm498, %v9220, 0
      %v9290 = vsel %vm498, %v9221, 0
      %v9293 = vsel %vm498, %v9222, 0
      %v9296 = vsel %vm498, %v9223, 0
      %v9299 = vsel %vm498, %v9224, 0
      %v9302 = vsel %vm498, %v9225, 0
      %v9305 = vsel %vm498, %v9226, 0
      %v9308 = vsel %vm498, %v9227, 0
      %v9311 = vsel %vm498, %v9228, 0
      %v9314 = vsel %vm498, %v9229, 0
      %v9317 = vsel %vm498, %v9230, 0
      %v9320 = vsel %vm498, %v9231, 0
      %v9323 = vsel %vm498, %v9232, 0
      %v9326 = vsel %vm498, %v9233, 0
      %v9329 = vsel %vm498, %v9234, 0
      %v9332 = vsel %vm498, %v9235, 0
      %v9335 = vsel %vm498, %v9236, 0
      %v9338 = vsel %vm498, %v9237, 0
      %v9341 = vsel %vm498, %v9238, 0
      %v9344 = vsel %vm498, %v9239, 0
      %v9347 = vsel %vm498, %v9240, 0
      %v9350 = vsel %vm498, %v9241, 0
      %v9353 = vsel %vm607, %v9243, 0
      %9355 = vmatprep.subr.mxu0 0.0
      %9356 = vmatpush1.msra.mxu0 %v9353
      %9357 = vmatprep.subr.mxu0 0.0
      %9358 = vmatpush1.msra.mxu0 0.0
      %9359 = vmatprep.subr.mxu0 0.0
      %9360 = vmatpush1.msra.mxu0 0.0
      %9361 = vmatprep.subr.mxu0 0.0
      %9362 = vmatpush1.msra.mxu0 0.0
      %9363 = vmatprep.subr.mxu0 0.0
      %9364 = vmatpush1.msra.mxu0 0.0
      %9365 = vmatprep.subr.mxu0 0.0
      %9366 = vmatpush1.msra.mxu0 0.0
      %9367 = vmatprep.subr.mxu0 0.0
      %9368 = vmatpush1.msra.mxu0 0.0
      %9369 = vmatprep.subr.mxu0 0.0
      %9370 = vmatpush1.msra.mxu0 0.0
      %9371 = vmatprep.subr.mxu0 0.0
      %9372 = vmatpush1.msra.mxu0 0.0
      %9373 = vmatprep.subr.mxu0 0.0
      %9374 = vmatpush1.msra.mxu0 0.0
      %9375 = vmatprep.subr.mxu0 0.0
      %9376 = vmatpush1.msra.mxu0 0.0
      %9377 = vmatprep.subr.mxu0 0.0
      %9378 = vmatpush1.msra.mxu0 0.0
      %9379 = vmatprep.subr.mxu0 0.0
      %9380 = vmatpush1.msra.mxu0 0.0
      %9381 = vmatprep.subr.mxu0 0.0
      %9382 = vmatpush1.msra.mxu0 0.0
      %9383 = vmatprep.subr.mxu0 0.0
      %9384 = vmatpush1.msra.mxu0 0.0
      %9385 = vmatprep.subr.mxu0 0.0
      %9386 = vmatpush1.msra.mxu0 0.0
      %9387 = vmatprep.subr.mxu0 0.0
      %9388 = vmatpush1.msra.mxu0 0.0
      %9389 = vmatprep.subr.mxu0 0.0
      %9390 = vmatpush1.msra.mxu0 0.0
      %9391 = vmatprep.subr.mxu0 0.0
      %9392 = vmatpush1.msra.mxu0 0.0
      %9393 = vmatprep.subr.mxu0 0.0
      %9394 = vmatpush1.msra.mxu0 0.0
      %9395 = vmatprep.subr.mxu0 0.0
      %9396 = vmatpush1.msra.mxu0 0.0
      %9397 = vmatprep.subr.mxu0 0.0
      %9398 = vmatpush1.msra.mxu0 0.0
      %9399 = vmatprep.subr.mxu0 0.0
      %9400 = vmatpush1.msra.mxu0 0.0
      %9401 = vmatprep.subr.mxu0 0.0
      %9402 = vmatpush1.msra.mxu0 0.0
      %9403 = vmatprep.subr.mxu0 0.0
      %9404 = vmatpush1.msra.mxu0 0.0
      %9405 = vmatprep.subr.mxu0 0.0
      %9406 = vmatpush1.msra.mxu0 0.0
      %9407 = vmatprep.subr.mxu0 0.0
      %9408 = vmatpush1.msra.mxu0 0.0
      %9409 = vmatprep.subr.mxu0 0.0
      %9410 = vmatpush1.msra.mxu0 0.0
      %9411 = vmatprep.subr.mxu0 0.0
      %9412 = vmatpush1.msra.mxu0 0.0
      %9413 = vmatprep.subr.mxu0 0.0
      %9414 = vmatpush1.msra.mxu0 0.0
      %9415 = vmatprep.subr.mxu0 0.0
      %9416 = vmatpush1.msra.mxu0 0.0
      %9417 = vmatprep.subr.mxu0 0.0
      %9418 = vmatpush1.msra.mxu0 0.0
      %9419 = vmatprep.mubr.f32.mxu0 0.0
      %9420 = vmatmul.mubr.f32.gmra.mrb[0].mxu0 %v9245
      %v9421 = vpop.f32.mrb[0].mxu0
      %v9422 = vadd.f32 0.0, %v9421
      %v9423 = vpop.f32.mrb[0].mxu0
      %9424 = vmatprep.mubr.f32.mxu0 0.0
      %9425 = vmatmul.mubr.f32.gmra.mrb[0].mxu0 %v9248
      %v9426 = vpop.f32.mrb[0].mxu0
      %v9427 = vadd.f32 0.0, %v9426
      %v9428 = vpop.f32.mrb[0].mxu0
      %9429 = vmatprep.mubr.f32.mxu0 0.0
      %9430 = vmatmul.mubr.f32.gmra.mrb[0].mxu0 %v9251
      %v9431 = vpop.f32.mrb[0].mxu0
      %v9432 = vadd.f32 0.0, %v9431
      %v9433 = vpop.f32.mrb[0].mxu0
      %9434 = vmatprep.mubr.f32.mxu0 0.0
      %9435 = vmatmul.mubr.f32.gmra.mrb[0].mxu0 %v9254
      %v9436 = vpop.f32.mrb[0].mxu0
      %v9437 = vadd.f32 0.0, %v9436
      %v9438 = vpop.f32.mrb[0].mxu0
      %9439 = vmatprep.mubr.f32.mxu0 0.0
      %9440 = vmatmul.mubr.f32.gmra.mrb[0].mxu0 %v9257
      %v9441 = vpop.f32.mrb[0].mxu0
      %v9442 = vadd.f32 0.0, %v9441
      %v9443 = vpop.f32.mrb[0].mxu0
      %9444 = vmatprep.mubr.f32.mxu0 0.0
      %9445 = vmatmul.mubr.f32.gmra.mrb[0].mxu0 %v9260
      %v9446 = vpop.f32.mrb[0].mxu0
      %v9447 = vadd.f32 0.0, %v9446
      %v9448 = vpop.f32.mrb[0].mxu0
      %9449 = vmatprep.mubr.f32.mxu0 0.0
      %9450 = vmatmul.mubr.f32.gmra.mrb[0].mxu0 %v9263
      %v9451 = vpop.f32.mrb[0].mxu0
      %v9452 = vadd.f32 0.0, %v9451
      %v9453 = vpop.f32.mrb[0].mxu0
      %9454 = vmatprep.mubr.f32.mxu0 0.0
      %9455 = vmatmul.mubr.f32.gmra.mrb[0].mxu0 %v9266
      %v9456 = vpop.f32.mrb[0].mxu0
      %v9457 = vadd.f32 0.0, %v9456
      %v9458 = vpop.f32.mrb[0].mxu0
      %9459 = vmatprep.mubr.f32.mxu0 0.0
      %9460 = vmatmul.mubr.f32.gmra.mrb[0].mxu0 %v9269
      %v9461 = vpop.f32.mrb[0].mxu0
      %v9462 = vadd.f32 0.0, %v9461
      %v9463 = vpop.f32.mrb[0].mxu0
      %9464 = vmatprep.mubr.f32.mxu0 0.0
      %9465 = vmatmul.mubr.f32.gmra.mrb[0].mxu0 %v9272
      %v9466 = vpop.f32.mrb[0].mxu0
      %v9467 = vadd.f32 0.0, %v9466
      %v9468 = vpop.f32.mrb[0].mxu0
      %9469 = vmatprep.mubr.f32.mxu0 0.0
      %9470 = vmatmul.mubr.f32.gmra.mrb[0].mxu0 %v9275
      %v9471 = vpop.f32.mrb[0].mxu0
      %v9472 = vadd.f32 0.0, %v9471
      %v9473 = vpop.f32.mrb[0].mxu0
      %9474 = vmatprep.mubr.f32.mxu0 0.0
      %9475 = vmatmul.mubr.f32.gmra.mrb[0].mxu0 %v9278
      %v9476 = vpop.f32.mrb[0].mxu0
      %v9477 = vadd.f32 0.0, %v9476
      %v9478 = vpop.f32.mrb[0].mxu0
      %9479 = vmatprep.mubr.f32.mxu0 0.0
      %9480 = vmatmul.mubr.f32.gmra.mrb[0].mxu0 %v9281
      %v9481 = vpop.f32.mrb[0].mxu0
      %v9482 = vadd.f32 0.0, %v9481
      %v9483 = vpop.f32.mrb[0].mxu0
      %9484 = vmatprep.mubr.f32.mxu0 0.0
      %9485 = vmatmul.mubr.f32.gmra.mrb[0].mxu0 %v9284
      %v9486 = vpop.f32.mrb[0].mxu0
      %v9487 = vadd.f32 0.0, %v9486
      %v9488 = vpop.f32.mrb[0].mxu0
      %9489 = vmatprep.mubr.f32.mxu0 0.0
      %9490 = vmatmul.mubr.f32.gmra.mrb[0].mxu0 %v9287
      %v9491 = vpop.f32.mrb[0].mxu0
      %v9492 = vadd.f32 0.0, %v9491
      %v9493 = vpop.f32.mrb[0].mxu0
      %9494 = vmatprep.mubr.f32.mxu0 0.0
      %9495 = vmatmul.mubr.f32.gmra.mrb[0].mxu0 %v9290
      %v9496 = vpop.f32.mrb[0].mxu0
      %v9497 = vadd.f32 0.0, %v9496
      %v9498 = vpop.f32.mrb[0].mxu0
      %9499 = vmatprep.mubr.f32.mxu0 0.0
      %9500 = vmatmul.mubr.f32.gmra.mrb[0].mxu0 %v9293
      %v9501 = vpop.f32.mrb[0].mxu0
      %v9502 = vadd.f32 0.0, %v9501
      %v9503 = vpop.f32.mrb[0].mxu0
      %9504 = vmatprep.mubr.f32.mxu0 0.0
      %9505 = vmatmul.mubr.f32.gmra.mrb[0].mxu0 %v9296
      %v9506 = vpop.f32.mrb[0].mxu0
      %v9507 = vadd.f32 0.0, %v9506
      %v9508 = vpop.f32.mrb[0].mxu0
      %9509 = vmatprep.mubr.f32.mxu0 0.0
      %9510 = vmatmul.mubr.f32.gmra.mrb[0].mxu0 %v9299
      %v9511 = vpop.f32.mrb[0].mxu0
      %v9512 = vadd.f32 0.0, %v9511
      %v9513 = vpop.f32.mrb[0].mxu0
      %9514 = vmatprep.mubr.f32.mxu0 0.0
      %9515 = vmatmul.mubr.f32.gmra.mrb[0].mxu0 %v9302
      %v9516 = vpop.f32.mrb[0].mxu0
      %v9517 = vadd.f32 0.0, %v9516
      %v9518 = vpop.f32.mrb[0].mxu0
      %9519 = vmatprep.mubr.f32.mxu0 0.0
      %9520 = vmatmul.mubr.f32.gmra.mrb[0].mxu0 %v9305
      %v9521 = vpop.f32.mrb[0].mxu0
      %v9522 = vadd.f32 0.0, %v9521
      %v9523 = vpop.f32.mrb[0].mxu0
      %9524 = vmatprep.mubr.f32.mxu0 0.0
      %9525 = vmatmul.mubr.f32.gmra.mrb[0].mxu0 %v9308
      %v9526 = vpop.f32.mrb[0].mxu0
      %v9527 = vadd.f32 0.0, %v9526
      %v9528 = vpop.f32.mrb[0].mxu0
      %9529 = vmatprep.mubr.f32.mxu0 0.0
      %9530 = vmatmul.mubr.f32.gmra.mrb[0].mxu0 %v9311
      %v9531 = vpop.f32.mrb[0].mxu0
      %v9532 = vadd.f32 0.0, %v9531
      %v9533 = vpop.f32.mrb[0].mxu0
      %9534 = vmatprep.mubr.f32.mxu0 0.0
      %9535 = vmatmul.mubr.f32.gmra.mrb[0].mxu0 %v9314
      %v9536 = vpop.f32.mrb[0].mxu0
      %v9537 = vadd.f32 0.0, %v9536
      %v9538 = vpop.f32.mrb[0].mxu0
      %9539 = vmatprep.mubr.f32.mxu0 0.0
      %9540 = vmatmul.mubr.f32.gmra.mrb[0].mxu0 %v9317
      %v9541 = vpop.f32.mrb[0].mxu0
      %v9542 = vadd.f32 0.0, %v9541
      %v9543 = vpop.f32.mrb[0].mxu0
      %9544 = vmatprep.mubr.f32.mxu0 0.0
      %9545 = vmatmul.mubr.f32.gmra.mrb[0].mxu0 %v9320
      %v9546 = vpop.f32.mrb[0].mxu0
      %v9547 = vadd.f32 0.0, %v9546
      %v9548 = vpop.f32.mrb[0].mxu0
      %9549 = vmatprep.mubr.f32.mxu0 0.0
      %9550 = vmatmul.mubr.f32.gmra.mrb[0].mxu0 %v9323
      %v9551 = vpop.f32.mrb[0].mxu0
      %v9552 = vadd.f32 0.0, %v9551
      %v9553 = vpop.f32.mrb[0].mxu0
      %9554 = vmatprep.mubr.f32.mxu0 0.0
      %9555 = vmatmul.mubr.f32.gmra.mrb[0].mxu0 %v9326
      %v9556 = vpop.f32.mrb[0].mxu0
      %v9557 = vadd.f32 0.0, %v9556
      %v9558 = vpop.f32.mrb[0].mxu0
      %9559 = vmatprep.mubr.f32.mxu0 0.0
      %9560 = vmatmul.mubr.f32.gmra.mrb[0].mxu0 %v9329
      %v9561 = vpop.f32.mrb[0].mxu0
      %v9562 = vadd.f32 0.0, %v9561
      %v9563 = vpop.f32.mrb[0].mxu0
      %9564 = vmatprep.mubr.f32.mxu0 0.0
      %9565 = vmatmul.mubr.f32.gmra.mrb[0].mxu0 %v9332
      %v9566 = vpop.f32.mrb[0].mxu0
      %v9567 = vadd.f32 0.0, %v9566
      %v9568 = vpop.f32.mrb[0].mxu0
      %9569 = vmatprep.mubr.f32.mxu0 0.0
      %9570 = vmatmul.mubr.f32.gmra.mrb[0].mxu0 %v9335
      %v9571 = vpop.f32.mrb[0].mxu0
      %v9572 = vadd.f32 0.0, %v9571
      %v9573 = vpop.f32.mrb[0].mxu0
      %9574 = vmatprep.mubr.f32.mxu0 0.0
      %9575 = vmatmul.mubr.f32.gmra.mrb[0].mxu0 %v9338
      %v9576 = vpop.f32.mrb[0].mxu0
      %v9577 = vadd.f32 0.0, %v9576
      %v9578 = vpop.f32.mrb[0].mxu0
      %9579 = vmatprep.mubr.f32.mxu0 0.0
      %9580 = vmatmul.mubr.f32.gmra.mrb[0].mxu0 %v9341
      %v9581 = vpop.f32.mrb[0].mxu0
      %v9582 = vadd.f32 0.0, %v9581
      %v9583 = vpop.f32.mrb[0].mxu0
      %9584 = vmatprep.mubr.f32.mxu0 0.0
      %9585 = vmatmul.mubr.f32.gmra.mrb[0].mxu0 %v9344
      %v9586 = vpop.f32.mrb[0].mxu0
      %v9587 = vadd.f32 0.0, %v9586
      %v9588 = vpop.f32.mrb[0].mxu0
      %9589 = vmatprep.mubr.f32.mxu0 0.0
      %9590 = vmatmul.mubr.f32.gmra.mrb[0].mxu0 %v9347
      %v9591 = vpop.f32.mrb[0].mxu0
      %v9592 = vadd.f32 0.0, %v9591
      %v9593 = vpop.f32.mrb[0].mxu0
      %9594 = vmatprep.mubr.f32.mxu0 0.0
      %9595 = vmatmul.mubr.f32.gmra.mrb[0].mxu0 %v9350
      %v9596 = vpop.f32.mrb[0].mxu0
      %v9597 = vadd.f32 0.0, %v9596
      %v9598 = vpop.f32.mrb[0].mxu0
      %9599 = vdwg.mxu0
      %v9600 = vadd.f32 %v9170, %v9422
      %v9601 = vadd.f32 %v9171, %v9427
      %v9602 = vadd.f32 %v9172, %v9432
      %v9603 = vadd.f32 %v9173, %v9437
      %v9604 = vadd.f32 %v9174, %v9442
      %v9605 = vadd.f32 %v9175, %v9447
      %v9606 = vadd.f32 %v9176, %v9452
      %v9607 = vadd.f32 %v9177, %v9457
      %v9608 = vadd.f32 %v9178, %v9462
      %v9609 = vadd.f32 %v9179, %v9467
      %v9610 = vadd.f32 %v9180, %v9472
      %v9611 = vadd.f32 %v9181, %v9477
      %v9612 = vadd.f32 %v9182, %v9482
      %v9613 = vadd.f32 %v9183, %v9487
      %v9614 = vadd.f32 %v9184, %v9492
      %v9615 = vadd.f32 %v9185, %v9497
      %v9616 = vadd.f32 %v9186, %v9502
      %v9617 = vadd.f32 %v9187, %v9507
      %v9618 = vadd.f32 %v9188, %v9512
      %v9619 = vadd.f32 %v9189, %v9517
      %v9620 = vadd.f32 %v9190, %v9522
      %v9621 = vadd.f32 %v9191, %v9527
      %v9622 = vadd.f32 %v9192, %v9532
      %v9623 = vadd.f32 %v9193, %v9537
      %v9624 = vadd.f32 %v9194, %v9542
      %v9625 = vadd.f32 %v9195, %v9547
      %v9626 = vadd.f32 %v9196, %v9552
      %v9627 = vadd.f32 %v9197, %v9557
      %v9628 = vadd.f32 %v9198, %v9562
      %v9629 = vadd.f32 %v9199, %v9567
      %v9630 = vadd.f32 %v9200, %v9572
      %v9631 = vadd.f32 %v9201, %v9577
      %v9632 = vadd.f32 %v9202, %v9582
      %v9633 = vadd.f32 %v9203, %v9587
      %v9634 = vadd.f32 %v9204, %v9592
      %v9635 = vadd.f32 %v9205, %v9597
      %v9636 = vld [vmem:[#allocation3 + $0x26] sm:$0xff]
      %v9637 = vld [vmem:[#allocation3 + $0x2e] sm:$0xff]
      %v9638 = vld [vmem:[#allocation3 + $0x36] sm:$0xff]
      %v9639 = vld [vmem:[#allocation3 + $0x3e] sm:$0xff]
      %v9640 = vld [vmem:[#allocation3 + $0x46] sm:$0xff]
      %v9641 = vld [vmem:[#allocation3 + $0x4e] sm:$0xff]
      %v9642 = vld [vmem:[#allocation3 + $0x56] sm:$0xff]
      %v9643 = vld [vmem:[#allocation3 + $0x5e] sm:$0xff]
      %v9644 = vld [vmem:[#allocation3 + $0x66] sm:$0xff]
      %v9645 = vld [vmem:[#allocation3 + $0x6e] sm:$0xff]
      %v9646 = vld [vmem:[#allocation3 + $0x76] sm:$0xff]
      %v9647 = vld [vmem:[#allocation3 + $0x7e] sm:$0xff]
      %v9648 = vld [vmem:[#allocation3 + $0x86] sm:$0xff]
      %v9649 = vld [vmem:[#allocation3 + $0x8e] sm:$0xff]
      %v9650 = vld [vmem:[#allocation3 + $0x96] sm:$0xff]
      %v9651 = vld [vmem:[#allocation3 + $0x9e] sm:$0xff]
      %v9652 = vld [vmem:[#allocation3 + $0xa6] sm:$0xff]
      %v9653 = vld [vmem:[#allocation3 + $0xae] sm:$0xff]
      %v9654 = vld [vmem:[#allocation3 + $0xb6] sm:$0xff]
      %v9655 = vld [vmem:[#allocation3 + $0xbe] sm:$0xff]
      %v9656 = vld [vmem:[#allocation3 + $0xc6] sm:$0xff]
      %v9657 = vld [vmem:[#allocation3 + $0xce] sm:$0xff]
      %v9658 = vld [vmem:[#allocation3 + $0xd6] sm:$0xff]
      %v9659 = vld [vmem:[#allocation3 + $0xde] sm:$0xff]
      %v9660 = vld [vmem:[#allocation3 + $0xe6] sm:$0xff]
      %v9661 = vld [vmem:[#allocation3 + $0xee] sm:$0xff]
      %v9662 = vld [vmem:[#allocation3 + $0xf6] sm:$0xff]
      %v9663 = vld [vmem:[#allocation3 + $0xfe] sm:$0xff]
      %v9664 = vld [vmem:[#allocation3 + $0x106] sm:$0xff]
      %v9665 = vld [vmem:[#allocation3 + $0x10e] sm:$0xff]
      %v9666 = vld [vmem:[#allocation3 + $0x116] sm:$0xff]
      %v9667 = vld [vmem:[#allocation3 + $0x11e] sm:$0xff]
      %v9668 = vld [vmem:[#allocation3 + $0x126] sm:$0xff]
      %v9669 = vld [vmem:[#allocation3 + $0x12e] sm:$0xff]
      %v9670 = vld [vmem:[#allocation3 + $0x136] sm:$0xff]
      %v9671 = vld [vmem:[#allocation3 + $0x13e] sm:$0xff]
      %s9672 = scalar_lea.vmem %s5, 32
      %v9673 = vld [vmem:[%s9672] sm:$0xf]
      %v9675 = vsel %vm498, %v9636, 0
      %v9678 = vsel %vm498, %v9637, 0
      %v9681 = vsel %vm498, %v9638, 0
      %v9684 = vsel %vm498, %v9639, 0
      %v9687 = vsel %vm498, %v9640, 0
      %v9690 = vsel %vm498, %v9641, 0
      %v9693 = vsel %vm498, %v9642, 0
      %v9696 = vsel %vm498, %v9643, 0
      %v9699 = vsel %vm498, %v9644, 0
      %v9702 = vsel %vm498, %v9645, 0
      %v9705 = vsel %vm498, %v9646, 0
      %v9708 = vsel %vm498, %v9647, 0
      %v9711 = vsel %vm498, %v9648, 0
      %v9714 = vsel %vm498, %v9649, 0
      %v9717 = vsel %vm498, %v9650, 0
      %v9720 = vsel %vm498, %v9651, 0
      %v9723 = vsel %vm498, %v9652, 0
      %v9726 = vsel %vm498, %v9653, 0
      %v9729 = vsel %vm498, %v9654, 0
      %v9732 = vsel %vm498, %v9655, 0
      %v9735 = vsel %vm498, %v9656, 0
      %v9738 = vsel %vm498, %v9657, 0
      %v9741 = vsel %vm498, %v9658, 0
      %v9744 = vsel %vm498, %v9659, 0
      %v9747 = vsel %vm498, %v9660, 0
      %v9750 = vsel %vm498, %v9661, 0
      %v9753 = vsel %vm498, %v9662, 0
      %v9756 = vsel %vm498, %v9663, 0
      %v9759 = vsel %vm498, %v9664, 0
      %v9762 = vsel %vm498, %v9665, 0
      %v9765 = vsel %vm498, %v9666, 0
      %v9768 = vsel %vm498, %v9667, 0
      %v9771 = vsel %vm498, %v9668, 0
      %v9774 = vsel %vm498, %v9669, 0
      %v9777 = vsel %vm498, %v9670, 0
      %v9780 = vsel %vm498, %v9671, 0
      %v9783 = vsel %vm607, %v9673, 0
      %9785 = vmatprep.subr.mxu0 0.0
      %9786 = vmatpush1.msra.mxu0 %v9783
      %9787 = vmatprep.subr.mxu0 0.0
      %9788 = vmatpush1.msra.mxu0 0.0
      %9789 = vmatprep.subr.mxu0 0.0
      %9790 = vmatpush1.msra.mxu0 0.0
      %9791 = vmatprep.subr.mxu0 0.0
      %9792 = vmatpush1.msra.mxu0 0.0
      %9793 = vmatprep.subr.mxu0 0.0
      %9794 = vmatpush1.msra.mxu0 0.0
      %9795 = vmatprep.subr.mxu0 0.0
      %9796 = vmatpush1.msra.mxu0 0.0
      %9797 = vmatprep.subr.mxu0 0.0
      %9798 = vmatpush1.msra.mxu0 0.0
      %9799 = vmatprep.subr.mxu0 0.0
      %9800 = vmatpush1.msra.mxu0 0.0
      %9801 = vmatprep.subr.mxu0 0.0
      %9802 = vmatpush1.msra.mxu0 0.0
      %9803 = vmatprep.subr.mxu0 0.0
      %9804 = vmatpush1.msra.mxu0 0.0
      %9805 = vmatprep.subr.mxu0 0.0
      %9806 = vmatpush1.msra.mxu0 0.0
      %9807 = vmatprep.subr.mxu0 0.0
      %9808 = vmatpush1.msra.mxu0 0.0
      %9809 = vmatprep.subr.mxu0 0.0
      %9810 = vmatpush1.msra.mxu0 0.0
      %9811 = vmatprep.subr.mxu0 0.0
      %9812 = vmatpush1.msra.mxu0 0.0
      %9813 = vmatprep.subr.mxu0 0.0
      %9814 = vmatpush1.msra.mxu0 0.0
      %9815 = vmatprep.subr.mxu0 0.0
      %9816 = vmatpush1.msra.mxu0 0.0
      %9817 = vmatprep.subr.mxu0 0.0
      %9818 = vmatpush1.msra.mxu0 0.0
      %9819 = vmatprep.subr.mxu0 0.0
      %9820 = vmatpush1.msra.mxu0 0.0
      %9821 = vmatprep.subr.mxu0 0.0
      %9822 = vmatpush1.msra.mxu0 0.0
      %9823 = vmatprep.subr.mxu0 0.0
      %9824 = vmatpush1.msra.mxu0 0.0
      %9825 = vmatprep.subr.mxu0 0.0
      %9826 = vmatpush1.msra.mxu0 0.0
      %9827 = vmatprep.subr.mxu0 0.0
      %9828 = vmatpush1.msra.mxu0 0.0
      %9829 = vmatprep.subr.mxu0 0.0
      %9830 = vmatpush1.msra.mxu0 0.0
      %9831 = vmatprep.subr.mxu0 0.0
      %9832 = vmatpush1.msra.mxu0 0.0
      %9833 = vmatprep.subr.mxu0 0.0
      %9834 = vmatpush1.msra.mxu0 0.0
      %9835 = vmatprep.subr.mxu0 0.0
      %9836 = vmatpush1.msra.mxu0 0.0
      %9837 = vmatprep.subr.mxu0 0.0
      %9838 = vmatpush1.msra.mxu0 0.0
      %9839 = vmatprep.subr.mxu0 0.0
      %9840 = vmatpush1.msra.mxu0 0.0
      %9841 = vmatprep.subr.mxu0 0.0
      %9842 = vmatpush1.msra.mxu0 0.0
      %9843 = vmatprep.subr.mxu0 0.0
      %9844 = vmatpush1.msra.mxu0 0.0
      %9845 = vmatprep.subr.mxu0 0.0
      %9846 = vmatpush1.msra.mxu0 0.0
      %9847 = vmatprep.subr.mxu0 0.0
      %9848 = vmatpush1.msra.mxu0 0.0
      %9849 = vmatprep.mubr.f32.mxu0 0.0
      %9850 = vmatmul.mubr.f32.gmra.mrb[0].mxu0 %v9675
      %v9851 = vpop.f32.mrb[0].mxu0
      %v9852 = vadd.f32 0.0, %v9851
      %v9853 = vpop.f32.mrb[0].mxu0
      %9854 = vmatprep.mubr.f32.mxu0 0.0
      %9855 = vmatmul.mubr.f32.gmra.mrb[0].mxu0 %v9678
      %v9856 = vpop.f32.mrb[0].mxu0
      %v9857 = vadd.f32 0.0, %v9856
      %v9858 = vpop.f32.mrb[0].mxu0
      %9859 = vmatprep.mubr.f32.mxu0 0.0
      %9860 = vmatmul.mubr.f32.gmra.mrb[0].mxu0 %v9681
      %v9861 = vpop.f32.mrb[0].mxu0
      %v9862 = vadd.f32 0.0, %v9861
      %v9863 = vpop.f32.mrb[0].mxu0
      %9864 = vmatprep.mubr.f32.mxu0 0.0
      %9865 = vmatmul.mubr.f32.gmra.mrb[0].mxu0 %v9684
      %v9866 = vpop.f32.mrb[0].mxu0
      %v9867 = vadd.f32 0.0, %v9866
      %v9868 = vpop.f32.mrb[0].mxu0
      %9869 = vmatprep.mubr.f32.mxu0 0.0
      %9870 = vmatmul.mubr.f32.gmra.mrb[0].mxu0 %v9687
      %v9871 = vpop.f32.mrb[0].mxu0
      %v9872 = vadd.f32 0.0, %v9871
      %v9873 = vpop.f32.mrb[0].mxu0
      %9874 = vmatprep.mubr.f32.mxu0 0.0
      %9875 = vmatmul.mubr.f32.gmra.mrb[0].mxu0 %v9690
      %v9876 = vpop.f32.mrb[0].mxu0
      %v9877 = vadd.f32 0.0, %v9876
      %v9878 = vpop.f32.mrb[0].mxu0
      %9879 = vmatprep.mubr.f32.mxu0 0.0
      %9880 = vmatmul.mubr.f32.gmra.mrb[0].mxu0 %v9693
      %v9881 = vpop.f32.mrb[0].mxu0
      %v9882 = vadd.f32 0.0, %v9881
      %v9883 = vpop.f32.mrb[0].mxu0
      %9884 = vmatprep.mubr.f32.mxu0 0.0
      %9885 = vmatmul.mubr.f32.gmra.mrb[0].mxu0 %v9696
      %v9886 = vpop.f32.mrb[0].mxu0
      %v9887 = vadd.f32 0.0, %v9886
      %v9888 = vpop.f32.mrb[0].mxu0
      %9889 = vmatprep.mubr.f32.mxu0 0.0
      %9890 = vmatmul.mubr.f32.gmra.mrb[0].mxu0 %v9699
      %v9891 = vpop.f32.mrb[0].mxu0
      %v9892 = vadd.f32 0.0, %v9891
      %v9893 = vpop.f32.mrb[0].mxu0
      %9894 = vmatprep.mubr.f32.mxu0 0.0
      %9895 = vmatmul.mubr.f32.gmra.mrb[0].mxu0 %v9702
      %v9896 = vpop.f32.mrb[0].mxu0
      %v9897 = vadd.f32 0.0, %v9896
      %v9898 = vpop.f32.mrb[0].mxu0
      %9899 = vmatprep.mubr.f32.mxu0 0.0
      %9900 = vmatmul.mubr.f32.gmra.mrb[0].mxu0 %v9705
      %v9901 = vpop.f32.mrb[0].mxu0
      %v9902 = vadd.f32 0.0, %v9901
      %v9903 = vpop.f32.mrb[0].mxu0
      %9904 = vmatprep.mubr.f32.mxu0 0.0
      %9905 = vmatmul.mubr.f32.gmra.mrb[0].mxu0 %v9708
      %v9906 = vpop.f32.mrb[0].mxu0
      %v9907 = vadd.f32 0.0, %v9906
      %v9908 = vpop.f32.mrb[0].mxu0
      %9909 = vmatprep.mubr.f32.mxu0 0.0
      %9910 = vmatmul.mubr.f32.gmra.mrb[0].mxu0 %v9711
      %v9911 = vpop.f32.mrb[0].mxu0
      %v9912 = vadd.f32 0.0, %v9911
      %v9913 = vpop.f32.mrb[0].mxu0
      %9914 = vmatprep.mubr.f32.mxu0 0.0
      %9915 = vmatmul.mubr.f32.gmra.mrb[0].mxu0 %v9714
      %v9916 = vpop.f32.mrb[0].mxu0
      %v9917 = vadd.f32 0.0, %v9916
      %v9918 = vpop.f32.mrb[0].mxu0
      %9919 = vmatprep.mubr.f32.mxu0 0.0
      %9920 = vmatmul.mubr.f32.gmra.mrb[0].mxu0 %v9717
      %v9921 = vpop.f32.mrb[0].mxu0
      %v9922 = vadd.f32 0.0, %v9921
      %v9923 = vpop.f32.mrb[0].mxu0
      %9924 = vmatprep.mubr.f32.mxu0 0.0
      %9925 = vmatmul.mubr.f32.gmra.mrb[0].mxu0 %v9720
      %v9926 = vpop.f32.mrb[0].mxu0
      %v9927 = vadd.f32 0.0, %v9926
      %v9928 = vpop.f32.mrb[0].mxu0
      %9929 = vmatprep.mubr.f32.mxu0 0.0
      %9930 = vmatmul.mubr.f32.gmra.mrb[0].mxu0 %v9723
      %v9931 = vpop.f32.mrb[0].mxu0
      %v9932 = vadd.f32 0.0, %v9931
      %v9933 = vpop.f32.mrb[0].mxu0
      %9934 = vmatprep.mubr.f32.mxu0 0.0
      %9935 = vmatmul.mubr.f32.gmra.mrb[0].mxu0 %v9726
      %v9936 = vpop.f32.mrb[0].mxu0
      %v9937 = vadd.f32 0.0, %v9936
      %v9938 = vpop.f32.mrb[0].mxu0
      %9939 = vmatprep.mubr.f32.mxu0 0.0
      %9940 = vmatmul.mubr.f32.gmra.mrb[0].mxu0 %v9729
      %v9941 = vpop.f32.mrb[0].mxu0
      %v9942 = vadd.f32 0.0, %v9941
      %v9943 = vpop.f32.mrb[0].mxu0
      %9944 = vmatprep.mubr.f32.mxu0 0.0
      %9945 = vmatmul.mubr.f32.gmra.mrb[0].mxu0 %v9732
      %v9946 = vpop.f32.mrb[0].mxu0
      %v9947 = vadd.f32 0.0, %v9946
      %v9948 = vpop.f32.mrb[0].mxu0
      %9949 = vmatprep.mubr.f32.mxu0 0.0
      %9950 = vmatmul.mubr.f32.gmra.mrb[0].mxu0 %v9735
      %v9951 = vpop.f32.mrb[0].mxu0
      %v9952 = vadd.f32 0.0, %v9951
      %v9953 = vpop.f32.mrb[0].mxu0
      %9954 = vmatprep.mubr.f32.mxu0 0.0
      %9955 = vmatmul.mubr.f32.gmra.mrb[0].mxu0 %v9738
      %v9956 = vpop.f32.mrb[0].mxu0
      %v9957 = vadd.f32 0.0, %v9956
      %v9958 = vpop.f32.mrb[0].mxu0
      %9959 = vmatprep.mubr.f32.mxu0 0.0
      %9960 = vmatmul.mubr.f32.gmra.mrb[0].mxu0 %v9741
      %v9961 = vpop.f32.mrb[0].mxu0
      %v9962 = vadd.f32 0.0, %v9961
      %v9963 = vpop.f32.mrb[0].mxu0
      %9964 = vmatprep.mubr.f32.mxu0 0.0
      %9965 = vmatmul.mubr.f32.gmra.mrb[0].mxu0 %v9744
      %v9966 = vpop.f32.mrb[0].mxu0
      %v9967 = vadd.f32 0.0, %v9966
      %v9968 = vpop.f32.mrb[0].mxu0
      %9969 = vmatprep.mubr.f32.mxu0 0.0
      %9970 = vmatmul.mubr.f32.gmra.mrb[0].mxu0 %v9747
      %v9971 = vpop.f32.mrb[0].mxu0
      %v9972 = vadd.f32 0.0, %v9971
      %v9973 = vpop.f32.mrb[0].mxu0
      %9974 = vmatprep.mubr.f32.mxu0 0.0
      %9975 = vmatmul.mubr.f32.gmra.mrb[0].mxu0 %v9750
      %v9976 = vpop.f32.mrb[0].mxu0
      %v9977 = vadd.f32 0.0, %v9976
      %v9978 = vpop.f32.mrb[0].mxu0
      %9979 = vmatprep.mubr.f32.mxu0 0.0
      %9980 = vmatmul.mubr.f32.gmra.mrb[0].mxu0 %v9753
      %v9981 = vpop.f32.mrb[0].mxu0
      %v9982 = vadd.f32 0.0, %v9981
      %v9983 = vpop.f32.mrb[0].mxu0
      %9984 = vmatprep.mubr.f32.mxu0 0.0
      %9985 = vmatmul.mubr.f32.gmra.mrb[0].mxu0 %v9756
      %v9986 = vpop.f32.mrb[0].mxu0
      %v9987 = vadd.f32 0.0, %v9986
      %v9988 = vpop.f32.mrb[0].mxu0
      %9989 = vmatprep.mubr.f32.mxu0 0.0
      %9990 = vmatmul.mubr.f32.gmra.mrb[0].mxu0 %v9759
      %v9991 = vpop.f32.mrb[0].mxu0
      %v9992 = vadd.f32 0.0, %v9991
      %v9993 = vpop.f32.mrb[0].mxu0
      %9994 = vmatprep.mubr.f32.mxu0 0.0
      %9995 = vmatmul.mubr.f32.gmra.mrb[0].mxu0 %v9762
      %v9996 = vpop.f32.mrb[0].mxu0
      %v9997 = vadd.f32 0.0, %v9996
      %v9998 = vpop.f32.mrb[0].mxu0
      %9999 = vmatprep.mubr.f32.mxu0 0.0
      %10000 = vmatmul.mubr.f32.gmra.mrb[0].mxu0 %v9765
      %v10001 = vpop.f32.mrb[0].mxu0
      %v10002 = vadd.f32 0.0, %v10001
      %v10003 = vpop.f32.mrb[0].mxu0
      %10004 = vmatprep.mubr.f32.mxu0 0.0
      %10005 = vmatmul.mubr.f32.gmra.mrb[0].mxu0 %v9768
      %v10006 = vpop.f32.mrb[0].mxu0
      %v10007 = vadd.f32 0.0, %v10006
      %v10008 = vpop.f32.mrb[0].mxu0
      %10009 = vmatprep.mubr.f32.mxu0 0.0
      %10010 = vmatmul.mubr.f32.gmra.mrb[0].mxu0 %v9771
      %v10011 = vpop.f32.mrb[0].mxu0
      %v10012 = vadd.f32 0.0, %v10011
      %v10013 = vpop.f32.mrb[0].mxu0
      %10014 = vmatprep.mubr.f32.mxu0 0.0
      %10015 = vmatmul.mubr.f32.gmra.mrb[0].mxu0 %v9774
      %v10016 = vpop.f32.mrb[0].mxu0
      %v10017 = vadd.f32 0.0, %v10016
      %v10018 = vpop.f32.mrb[0].mxu0
      %10019 = vmatprep.mubr.f32.mxu0 0.0
      %10020 = vmatmul.mubr.f32.gmra.mrb[0].mxu0 %v9777
      %v10021 = vpop.f32.mrb[0].mxu0
      %v10022 = vadd.f32 0.0, %v10021
      %v10023 = vpop.f32.mrb[0].mxu0
      %10024 = vmatprep.mubr.f32.mxu0 0.0
      %10025 = vmatmul.mubr.f32.gmra.mrb[0].mxu0 %v9780
      %v10026 = vpop.f32.mrb[0].mxu0
      %v10027 = vadd.f32 0.0, %v10026
      %v10028 = vpop.f32.mrb[0].mxu0
      %10029 = vdwg.mxu0
      %v10030 = vadd.f32 %v9600, %v9852
      %v10031 = vadd.f32 %v9601, %v9857
      %v10032 = vadd.f32 %v9602, %v9862
      %v10033 = vadd.f32 %v9603, %v9867
      %v10034 = vadd.f32 %v9604, %v9872
      %v10035 = vadd.f32 %v9605, %v9877
      %v10036 = vadd.f32 %v9606, %v9882
      %v10037 = vadd.f32 %v9607, %v9887
      %v10038 = vadd.f32 %v9608, %v9892
      %v10039 = vadd.f32 %v9609, %v9897
      %v10040 = vadd.f32 %v9610, %v9902
      %v10041 = vadd.f32 %v9611, %v9907
      %v10042 = vadd.f32 %v9612, %v9912
      %v10043 = vadd.f32 %v9613, %v9917
      %v10044 = vadd.f32 %v9614, %v9922
      %v10045 = vadd.f32 %v9615, %v9927
      %v10046 = vadd.f32 %v9616, %v9932
      %v10047 = vadd.f32 %v9617, %v9937
      %v10048 = vadd.f32 %v9618, %v9942
      %v10049 = vadd.f32 %v9619, %v9947
      %v10050 = vadd.f32 %v9620, %v9952
      %v10051 = vadd.f32 %v9621, %v9957
      %v10052 = vadd.f32 %v9622, %v9962
      %v10053 = vadd.f32 %v9623, %v9967
      %v10054 = vadd.f32 %v9624, %v9972
      %v10055 = vadd.f32 %v9625, %v9977
      %v10056 = vadd.f32 %v9626, %v9982
      %v10057 = vadd.f32 %v9627, %v9987
      %v10058 = vadd.f32 %v9628, %v9992
      %v10059 = vadd.f32 %v9629, %v9997
      %v10060 = vadd.f32 %v9630, %v10002
      %v10061 = vadd.f32 %v9631, %v10007
      %v10062 = vadd.f32 %v9632, %v10012
      %v10063 = vadd.f32 %v9633, %v10017
      %v10064 = vadd.f32 %v9634, %v10022
      %v10065 = vadd.f32 %v9635, %v10027
      %v10066 = vld [vmem:[%s6] sm:$0x1]
      %v10068 = vlaneseq
      %v10069 = vshrl.u32 %v10068, 7
      %v10070 = vsub.s32 0, %v10069
      %v10071 = vrot.slane %v10066, %v10070
      %v10073 = vadd.f32 %v10030, %v10071
      %v10074 = vadd.f32 %v10031, %v10071
      %v10075 = vadd.f32 %v10032, %v10071
      %v10076 = vadd.f32 %v10033, %v10071
      %v10077 = vadd.f32 %v10034, %v10071
      %v10078 = vadd.f32 %v10035, %v10071
      %v10079 = vadd.f32 %v10036, %v10071
      %v10080 = vadd.f32 %v10037, %v10071
      %v10081 = vadd.f32 %v10038, %v10071
      %v10082 = vadd.f32 %v10039, %v10071
      %v10083 = vadd.f32 %v10040, %v10071
      %v10084 = vadd.f32 %v10041, %v10071
      %v10085 = vadd.f32 %v10042, %v10071
      %v10086 = vadd.f32 %v10043, %v10071
      %v10087 = vadd.f32 %v10044, %v10071
      %v10088 = vadd.f32 %v10045, %v10071
      %v10089 = vadd.f32 %v10046, %v10071
      %v10090 = vadd.f32 %v10047, %v10071
      %v10091 = vadd.f32 %v10048, %v10071
      %v10092 = vadd.f32 %v10049, %v10071
      %v10093 = vadd.f32 %v10050, %v10071
      %v10094 = vadd.f32 %v10051, %v10071
      %v10095 = vadd.f32 %v10052, %v10071
      %v10096 = vadd.f32 %v10053, %v10071
      %v10097 = vadd.f32 %v10054, %v10071
      %v10098 = vadd.f32 %v10055, %v10071
      %v10099 = vadd.f32 %v10056, %v10071
      %v10100 = vadd.f32 %v10057, %v10071
      %v10101 = vadd.f32 %v10058, %v10071
      %v10102 = vadd.f32 %v10059, %v10071
      %v10103 = vadd.f32 %v10060, %v10071
      %v10104 = vadd.f32 %v10061, %v10071
      %v10105 = vadd.f32 %v10062, %v10071
      %v10106 = vadd.f32 %v10063, %v10071
      %v10107 = vadd.f32 %v10064, %v10071
      %v10108 = vadd.f32 %v10065, %v10071
      %v10109 = vmul.f32 %v10073, %v4268
      %v10110 = vmul.f32 %v10074, %v4273
      %v10111 = vmul.f32 %v10075, %v4278
      %v10112 = vmul.f32 %v10076, %v4283
      %v10113 = vmul.f32 %v10077, %v4288
      %v10114 = vmul.f32 %v10078, %v4293
      %v10115 = vmul.f32 %v10079, %v4298
      %v10116 = vmul.f32 %v10080, %v4303
      %v10117 = vmul.f32 %v10081, %v4308
      %v10118 = vmul.f32 %v10082, %v4313
      %v10119 = vmul.f32 %v10083, %v4318
      %v10120 = vmul.f32 %v10084, %v4323
      %v10121 = vmul.f32 %v10085, %v4328
      %v10122 = vmul.f32 %v10086, %v4333
      %v10123 = vmul.f32 %v10087, %v4338
      %v10124 = vmul.f32 %v10088, %v4343
      %v10125 = vmul.f32 %v10089, %v4348
      %v10126 = vmul.f32 %v10090, %v4353
      %v10127 = vmul.f32 %v10091, %v4358
      %v10128 = vmul.f32 %v10092, %v4363
      %v10129 = vmul.f32 %v10093, %v4368
      %v10130 = vmul.f32 %v10094, %v4373
      %v10131 = vmul.f32 %v10095, %v4378
      %v10132 = vmul.f32 %v10096, %v4383
      %v10133 = vmul.f32 %v10097, %v4388
      %v10134 = vmul.f32 %v10098, %v4393
      %v10135 = vmul.f32 %v10099, %v4398
      %v10136 = vmul.f32 %v10100, %v4403
      %v10137 = vmul.f32 %v10101, %v4408
      %v10138 = vmul.f32 %v10102, %v4413
      %v10139 = vmul.f32 %v10103, %v4418
      %v10140 = vmul.f32 %v10104, %v4423
      %v10141 = vmul.f32 %v10105, %v4428
      %v10142 = vmul.f32 %v10106, %v4433
      %v10143 = vmul.f32 %v10107, %v4438
      %v10144 = vmul.f32 %v10108, %v4443
      %v10145 = vsel %vm498, %v10109, 0.0
      %v10146 = vsel %vm498, %v10110, 0.0
      %v10147 = vadd.f32 %v10145, %v10146
      %v10148 = vsel %vm498, %v10111, 0.0
      %v10149 = vadd.f32 %v10147, %v10148
      %v10150 = vsel %vm498, %v10112, 0.0
      %v10151 = vadd.f32 %v10149, %v10150
      %v10152 = vsel %vm498, %v10113, 0.0
      %v10153 = vadd.f32 %v10151, %v10152
      %v10154 = vsel %vm498, %v10114, 0.0
      %v10155 = vadd.f32 %v10153, %v10154
      %v10156 = vsel %vm498, %v10115, 0.0
      %v10157 = vadd.f32 %v10155, %v10156
      %v10158 = vsel %vm498, %v10116, 0.0
      %v10159 = vadd.f32 %v10157, %v10158
      %v10160 = vsel %vm498, %v10117, 0.0
      %v10161 = vadd.f32 %v10159, %v10160
      %v10162 = vsel %vm498, %v10118, 0.0
      %v10163 = vadd.f32 %v10161, %v10162
      %v10164 = vsel %vm498, %v10119, 0.0
      %v10165 = vadd.f32 %v10163, %v10164
      %v10166 = vsel %vm498, %v10120, 0.0
      %v10167 = vadd.f32 %v10165, %v10166
      %v10168 = vsel %vm498, %v10121, 0.0
      %v10169 = vadd.f32 %v10167, %v10168
      %v10170 = vsel %vm498, %v10122, 0.0
      %v10171 = vadd.f32 %v10169, %v10170
      %v10172 = vsel %vm498, %v10123, 0.0
      %v10173 = vadd.f32 %v10171, %v10172
      %v10174 = vsel %vm498, %v10124, 0.0
      %v10175 = vadd.f32 %v10173, %v10174
      %v10176 = vsel %vm498, %v10125, 0.0
      %v10177 = vadd.f32 %v10175, %v10176
      %v10178 = vsel %vm498, %v10126, 0.0
      %v10179 = vadd.f32 %v10177, %v10178
      %v10180 = vsel %vm498, %v10127, 0.0
      %v10181 = vadd.f32 %v10179, %v10180
      %v10182 = vsel %vm498, %v10128, 0.0
      %v10183 = vadd.f32 %v10181, %v10182
      %v10184 = vsel %vm498, %v10129, 0.0
      %v10185 = vadd.f32 %v10183, %v10184
      %v10186 = vsel %vm498, %v10130, 0.0
      %v10187 = vadd.f32 %v10185, %v10186
      %v10188 = vsel %vm498, %v10131, 0.0
      %v10189 = vadd.f32 %v10187, %v10188
      %v10190 = vsel %vm498, %v10132, 0.0
      %v10191 = vadd.f32 %v10189, %v10190
      %v10192 = vsel %vm498, %v10133, 0.0
      %v10193 = vadd.f32 %v10191, %v10192
      %v10194 = vsel %vm498, %v10134, 0.0
      %v10195 = vadd.f32 %v10193, %v10194
      %v10196 = vsel %vm498, %v10135, 0.0
      %v10197 = vadd.f32 %v10195, %v10196
      %v10198 = vsel %vm498, %v10136, 0.0
      %v10199 = vadd.f32 %v10197, %v10198
      %v10200 = vsel %vm498, %v10137, 0.0
      %v10201 = vadd.f32 %v10199, %v10200
      %v10202 = vsel %vm498, %v10138, 0.0
      %v10203 = vadd.f32 %v10201, %v10202
      %v10204 = vsel %vm498, %v10139, 0.0
      %v10205 = vadd.f32 %v10203, %v10204
      %v10206 = vsel %vm498, %v10140, 0.0
      %v10207 = vadd.f32 %v10205, %v10206
      %v10208 = vsel %vm498, %v10141, 0.0
      %v10209 = vadd.f32 %v10207, %v10208
      %v10210 = vsel %vm498, %v10142, 0.0
      %v10211 = vadd.f32 %v10209, %v10210
      %v10212 = vsel %vm498, %v10143, 0.0
      %v10213 = vadd.f32 %v10211, %v10212
      %v10214 = vsel %vm498, %v10144, 0.0
      %v10215 = vadd.f32 %v10213, %v10214
      %v10216 = vrot.slane %v10215, 4
      %v10217 = vadd.f32 %v10215, %v10216
      %v10218 = vrot.slane %v10217, 2
      %v10219 = vadd.f32 %v10217, %v10218
      %v10220 = vrot.slane %v10219, 1
      %v10221 = vadd.f32 %v10219, %v10220
      %v10222 = vmul.f32 %v10109, %v10073
      %v10223 = vmul.f32 %v10110, %v10074
      %v10224 = vmul.f32 %v10111, %v10075
      %v10225 = vmul.f32 %v10112, %v10076
      %v10226 = vmul.f32 %v10113, %v10077
      %v10227 = vmul.f32 %v10114, %v10078
      %v10228 = vmul.f32 %v10115, %v10079
      %v10229 = vmul.f32 %v10116, %v10080
      %v10230 = vmul.f32 %v10117, %v10081
      %v10231 = vmul.f32 %v10118, %v10082
      %v10232 = vmul.f32 %v10119, %v10083
      %v10233 = vmul.f32 %v10120, %v10084
      %v10234 = vmul.f32 %v10121, %v10085
      %v10235 = vmul.f32 %v10122, %v10086
      %v10236 = vmul.f32 %v10123, %v10087
      %v10237 = vmul.f32 %v10124, %v10088
      %v10238 = vmul.f32 %v10125, %v10089
      %v10239 = vmul.f32 %v10126, %v10090
      %v10240 = vmul.f32 %v10127, %v10091
      %v10241 = vmul.f32 %v10128, %v10092
      %v10242 = vmul.f32 %v10129, %v10093
      %v10243 = vmul.f32 %v10130, %v10094
      %v10244 = vmul.f32 %v10131, %v10095
      %v10245 = vmul.f32 %v10132, %v10096
      %v10246 = vmul.f32 %v10133, %v10097
      %v10247 = vmul.f32 %v10134, %v10098
      %v10248 = vmul.f32 %v10135, %v10099
      %v10249 = vmul.f32 %v10136, %v10100
      %v10250 = vmul.f32 %v10137, %v10101
      %v10251 = vmul.f32 %v10138, %v10102
      %v10252 = vmul.f32 %v10139, %v10103
      %v10253 = vmul.f32 %v10140, %v10104
      %v10254 = vmul.f32 %v10141, %v10105
      %v10255 = vmul.f32 %v10142, %v10106
      %v10256 = vmul.f32 %v10143, %v10107
      %v10257 = vmul.f32 %v10144, %v10108
      %v10258 = vsel %vm498, %v10222, 0.0
      %v10259 = vsel %vm498, %v10223, 0.0
      %v10260 = vadd.f32 %v10258, %v10259
      %v10261 = vsel %vm498, %v10224, 0.0
      %v10262 = vadd.f32 %v10260, %v10261
      %v10263 = vsel %vm498, %v10225, 0.0
      %v10264 = vadd.f32 %v10262, %v10263
      %v10265 = vsel %vm498, %v10226, 0.0
      %v10266 = vadd.f32 %v10264, %v10265
      %v10267 = vsel %vm498, %v10227, 0.0
      %v10268 = vadd.f32 %v10266, %v10267
      %v10269 = vsel %vm498, %v10228, 0.0
      %v10270 = vadd.f32 %v10268, %v10269
      %v10271 = vsel %vm498, %v10229, 0.0
      %v10272 = vadd.f32 %v10270, %v10271
      %v10273 = vsel %vm498, %v10230, 0.0
      %v10274 = vadd.f32 %v10272, %v10273
      %v10275 = vsel %vm498, %v10231, 0.0
      %v10276 = vadd.f32 %v10274, %v10275
      %v10277 = vsel %vm498, %v10232, 0.0
      %v10278 = vadd.f32 %v10276, %v10277
      %v10279 = vsel %vm498, %v10233, 0.0
      %v10280 = vadd.f32 %v10278, %v10279
      %v10281 = vsel %vm498, %v10234, 0.0
      %v10282 = vadd.f32 %v10280, %v10281
      %v10283 = vsel %vm498, %v10235, 0.0
      %v10284 = vadd.f32 %v10282, %v10283
      %v10285 = vsel %vm498, %v10236, 0.0
      %v10286 = vadd.f32 %v10284, %v10285
      %v10287 = vsel %vm498, %v10237, 0.0
      %v10288 = vadd.f32 %v10286, %v10287
      %v10289 = vsel %vm498, %v10238, 0.0
      %v10290 = vadd.f32 %v10288, %v10289
      %v10291 = vsel %vm498, %v10239, 0.0
      %v10292 = vadd.f32 %v10290, %v10291
      %v10293 = vsel %vm498, %v10240, 0.0
      %v10294 = vadd.f32 %v10292, %v10293
      %v10295 = vsel %vm498, %v10241, 0.0
      %v10296 = vadd.f32 %v10294, %v10295
      %v10297 = vsel %vm498, %v10242, 0.0
      %v10298 = vadd.f32 %v10296, %v10297
      %v10299 = vsel %vm498, %v10243, 0.0
      %v10300 = vadd.f32 %v10298, %v10299
      %v10301 = vsel %vm498, %v10244, 0.0
      %v10302 = vadd.f32 %v10300, %v10301
      %v10303 = vsel %vm498, %v10245, 0.0
      %v10304 = vadd.f32 %v10302, %v10303
      %v10305 = vsel %vm498, %v10246, 0.0
      %v10306 = vadd.f32 %v10304, %v10305
      %v10307 = vsel %vm498, %v10247, 0.0
      %v10308 = vadd.f32 %v10306, %v10307
      %v10309 = vsel %vm498, %v10248, 0.0
      %v10310 = vadd.f32 %v10308, %v10309
      %v10311 = vsel %vm498, %v10249, 0.0
      %v10312 = vadd.f32 %v10310, %v10311
      %v10313 = vsel %vm498, %v10250, 0.0
      %v10314 = vadd.f32 %v10312, %v10313
      %v10315 = vsel %vm498, %v10251, 0.0
      %v10316 = vadd.f32 %v10314, %v10315
      %v10317 = vsel %vm498, %v10252, 0.0
      %v10318 = vadd.f32 %v10316, %v10317
      %v10319 = vsel %vm498, %v10253, 0.0
      %v10320 = vadd.f32 %v10318, %v10319
      %v10321 = vsel %vm498, %v10254, 0.0
      %v10322 = vadd.f32 %v10320, %v10321
      %v10323 = vsel %vm498, %v10255, 0.0
      %v10324 = vadd.f32 %v10322, %v10323
      %v10325 = vsel %vm498, %v10256, 0.0
      %v10326 = vadd.f32 %v10324, %v10325
      %v10327 = vsel %vm498, %v10257, 0.0
      %v10328 = vadd.f32 %v10326, %v10327
      %v10329 = vrot.slane %v10328, 4
      %v10330 = vadd.f32 %v10328, %v10329
      %v10331 = vrot.slane %v10330, 2
      %v10332 = vadd.f32 %v10330, %v10331
      %v10333 = vrot.slane %v10332, 1
      %v10334 = vadd.f32 %v10332, %v10333
      %v10335 = vmul.f32 %v10221, 0.00390625
      %v10336 = vmul.f32 %v10334, 0.00390625
      %v10337 = vmul.f32 %v10335, %v10335
      %v10338 = vsub.f32 %v10336, %v10337
      %v10339 = vsub.f32 %v10073, %v10335
      %v10340 = vsub.f32 %v10074, %v10335
      %v10341 = vsub.f32 %v10075, %v10335
      %v10342 = vsub.f32 %v10076, %v10335
      %v10343 = vsub.f32 %v10077, %v10335
      %v10344 = vsub.f32 %v10078, %v10335
      %v10345 = vsub.f32 %v10079, %v10335
      %v10346 = vsub.f32 %v10080, %v10335
      %v10347 = vsub.f32 %v10081, %v10335
      %v10348 = vsub.f32 %v10082, %v10335
      %v10349 = vsub.f32 %v10083, %v10335
      %v10350 = vsub.f32 %v10084, %v10335
      %v10351 = vsub.f32 %v10085, %v10335
      %v10352 = vsub.f32 %v10086, %v10335
      %v10353 = vsub.f32 %v10087, %v10335
      %v10354 = vsub.f32 %v10088, %v10335
      %v10355 = vsub.f32 %v10089, %v10335
      %v10356 = vsub.f32 %v10090, %v10335
      %v10357 = vsub.f32 %v10091, %v10335
      %v10358 = vsub.f32 %v10092, %v10335
      %v10359 = vsub.f32 %v10093, %v10335
      %v10360 = vsub.f32 %v10094, %v10335
      %v10361 = vsub.f32 %v10095, %v10335
      %v10362 = vsub.f32 %v10096, %v10335
      %v10363 = vsub.f32 %v10097, %v10335
      %v10364 = vsub.f32 %v10098, %v10335
      %v10365 = vsub.f32 %v10099, %v10335
      %v10366 = vsub.f32 %v10100, %v10335
      %v10367 = vsub.f32 %v10101, %v10335
      %v10368 = vsub.f32 %v10102, %v10335
      %v10369 = vsub.f32 %v10103, %v10335
      %v10370 = vsub.f32 %v10104, %v10335
      %v10371 = vsub.f32 %v10105, %v10335
      %v10372 = vsub.f32 %v10106, %v10335
      %v10373 = vsub.f32 %v10107, %v10335
      %v10374 = vsub.f32 %v10108, %v10335
      %v10375 = vadd.f32 %v10338, 1e-05
      %v10376 = vrsqrt.pop %v10375
      %v10377 = vmul.f32 %v10339, %v10376
      %v10378 = vmul.f32 %v10340, %v10376
      %v10379 = vmul.f32 %v10341, %v10376
      %v10380 = vmul.f32 %v10342, %v10376
      %v10381 = vmul.f32 %v10343, %v10376
      %v10382 = vmul.f32 %v10344, %v10376
      %v10383 = vmul.f32 %v10345, %v10376
      %v10384 = vmul.f32 %v10346, %v10376
      %v10385 = vmul.f32 %v10347, %v10376
      %v10386 = vmul.f32 %v10348, %v10376
      %v10387 = vmul.f32 %v10349, %v10376
      %v10388 = vmul.f32 %v10350, %v10376
      %v10389 = vmul.f32 %v10351, %v10376
      %v10390 = vmul.f32 %v10352, %v10376
      %v10391 = vmul.f32 %v10353, %v10376
      %v10392 = vmul.f32 %v10354, %v10376
      %v10393 = vmul.f32 %v10355, %v10376
      %v10394 = vmul.f32 %v10356, %v10376
      %v10395 = vmul.f32 %v10357, %v10376
      %v10396 = vmul.f32 %v10358, %v10376
      %v10397 = vmul.f32 %v10359, %v10376
      %v10398 = vmul.f32 %v10360, %v10376
      %v10399 = vmul.f32 %v10361, %v10376
      %v10400 = vmul.f32 %v10362, %v10376
      %v10401 = vmul.f32 %v10363, %v10376
      %v10402 = vmul.f32 %v10364, %v10376
      %v10403 = vmul.f32 %v10365, %v10376
      %v10404 = vmul.f32 %v10366, %v10376
      %v10405 = vmul.f32 %v10367, %v10376
      %v10406 = vmul.f32 %v10368, %v10376
      %v10407 = vmul.f32 %v10369, %v10376
      %v10408 = vmul.f32 %v10370, %v10376
      %v10409 = vmul.f32 %v10371, %v10376
      %v10410 = vmul.f32 %v10372, %v10376
      %v10411 = vmul.f32 %v10373, %v10376
      %v10412 = vmul.f32 %v10374, %v10376
      %v10413 = vld [vmem:[%s273 + $0x13] sm:$0xff]
      %v10414 = vld [vmem:[%s273 + $0x1b] sm:$0xff]
      %v10415 = vld [vmem:[%s273 + $0x23] sm:$0xff]
      %v10416 = vld [vmem:[%s273 + $0x2b] sm:$0xff]
      %v10417 = vld [vmem:[%s273 + $0x33] sm:$0xff]
      %v10418 = vld [vmem:[%s273 + $0x3b] sm:$0xff]
      %v10419 = vld [vmem:[%s273 + $0x43] sm:$0xff]
      %v10420 = vld [vmem:[%s273 + $0x4b] sm:$0xff]
      %v10421 = vld [vmem:[%s273 + $0x53] sm:$0xff]
      %v10422 = vld [vmem:[%s273 + $0x5b] sm:$0xff]
      %v10423 = vld [vmem:[%s273 + $0x63] sm:$0xff]
      %v10424 = vld [vmem:[%s273 + $0x6b] sm:$0xff]
      %v10425 = vld [vmem:[%s273 + $0x73] sm:$0xff]
      %v10426 = vld [vmem:[%s273 + $0x7b] sm:$0xff]
      %v10427 = vld [vmem:[%s273 + $0x83] sm:$0xff]
      %v10428 = vld [vmem:[%s273 + $0x8b] sm:$0xff]
      %v10429 = vld [vmem:[%s273 + $0x93] sm:$0xff]
      %v10430 = vld [vmem:[%s273 + $0x9b] sm:$0xff]
      %v10431 = vld [vmem:[%s273 + $0xa3] sm:$0xff]
      %v10432 = vld [vmem:[%s273 + $0xab] sm:$0xff]
      %v10433 = vld [vmem:[%s273 + $0xb3] sm:$0xff]
      %v10434 = vld [vmem:[%s273 + $0xbb] sm:$0xff]
      %v10435 = vld [vmem:[%s273 + $0xc3] sm:$0xff]
      %v10436 = vld [vmem:[%s273 + $0xcb] sm:$0xff]
      %v10437 = vld [vmem:[%s273 + $0xd3] sm:$0xff]
      %v10438 = vld [vmem:[%s273 + $0xdb] sm:$0xff]
      %v10439 = vld [vmem:[%s273 + $0xe3] sm:$0xff]
      %v10440 = vld [vmem:[%s273 + $0xeb] sm:$0xff]
      %v10441 = vld [vmem:[%s273 + $0xf3] sm:$0xff]
      %v10442 = vld [vmem:[%s273 + $0xfb] sm:$0xff]
      %v10443 = vld [vmem:[%s273 + $0x103] sm:$0xff]
      %v10444 = vld [vmem:[%s273 + $0x10b] sm:$0xff]
      %v10445 = vld [vmem:[%s273 + $0x113] sm:$0xff]
      %v10446 = vld [vmem:[%s273 + $0x11b] sm:$0xff]
      %v10447 = vld [vmem:[%s273 + $0x123] sm:$0xff]
      %v10448 = vld [vmem:[%s273 + $0x12b] sm:$0xff]
      %v10449 = vadd.f32 %v10413, %v10377
      %v10450 = vadd.f32 %v10414, %v10378
      %v10451 = vadd.f32 %v10415, %v10379
      %v10452 = vadd.f32 %v10416, %v10380
      %v10453 = vadd.f32 %v10417, %v10381
      %v10454 = vadd.f32 %v10418, %v10382
      %v10455 = vadd.f32 %v10419, %v10383
      %v10456 = vadd.f32 %v10420, %v10384
      %v10457 = vadd.f32 %v10421, %v10385
      %v10458 = vadd.f32 %v10422, %v10386
      %v10459 = vadd.f32 %v10423, %v10387
      %v10460 = vadd.f32 %v10424, %v10388
      %v10461 = vadd.f32 %v10425, %v10389
      %v10462 = vadd.f32 %v10426, %v10390
      %v10463 = vadd.f32 %v10427, %v10391
      %v10464 = vadd.f32 %v10428, %v10392
      %v10465 = vadd.f32 %v10429, %v10393
      %v10466 = vadd.f32 %v10430, %v10394
      %v10467 = vadd.f32 %v10431, %v10395
      %v10468 = vadd.f32 %v10432, %v10396
      %v10469 = vadd.f32 %v10433, %v10397
      %v10470 = vadd.f32 %v10434, %v10398
      %v10471 = vadd.f32 %v10435, %v10399
      %v10472 = vadd.f32 %v10436, %v10400
      %v10473 = vadd.f32 %v10437, %v10401
      %v10474 = vadd.f32 %v10438, %v10402
      %v10475 = vadd.f32 %v10439, %v10403
      %v10476 = vadd.f32 %v10440, %v10404
      %v10477 = vadd.f32 %v10441, %v10405
      %v10478 = vadd.f32 %v10442, %v10406
      %v10479 = vadd.f32 %v10443, %v10407
      %v10480 = vadd.f32 %v10444, %v10408
      %v10481 = vadd.f32 %v10445, %v10409
      %v10482 = vadd.f32 %v10446, %v10410
      %v10483 = vadd.f32 %v10447, %v10411
      %v10484 = vadd.f32 %v10448, %v10412
      %10485 = vst.msk [vmem:[%s278] sm:$0xff] %vm498, %v10449
      %10486 = vst.msk [vmem:[%s278 + $0x8] sm:$0xff] %vm498, %v10450
      %10487 = vst.msk [vmem:[%s278 + $0x10] sm:$0xff] %vm498, %v10451
      %10488 = vst.msk [vmem:[%s278 + $0x18] sm:$0xff] %vm498, %v10452
      %10489 = vst.msk [vmem:[%s278 + $0x20] sm:$0xff] %vm498, %v10453
      %10490 = vst.msk [vmem:[%s278 + $0x28] sm:$0xff] %vm498, %v10454
      %10491 = vst.msk [vmem:[%s278 + $0x30] sm:$0xff] %vm498, %v10455
      %10492 = vst.msk [vmem:[%s278 + $0x38] sm:$0xff] %vm498, %v10456
      %10493 = vst.msk [vmem:[%s278 + $0x40] sm:$0xff] %vm498, %v10457
      %10494 = vst.msk [vmem:[%s278 + $0x48] sm:$0xff] %vm498, %v10458
      %10495 = vst.msk [vmem:[%s278 + $0x50] sm:$0xff] %vm498, %v10459
      %10496 = vst.msk [vmem:[%s278 + $0x58] sm:$0xff] %vm498, %v10460
      %10497 = vst.msk [vmem:[%s278 + $0x60] sm:$0xff] %vm498, %v10461
      %10498 = vst.msk [vmem:[%s278 + $0x68] sm:$0xff] %vm498, %v10462
      %10499 = vst.msk [vmem:[%s278 + $0x70] sm:$0xff] %vm498, %v10463
      %10500 = vst.msk [vmem:[%s278 + $0x78] sm:$0xff] %vm498, %v10464
      %10501 = vst.msk [vmem:[%s278 + $0x80] sm:$0xff] %vm498, %v10465
      %10502 = vst.msk [vmem:[%s278 + $0x88] sm:$0xff] %vm498, %v10466
      %10503 = vst.msk [vmem:[%s278 + $0x90] sm:$0xff] %vm498, %v10467
      %10504 = vst.msk [vmem:[%s278 + $0x98] sm:$0xff] %vm498, %v10468
      %10505 = vst.msk [vmem:[%s278 + $0xa0] sm:$0xff] %vm498, %v10469
      %10506 = vst.msk [vmem:[%s278 + $0xa8] sm:$0xff] %vm498, %v10470
      %10507 = vst.msk [vmem:[%s278 + $0xb0] sm:$0xff] %vm498, %v10471
      %10508 = vst.msk [vmem:[%s278 + $0xb8] sm:$0xff] %vm498, %v10472
      %10509 = vst.msk [vmem:[%s278 + $0xc0] sm:$0xff] %vm498, %v10473
      %10510 = vst.msk [vmem:[%s278 + $0xc8] sm:$0xff] %vm498, %v10474
      %10511 = vst.msk [vmem:[%s278 + $0xd0] sm:$0xff] %vm498, %v10475
      %10512 = vst.msk [vmem:[%s278 + $0xd8] sm:$0xff] %vm498, %v10476
      %10513 = vst.msk [vmem:[%s278 + $0xe0] sm:$0xff] %vm498, %v10477
      %10514 = vst.msk [vmem:[%s278 + $0xe8] sm:$0xff] %vm498, %v10478
      %10515 = vst.msk [vmem:[%s278 + $0xf0] sm:$0xff] %vm498, %v10479
      %10516 = vst.msk [vmem:[%s278 + $0xf8] sm:$0xff] %vm498, %v10480
      %10517 = vst.msk [vmem:[%s278 + $0x100] sm:$0xff] %vm498, %v10481
      %10518 = vst.msk [vmem:[%s278 + $0x108] sm:$0xff] %vm498, %v10482
      %10519 = vst.msk [vmem:[%s278 + $0x110] sm:$0xff] %vm498, %v10483
      %10520 = vst.msk [vmem:[%s278 + $0x118] sm:$0xff] %vm498, %v10484
      %p10521 = scmp.lt.s32.totalorder %s18, 1
      %s10522 = scalar_select %p10521, %s18, 1
      %s10523 = smul.addr %s10522, 36
      %s10524 = smul.addr %s10523, 8
      %s10525 = scalar_lea.vmem %s7, %s10524
      // Predicated region
      $region49: #{resnet_block.1} parent=47 // pred_check
        %p10526 = pneg %p188
      $region50: #{resnet_block.1} parent=47 // pred_check_branch
        %10528 = sbr.rel (%p10526) target = $region52
      $region51: #{resnet_block.1} parent=47 // pred_region
        _
      $region52: #{resnet_block.1} parent=47 // pred_fallthru
        _
    $region48: #{resnet_block.1} parent=5 // pred_fallthru
      _
    %p10529 = scmp.le.s32.totalorder 2, %s13
    // Predicated region
    $region53: #{resnet_block.1} parent=5 // pred_check
      %p10530 = pneg %p10529
    $region54: #{resnet_block.1} parent=5 // pred_check_branch
      %10532 = sbr.rel (%p10530) target = $region56
    $region55: #{resnet_block.1} parent=5 // pred_region
      %s10533 = ssub.s32 %s13, 2
      // Predicated region
      $region57: #{resnet_block.1} parent=55 // pred_check
        %p10534 = pneg %p194
      $region58: #{resnet_block.1} parent=55 // pred_check_branch
        %10536 = sbr.rel (%p10534) target = $region60
      $region59: #{resnet_block.1} parent=55 // pred_region
        %p10537 = scmp.lt.s32.totalorder %s19, 1
        %s10538 = scalar_select %p10537, %s19, 1
        %s10539 = smul.addr %s10538, 36
        %s10540 = smul.addr %s10539, 8
        %s10541 = scalar_lea.vmem %s7, %s10540
      $region60: #{resnet_block.1} parent=55 // pred_fallthru
        _
    $region56: #{resnet_block.1} parent=5 // pred_fallthru
      _
  $region6: #{resnet_block.1} parent=0 // loop_footer
    %s17 = sadd.s32 1, %s13
  $region7: #{resnet_block.1} parent=0 // loop_footer_branch
    %12 = sbr.rel target = $region3
  $region8: #{resnet_block.1} parent=0 // loop_exit
    _

</llo_original>
